<compile_context>
chip_gen: v6e
topology: v6e:2x2x1
jax: 0.10.0
libtpu: 0.0.40
codegen_flags: <defaults>
</compile_context>

<pallas_src>
import functools

import numpy as np

import jax
import jax.numpy as jnp
from jax.experimental import pallas as pl
from jax.experimental.pallas import tpu as pltpu


def _selection_matrices(A, Q, l_max):
    """Constant selection matrices mapping the coefficient row x_l[i, m, :]
    (flattened (a,q) -> a*Q+q) onto the final flattened output position
    k = (((a*A + b)*Q + q)*Q + e)*(l_max+1) + l.

    R1[l, r, k] = cg_l  if (k % L1 == l) and r == a(k)*Q + q(k)   else 0
    R2[r, k]    = 1     if r == b(k)*Q + e(k)                     else 0
    """
    L1 = l_max + 1
    AQ = A * Q
    n_out = A * A * Q * Q * L1

    k = np.arange(n_out)
    l_of_k = k % L1
    j = k // L1                          # (((a*A + b)*Q + q)*Q + e)
    e = j % Q
    q = (j // Q) % Q
    b = (j // (Q * Q)) % A
    a = j // (Q * Q * A)
    row1 = a * Q + q
    row2 = b * Q + e

    r1 = np.zeros((L1, AQ, n_out), dtype=np.float32)
    for l in range(L1):
        cg = ((-1.0) ** l) * (2.0 * l + 1.0) ** (-0.5)
        cols = np.nonzero(l_of_k == l)[0]
        r1[l, row1[cols], cols] = cg
    r2 = np.zeros((AQ, n_out), dtype=np.float32)
    r2[row2, k] = 1.0
    return jnp.asarray(r1), jnp.asarray(r2)


def _ps_kernel(*refs, m_sizes):
    """refs = (x_0, ..., x_L, r1, r2, out)

    x_l : (M_l, B, AQ)      coefficients for this block of samples (m-major)
    r1  : (L1, AQ, n_out)   selection matrix (carries cg_l and the l-lane mask)
    r2  : (AQ, n_out)       selection matrix
    out : (B, n_out)        final flattened power spectrum for the block
    """
    n_l = len(m_sizes)
    x_refs = refs[:n_l]
    r1_ref = refs[n_l]
    r2_ref = refs[n_l + 1]
    o_ref = refs[n_l + 2]

    r2 = r2_ref[...]                                    # (AQ, n_out)
    acc = None
    for l in range(n_l):
        m = m_sizes[l]
        x = x_refs[l][...]                              # (m, B, AQ)
        b = x.shape[1]
        x2 = x.reshape(m * b, x.shape[2])               # relayout-free (B % 8 == 0)
        # One RHS weight-push per selection matrix per l; all m rows batched.
        f1 = jnp.dot(x2, r1_ref[l], preferred_element_type=jnp.float32)
        f2 = jnp.dot(x2, r2, preferred_element_type=jnp.float32)
        p = f1 * f2                                     # (m*B, n_out)
        s = p[:b]
        for mm in range(1, m):
            s = s + p[mm * b:(mm + 1) * b]
        acc = s if acc is None else acc + s
    o_ref[...] = acc                                    # single lane-dense store


def power_spectrum(spex, l_max):
    """spex: list of (I, 2l+1, A, Q) arrays for l = 0..l_max.
    Returns (I, A*A*Q*Q*(l_max+1)) float32, matching the PyTorch module."""
    L1 = l_max + 1
    I, _, A, Q = spex[0].shape
    AQ = A * Q
    n_out = A * A * Q * Q * L1
    m_sizes = [int(spex[l].shape[1]) for l in range(L1)]
    max_m = max(m_sizes)

    # Samples per grid step: big enough to amortize ~0.35us per-step overhead,
    # capped so the two (max_m*B, n_out) f32 matmul outputs stay within ~8 MiB
    # (safe for the 32 MiB scoped VMEM limit on v5e/v6e/v7x).
    B = 128
    if I < B:
        B = max(8, -(-I // 8) * 8)
    while B > 8 and 2 * max_m * B * n_out * 4 > 8 * 1024 * 1024:
        B = max(8, (B // 2 + 7) // 8 * 8)
    I_pad = -(-I // B) * B

    xs = []
    for l in range(L1):
        c = spex[l].astype(jnp.float32)
        M = m_sizes[l]
        # m-major layout so each grid block is a contiguous (M, B, AQ) slab and
        # the in-kernel merge to (M*B, AQ) needs no relayout.
        x = jnp.transpose(c.reshape(I, M, AQ), (1, 0, 2))   # (M, I, AQ)
        if I_pad != I:
            x = jnp.pad(x, ((0, 0), (0, I_pad - I), (0, 0)))  # zero rows -> zero output rows
        xs.append(x)

    r1, r2 = _selection_matrices(A, Q, l_max)

    in_specs = [pl.BlockSpec((m_sizes[l], B, AQ), lambda i: (0, i, 0))
                for l in range(L1)]
    in_specs.append(pl.BlockSpec((L1, AQ, n_out), lambda i: (0, 0, 0)))
    in_specs.append(pl.BlockSpec((AQ, n_out), lambda i: (0, 0)))

    out = pl.pallas_call(
        functools.partial(_ps_kernel, m_sizes=tuple(m_sizes)),
        out_shape=jax.ShapeDtypeStruct((I_pad, n_out), jnp.float32),
        grid_spec=pltpu.PrefetchScalarGridSpec(
            num_scalar_prefetch=0,
            grid=(I_pad // B,),
            in_specs=in_specs,
            out_specs=pl.BlockSpec((B, n_out), lambda i: (i, 0)),
        ),
        compiler_params=pltpu.CompilerParams(
            dimension_semantics=("parallel",),
            vmem_limit_bytes=32 * 1024 * 1024,
        ),
    )(*xs, r1, r2)

    return out[:I] if I_pad != I else out


def power_spectrum_ref(spex, l_max):
    """Pure-JAX reference for verification."""
    ps_values = []
    for l in range(l_max + 1):
        cg = ((-1.0) ** l) * (2.0 * l + 1.0) ** (-0.5)
        c = spex[l].astype(jnp.float32)
        ps_values.append(cg * jnp.einsum('imaq,imbe->iabqe', c, c))
    ps_cat = jnp.stack(ps_values, axis=-1)
    return ps_cat.reshape(ps_cat.shape[0], -1)


if __name__ == "__main__":
    l_max = 2
    I, A, Q = 2, 4, 8          # samples, species channels, radial features

    key = jax.random.PRNGKey(0)
    spex = []
    for l in range(l_max + 1):
        key, sub = jax.random.split(key)
        M = 2 * l + 1
        spex.append(jax.random.normal(sub, (I, M, A, Q), dtype=jnp.float32))

    out = power_spectrum(spex, l_max)
    out = jax.block_until_ready(out)

    ref = power_spectrum_ref(spex, l_max)
    assert out.shape == (I, A * A * Q * Q * (l_max + 1)), out.shape
    assert jnp.allclose(out, ref, atol=1e-5, rtol=1e-5), "mismatch vs reference"

    print("KERNEL_OK")
</pallas_src>

<mosaic_0001>
module attributes {stable_mosaic.version = 11 : i64} {
  func.func @_ps_kernel(%arg0: i32, %arg1: memref<1x8x32xf32, #tpu.memory_space<vmem>>, %arg2: memref<3x8x32xf32, #tpu.memory_space<vmem>>, %arg3: memref<5x8x32xf32, #tpu.memory_space<vmem>>, %arg4: memref<3x32x3072xf32, #tpu.memory_space<vmem>>, %arg5: memref<32x3072xf32, #tpu.memory_space<vmem>>, %arg6: memref<8x3072xf32, #tpu.memory_space<vmem>>) attributes {dimension_semantics = [#tpu.dimension_semantics<parallel>], iteration_bounds = array<i64: 1>, scalar_prefetch = 0 : i64, scratch_operands = 0 : i64, tpu.core_type = #tpu.core_type<tc>, window_params = [{transform_indices = @transform_0, window_bounds = array<i64: 1, 8, 32>}, {transform_indices = @transform_1, window_bounds = array<i64: 3, 8, 32>}, {transform_indices = @transform_2, window_bounds = array<i64: 5, 8, 32>}, {pipeline_mode = #tpu.pipeline_mode<synchronous>, transform_indices = @transform_3, window_bounds = array<i64: 3, 32, 3072>}, {pipeline_mode = #tpu.pipeline_mode<synchronous>, transform_indices = @transform_4, window_bounds = array<i64: 32, 3072>}, {transform_indices = @transform_5, window_bounds = array<i64: 8, 3072>}]} {
    %c0 = arith.constant 0 : index
    %c0_0 = arith.constant 0 : index
    %0 = vector.load %arg5[%c0, %c0_0] : memref<32x3072xf32, #tpu.memory_space<vmem>>, vector<32x3072xf32>
    %c0_1 = arith.constant 0 : index
    %c0_2 = arith.constant 0 : index
    %c0_3 = arith.constant 0 : index
    %1 = vector.load %arg1[%c0_1, %c0_2, %c0_3] : memref<1x8x32xf32, #tpu.memory_space<vmem>>, vector<1x8x32xf32>
    %2 = vector.shape_cast %1 : vector<1x8x32xf32> to vector<8x32xf32>
    %c0_4 = arith.constant 0 : index
    %c0_5 = arith.constant 0 : index
    %c0_6 = arith.constant 0 : index
    %3 = vector.load %arg4[%c0_4, %c0_5, %c0_6] : memref<3x32x3072xf32, #tpu.memory_space<vmem>>, vector<1x32x3072xf32>
    %4 = vector.shape_cast %3 : vector<1x32x3072xf32> to vector<32x3072xf32>
    %cst = arith.constant dense<0.000000e+00> : vector<8x3072xf32>
    %5 = tpu.matmul %2, %4, %cst {dimension_numbers = #tpu.dot_dimension_numbers<[1], [0], [0], [1], [0, 0, 1, 1], [], []>} : vector<8x32xf32>, vector<32x3072xf32>, vector<8x3072xf32> -> vector<8x3072xf32>
    %cst_7 = arith.constant dense<0.000000e+00> : vector<8x3072xf32>
    %6 = tpu.matmul %2, %0, %cst_7 {dimension_numbers = #tpu.dot_dimension_numbers<[1], [0], [0], [1], [0, 0, 1, 1], [], []>} : vector<8x32xf32>, vector<32x3072xf32>, vector<8x3072xf32> -> vector<8x3072xf32>
    %7 = arith.mulf %5, %6 : vector<8x3072xf32>
    %c0_8 = arith.constant 0 : index
    %c0_9 = arith.constant 0 : index
    %c0_10 = arith.constant 0 : index
    %8 = vector.load %arg2[%c0_8, %c0_9, %c0_10] : memref<3x8x32xf32, #tpu.memory_space<vmem>>, vector<3x8x32xf32>
    %9 = vector.shape_cast %8 : vector<3x8x32xf32> to vector<24x32xf32>
    %c1 = arith.constant 1 : index
    %c0_11 = arith.constant 0 : index
    %c0_12 = arith.constant 0 : index
    %10 = vector.load %arg4[%c1, %c0_11, %c0_12] : memref<3x32x3072xf32, #tpu.memory_space<vmem>>, vector<1x32x3072xf32>
    %11 = vector.shape_cast %10 : vector<1x32x3072xf32> to vector<32x3072xf32>
    %cst_13 = arith.constant dense<0.000000e+00> : vector<24x3072xf32>
    %12 = tpu.matmul %9, %11, %cst_13 {dimension_numbers = #tpu.dot_dimension_numbers<[1], [0], [0], [1], [0, 0, 1, 1], [], []>} : vector<24x32xf32>, vector<32x3072xf32>, vector<24x3072xf32> -> vector<24x3072xf32>
    %cst_14 = arith.constant dense<0.000000e+00> : vector<24x3072xf32>
    %13 = tpu.matmul %9, %0, %cst_14 {dimension_numbers = #tpu.dot_dimension_numbers<[1], [0], [0], [1], [0, 0, 1, 1], [], []>} : vector<24x32xf32>, vector<32x3072xf32>, vector<24x3072xf32> -> vector<24x3072xf32>
    %14 = arith.mulf %12, %13 : vector<24x3072xf32>
    %15 = vector.extract_strided_slice %14 {offsets = [0, 0], sizes = [8, 3072], strides = [1, 1]} : vector<24x3072xf32> to vector<8x3072xf32>
    %16 = vector.extract_strided_slice %14 {offsets = [8, 0], sizes = [8, 3072], strides = [1, 1]} : vector<24x3072xf32> to vector<8x3072xf32>
    %17 = arith.addf %15, %16 : vector<8x3072xf32>
    %18 = vector.extract_strided_slice %14 {offsets = [16, 0], sizes = [8, 3072], strides = [1, 1]} : vector<24x3072xf32> to vector<8x3072xf32>
    %19 = arith.addf %17, %18 : vector<8x3072xf32>
    %20 = arith.addf %7, %19 : vector<8x3072xf32>
    %c0_15 = arith.constant 0 : index
    %c0_16 = arith.constant 0 : index
    %c0_17 = arith.constant 0 : index
    %21 = vector.load %arg3[%c0_15, %c0_16, %c0_17] : memref<5x8x32xf32, #tpu.memory_space<vmem>>, vector<5x8x32xf32>
    %22 = vector.shape_cast %21 : vector<5x8x32xf32> to vector<40x32xf32>
    %c2 = arith.constant 2 : index
    %c0_18 = arith.constant 0 : index
    %c0_19 = arith.constant 0 : index
    %23 = vector.load %arg4[%c2, %c0_18, %c0_19] : memref<3x32x3072xf32, #tpu.memory_space<vmem>>, vector<1x32x3072xf32>
    %24 = vector.shape_cast %23 : vector<1x32x3072xf32> to vector<32x3072xf32>
    %cst_20 = arith.constant dense<0.000000e+00> : vector<40x3072xf32>
    %25 = tpu.matmul %22, %24, %cst_20 {dimension_numbers = #tpu.dot_dimension_numbers<[1], [0], [0], [1], [0, 0, 1, 1], [], []>} : vector<40x32xf32>, vector<32x3072xf32>, vector<40x3072xf32> -> vector<40x3072xf32>
    %cst_21 = arith.constant dense<0.000000e+00> : vector<40x3072xf32>
    %26 = tpu.matmul %22, %0, %cst_21 {dimension_numbers = #tpu.dot_dimension_numbers<[1], [0], [0], [1], [0, 0, 1, 1], [], []>} : vector<40x32xf32>, vector<32x3072xf32>, vector<40x3072xf32> -> vector<40x3072xf32>
    %27 = arith.mulf %25, %26 : vector<40x3072xf32>
    %28 = vector.extract_strided_slice %27 {offsets = [0, 0], sizes = [8, 3072], strides = [1, 1]} : vector<40x3072xf32> to vector<8x3072xf32>
    %29 = vector.extract_strided_slice %27 {offsets = [8, 0], sizes = [8, 3072], strides = [1, 1]} : vector<40x3072xf32> to vector<8x3072xf32>
    %30 = arith.addf %28, %29 : vector<8x3072xf32>
    %31 = vector.extract_strided_slice %27 {offsets = [16, 0], sizes = [8, 3072], strides = [1, 1]} : vector<40x3072xf32> to vector<8x3072xf32>
    %32 = arith.addf %30, %31 : vector<8x3072xf32>
    %33 = vector.extract_strided_slice %27 {offsets = [24, 0], sizes = [8, 3072], strides = [1, 1]} : vector<40x3072xf32> to vector<8x3072xf32>
    %34 = arith.addf %32, %33 : vector<8x3072xf32>
    %35 = vector.extract_strided_slice %27 {offsets = [32, 0], sizes = [8, 3072], strides = [1, 1]} : vector<40x3072xf32> to vector<8x3072xf32>
    %36 = arith.addf %34, %35 : vector<8x3072xf32>
    %37 = arith.addf %20, %36 : vector<8x3072xf32>
    %c0_22 = arith.constant 0 : index
    %c0_23 = arith.constant 0 : index
    %38 = vector.load %arg6[%c0_22, %c0_23] : memref<8x3072xf32, #tpu.memory_space<vmem>>, vector<8x3072xf32>
    tpu.vector_store %arg6[%c0_22, %c0_23], %37 {strides = array<i32>} : memref<8x3072xf32, #tpu.memory_space<vmem>>, vector<8x3072xf32>,
    return
  }
  func.func @transform_0(%arg0: i32) -> (i32, i32, i32) {
    %c0_i32 = arith.constant 0 : i32
    %c0_i32_0 = arith.constant 0 : i32
    %c0_i32_1 = arith.constant 0 : i32
    return %c0_i32, %arg0, %c0_i32_0 : i32, i32, i32
  }
  func.func @transform_1(%arg0: i32) -> (i32, i32, i32) {
    %c0_i32 = arith.constant 0 : i32
    %c0_i32_0 = arith.constant 0 : i32
    %c0_i32_1 = arith.constant 0 : i32
    return %c0_i32, %arg0, %c0_i32_0 : i32, i32, i32
  }
  func.func @transform_2(%arg0: i32) -> (i32, i32, i32) {
    %c0_i32 = arith.constant 0 : i32
    %c0_i32_0 = arith.constant 0 : i32
    %c0_i32_1 = arith.constant 0 : i32
    return %c0_i32, %arg0, %c0_i32_0 : i32, i32, i32
  }
  func.func @transform_3(%arg0: i32) -> (i32, i32, i32) {
    %c0_i32 = arith.constant 0 : i32
    %c0_i32_0 = arith.constant 0 : i32
    %c0_i32_1 = arith.constant 0 : i32
    %c0_i32_2 = arith.constant 0 : i32
    return %c0_i32, %c0_i32_0, %c0_i32_1 : i32, i32, i32
  }
  func.func @transform_4(%arg0: i32) -> (i32, i32) {
    %c0_i32 = arith.constant 0 : i32
    %c0_i32_0 = arith.constant 0 : i32
    %c0_i32_1 = arith.constant 0 : i32
    return %c0_i32, %c0_i32_0 : i32, i32
  }
  func.func @transform_5(%arg0: i32) -> (i32, i32) {
    %c0_i32 = arith.constant 0 : i32
    %c0_i32_0 = arith.constant 0 : i32
    return %arg0, %c0_i32 : i32, i32
  }
}

</mosaic_0001>

<llo_original>
// kernel: tpu_custom_call.1
$region0: #{tpu_custom_call.1}
  #allocation0 [shape = 'u32[]', space=smem, size = 0x4, offset = 0x4, fixed_abs, tag = 'smem constant byte address 0x4 - core index']
  #allocation1 [shape = 'u32[144,128]{1,0:T(1,128)}', space=vmem, size = 0x12000, scoped, tag = 'internal scratch']
  %s0 = inlined_call_operand.hbm [shape: f32[1,8,32], index: 0, kind: input, shape index: {}]
  %s1 = inlined_call_operand.hbm [shape: f32[3,8,32], index: 1, kind: input, shape index: {}]
  %s2 = inlined_call_operand.hbm [shape: f32[5,8,32], index: 2, kind: input, shape index: {}]
  %s3 = inlined_call_operand.hbm [shape: f32[3,32,3072], index: 3, kind: input, shape index: {}]
  %s4 = inlined_call_operand.hbm [shape: f32[32,3072], index: 4, kind: input, shape index: {}]
  %s5 = inlined_call_operand.hbm [shape: f32[8,3072], index: 5, kind: output, shape index: {}]
  %s6 = sld [smem:[#allocation0]]
  $region50: #{tpu_custom_call.1} parent=0
    _
  %s8 = ssub.s32 1, %s6
  %s9 = scalar_select 0, %s8, %s6
  $region1: #{tpu_custom_call.1} parent=0
    #allocation2 [shape = 'u8[4096]{0}', space=vmem, size = 0x1000, scoped, tag = 'input window, operand 0, single buffered']
    #allocation3 [shape = 's32[1]{0}', space=sflag, size = 0x4, scoped, tag = 'scoped memory for tpu_custom_call.1']
    #allocation4 [shape = 's32[1]{0}', space=sflag, size = 0x4, scoped, tag = 'scoped memory for tpu_custom_call.1']
    #allocation5 [shape = 'u8[12288]{0}', space=vmem, size = 0x3000, scoped, tag = 'input window, operand 1, single buffered']
    #allocation6 [shape = 's32[1]{0}', space=sflag, size = 0x4, scoped, tag = 'scoped memory for tpu_custom_call.1']
    #allocation7 [shape = 'u8[20480]{0}', space=vmem, size = 0x5000, scoped, tag = 'input window, operand 2, single buffered']
    #allocation8 [shape = 'u8[1179648]{0}', space=vmem, size = 0x120000, scoped, tag = 'input window, operand 3, single buffered']
    #allocation9 [shape = 's32[1]{0}', space=sflag, size = 0x4, scoped, tag = 'scoped memory for tpu_custom_call.1']
    #allocation10 [shape = 'u8[393216]{0}', space=vmem, size = 0x60000, scoped, tag = 'input window, operand 4, single buffered']
    #allocation11 [shape = 'u8[98304]{0}', space=vmem, size = 0x18000, scoped, tag = 'output window, operand 0, single buffered']
    %10 = vsyncpa [#allocation3], 0
    %11 = vsyncpa [#allocation6], 0
    %12 = vsyncpa [#allocation9], 0
    %13 = vsyncpa [#allocation4], 0
    // Predicated region
    $region2: #{tpu_custom_call.1} parent=1 // pred_check
      _
    $region3: #{tpu_custom_call.1} parent=1 // pred_check_branch
      %15 = sbr.rel (0) target = $region5
    $region4: #{tpu_custom_call.1} parent=1 // pred_region
      %s17 = ssub.s32 128, 128
      %18 = vsyncadd [#allocation3], %s17
      %s20 = sshll.u32 [#allocation2], 4
      %s21 = int_to_ptr.vmem [resolvable:$true] %s20
      %23 = dma.hbm_to_vmem [thread:$0]  %s0, 128, %s21, [#allocation3]
    $region5: #{tpu_custom_call.1} parent=1 // pred_fallthru
      _
    // Predicated region
    $region6: #{tpu_custom_call.1} parent=1 // pred_check
      _
    $region7: #{tpu_custom_call.1} parent=1 // pred_check_branch
      %25 = sbr.rel (0) target = $region9
    $region8: #{tpu_custom_call.1} parent=1 // pred_region
      %s27 = ssub.s32 384, 384
      %28 = vsyncadd [#allocation6], %s27
      %s29 = sshll.u32 [#allocation5], 4
      %s30 = int_to_ptr.vmem [resolvable:$true] %s29
      %35 = dma.hbm_to_vmem [thread:$0]  %s1, 384, %s30, [#allocation6], 128, 128, 8
    $region9: #{tpu_custom_call.1} parent=1 // pred_fallthru
      _
    // Predicated region
    $region10: #{tpu_custom_call.1} parent=1 // pred_check
      _
    $region11: #{tpu_custom_call.1} parent=1 // pred_check_branch
      %37 = sbr.rel (0) target = $region13
    $region12: #{tpu_custom_call.1} parent=1 // pred_region
      %s39 = ssub.s32 640, 640
      %40 = vsyncadd [#allocation6], %s39
      %s41 = sshll.u32 [#allocation7], 4
      %s42 = int_to_ptr.vmem [resolvable:$true] %s41
      %47 = dma.hbm_to_vmem [thread:$0]  %s2, 640, %s42, [#allocation6], 128, 128, 8
    $region13: #{tpu_custom_call.1} parent=1 // pred_fallthru
      _
    // Predicated region
    $region14: #{tpu_custom_call.1} parent=1 // pred_check
      _
    $region15: #{tpu_custom_call.1} parent=1 // pred_check_branch
      %49 = sbr.rel (0) target = $region17
    $region16: #{tpu_custom_call.1} parent=1 // pred_region
      %s51 = ssub.s32 36864, 36864
      %52 = vsyncadd [#allocation9], %s51
      %s53 = sshll.u32 [#allocation8], 4
      %s54 = int_to_ptr.vmem [resolvable:$true] %s53
      %59 = dma.hbm_to_vmem [thread:$0]  %s3, 36864, %s54, [#allocation9], 3072, 3072, 192
    $region17: #{tpu_custom_call.1} parent=1 // pred_fallthru
      _
    // Predicated region
    $region18: #{tpu_custom_call.1} parent=1 // pred_check
      _
    $region19: #{tpu_custom_call.1} parent=1 // pred_check_branch
      %61 = sbr.rel (0) target = $region21
    $region20: #{tpu_custom_call.1} parent=1 // pred_region
      %s63 = ssub.s32 12288, 12288
      %64 = vsyncadd [#allocation9], %s63
      %s65 = sshll.u32 [#allocation10], 4
      %s66 = int_to_ptr.vmem [resolvable:$true] %s65
      %71 = dma.hbm_to_vmem [thread:$0]  %s4, 12288, %s66, [#allocation9], 3072, 3072, 192
    $region21: #{tpu_custom_call.1} parent=1 // pred_fallthru
      _
    // Predicated region
    $region22: #{tpu_custom_call.1} parent=1 // pred_check
      _
    $region23: #{tpu_custom_call.1} parent=1 // pred_check_branch
      %73 = sbr.rel (0) target = $region25
    $region24: #{tpu_custom_call.1} parent=1 // pred_region
      %74 = dma.done [#allocation3], 128
    $region25: #{tpu_custom_call.1} parent=1 // pred_fallthru
      _
    // Predicated region
    $region26: #{tpu_custom_call.1} parent=1 // pred_check
      _
    $region27: #{tpu_custom_call.1} parent=1 // pred_check_branch
      %76 = sbr.rel (0) target = $region29
    $region28: #{tpu_custom_call.1} parent=1 // pred_region
      %77 = dma.done [#allocation6], 384
    $region29: #{tpu_custom_call.1} parent=1 // pred_fallthru
      _
    // Predicated region
    $region30: #{tpu_custom_call.1} parent=1 // pred_check
      _
    $region31: #{tpu_custom_call.1} parent=1 // pred_check_branch
      %79 = sbr.rel (0) target = $region33
    $region32: #{tpu_custom_call.1} parent=1 // pred_region
      %80 = dma.done [#allocation6], 640
    $region33: #{tpu_custom_call.1} parent=1 // pred_fallthru
      _
    // Predicated region
    $region34: #{tpu_custom_call.1} parent=1 // pred_check
      _
    $region35: #{tpu_custom_call.1} parent=1 // pred_check_branch
      %82 = sbr.rel (0) target = $region37
    $region36: #{tpu_custom_call.1} parent=1 // pred_region
      %83 = dma.done [#allocation9], 36864
    $region37: #{tpu_custom_call.1} parent=1 // pred_fallthru
      _
    // Predicated region
    $region38: #{tpu_custom_call.1} parent=1 // pred_check
      _
    $region39: #{tpu_custom_call.1} parent=1 // pred_check_branch
      %85 = sbr.rel (0) target = $region41
    $region40: #{tpu_custom_call.1} parent=1 // pred_region
      %86 = dma.done [#allocation9], 12288
    $region41: #{tpu_custom_call.1} parent=1 // pred_fallthru
      _
    %v87 = vld [vmem:[#allocation10] sm:$0xff]
    %v88 = vld [vmem:[#allocation10 + $0x8] sm:$0xff]
    %v89 = vld [vmem:[#allocation10 + $0x10] sm:$0xff]
    %v90 = vld [vmem:[#allocation10 + $0x18] sm:$0xff]
    %v91 = vld [vmem:[#allocation10 + $0x20] sm:$0xff]
    %v92 = vld [vmem:[#allocation10 + $0x28] sm:$0xff]
    %v93 = vld [vmem:[#allocation10 + $0x30] sm:$0xff]
    %v94 = vld [vmem:[#allocation10 + $0x38] sm:$0xff]
    %v95 = vld [vmem:[#allocation10 + $0x40] sm:$0xff]
    %v96 = vld [vmem:[#allocation10 + $0x48] sm:$0xff]
    %v97 = vld [vmem:[#allocation10 + $0x50] sm:$0xff]
    %v98 = vld [vmem:[#allocation10 + $0x58] sm:$0xff]
    %v99 = vld [vmem:[#allocation10 + $0x60] sm:$0xff]
    %v100 = vld [vmem:[#allocation10 + $0x68] sm:$0xff]
    %v101 = vld [vmem:[#allocation10 + $0x70] sm:$0xff]
    %v102 = vld [vmem:[#allocation10 + $0x78] sm:$0xff]
    %v103 = vld [vmem:[#allocation10 + $0x80] sm:$0xff]
    %v104 = vld [vmem:[#allocation10 + $0x88] sm:$0xff]
    %v105 = vld [vmem:[#allocation10 + $0x90] sm:$0xff]
    %v106 = vld [vmem:[#allocation10 + $0x98] sm:$0xff]
    %v107 = vld [vmem:[#allocation10 + $0xa0] sm:$0xff]
    %v108 = vld [vmem:[#allocation10 + $0xa8] sm:$0xff]
    %v109 = vld [vmem:[#allocation10 + $0xb0] sm:$0xff]
    %v110 = vld [vmem:[#allocation10 + $0xb8] sm:$0xff]
    %v111 = vld [vmem:[#allocation10 + $0xc0] sm:$0xff]
    %v112 = vld [vmem:[#allocation10 + $0xc8] sm:$0xff]
    %v113 = vld [vmem:[#allocation10 + $0xd0] sm:$0xff]
    %v114 = vld [vmem:[#allocation10 + $0xd8] sm:$0xff]
    %v115 = vld [vmem:[#allocation10 + $0xe0] sm:$0xff]
    %v116 = vld [vmem:[#allocation10 + $0xe8] sm:$0xff]
    %v117 = vld [vmem:[#allocation10 + $0xf0] sm:$0xff]
    %v118 = vld [vmem:[#allocation10 + $0xf8] sm:$0xff]
    %v119 = vld [vmem:[#allocation10 + $0x100] sm:$0xff]
    %v120 = vld [vmem:[#allocation10 + $0x108] sm:$0xff]
    %v121 = vld [vmem:[#allocation10 + $0x110] sm:$0xff]
    %v122 = vld [vmem:[#allocation10 + $0x118] sm:$0xff]
    %v123 = vld [vmem:[#allocation10 + $0x120] sm:$0xff]
    %v124 = vld [vmem:[#allocation10 + $0x128] sm:$0xff]
    %v125 = vld [vmem:[#allocation10 + $0x130] sm:$0xff]
    %v126 = vld [vmem:[#allocation10 + $0x138] sm:$0xff]
    %v127 = vld [vmem:[#allocation10 + $0x140] sm:$0xff]
    %v128 = vld [vmem:[#allocation10 + $0x148] sm:$0xff]
    %v129 = vld [vmem:[#allocation10 + $0x150] sm:$0xff]
    %v130 = vld [vmem:[#allocation10 + $0x158] sm:$0xff]
    %v131 = vld [vmem:[#allocation10 + $0x160] sm:$0xff]
    %v132 = vld [vmem:[#allocation10 + $0x168] sm:$0xff]
    %v133 = vld [vmem:[#allocation10 + $0x170] sm:$0xff]
    %v134 = vld [vmem:[#allocation10 + $0x178] sm:$0xff]
    %v135 = vld [vmem:[#allocation10 + $0x180] sm:$0xff]
    %v136 = vld [vmem:[#allocation10 + $0x188] sm:$0xff]
    %v137 = vld [vmem:[#allocation10 + $0x190] sm:$0xff]
    %v138 = vld [vmem:[#allocation10 + $0x198] sm:$0xff]
    %v139 = vld [vmem:[#allocation10 + $0x1a0] sm:$0xff]
    %v140 = vld [vmem:[#allocation10 + $0x1a8] sm:$0xff]
    %v141 = vld [vmem:[#allocation10 + $0x1b0] sm:$0xff]
    %v142 = vld [vmem:[#allocation10 + $0x1b8] sm:$0xff]
    %v143 = vld [vmem:[#allocation10 + $0x1c0] sm:$0xff]
    %v144 = vld [vmem:[#allocation10 + $0x1c8] sm:$0xff]
    %v145 = vld [vmem:[#allocation10 + $0x1d0] sm:$0xff]
    %v146 = vld [vmem:[#allocation10 + $0x1d8] sm:$0xff]
    %v147 = vld [vmem:[#allocation10 + $0x1e0] sm:$0xff]
    %v148 = vld [vmem:[#allocation10 + $0x1e8] sm:$0xff]
    %v149 = vld [vmem:[#allocation10 + $0x1f0] sm:$0xff]
    %v150 = vld [vmem:[#allocation10 + $0x1f8] sm:$0xff]
    %v151 = vld [vmem:[#allocation10 + $0x200] sm:$0xff]
    %v152 = vld [vmem:[#allocation10 + $0x208] sm:$0xff]
    %v153 = vld [vmem:[#allocation10 + $0x210] sm:$0xff]
    %v154 = vld [vmem:[#allocation10 + $0x218] sm:$0xff]
    %v155 = vld [vmem:[#allocation10 + $0x220] sm:$0xff]
    %v156 = vld [vmem:[#allocation10 + $0x228] sm:$0xff]
    %v157 = vld [vmem:[#allocation10 + $0x230] sm:$0xff]
    %v158 = vld [vmem:[#allocation10 + $0x238] sm:$0xff]
    %v159 = vld [vmem:[#allocation10 + $0x240] sm:$0xff]
    %v160 = vld [vmem:[#allocation10 + $0x248] sm:$0xff]
    %v161 = vld [vmem:[#allocation10 + $0x250] sm:$0xff]
    %v162 = vld [vmem:[#allocation10 + $0x258] sm:$0xff]
    %v163 = vld [vmem:[#allocation10 + $0x260] sm:$0xff]
    %v164 = vld [vmem:[#allocation10 + $0x268] sm:$0xff]
    %v165 = vld [vmem:[#allocation10 + $0x270] sm:$0xff]
    %v166 = vld [vmem:[#allocation10 + $0x278] sm:$0xff]
    %v167 = vld [vmem:[#allocation10 + $0x280] sm:$0xff]
    %v168 = vld [vmem:[#allocation10 + $0x288] sm:$0xff]
    %v169 = vld [vmem:[#allocation10 + $0x290] sm:$0xff]
    %v170 = vld [vmem:[#allocation10 + $0x298] sm:$0xff]
    %v171 = vld [vmem:[#allocation10 + $0x2a0] sm:$0xff]
    %v172 = vld [vmem:[#allocation10 + $0x2a8] sm:$0xff]
    %v173 = vld [vmem:[#allocation10 + $0x2b0] sm:$0xff]
    %v174 = vld [vmem:[#allocation10 + $0x2b8] sm:$0xff]
    %v175 = vld [vmem:[#allocation10 + $0x2c0] sm:$0xff]
    %v176 = vld [vmem:[#allocation10 + $0x2c8] sm:$0xff]
    %v177 = vld [vmem:[#allocation10 + $0x2d0] sm:$0xff]
    %v178 = vld [vmem:[#allocation10 + $0x2d8] sm:$0xff]
    %v179 = vld [vmem:[#allocation10 + $0x2e0] sm:$0xff]
    %v180 = vld [vmem:[#allocation10 + $0x2e8] sm:$0xff]
    %v181 = vld [vmem:[#allocation10 + $0x2f0] sm:$0xff]
    %v182 = vld [vmem:[#allocation10 + $0x2f8] sm:$0xff]
    %v183 = vld [vmem:[#allocation2] sm:$0xff]
    %v184 = vld [vmem:[#allocation8] sm:$0xff]
    %v185 = vld [vmem:[#allocation8 + $0x8] sm:$0xff]
    %v186 = vld [vmem:[#allocation8 + $0x10] sm:$0xff]
    %v187 = vld [vmem:[#allocation8 + $0x18] sm:$0xff]
    %v188 = vld [vmem:[#allocation8 + $0x20] sm:$0xff]
    %v189 = vld [vmem:[#allocation8 + $0x28] sm:$0xff]
    %v190 = vld [vmem:[#allocation8 + $0x30] sm:$0xff]
    %v191 = vld [vmem:[#allocation8 + $0x38] sm:$0xff]
    %v192 = vld [vmem:[#allocation8 + $0x40] sm:$0xff]
    %v193 = vld [vmem:[#allocation8 + $0x48] sm:$0xff]
    %v194 = vld [vmem:[#allocation8 + $0x50] sm:$0xff]
    %v195 = vld [vmem:[#allocation8 + $0x58] sm:$0xff]
    %v196 = vld [vmem:[#allocation8 + $0x60] sm:$0xff]
    %v197 = vld [vmem:[#allocation8 + $0x68] sm:$0xff]
    %v198 = vld [vmem:[#allocation8 + $0x70] sm:$0xff]
    %v199 = vld [vmem:[#allocation8 + $0x78] sm:$0xff]
    %v200 = vld [vmem:[#allocation8 + $0x80] sm:$0xff]
    %v201 = vld [vmem:[#allocation8 + $0x88] sm:$0xff]
    %v202 = vld [vmem:[#allocation8 + $0x90] sm:$0xff]
    %v203 = vld [vmem:[#allocation8 + $0x98] sm:$0xff]
    %v204 = vld [vmem:[#allocation8 + $0xa0] sm:$0xff]
    %v205 = vld [vmem:[#allocation8 + $0xa8] sm:$0xff]
    %v206 = vld [vmem:[#allocation8 + $0xb0] sm:$0xff]
    %v207 = vld [vmem:[#allocation8 + $0xb8] sm:$0xff]
    %v208 = vld [vmem:[#allocation8 + $0xc0] sm:$0xff]
    %v209 = vld [vmem:[#allocation8 + $0xc8] sm:$0xff]
    %v210 = vld [vmem:[#allocation8 + $0xd0] sm:$0xff]
    %v211 = vld [vmem:[#allocation8 + $0xd8] sm:$0xff]
    %v212 = vld [vmem:[#allocation8 + $0xe0] sm:$0xff]
    %v213 = vld [vmem:[#allocation8 + $0xe8] sm:$0xff]
    %v214 = vld [vmem:[#allocation8 + $0xf0] sm:$0xff]
    %v215 = vld [vmem:[#allocation8 + $0xf8] sm:$0xff]
    %v216 = vld [vmem:[#allocation8 + $0x100] sm:$0xff]
    %v217 = vld [vmem:[#allocation8 + $0x108] sm:$0xff]
    %v218 = vld [vmem:[#allocation8 + $0x110] sm:$0xff]
    %v219 = vld [vmem:[#allocation8 + $0x118] sm:$0xff]
    %v220 = vld [vmem:[#allocation8 + $0x120] sm:$0xff]
    %v221 = vld [vmem:[#allocation8 + $0x128] sm:$0xff]
    %v222 = vld [vmem:[#allocation8 + $0x130] sm:$0xff]
    %v223 = vld [vmem:[#allocation8 + $0x138] sm:$0xff]
    %v224 = vld [vmem:[#allocation8 + $0x140] sm:$0xff]
    %v225 = vld [vmem:[#allocation8 + $0x148] sm:$0xff]
    %v226 = vld [vmem:[#allocation8 + $0x150] sm:$0xff]
    %v227 = vld [vmem:[#allocation8 + $0x158] sm:$0xff]
    %v228 = vld [vmem:[#allocation8 + $0x160] sm:$0xff]
    %v229 = vld [vmem:[#allocation8 + $0x168] sm:$0xff]
    %v230 = vld [vmem:[#allocation8 + $0x170] sm:$0xff]
    %v231 = vld [vmem:[#allocation8 + $0x178] sm:$0xff]
    %v232 = vld [vmem:[#allocation8 + $0x180] sm:$0xff]
    %v233 = vld [vmem:[#allocation8 + $0x188] sm:$0xff]
    %v234 = vld [vmem:[#allocation8 + $0x190] sm:$0xff]
    %v235 = vld [vmem:[#allocation8 + $0x198] sm:$0xff]
    %v236 = vld [vmem:[#allocation8 + $0x1a0] sm:$0xff]
    %v237 = vld [vmem:[#allocation8 + $0x1a8] sm:$0xff]
    %v238 = vld [vmem:[#allocation8 + $0x1b0] sm:$0xff]
    %v239 = vld [vmem:[#allocation8 + $0x1b8] sm:$0xff]
    %v240 = vld [vmem:[#allocation8 + $0x1c0] sm:$0xff]
    %v241 = vld [vmem:[#allocation8 + $0x1c8] sm:$0xff]
    %v242 = vld [vmem:[#allocation8 + $0x1d0] sm:$0xff]
    %v243 = vld [vmem:[#allocation8 + $0x1d8] sm:$0xff]
    %v244 = vld [vmem:[#allocation8 + $0x1e0] sm:$0xff]
    %v245 = vld [vmem:[#allocation8 + $0x1e8] sm:$0xff]
    %v246 = vld [vmem:[#allocation8 + $0x1f0] sm:$0xff]
    %v247 = vld [vmem:[#allocation8 + $0x1f8] sm:$0xff]
    %v248 = vld [vmem:[#allocation8 + $0x200] sm:$0xff]
    %v249 = vld [vmem:[#allocation8 + $0x208] sm:$0xff]
    %v250 = vld [vmem:[#allocation8 + $0x210] sm:$0xff]
    %v251 = vld [vmem:[#allocation8 + $0x218] sm:$0xff]
    %v252 = vld [vmem:[#allocation8 + $0x220] sm:$0xff]
    %v253 = vld [vmem:[#allocation8 + $0x228] sm:$0xff]
    %v254 = vld [vmem:[#allocation8 + $0x230] sm:$0xff]
    %v255 = vld [vmem:[#allocation8 + $0x238] sm:$0xff]
    %v256 = vld [vmem:[#allocation8 + $0x240] sm:$0xff]
    %v257 = vld [vmem:[#allocation8 + $0x248] sm:$0xff]
    %v258 = vld [vmem:[#allocation8 + $0x250] sm:$0xff]
    %v259 = vld [vmem:[#allocation8 + $0x258] sm:$0xff]
    %v260 = vld [vmem:[#allocation8 + $0x260] sm:$0xff]
    %v261 = vld [vmem:[#allocation8 + $0x268] sm:$0xff]
    %v262 = vld [vmem:[#allocation8 + $0x270] sm:$0xff]
    %v263 = vld [vmem:[#allocation8 + $0x278] sm:$0xff]
    %v264 = vld [vmem:[#allocation8 + $0x280] sm:$0xff]
    %v265 = vld [vmem:[#allocation8 + $0x288] sm:$0xff]
    %v266 = vld [vmem:[#allocation8 + $0x290] sm:$0xff]
    %v267 = vld [vmem:[#allocation8 + $0x298] sm:$0xff]
    %v268 = vld [vmem:[#allocation8 + $0x2a0] sm:$0xff]
    %v269 = vld [vmem:[#allocation8 + $0x2a8] sm:$0xff]
    %v270 = vld [vmem:[#allocation8 + $0x2b0] sm:$0xff]
    %v271 = vld [vmem:[#allocation8 + $0x2b8] sm:$0xff]
    %v272 = vld [vmem:[#allocation8 + $0x2c0] sm:$0xff]
    %v273 = vld [vmem:[#allocation8 + $0x2c8] sm:$0xff]
    %v274 = vld [vmem:[#allocation8 + $0x2d0] sm:$0xff]
    %v275 = vld [vmem:[#allocation8 + $0x2d8] sm:$0xff]
    %v276 = vld [vmem:[#allocation8 + $0x2e0] sm:$0xff]
    %v277 = vld [vmem:[#allocation8 + $0x2e8] sm:$0xff]
    %v278 = vld [vmem:[#allocation8 + $0x2f0] sm:$0xff]
    %v279 = vld [vmem:[#allocation8 + $0x2f8] sm:$0xff]
    %vm280 = vcmask 261120
    %v282 = vsel %vm280, %v183, 0
    %284 = vmatprep.subr.mxu0 0.0
    %285 = vmatpush1.msra.mxu0 0.0
    %286 = vmatprep.subr.mxu0 0.0
    %287 = vmatpush1.msra.mxu0 0.0
    %288 = vmatprep.subr.mxu0 0.0
    %289 = vmatpush1.msra.mxu0 0.0
    %290 = vmatprep.subr.mxu0 0.0
    %291 = vmatpush1.msra.mxu0 0.0
    %292 = vmatprep.subr.mxu0 0.0
    %293 = vmatpush1.msra.mxu0 0.0
    %294 = vmatprep.subr.mxu0 0.0
    %295 = vmatpush1.msra.mxu0 0.0
    %296 = vmatprep.subr.mxu0 0.0
    %297 = vmatpush1.msra.mxu0 0.0
    %298 = vmatprep.subr.mxu0 0.0
    %299 = vmatpush1.msra.mxu0 0.0
    %300 = vmatprep.subr.mxu0 0.0
    %301 = vmatpush1.msra.mxu0 0.0
    %302 = vmatprep.subr.mxu0 0.0
    %303 = vmatpush1.msra.mxu0 0.0
    %304 = vmatprep.subr.mxu0 0.0
    %305 = vmatpush1.msra.mxu0 0.0
    %306 = vmatprep.subr.mxu0 0.0
    %307 = vmatpush1.msra.mxu0 0.0
    %308 = vmatprep.subr.mxu0 %v257
    %309 = vmatpush1.msra.mxu0 %v256
    %310 = vmatprep.subr.mxu0 %v233
    %311 = vmatpush1.msra.mxu0 %v232
    %312 = vmatprep.subr.mxu0 %v209
    %313 = vmatpush1.msra.mxu0 %v208
    %314 = vmatprep.subr.mxu0 %v185
    %315 = vmatpush1.msra.mxu0 %v184
    %316 = vmatprep.subr.mxu0 0.0
    %317 = vmatpush2.msra.mxu0 0.0
    %318 = vmatprep.subr.mxu0 0.0
    %319 = vmatpush2.msra.mxu0 0.0
    %320 = vmatprep.subr.mxu0 0.0
    %321 = vmatpush2.msra.mxu0 0.0
    %322 = vmatprep.subr.mxu0 0.0
    %323 = vmatpush2.msra.mxu0 0.0
    %324 = vmatprep.subr.mxu0 0.0
    %325 = vmatpush2.msra.mxu0 0.0
    %326 = vmatprep.subr.mxu0 0.0
    %327 = vmatpush2.msra.mxu0 0.0
    %328 = vmatprep.subr.mxu0 0.0
    %329 = vmatpush2.msra.mxu0 0.0
    %330 = vmatprep.subr.mxu0 0.0
    %331 = vmatpush2.msra.mxu0 0.0
    %332 = vmatprep.subr.mxu0 0.0
    %333 = vmatpush2.msra.mxu0 0.0
    %334 = vmatprep.subr.mxu0 0.0
    %335 = vmatpush2.msra.mxu0 0.0
    %336 = vmatprep.subr.mxu0 0.0
    %337 = vmatpush2.msra.mxu0 0.0
    %338 = vmatprep.subr.mxu0 0.0
    %339 = vmatpush2.msra.mxu0 0.0
    %340 = vmatprep.subr.mxu0 0.0
    %341 = vmatpush2.msra.mxu0 0.0
    %342 = vmatprep.subr.mxu0 0.0
    %343 = vmatpush2.msra.mxu0 0.0
    %344 = vmatprep.subr.mxu0 0.0
    %345 = vmatpush2.msra.mxu0 0.0
    %346 = vmatprep.subr.mxu0 0.0
    %347 = vmatpush2.msra.mxu0 0.0
    %348 = vmatprep.mubr.f32.mxu0 0.0
    %349 = vmatmul.mubr.f32.gmra.mxu0 %v282
    %v350 = vpop.f32.mrf.mxu0
    %v351 = vadd.f32 0.0, %v350
    %v352 = vpop.f32.mrf.mxu0
    %v353 = vadd.f32 0.0, %v352
    %354 = vdwg.mxu0
    %355 = vmatprep.subr.mxu0 0.0
    %356 = vmatpush1.msra.mxu0 0.0
    %357 = vmatprep.subr.mxu0 0.0
    %358 = vmatpush1.msra.mxu0 0.0
    %359 = vmatprep.subr.mxu0 0.0
    %360 = vmatpush1.msra.mxu0 0.0
    %361 = vmatprep.subr.mxu0 0.0
    %362 = vmatpush1.msra.mxu0 0.0
    %363 = vmatprep.subr.mxu0 0.0
    %364 = vmatpush1.msra.mxu0 0.0
    %365 = vmatprep.subr.mxu0 0.0
    %366 = vmatpush1.msra.mxu0 0.0
    %367 = vmatprep.subr.mxu0 0.0
    %368 = vmatpush1.msra.mxu0 0.0
    %369 = vmatprep.subr.mxu0 0.0
    %370 = vmatpush1.msra.mxu0 0.0
    %371 = vmatprep.subr.mxu0 0.0
    %372 = vmatpush1.msra.mxu0 0.0
    %373 = vmatprep.subr.mxu0 0.0
    %374 = vmatpush1.msra.mxu0 0.0
    %375 = vmatprep.subr.mxu0 0.0
    %376 = vmatpush1.msra.mxu0 0.0
    %377 = vmatprep.subr.mxu0 0.0
    %378 = vmatpush1.msra.mxu0 0.0
    %379 = vmatprep.subr.mxu0 %v259
    %380 = vmatpush1.msra.mxu0 %v258
    %381 = vmatprep.subr.mxu0 %v235
    %382 = vmatpush1.msra.mxu0 %v234
    %383 = vmatprep.subr.mxu0 %v211
    %384 = vmatpush1.msra.mxu0 %v210
    %385 = vmatprep.subr.mxu0 %v187
    %386 = vmatpush1.msra.mxu0 %v186
    %387 = vmatprep.subr.mxu0 0.0
    %388 = vmatpush2.msra.mxu0 0.0
    %389 = vmatprep.subr.mxu0 0.0
    %390 = vmatpush2.msra.mxu0 0.0
    %391 = vmatprep.subr.mxu0 0.0
    %392 = vmatpush2.msra.mxu0 0.0
    %393 = vmatprep.subr.mxu0 0.0
    %394 = vmatpush2.msra.mxu0 0.0
    %395 = vmatprep.subr.mxu0 0.0
    %396 = vmatpush2.msra.mxu0 0.0
    %397 = vmatprep.subr.mxu0 0.0
    %398 = vmatpush2.msra.mxu0 0.0
    %399 = vmatprep.subr.mxu0 0.0
    %400 = vmatpush2.msra.mxu0 0.0
    %401 = vmatprep.subr.mxu0 0.0
    %402 = vmatpush2.msra.mxu0 0.0
    %403 = vmatprep.subr.mxu0 0.0
    %404 = vmatpush2.msra.mxu0 0.0
    %405 = vmatprep.subr.mxu0 0.0
    %406 = vmatpush2.msra.mxu0 0.0
    %407 = vmatprep.subr.mxu0 0.0
    %408 = vmatpush2.msra.mxu0 0.0
    %409 = vmatprep.subr.mxu0 0.0
    %410 = vmatpush2.msra.mxu0 0.0
    %411 = vmatprep.subr.mxu0 0.0
    %412 = vmatpush2.msra.mxu0 0.0
    %413 = vmatprep.subr.mxu0 0.0
    %414 = vmatpush2.msra.mxu0 0.0
    %415 = vmatprep.subr.mxu0 0.0
    %416 = vmatpush2.msra.mxu0 0.0
    %417 = vmatprep.subr.mxu0 0.0
    %418 = vmatpush2.msra.mxu0 0.0
    %419 = vmatprep.mubr.f32.mxu0 0.0
    %420 = vmatmul.mubr.f32.gmra.mxu0 %v282
    %v421 = vpop.f32.mrf.mxu0
    %v422 = vadd.f32 0.0, %v421
    %v423 = vpop.f32.mrf.mxu0
    %v424 = vadd.f32 0.0, %v423
    %425 = vdwg.mxu0
    %426 = vmatprep.subr.mxu0 0.0
    %427 = vmatpush1.msra.mxu0 0.0
    %428 = vmatprep.subr.mxu0 0.0
    %429 = vmatpush1.msra.mxu0 0.0
    %430 = vmatprep.subr.mxu0 0.0
    %431 = vmatpush1.msra.mxu0 0.0
    %432 = vmatprep.subr.mxu0 0.0
    %433 = vmatpush1.msra.mxu0 0.0
    %434 = vmatprep.subr.mxu0 0.0
    %435 = vmatpush1.msra.mxu0 0.0
    %436 = vmatprep.subr.mxu0 0.0
    %437 = vmatpush1.msra.mxu0 0.0
    %438 = vmatprep.subr.mxu0 0.0
    %439 = vmatpush1.msra.mxu0 0.0
    %440 = vmatprep.subr.mxu0 0.0
    %441 = vmatpush1.msra.mxu0 0.0
    %442 = vmatprep.subr.mxu0 0.0
    %443 = vmatpush1.msra.mxu0 0.0
    %444 = vmatprep.subr.mxu0 0.0
    %445 = vmatpush1.msra.mxu0 0.0
    %446 = vmatprep.subr.mxu0 0.0
    %447 = vmatpush1.msra.mxu0 0.0
    %448 = vmatprep.subr.mxu0 0.0
    %449 = vmatpush1.msra.mxu0 0.0
    %450 = vmatprep.subr.mxu0 %v261
    %451 = vmatpush1.msra.mxu0 %v260
    %452 = vmatprep.subr.mxu0 %v237
    %453 = vmatpush1.msra.mxu0 %v236
    %454 = vmatprep.subr.mxu0 %v213
    %455 = vmatpush1.msra.mxu0 %v212
    %456 = vmatprep.subr.mxu0 %v189
    %457 = vmatpush1.msra.mxu0 %v188
    %458 = vmatprep.subr.mxu0 0.0
    %459 = vmatpush2.msra.mxu0 0.0
    %460 = vmatprep.subr.mxu0 0.0
    %461 = vmatpush2.msra.mxu0 0.0
    %462 = vmatprep.subr.mxu0 0.0
    %463 = vmatpush2.msra.mxu0 0.0
    %464 = vmatprep.subr.mxu0 0.0
    %465 = vmatpush2.msra.mxu0 0.0
    %466 = vmatprep.subr.mxu0 0.0
    %467 = vmatpush2.msra.mxu0 0.0
    %468 = vmatprep.subr.mxu0 0.0
    %469 = vmatpush2.msra.mxu0 0.0
    %470 = vmatprep.subr.mxu0 0.0
    %471 = vmatpush2.msra.mxu0 0.0
    %472 = vmatprep.subr.mxu0 0.0
    %473 = vmatpush2.msra.mxu0 0.0
    %474 = vmatprep.subr.mxu0 0.0
    %475 = vmatpush2.msra.mxu0 0.0
    %476 = vmatprep.subr.mxu0 0.0
    %477 = vmatpush2.msra.mxu0 0.0
    %478 = vmatprep.subr.mxu0 0.0
    %479 = vmatpush2.msra.mxu0 0.0
    %480 = vmatprep.subr.mxu0 0.0
    %481 = vmatpush2.msra.mxu0 0.0
    %482 = vmatprep.subr.mxu0 0.0
    %483 = vmatpush2.msra.mxu0 0.0
    %484 = vmatprep.subr.mxu0 0.0
    %485 = vmatpush2.msra.mxu0 0.0
    %486 = vmatprep.subr.mxu0 0.0
    %487 = vmatpush2.msra.mxu0 0.0
    %488 = vmatprep.subr.mxu0 0.0
    %489 = vmatpush2.msra.mxu0 0.0
    %490 = vmatprep.mubr.f32.mxu0 0.0
    %491 = vmatmul.mubr.f32.gmra.mxu0 %v282
    %v492 = vpop.f32.mrf.mxu0
    %v493 = vadd.f32 0.0, %v492
    %v494 = vpop.f32.mrf.mxu0
    %v495 = vadd.f32 0.0, %v494
    %496 = vdwg.mxu0
    %497 = vmatprep.subr.mxu0 0.0
    %498 = vmatpush1.msra.mxu0 0.0
    %499 = vmatprep.subr.mxu0 0.0
    %500 = vmatpush1.msra.mxu0 0.0
    %501 = vmatprep.subr.mxu0 0.0
    %502 = vmatpush1.msra.mxu0 0.0
    %503 = vmatprep.subr.mxu0 0.0
    %504 = vmatpush1.msra.mxu0 0.0
    %505 = vmatprep.subr.mxu0 0.0
    %506 = vmatpush1.msra.mxu0 0.0
    %507 = vmatprep.subr.mxu0 0.0
    %508 = vmatpush1.msra.mxu0 0.0
    %509 = vmatprep.subr.mxu0 0.0
    %510 = vmatpush1.msra.mxu0 0.0
    %511 = vmatprep.subr.mxu0 0.0
    %512 = vmatpush1.msra.mxu0 0.0
    %513 = vmatprep.subr.mxu0 0.0
    %514 = vmatpush1.msra.mxu0 0.0
    %515 = vmatprep.subr.mxu0 0.0
    %516 = vmatpush1.msra.mxu0 0.0
    %517 = vmatprep.subr.mxu0 0.0
    %518 = vmatpush1.msra.mxu0 0.0
    %519 = vmatprep.subr.mxu0 0.0
    %520 = vmatpush1.msra.mxu0 0.0
    %521 = vmatprep.subr.mxu0 %v263
    %522 = vmatpush1.msra.mxu0 %v262
    %523 = vmatprep.subr.mxu0 %v239
    %524 = vmatpush1.msra.mxu0 %v238
    %525 = vmatprep.subr.mxu0 %v215
    %526 = vmatpush1.msra.mxu0 %v214
    %527 = vmatprep.subr.mxu0 %v191
    %528 = vmatpush1.msra.mxu0 %v190
    %529 = vmatprep.subr.mxu0 0.0
    %530 = vmatpush2.msra.mxu0 0.0
    %531 = vmatprep.subr.mxu0 0.0
    %532 = vmatpush2.msra.mxu0 0.0
    %533 = vmatprep.subr.mxu0 0.0
    %534 = vmatpush2.msra.mxu0 0.0
    %535 = vmatprep.subr.mxu0 0.0
    %536 = vmatpush2.msra.mxu0 0.0
    %537 = vmatprep.subr.mxu0 0.0
    %538 = vmatpush2.msra.mxu0 0.0
    %539 = vmatprep.subr.mxu0 0.0
    %540 = vmatpush2.msra.mxu0 0.0
    %541 = vmatprep.subr.mxu0 0.0
    %542 = vmatpush2.msra.mxu0 0.0
    %543 = vmatprep.subr.mxu0 0.0
    %544 = vmatpush2.msra.mxu0 0.0
    %545 = vmatprep.subr.mxu0 0.0
    %546 = vmatpush2.msra.mxu0 0.0
    %547 = vmatprep.subr.mxu0 0.0
    %548 = vmatpush2.msra.mxu0 0.0
    %549 = vmatprep.subr.mxu0 0.0
    %550 = vmatpush2.msra.mxu0 0.0
    %551 = vmatprep.subr.mxu0 0.0
    %552 = vmatpush2.msra.mxu0 0.0
    %553 = vmatprep.subr.mxu0 0.0
    %554 = vmatpush2.msra.mxu0 0.0
    %555 = vmatprep.subr.mxu0 0.0
    %556 = vmatpush2.msra.mxu0 0.0
    %557 = vmatprep.subr.mxu0 0.0
    %558 = vmatpush2.msra.mxu0 0.0
    %559 = vmatprep.subr.mxu0 0.0
    %560 = vmatpush2.msra.mxu0 0.0
    %561 = vmatprep.mubr.f32.mxu0 0.0
    %562 = vmatmul.mubr.f32.gmra.mxu0 %v282
    %v563 = vpop.f32.mrf.mxu0
    %v564 = vadd.f32 0.0, %v563
    %v565 = vpop.f32.mrf.mxu0
    %v566 = vadd.f32 0.0, %v565
    %567 = vdwg.mxu0
    %568 = vmatprep.subr.mxu0 0.0
    %569 = vmatpush1.msra.mxu0 0.0
    %570 = vmatprep.subr.mxu0 0.0
    %571 = vmatpush1.msra.mxu0 0.0
    %572 = vmatprep.subr.mxu0 0.0
    %573 = vmatpush1.msra.mxu0 0.0
    %574 = vmatprep.subr.mxu0 0.0
    %575 = vmatpush1.msra.mxu0 0.0
    %576 = vmatprep.subr.mxu0 0.0
    %577 = vmatpush1.msra.mxu0 0.0
    %578 = vmatprep.subr.mxu0 0.0
    %579 = vmatpush1.msra.mxu0 0.0
    %580 = vmatprep.subr.mxu0 0.0
    %581 = vmatpush1.msra.mxu0 0.0
    %582 = vmatprep.subr.mxu0 0.0
    %583 = vmatpush1.msra.mxu0 0.0
    %584 = vmatprep.subr.mxu0 0.0
    %585 = vmatpush1.msra.mxu0 0.0
    %586 = vmatprep.subr.mxu0 0.0
    %587 = vmatpush1.msra.mxu0 0.0
    %588 = vmatprep.subr.mxu0 0.0
    %589 = vmatpush1.msra.mxu0 0.0
    %590 = vmatprep.subr.mxu0 0.0
    %591 = vmatpush1.msra.mxu0 0.0
    %592 = vmatprep.subr.mxu0 %v265
    %593 = vmatpush1.msra.mxu0 %v264
    %594 = vmatprep.subr.mxu0 %v241
    %595 = vmatpush1.msra.mxu0 %v240
    %596 = vmatprep.subr.mxu0 %v217
    %597 = vmatpush1.msra.mxu0 %v216
    %598 = vmatprep.subr.mxu0 %v193
    %599 = vmatpush1.msra.mxu0 %v192
    %600 = vmatprep.subr.mxu0 0.0
    %601 = vmatpush2.msra.mxu0 0.0
    %602 = vmatprep.subr.mxu0 0.0
    %603 = vmatpush2.msra.mxu0 0.0
    %604 = vmatprep.subr.mxu0 0.0
    %605 = vmatpush2.msra.mxu0 0.0
    %606 = vmatprep.subr.mxu0 0.0
    %607 = vmatpush2.msra.mxu0 0.0
    %608 = vmatprep.subr.mxu0 0.0
    %609 = vmatpush2.msra.mxu0 0.0
    %610 = vmatprep.subr.mxu0 0.0
    %611 = vmatpush2.msra.mxu0 0.0
    %612 = vmatprep.subr.mxu0 0.0
    %613 = vmatpush2.msra.mxu0 0.0
    %614 = vmatprep.subr.mxu0 0.0
    %615 = vmatpush2.msra.mxu0 0.0
    %616 = vmatprep.subr.mxu0 0.0
    %617 = vmatpush2.msra.mxu0 0.0
    %618 = vmatprep.subr.mxu0 0.0
    %619 = vmatpush2.msra.mxu0 0.0
    %620 = vmatprep.subr.mxu0 0.0
    %621 = vmatpush2.msra.mxu0 0.0
    %622 = vmatprep.subr.mxu0 0.0
    %623 = vmatpush2.msra.mxu0 0.0
    %624 = vmatprep.subr.mxu0 0.0
    %625 = vmatpush2.msra.mxu0 0.0
    %626 = vmatprep.subr.mxu0 0.0
    %627 = vmatpush2.msra.mxu0 0.0
    %628 = vmatprep.subr.mxu0 0.0
    %629 = vmatpush2.msra.mxu0 0.0
    %630 = vmatprep.subr.mxu0 0.0
    %631 = vmatpush2.msra.mxu0 0.0
    %632 = vmatprep.mubr.f32.mxu0 0.0
    %633 = vmatmul.mubr.f32.gmra.mxu0 %v282
    %v634 = vpop.f32.mrf.mxu0
    %v635 = vadd.f32 0.0, %v634
    %v636 = vpop.f32.mrf.mxu0
    %v637 = vadd.f32 0.0, %v636
    %638 = vdwg.mxu0
    %639 = vmatprep.subr.mxu0 0.0
    %640 = vmatpush1.msra.mxu0 0.0
    %641 = vmatprep.subr.mxu0 0.0
    %642 = vmatpush1.msra.mxu0 0.0
    %643 = vmatprep.subr.mxu0 0.0
    %644 = vmatpush1.msra.mxu0 0.0
    %645 = vmatprep.subr.mxu0 0.0
    %646 = vmatpush1.msra.mxu0 0.0
    %647 = vmatprep.subr.mxu0 0.0
    %648 = vmatpush1.msra.mxu0 0.0
    %649 = vmatprep.subr.mxu0 0.0
    %650 = vmatpush1.msra.mxu0 0.0
    %651 = vmatprep.subr.mxu0 0.0
    %652 = vmatpush1.msra.mxu0 0.0
    %653 = vmatprep.subr.mxu0 0.0
    %654 = vmatpush1.msra.mxu0 0.0
    %655 = vmatprep.subr.mxu0 0.0
    %656 = vmatpush1.msra.mxu0 0.0
    %657 = vmatprep.subr.mxu0 0.0
    %658 = vmatpush1.msra.mxu0 0.0
    %659 = vmatprep.subr.mxu0 0.0
    %660 = vmatpush1.msra.mxu0 0.0
    %661 = vmatprep.subr.mxu0 0.0
    %662 = vmatpush1.msra.mxu0 0.0
    %663 = vmatprep.subr.mxu0 %v267
    %664 = vmatpush1.msra.mxu0 %v266
    %665 = vmatprep.subr.mxu0 %v243
    %666 = vmatpush1.msra.mxu0 %v242
    %667 = vmatprep.subr.mxu0 %v219
    %668 = vmatpush1.msra.mxu0 %v218
    %669 = vmatprep.subr.mxu0 %v195
    %670 = vmatpush1.msra.mxu0 %v194
    %671 = vmatprep.subr.mxu0 0.0
    %672 = vmatpush2.msra.mxu0 0.0
    %673 = vmatprep.subr.mxu0 0.0
    %674 = vmatpush2.msra.mxu0 0.0
    %675 = vmatprep.subr.mxu0 0.0
    %676 = vmatpush2.msra.mxu0 0.0
    %677 = vmatprep.subr.mxu0 0.0
    %678 = vmatpush2.msra.mxu0 0.0
    %679 = vmatprep.subr.mxu0 0.0
    %680 = vmatpush2.msra.mxu0 0.0
    %681 = vmatprep.subr.mxu0 0.0
    %682 = vmatpush2.msra.mxu0 0.0
    %683 = vmatprep.subr.mxu0 0.0
    %684 = vmatpush2.msra.mxu0 0.0
    %685 = vmatprep.subr.mxu0 0.0
    %686 = vmatpush2.msra.mxu0 0.0
    %687 = vmatprep.subr.mxu0 0.0
    %688 = vmatpush2.msra.mxu0 0.0
    %689 = vmatprep.subr.mxu0 0.0
    %690 = vmatpush2.msra.mxu0 0.0
    %691 = vmatprep.subr.mxu0 0.0
    %692 = vmatpush2.msra.mxu0 0.0
    %693 = vmatprep.subr.mxu0 0.0
    %694 = vmatpush2.msra.mxu0 0.0
    %695 = vmatprep.subr.mxu0 0.0
    %696 = vmatpush2.msra.mxu0 0.0
    %697 = vmatprep.subr.mxu0 0.0
    %698 = vmatpush2.msra.mxu0 0.0
    %699 = vmatprep.subr.mxu0 0.0
    %700 = vmatpush2.msra.mxu0 0.0
    %701 = vmatprep.subr.mxu0 0.0
    %702 = vmatpush2.msra.mxu0 0.0
    %703 = vmatprep.mubr.f32.mxu0 0.0
    %704 = vmatmul.mubr.f32.gmra.mxu0 %v282
    %v705 = vpop.f32.mrf.mxu0
    %v706 = vadd.f32 0.0, %v705
    %v707 = vpop.f32.mrf.mxu0
    %v708 = vadd.f32 0.0, %v707
    %709 = vdwg.mxu0
    %710 = vmatprep.subr.mxu0 0.0
    %711 = vmatpush1.msra.mxu0 0.0
    %712 = vmatprep.subr.mxu0 0.0
    %713 = vmatpush1.msra.mxu0 0.0
    %714 = vmatprep.subr.mxu0 0.0
    %715 = vmatpush1.msra.mxu0 0.0
    %716 = vmatprep.subr.mxu0 0.0
    %717 = vmatpush1.msra.mxu0 0.0
    %718 = vmatprep.subr.mxu0 0.0
    %719 = vmatpush1.msra.mxu0 0.0
    %720 = vmatprep.subr.mxu0 0.0
    %721 = vmatpush1.msra.mxu0 0.0
    %722 = vmatprep.subr.mxu0 0.0
    %723 = vmatpush1.msra.mxu0 0.0
    %724 = vmatprep.subr.mxu0 0.0
    %725 = vmatpush1.msra.mxu0 0.0
    %726 = vmatprep.subr.mxu0 0.0
    %727 = vmatpush1.msra.mxu0 0.0
    %728 = vmatprep.subr.mxu0 0.0
    %729 = vmatpush1.msra.mxu0 0.0
    %730 = vmatprep.subr.mxu0 0.0
    %731 = vmatpush1.msra.mxu0 0.0
    %732 = vmatprep.subr.mxu0 0.0
    %733 = vmatpush1.msra.mxu0 0.0
    %734 = vmatprep.subr.mxu0 %v269
    %735 = vmatpush1.msra.mxu0 %v268
    %736 = vmatprep.subr.mxu0 %v245
    %737 = vmatpush1.msra.mxu0 %v244
    %738 = vmatprep.subr.mxu0 %v221
    %739 = vmatpush1.msra.mxu0 %v220
    %740 = vmatprep.subr.mxu0 %v197
    %741 = vmatpush1.msra.mxu0 %v196
    %742 = vmatprep.subr.mxu0 0.0
    %743 = vmatpush2.msra.mxu0 0.0
    %744 = vmatprep.subr.mxu0 0.0
    %745 = vmatpush2.msra.mxu0 0.0
    %746 = vmatprep.subr.mxu0 0.0
    %747 = vmatpush2.msra.mxu0 0.0
    %748 = vmatprep.subr.mxu0 0.0
    %749 = vmatpush2.msra.mxu0 0.0
    %750 = vmatprep.subr.mxu0 0.0
    %751 = vmatpush2.msra.mxu0 0.0
    %752 = vmatprep.subr.mxu0 0.0
    %753 = vmatpush2.msra.mxu0 0.0
    %754 = vmatprep.subr.mxu0 0.0
    %755 = vmatpush2.msra.mxu0 0.0
    %756 = vmatprep.subr.mxu0 0.0
    %757 = vmatpush2.msra.mxu0 0.0
    %758 = vmatprep.subr.mxu0 0.0
    %759 = vmatpush2.msra.mxu0 0.0
    %760 = vmatprep.subr.mxu0 0.0
    %761 = vmatpush2.msra.mxu0 0.0
    %762 = vmatprep.subr.mxu0 0.0
    %763 = vmatpush2.msra.mxu0 0.0
    %764 = vmatprep.subr.mxu0 0.0
    %765 = vmatpush2.msra.mxu0 0.0
    %766 = vmatprep.subr.mxu0 0.0
    %767 = vmatpush2.msra.mxu0 0.0
    %768 = vmatprep.subr.mxu0 0.0
    %769 = vmatpush2.msra.mxu0 0.0
    %770 = vmatprep.subr.mxu0 0.0
    %771 = vmatpush2.msra.mxu0 0.0
    %772 = vmatprep.subr.mxu0 0.0
    %773 = vmatpush2.msra.mxu0 0.0
    %774 = vmatprep.mubr.f32.mxu0 0.0
    %775 = vmatmul.mubr.f32.gmra.mxu0 %v282
    %v776 = vpop.f32.mrf.mxu0
    %v777 = vadd.f32 0.0, %v776
    %v778 = vpop.f32.mrf.mxu0
    %v779 = vadd.f32 0.0, %v778
    %780 = vdwg.mxu0
    %781 = vmatprep.subr.mxu0 0.0
    %782 = vmatpush1.msra.mxu0 0.0
    %783 = vmatprep.subr.mxu0 0.0
    %784 = vmatpush1.msra.mxu0 0.0
    %785 = vmatprep.subr.mxu0 0.0
    %786 = vmatpush1.msra.mxu0 0.0
    %787 = vmatprep.subr.mxu0 0.0
    %788 = vmatpush1.msra.mxu0 0.0
    %789 = vmatprep.subr.mxu0 0.0
    %790 = vmatpush1.msra.mxu0 0.0
    %791 = vmatprep.subr.mxu0 0.0
    %792 = vmatpush1.msra.mxu0 0.0
    %793 = vmatprep.subr.mxu0 0.0
    %794 = vmatpush1.msra.mxu0 0.0
    %795 = vmatprep.subr.mxu0 0.0
    %796 = vmatpush1.msra.mxu0 0.0
    %797 = vmatprep.subr.mxu0 0.0
    %798 = vmatpush1.msra.mxu0 0.0
    %799 = vmatprep.subr.mxu0 0.0
    %800 = vmatpush1.msra.mxu0 0.0
    %801 = vmatprep.subr.mxu0 0.0
    %802 = vmatpush1.msra.mxu0 0.0
    %803 = vmatprep.subr.mxu0 0.0
    %804 = vmatpush1.msra.mxu0 0.0
    %805 = vmatprep.subr.mxu0 %v271
    %806 = vmatpush1.msra.mxu0 %v270
    %807 = vmatprep.subr.mxu0 %v247
    %808 = vmatpush1.msra.mxu0 %v246
    %809 = vmatprep.subr.mxu0 %v223
    %810 = vmatpush1.msra.mxu0 %v222
    %811 = vmatprep.subr.mxu0 %v199
    %812 = vmatpush1.msra.mxu0 %v198
    %813 = vmatprep.subr.mxu0 0.0
    %814 = vmatpush2.msra.mxu0 0.0
    %815 = vmatprep.subr.mxu0 0.0
    %816 = vmatpush2.msra.mxu0 0.0
    %817 = vmatprep.subr.mxu0 0.0
    %818 = vmatpush2.msra.mxu0 0.0
    %819 = vmatprep.subr.mxu0 0.0
    %820 = vmatpush2.msra.mxu0 0.0
    %821 = vmatprep.subr.mxu0 0.0
    %822 = vmatpush2.msra.mxu0 0.0
    %823 = vmatprep.subr.mxu0 0.0
    %824 = vmatpush2.msra.mxu0 0.0
    %825 = vmatprep.subr.mxu0 0.0
    %826 = vmatpush2.msra.mxu0 0.0
    %827 = vmatprep.subr.mxu0 0.0
    %828 = vmatpush2.msra.mxu0 0.0
    %829 = vmatprep.subr.mxu0 0.0
    %830 = vmatpush2.msra.mxu0 0.0
    %831 = vmatprep.subr.mxu0 0.0
    %832 = vmatpush2.msra.mxu0 0.0
    %833 = vmatprep.subr.mxu0 0.0
    %834 = vmatpush2.msra.mxu0 0.0
    %835 = vmatprep.subr.mxu0 0.0
    %836 = vmatpush2.msra.mxu0 0.0
    %837 = vmatprep.subr.mxu0 0.0
    %838 = vmatpush2.msra.mxu0 0.0
    %839 = vmatprep.subr.mxu0 0.0
    %840 = vmatpush2.msra.mxu0 0.0
    %841 = vmatprep.subr.mxu0 0.0
    %842 = vmatpush2.msra.mxu0 0.0
    %843 = vmatprep.subr.mxu0 0.0
    %844 = vmatpush2.msra.mxu0 0.0
    %845 = vmatprep.mubr.f32.mxu0 0.0
    %846 = vmatmul.mubr.f32.gmra.mxu0 %v282
    %v847 = vpop.f32.mrf.mxu0
    %v848 = vadd.f32 0.0, %v847
    %v849 = vpop.f32.mrf.mxu0
    %v850 = vadd.f32 0.0, %v849
    %851 = vdwg.mxu0
    %852 = vmatprep.subr.mxu0 0.0
    %853 = vmatpush1.msra.mxu0 0.0
    %854 = vmatprep.subr.mxu0 0.0
    %855 = vmatpush1.msra.mxu0 0.0
    %856 = vmatprep.subr.mxu0 0.0
    %857 = vmatpush1.msra.mxu0 0.0
    %858 = vmatprep.subr.mxu0 0.0
    %859 = vmatpush1.msra.mxu0 0.0
    %860 = vmatprep.subr.mxu0 0.0
    %861 = vmatpush1.msra.mxu0 0.0
    %862 = vmatprep.subr.mxu0 0.0
    %863 = vmatpush1.msra.mxu0 0.0
    %864 = vmatprep.subr.mxu0 0.0
    %865 = vmatpush1.msra.mxu0 0.0
    %866 = vmatprep.subr.mxu0 0.0
    %867 = vmatpush1.msra.mxu0 0.0
    %868 = vmatprep.subr.mxu0 0.0
    %869 = vmatpush1.msra.mxu0 0.0
    %870 = vmatprep.subr.mxu0 0.0
    %871 = vmatpush1.msra.mxu0 0.0
    %872 = vmatprep.subr.mxu0 0.0
    %873 = vmatpush1.msra.mxu0 0.0
    %874 = vmatprep.subr.mxu0 0.0
    %875 = vmatpush1.msra.mxu0 0.0
    %876 = vmatprep.subr.mxu0 %v273
    %877 = vmatpush1.msra.mxu0 %v272
    %878 = vmatprep.subr.mxu0 %v249
    %879 = vmatpush1.msra.mxu0 %v248
    %880 = vmatprep.subr.mxu0 %v225
    %881 = vmatpush1.msra.mxu0 %v224
    %882 = vmatprep.subr.mxu0 %v201
    %883 = vmatpush1.msra.mxu0 %v200
    %884 = vmatprep.subr.mxu0 0.0
    %885 = vmatpush2.msra.mxu0 0.0
    %886 = vmatprep.subr.mxu0 0.0
    %887 = vmatpush2.msra.mxu0 0.0
    %888 = vmatprep.subr.mxu0 0.0
    %889 = vmatpush2.msra.mxu0 0.0
    %890 = vmatprep.subr.mxu0 0.0
    %891 = vmatpush2.msra.mxu0 0.0
    %892 = vmatprep.subr.mxu0 0.0
    %893 = vmatpush2.msra.mxu0 0.0
    %894 = vmatprep.subr.mxu0 0.0
    %895 = vmatpush2.msra.mxu0 0.0
    %896 = vmatprep.subr.mxu0 0.0
    %897 = vmatpush2.msra.mxu0 0.0
    %898 = vmatprep.subr.mxu0 0.0
    %899 = vmatpush2.msra.mxu0 0.0
    %900 = vmatprep.subr.mxu0 0.0
    %901 = vmatpush2.msra.mxu0 0.0
    %902 = vmatprep.subr.mxu0 0.0
    %903 = vmatpush2.msra.mxu0 0.0
    %904 = vmatprep.subr.mxu0 0.0
    %905 = vmatpush2.msra.mxu0 0.0
    %906 = vmatprep.subr.mxu0 0.0
    %907 = vmatpush2.msra.mxu0 0.0
    %908 = vmatprep.subr.mxu0 0.0
    %909 = vmatpush2.msra.mxu0 0.0
    %910 = vmatprep.subr.mxu0 0.0
    %911 = vmatpush2.msra.mxu0 0.0
    %912 = vmatprep.subr.mxu0 0.0
    %913 = vmatpush2.msra.mxu0 0.0
    %914 = vmatprep.subr.mxu0 0.0
    %915 = vmatpush2.msra.mxu0 0.0
    %916 = vmatprep.mubr.f32.mxu0 0.0
    %917 = vmatmul.mubr.f32.gmra.mxu0 %v282
    %v918 = vpop.f32.mrf.mxu0
    %v919 = vadd.f32 0.0, %v918
    %v920 = vpop.f32.mrf.mxu0
    %v921 = vadd.f32 0.0, %v920
    %922 = vdwg.mxu0
    %923 = vmatprep.subr.mxu0 0.0
    %924 = vmatpush1.msra.mxu0 0.0
    %925 = vmatprep.subr.mxu0 0.0
    %926 = vmatpush1.msra.mxu0 0.0
    %927 = vmatprep.subr.mxu0 0.0
    %928 = vmatpush1.msra.mxu0 0.0
    %929 = vmatprep.subr.mxu0 0.0
    %930 = vmatpush1.msra.mxu0 0.0
    %931 = vmatprep.subr.mxu0 0.0
    %932 = vmatpush1.msra.mxu0 0.0
    %933 = vmatprep.subr.mxu0 0.0
    %934 = vmatpush1.msra.mxu0 0.0
    %935 = vmatprep.subr.mxu0 0.0
    %936 = vmatpush1.msra.mxu0 0.0
    %937 = vmatprep.subr.mxu0 0.0
    %938 = vmatpush1.msra.mxu0 0.0
    %939 = vmatprep.subr.mxu0 0.0
    %940 = vmatpush1.msra.mxu0 0.0
    %941 = vmatprep.subr.mxu0 0.0
    %942 = vmatpush1.msra.mxu0 0.0
    %943 = vmatprep.subr.mxu0 0.0
    %944 = vmatpush1.msra.mxu0 0.0
    %945 = vmatprep.subr.mxu0 0.0
    %946 = vmatpush1.msra.mxu0 0.0
    %947 = vmatprep.subr.mxu0 %v275
    %948 = vmatpush1.msra.mxu0 %v274
    %949 = vmatprep.subr.mxu0 %v251
    %950 = vmatpush1.msra.mxu0 %v250
    %951 = vmatprep.subr.mxu0 %v227
    %952 = vmatpush1.msra.mxu0 %v226
    %953 = vmatprep.subr.mxu0 %v203
    %954 = vmatpush1.msra.mxu0 %v202
    %955 = vmatprep.subr.mxu0 0.0
    %956 = vmatpush2.msra.mxu0 0.0
    %957 = vmatprep.subr.mxu0 0.0
    %958 = vmatpush2.msra.mxu0 0.0
    %959 = vmatprep.subr.mxu0 0.0
    %960 = vmatpush2.msra.mxu0 0.0
    %961 = vmatprep.subr.mxu0 0.0
    %962 = vmatpush2.msra.mxu0 0.0
    %963 = vmatprep.subr.mxu0 0.0
    %964 = vmatpush2.msra.mxu0 0.0
    %965 = vmatprep.subr.mxu0 0.0
    %966 = vmatpush2.msra.mxu0 0.0
    %967 = vmatprep.subr.mxu0 0.0
    %968 = vmatpush2.msra.mxu0 0.0
    %969 = vmatprep.subr.mxu0 0.0
    %970 = vmatpush2.msra.mxu0 0.0
    %971 = vmatprep.subr.mxu0 0.0
    %972 = vmatpush2.msra.mxu0 0.0
    %973 = vmatprep.subr.mxu0 0.0
    %974 = vmatpush2.msra.mxu0 0.0
    %975 = vmatprep.subr.mxu0 0.0
    %976 = vmatpush2.msra.mxu0 0.0
    %977 = vmatprep.subr.mxu0 0.0
    %978 = vmatpush2.msra.mxu0 0.0
    %979 = vmatprep.subr.mxu0 0.0
    %980 = vmatpush2.msra.mxu0 0.0
    %981 = vmatprep.subr.mxu0 0.0
    %982 = vmatpush2.msra.mxu0 0.0
    %983 = vmatprep.subr.mxu0 0.0
    %984 = vmatpush2.msra.mxu0 0.0
    %985 = vmatprep.subr.mxu0 0.0
    %986 = vmatpush2.msra.mxu0 0.0
    %987 = vmatprep.mubr.f32.mxu0 0.0
    %988 = vmatmul.mubr.f32.gmra.mxu0 %v282
    %v989 = vpop.f32.mrf.mxu0
    %v990 = vadd.f32 0.0, %v989
    %v991 = vpop.f32.mrf.mxu0
    %v992 = vadd.f32 0.0, %v991
    %993 = vdwg.mxu0
    %994 = vmatprep.subr.mxu0 0.0
    %995 = vmatpush1.msra.mxu0 0.0
    %996 = vmatprep.subr.mxu0 0.0
    %997 = vmatpush1.msra.mxu0 0.0
    %998 = vmatprep.subr.mxu0 0.0
    %999 = vmatpush1.msra.mxu0 0.0
    %1000 = vmatprep.subr.mxu0 0.0
    %1001 = vmatpush1.msra.mxu0 0.0
    %1002 = vmatprep.subr.mxu0 0.0
    %1003 = vmatpush1.msra.mxu0 0.0
    %1004 = vmatprep.subr.mxu0 0.0
    %1005 = vmatpush1.msra.mxu0 0.0
    %1006 = vmatprep.subr.mxu0 0.0
    %1007 = vmatpush1.msra.mxu0 0.0
    %1008 = vmatprep.subr.mxu0 0.0
    %1009 = vmatpush1.msra.mxu0 0.0
    %1010 = vmatprep.subr.mxu0 0.0
    %1011 = vmatpush1.msra.mxu0 0.0
    %1012 = vmatprep.subr.mxu0 0.0
    %1013 = vmatpush1.msra.mxu0 0.0
    %1014 = vmatprep.subr.mxu0 0.0
    %1015 = vmatpush1.msra.mxu0 0.0
    %1016 = vmatprep.subr.mxu0 0.0
    %1017 = vmatpush1.msra.mxu0 0.0
    %1018 = vmatprep.subr.mxu0 %v277
    %1019 = vmatpush1.msra.mxu0 %v276
    %1020 = vmatprep.subr.mxu0 %v253
    %1021 = vmatpush1.msra.mxu0 %v252
    %1022 = vmatprep.subr.mxu0 %v229
    %1023 = vmatpush1.msra.mxu0 %v228
    %1024 = vmatprep.subr.mxu0 %v205
    %1025 = vmatpush1.msra.mxu0 %v204
    %1026 = vmatprep.subr.mxu0 0.0
    %1027 = vmatpush2.msra.mxu0 0.0
    %1028 = vmatprep.subr.mxu0 0.0
    %1029 = vmatpush2.msra.mxu0 0.0
    %1030 = vmatprep.subr.mxu0 0.0
    %1031 = vmatpush2.msra.mxu0 0.0
    %1032 = vmatprep.subr.mxu0 0.0
    %1033 = vmatpush2.msra.mxu0 0.0
    %1034 = vmatprep.subr.mxu0 0.0
    %1035 = vmatpush2.msra.mxu0 0.0
    %1036 = vmatprep.subr.mxu0 0.0
    %1037 = vmatpush2.msra.mxu0 0.0
    %1038 = vmatprep.subr.mxu0 0.0
    %1039 = vmatpush2.msra.mxu0 0.0
    %1040 = vmatprep.subr.mxu0 0.0
    %1041 = vmatpush2.msra.mxu0 0.0
    %1042 = vmatprep.subr.mxu0 0.0
    %1043 = vmatpush2.msra.mxu0 0.0
    %1044 = vmatprep.subr.mxu0 0.0
    %1045 = vmatpush2.msra.mxu0 0.0
    %1046 = vmatprep.subr.mxu0 0.0
    %1047 = vmatpush2.msra.mxu0 0.0
    %1048 = vmatprep.subr.mxu0 0.0
    %1049 = vmatpush2.msra.mxu0 0.0
    %1050 = vmatprep.subr.mxu0 0.0
    %1051 = vmatpush2.msra.mxu0 0.0
    %1052 = vmatprep.subr.mxu0 0.0
    %1053 = vmatpush2.msra.mxu0 0.0
    %1054 = vmatprep.subr.mxu0 0.0
    %1055 = vmatpush2.msra.mxu0 0.0
    %1056 = vmatprep.subr.mxu0 0.0
    %1057 = vmatpush2.msra.mxu0 0.0
    %1058 = vmatprep.mubr.f32.mxu0 0.0
    %1059 = vmatmul.mubr.f32.gmra.mxu0 %v282
    %v1060 = vpop.f32.mrf.mxu0
    %v1061 = vadd.f32 0.0, %v1060
    %v1062 = vpop.f32.mrf.mxu0
    %v1063 = vadd.f32 0.0, %v1062
    %1064 = vdwg.mxu0
    %1065 = vmatprep.subr.mxu0 0.0
    %1066 = vmatpush1.msra.mxu0 0.0
    %1067 = vmatprep.subr.mxu0 0.0
    %1068 = vmatpush1.msra.mxu0 0.0
    %1069 = vmatprep.subr.mxu0 0.0
    %1070 = vmatpush1.msra.mxu0 0.0
    %1071 = vmatprep.subr.mxu0 0.0
    %1072 = vmatpush1.msra.mxu0 0.0
    %1073 = vmatprep.subr.mxu0 0.0
    %1074 = vmatpush1.msra.mxu0 0.0
    %1075 = vmatprep.subr.mxu0 0.0
    %1076 = vmatpush1.msra.mxu0 0.0
    %1077 = vmatprep.subr.mxu0 0.0
    %1078 = vmatpush1.msra.mxu0 0.0
    %1079 = vmatprep.subr.mxu0 0.0
    %1080 = vmatpush1.msra.mxu0 0.0
    %1081 = vmatprep.subr.mxu0 0.0
    %1082 = vmatpush1.msra.mxu0 0.0
    %1083 = vmatprep.subr.mxu0 0.0
    %1084 = vmatpush1.msra.mxu0 0.0
    %1085 = vmatprep.subr.mxu0 0.0
    %1086 = vmatpush1.msra.mxu0 0.0
    %1087 = vmatprep.subr.mxu0 0.0
    %1088 = vmatpush1.msra.mxu0 0.0
    %1089 = vmatprep.subr.mxu0 %v279
    %1090 = vmatpush1.msra.mxu0 %v278
    %1091 = vmatprep.subr.mxu0 %v255
    %1092 = vmatpush1.msra.mxu0 %v254
    %1093 = vmatprep.subr.mxu0 %v231
    %1094 = vmatpush1.msra.mxu0 %v230
    %1095 = vmatprep.subr.mxu0 %v207
    %1096 = vmatpush1.msra.mxu0 %v206
    %1097 = vmatprep.subr.mxu0 0.0
    %1098 = vmatpush2.msra.mxu0 0.0
    %1099 = vmatprep.subr.mxu0 0.0
    %1100 = vmatpush2.msra.mxu0 0.0
    %1101 = vmatprep.subr.mxu0 0.0
    %1102 = vmatpush2.msra.mxu0 0.0
    %1103 = vmatprep.subr.mxu0 0.0
    %1104 = vmatpush2.msra.mxu0 0.0
    %1105 = vmatprep.subr.mxu0 0.0
    %1106 = vmatpush2.msra.mxu0 0.0
    %1107 = vmatprep.subr.mxu0 0.0
    %1108 = vmatpush2.msra.mxu0 0.0
    %1109 = vmatprep.subr.mxu0 0.0
    %1110 = vmatpush2.msra.mxu0 0.0
    %1111 = vmatprep.subr.mxu0 0.0
    %1112 = vmatpush2.msra.mxu0 0.0
    %1113 = vmatprep.subr.mxu0 0.0
    %1114 = vmatpush2.msra.mxu0 0.0
    %1115 = vmatprep.subr.mxu0 0.0
    %1116 = vmatpush2.msra.mxu0 0.0
    %1117 = vmatprep.subr.mxu0 0.0
    %1118 = vmatpush2.msra.mxu0 0.0
    %1119 = vmatprep.subr.mxu0 0.0
    %1120 = vmatpush2.msra.mxu0 0.0
    %1121 = vmatprep.subr.mxu0 0.0
    %1122 = vmatpush2.msra.mxu0 0.0
    %1123 = vmatprep.subr.mxu0 0.0
    %1124 = vmatpush2.msra.mxu0 0.0
    %1125 = vmatprep.subr.mxu0 0.0
    %1126 = vmatpush2.msra.mxu0 0.0
    %1127 = vmatprep.subr.mxu0 0.0
    %1128 = vmatpush2.msra.mxu0 0.0
    %1129 = vmatprep.mubr.f32.mxu0 0.0
    %1130 = vmatmul.mubr.f32.gmra.mxu0 %v282
    %v1131 = vpop.f32.mrf.mxu0
    %v1132 = vadd.f32 0.0, %v1131
    %v1133 = vpop.f32.mrf.mxu0
    %v1134 = vadd.f32 0.0, %v1133
    %1135 = vdwg.mxu0
    %1136 = vmatprep.subr.mxu0 0.0
    %1137 = vmatpush1.msra.mxu0 0.0
    %1138 = vmatprep.subr.mxu0 0.0
    %1139 = vmatpush1.msra.mxu0 0.0
    %1140 = vmatprep.subr.mxu0 0.0
    %1141 = vmatpush1.msra.mxu0 0.0
    %1142 = vmatprep.subr.mxu0 0.0
    %1143 = vmatpush1.msra.mxu0 0.0
    %1144 = vmatprep.subr.mxu0 0.0
    %1145 = vmatpush1.msra.mxu0 0.0
    %1146 = vmatprep.subr.mxu0 0.0
    %1147 = vmatpush1.msra.mxu0 0.0
    %1148 = vmatprep.subr.mxu0 0.0
    %1149 = vmatpush1.msra.mxu0 0.0
    %1150 = vmatprep.subr.mxu0 0.0
    %1151 = vmatpush1.msra.mxu0 0.0
    %1152 = vmatprep.subr.mxu0 0.0
    %1153 = vmatpush1.msra.mxu0 0.0
    %1154 = vmatprep.subr.mxu0 0.0
    %1155 = vmatpush1.msra.mxu0 0.0
    %1156 = vmatprep.subr.mxu0 0.0
    %1157 = vmatpush1.msra.mxu0 0.0
    %1158 = vmatprep.subr.mxu0 0.0
    %1159 = vmatpush1.msra.mxu0 0.0
    %1160 = vmatprep.subr.mxu0 %v160
    %1161 = vmatpush1.msra.mxu0 %v159
    %1162 = vmatprep.subr.mxu0 %v136
    %1163 = vmatpush1.msra.mxu0 %v135
    %1164 = vmatprep.subr.mxu0 %v112
    %1165 = vmatpush1.msra.mxu0 %v111
    %1166 = vmatprep.subr.mxu0 %v88
    %1167 = vmatpush1.msra.mxu0 %v87
    %1168 = vmatprep.subr.mxu0 0.0
    %1169 = vmatpush2.msra.mxu0 0.0
    %1170 = vmatprep.subr.mxu0 0.0
    %1171 = vmatpush2.msra.mxu0 0.0
    %1172 = vmatprep.subr.mxu0 0.0
    %1173 = vmatpush2.msra.mxu0 0.0
    %1174 = vmatprep.subr.mxu0 0.0
    %1175 = vmatpush2.msra.mxu0 0.0
    %1176 = vmatprep.subr.mxu0 0.0
    %1177 = vmatpush2.msra.mxu0 0.0
    %1178 = vmatprep.subr.mxu0 0.0
    %1179 = vmatpush2.msra.mxu0 0.0
    %1180 = vmatprep.subr.mxu0 0.0
    %1181 = vmatpush2.msra.mxu0 0.0
    %1182 = vmatprep.subr.mxu0 0.0
    %1183 = vmatpush2.msra.mxu0 0.0
    %1184 = vmatprep.subr.mxu0 0.0
    %1185 = vmatpush2.msra.mxu0 0.0
    %1186 = vmatprep.subr.mxu0 0.0
    %1187 = vmatpush2.msra.mxu0 0.0
    %1188 = vmatprep.subr.mxu0 0.0
    %1189 = vmatpush2.msra.mxu0 0.0
    %1190 = vmatprep.subr.mxu0 0.0
    %1191 = vmatpush2.msra.mxu0 0.0
    %1192 = vmatprep.subr.mxu0 0.0
    %1193 = vmatpush2.msra.mxu0 0.0
    %1194 = vmatprep.subr.mxu0 0.0
    %1195 = vmatpush2.msra.mxu0 0.0
    %1196 = vmatprep.subr.mxu0 0.0
    %1197 = vmatpush2.msra.mxu0 0.0
    %1198 = vmatprep.subr.mxu0 0.0
    %1199 = vmatpush2.msra.mxu0 0.0
    %1200 = vmatprep.mubr.f32.mxu0 0.0
    %1201 = vmatmul.mubr.f32.gmra.mxu0 %v282
    %v1202 = vpop.f32.mrf.mxu0
    %v1203 = vadd.f32 0.0, %v1202
    %v1204 = vpop.f32.mrf.mxu0
    %v1205 = vadd.f32 0.0, %v1204
    %1206 = vdwg.mxu0
    %1207 = vmatprep.subr.mxu0 0.0
    %1208 = vmatpush1.msra.mxu0 0.0
    %1209 = vmatprep.subr.mxu0 0.0
    %1210 = vmatpush1.msra.mxu0 0.0
    %1211 = vmatprep.subr.mxu0 0.0
    %1212 = vmatpush1.msra.mxu0 0.0
    %1213 = vmatprep.subr.mxu0 0.0
    %1214 = vmatpush1.msra.mxu0 0.0
    %1215 = vmatprep.subr.mxu0 0.0
    %1216 = vmatpush1.msra.mxu0 0.0
    %1217 = vmatprep.subr.mxu0 0.0
    %1218 = vmatpush1.msra.mxu0 0.0
    %1219 = vmatprep.subr.mxu0 0.0
    %1220 = vmatpush1.msra.mxu0 0.0
    %1221 = vmatprep.subr.mxu0 0.0
    %1222 = vmatpush1.msra.mxu0 0.0
    %1223 = vmatprep.subr.mxu0 0.0
    %1224 = vmatpush1.msra.mxu0 0.0
    %1225 = vmatprep.subr.mxu0 0.0
    %1226 = vmatpush1.msra.mxu0 0.0
    %1227 = vmatprep.subr.mxu0 0.0
    %1228 = vmatpush1.msra.mxu0 0.0
    %1229 = vmatprep.subr.mxu0 0.0
    %1230 = vmatpush1.msra.mxu0 0.0
    %1231 = vmatprep.subr.mxu0 %v162
    %1232 = vmatpush1.msra.mxu0 %v161
    %1233 = vmatprep.subr.mxu0 %v138
    %1234 = vmatpush1.msra.mxu0 %v137
    %1235 = vmatprep.subr.mxu0 %v114
    %1236 = vmatpush1.msra.mxu0 %v113
    %1237 = vmatprep.subr.mxu0 %v90
    %1238 = vmatpush1.msra.mxu0 %v89
    %1239 = vmatprep.subr.mxu0 0.0
    %1240 = vmatpush2.msra.mxu0 0.0
    %1241 = vmatprep.subr.mxu0 0.0
    %1242 = vmatpush2.msra.mxu0 0.0
    %1243 = vmatprep.subr.mxu0 0.0
    %1244 = vmatpush2.msra.mxu0 0.0
    %1245 = vmatprep.subr.mxu0 0.0
    %1246 = vmatpush2.msra.mxu0 0.0
    %1247 = vmatprep.subr.mxu0 0.0
    %1248 = vmatpush2.msra.mxu0 0.0
    %1249 = vmatprep.subr.mxu0 0.0
    %1250 = vmatpush2.msra.mxu0 0.0
    %1251 = vmatprep.subr.mxu0 0.0
    %1252 = vmatpush2.msra.mxu0 0.0
    %1253 = vmatprep.subr.mxu0 0.0
    %1254 = vmatpush2.msra.mxu0 0.0
    %1255 = vmatprep.subr.mxu0 0.0
    %1256 = vmatpush2.msra.mxu0 0.0
    %1257 = vmatprep.subr.mxu0 0.0
    %1258 = vmatpush2.msra.mxu0 0.0
    %1259 = vmatprep.subr.mxu0 0.0
    %1260 = vmatpush2.msra.mxu0 0.0
    %1261 = vmatprep.subr.mxu0 0.0
    %1262 = vmatpush2.msra.mxu0 0.0
    %1263 = vmatprep.subr.mxu0 0.0
    %1264 = vmatpush2.msra.mxu0 0.0
    %1265 = vmatprep.subr.mxu0 0.0
    %1266 = vmatpush2.msra.mxu0 0.0
    %1267 = vmatprep.subr.mxu0 0.0
    %1268 = vmatpush2.msra.mxu0 0.0
    %1269 = vmatprep.subr.mxu0 0.0
    %1270 = vmatpush2.msra.mxu0 0.0
    %1271 = vmatprep.mubr.f32.mxu0 0.0
    %1272 = vmatmul.mubr.f32.gmra.mxu0 %v282
    %v1273 = vpop.f32.mrf.mxu0
    %v1274 = vadd.f32 0.0, %v1273
    %v1275 = vpop.f32.mrf.mxu0
    %v1276 = vadd.f32 0.0, %v1275
    %1277 = vdwg.mxu0
    %1278 = vmatprep.subr.mxu0 0.0
    %1279 = vmatpush1.msra.mxu0 0.0
    %1280 = vmatprep.subr.mxu0 0.0
    %1281 = vmatpush1.msra.mxu0 0.0
    %1282 = vmatprep.subr.mxu0 0.0
    %1283 = vmatpush1.msra.mxu0 0.0
    %1284 = vmatprep.subr.mxu0 0.0
    %1285 = vmatpush1.msra.mxu0 0.0
    %1286 = vmatprep.subr.mxu0 0.0
    %1287 = vmatpush1.msra.mxu0 0.0
    %1288 = vmatprep.subr.mxu0 0.0
    %1289 = vmatpush1.msra.mxu0 0.0
    %1290 = vmatprep.subr.mxu0 0.0
    %1291 = vmatpush1.msra.mxu0 0.0
    %1292 = vmatprep.subr.mxu0 0.0
    %1293 = vmatpush1.msra.mxu0 0.0
    %1294 = vmatprep.subr.mxu0 0.0
    %1295 = vmatpush1.msra.mxu0 0.0
    %1296 = vmatprep.subr.mxu0 0.0
    %1297 = vmatpush1.msra.mxu0 0.0
    %1298 = vmatprep.subr.mxu0 0.0
    %1299 = vmatpush1.msra.mxu0 0.0
    %1300 = vmatprep.subr.mxu0 0.0
    %1301 = vmatpush1.msra.mxu0 0.0
    %1302 = vmatprep.subr.mxu0 %v164
    %1303 = vmatpush1.msra.mxu0 %v163
    %1304 = vmatprep.subr.mxu0 %v140
    %1305 = vmatpush1.msra.mxu0 %v139
    %1306 = vmatprep.subr.mxu0 %v116
    %1307 = vmatpush1.msra.mxu0 %v115
    %1308 = vmatprep.subr.mxu0 %v92
    %1309 = vmatpush1.msra.mxu0 %v91
    %1310 = vmatprep.subr.mxu0 0.0
    %1311 = vmatpush2.msra.mxu0 0.0
    %1312 = vmatprep.subr.mxu0 0.0
    %1313 = vmatpush2.msra.mxu0 0.0
    %1314 = vmatprep.subr.mxu0 0.0
    %1315 = vmatpush2.msra.mxu0 0.0
    %1316 = vmatprep.subr.mxu0 0.0
    %1317 = vmatpush2.msra.mxu0 0.0
    %1318 = vmatprep.subr.mxu0 0.0
    %1319 = vmatpush2.msra.mxu0 0.0
    %1320 = vmatprep.subr.mxu0 0.0
    %1321 = vmatpush2.msra.mxu0 0.0
    %1322 = vmatprep.subr.mxu0 0.0
    %1323 = vmatpush2.msra.mxu0 0.0
    %1324 = vmatprep.subr.mxu0 0.0
    %1325 = vmatpush2.msra.mxu0 0.0
    %1326 = vmatprep.subr.mxu0 0.0
    %1327 = vmatpush2.msra.mxu0 0.0
    %1328 = vmatprep.subr.mxu0 0.0
    %1329 = vmatpush2.msra.mxu0 0.0
    %1330 = vmatprep.subr.mxu0 0.0
    %1331 = vmatpush2.msra.mxu0 0.0
    %1332 = vmatprep.subr.mxu0 0.0
    %1333 = vmatpush2.msra.mxu0 0.0
    %1334 = vmatprep.subr.mxu0 0.0
    %1335 = vmatpush2.msra.mxu0 0.0
    %1336 = vmatprep.subr.mxu0 0.0
    %1337 = vmatpush2.msra.mxu0 0.0
    %1338 = vmatprep.subr.mxu0 0.0
    %1339 = vmatpush2.msra.mxu0 0.0
    %1340 = vmatprep.subr.mxu0 0.0
    %1341 = vmatpush2.msra.mxu0 0.0
    %1342 = vmatprep.mubr.f32.mxu0 0.0
    %1343 = vmatmul.mubr.f32.gmra.mxu0 %v282
    %v1344 = vpop.f32.mrf.mxu0
    %v1345 = vadd.f32 0.0, %v1344
    %v1346 = vpop.f32.mrf.mxu0
    %v1347 = vadd.f32 0.0, %v1346
    %1348 = vdwg.mxu0
    %1349 = vmatprep.subr.mxu0 0.0
    %1350 = vmatpush1.msra.mxu0 0.0
    %1351 = vmatprep.subr.mxu0 0.0
    %1352 = vmatpush1.msra.mxu0 0.0
    %1353 = vmatprep.subr.mxu0 0.0
    %1354 = vmatpush1.msra.mxu0 0.0
    %1355 = vmatprep.subr.mxu0 0.0
    %1356 = vmatpush1.msra.mxu0 0.0
    %1357 = vmatprep.subr.mxu0 0.0
    %1358 = vmatpush1.msra.mxu0 0.0
    %1359 = vmatprep.subr.mxu0 0.0
    %1360 = vmatpush1.msra.mxu0 0.0
    %1361 = vmatprep.subr.mxu0 0.0
    %1362 = vmatpush1.msra.mxu0 0.0
    %1363 = vmatprep.subr.mxu0 0.0
    %1364 = vmatpush1.msra.mxu0 0.0
    %1365 = vmatprep.subr.mxu0 0.0
    %1366 = vmatpush1.msra.mxu0 0.0
    %1367 = vmatprep.subr.mxu0 0.0
    %1368 = vmatpush1.msra.mxu0 0.0
    %1369 = vmatprep.subr.mxu0 0.0
    %1370 = vmatpush1.msra.mxu0 0.0
    %1371 = vmatprep.subr.mxu0 0.0
    %1372 = vmatpush1.msra.mxu0 0.0
    %1373 = vmatprep.subr.mxu0 %v166
    %1374 = vmatpush1.msra.mxu0 %v165
    %1375 = vmatprep.subr.mxu0 %v142
    %1376 = vmatpush1.msra.mxu0 %v141
    %1377 = vmatprep.subr.mxu0 %v118
    %1378 = vmatpush1.msra.mxu0 %v117
    %1379 = vmatprep.subr.mxu0 %v94
    %1380 = vmatpush1.msra.mxu0 %v93
    %1381 = vmatprep.subr.mxu0 0.0
    %1382 = vmatpush2.msra.mxu0 0.0
    %1383 = vmatprep.subr.mxu0 0.0
    %1384 = vmatpush2.msra.mxu0 0.0
    %1385 = vmatprep.subr.mxu0 0.0
    %1386 = vmatpush2.msra.mxu0 0.0
    %1387 = vmatprep.subr.mxu0 0.0
    %1388 = vmatpush2.msra.mxu0 0.0
    %1389 = vmatprep.subr.mxu0 0.0
    %1390 = vmatpush2.msra.mxu0 0.0
    %1391 = vmatprep.subr.mxu0 0.0
    %1392 = vmatpush2.msra.mxu0 0.0
    %1393 = vmatprep.subr.mxu0 0.0
    %1394 = vmatpush2.msra.mxu0 0.0
    %1395 = vmatprep.subr.mxu0 0.0
    %1396 = vmatpush2.msra.mxu0 0.0
    %1397 = vmatprep.subr.mxu0 0.0
    %1398 = vmatpush2.msra.mxu0 0.0
    %1399 = vmatprep.subr.mxu0 0.0
    %1400 = vmatpush2.msra.mxu0 0.0
    %1401 = vmatprep.subr.mxu0 0.0
    %1402 = vmatpush2.msra.mxu0 0.0
    %1403 = vmatprep.subr.mxu0 0.0
    %1404 = vmatpush2.msra.mxu0 0.0
    %1405 = vmatprep.subr.mxu0 0.0
    %1406 = vmatpush2.msra.mxu0 0.0
    %1407 = vmatprep.subr.mxu0 0.0
    %1408 = vmatpush2.msra.mxu0 0.0
    %1409 = vmatprep.subr.mxu0 0.0
    %1410 = vmatpush2.msra.mxu0 0.0
    %1411 = vmatprep.subr.mxu0 0.0
    %1412 = vmatpush2.msra.mxu0 0.0
    %1413 = vmatprep.mubr.f32.mxu0 0.0
    %1414 = vmatmul.mubr.f32.gmra.mxu0 %v282
    %v1415 = vpop.f32.mrf.mxu0
    %v1416 = vadd.f32 0.0, %v1415
    %v1417 = vpop.f32.mrf.mxu0
    %v1418 = vadd.f32 0.0, %v1417
    %1419 = vdwg.mxu0
    %1420 = vmatprep.subr.mxu0 0.0
    %1421 = vmatpush1.msra.mxu0 0.0
    %1422 = vmatprep.subr.mxu0 0.0
    %1423 = vmatpush1.msra.mxu0 0.0
    %1424 = vmatprep.subr.mxu0 0.0
    %1425 = vmatpush1.msra.mxu0 0.0
    %1426 = vmatprep.subr.mxu0 0.0
    %1427 = vmatpush1.msra.mxu0 0.0
    %1428 = vmatprep.subr.mxu0 0.0
    %1429 = vmatpush1.msra.mxu0 0.0
    %1430 = vmatprep.subr.mxu0 0.0
    %1431 = vmatpush1.msra.mxu0 0.0
    %1432 = vmatprep.subr.mxu0 0.0
    %1433 = vmatpush1.msra.mxu0 0.0
    %1434 = vmatprep.subr.mxu0 0.0
    %1435 = vmatpush1.msra.mxu0 0.0
    %1436 = vmatprep.subr.mxu0 0.0
    %1437 = vmatpush1.msra.mxu0 0.0
    %1438 = vmatprep.subr.mxu0 0.0
    %1439 = vmatpush1.msra.mxu0 0.0
    %1440 = vmatprep.subr.mxu0 0.0
    %1441 = vmatpush1.msra.mxu0 0.0
    %1442 = vmatprep.subr.mxu0 0.0
    %1443 = vmatpush1.msra.mxu0 0.0
    %1444 = vmatprep.subr.mxu0 %v168
    %1445 = vmatpush1.msra.mxu0 %v167
    %1446 = vmatprep.subr.mxu0 %v144
    %1447 = vmatpush1.msra.mxu0 %v143
    %1448 = vmatprep.subr.mxu0 %v120
    %1449 = vmatpush1.msra.mxu0 %v119
    %1450 = vmatprep.subr.mxu0 %v96
    %1451 = vmatpush1.msra.mxu0 %v95
    %1452 = vmatprep.subr.mxu0 0.0
    %1453 = vmatpush2.msra.mxu0 0.0
    %1454 = vmatprep.subr.mxu0 0.0
    %1455 = vmatpush2.msra.mxu0 0.0
    %1456 = vmatprep.subr.mxu0 0.0
    %1457 = vmatpush2.msra.mxu0 0.0
    %1458 = vmatprep.subr.mxu0 0.0
    %1459 = vmatpush2.msra.mxu0 0.0
    %1460 = vmatprep.subr.mxu0 0.0
    %1461 = vmatpush2.msra.mxu0 0.0
    %1462 = vmatprep.subr.mxu0 0.0
    %1463 = vmatpush2.msra.mxu0 0.0
    %1464 = vmatprep.subr.mxu0 0.0
    %1465 = vmatpush2.msra.mxu0 0.0
    %1466 = vmatprep.subr.mxu0 0.0
    %1467 = vmatpush2.msra.mxu0 0.0
    %1468 = vmatprep.subr.mxu0 0.0
    %1469 = vmatpush2.msra.mxu0 0.0
    %1470 = vmatprep.subr.mxu0 0.0
    %1471 = vmatpush2.msra.mxu0 0.0
    %1472 = vmatprep.subr.mxu0 0.0
    %1473 = vmatpush2.msra.mxu0 0.0
    %1474 = vmatprep.subr.mxu0 0.0
    %1475 = vmatpush2.msra.mxu0 0.0
    %1476 = vmatprep.subr.mxu0 0.0
    %1477 = vmatpush2.msra.mxu0 0.0
    %1478 = vmatprep.subr.mxu0 0.0
    %1479 = vmatpush2.msra.mxu0 0.0
    %1480 = vmatprep.subr.mxu0 0.0
    %1481 = vmatpush2.msra.mxu0 0.0
    %1482 = vmatprep.subr.mxu0 0.0
    %1483 = vmatpush2.msra.mxu0 0.0
    %1484 = vmatprep.mubr.f32.mxu0 0.0
    %1485 = vmatmul.mubr.f32.gmra.mxu0 %v282
    %v1486 = vpop.f32.mrf.mxu0
    %v1487 = vadd.f32 0.0, %v1486
    %v1488 = vpop.f32.mrf.mxu0
    %v1489 = vadd.f32 0.0, %v1488
    %1490 = vdwg.mxu0
    %1491 = vmatprep.subr.mxu0 0.0
    %1492 = vmatpush1.msra.mxu0 0.0
    %1493 = vmatprep.subr.mxu0 0.0
    %1494 = vmatpush1.msra.mxu0 0.0
    %1495 = vmatprep.subr.mxu0 0.0
    %1496 = vmatpush1.msra.mxu0 0.0
    %1497 = vmatprep.subr.mxu0 0.0
    %1498 = vmatpush1.msra.mxu0 0.0
    %1499 = vmatprep.subr.mxu0 0.0
    %1500 = vmatpush1.msra.mxu0 0.0
    %1501 = vmatprep.subr.mxu0 0.0
    %1502 = vmatpush1.msra.mxu0 0.0
    %1503 = vmatprep.subr.mxu0 0.0
    %1504 = vmatpush1.msra.mxu0 0.0
    %1505 = vmatprep.subr.mxu0 0.0
    %1506 = vmatpush1.msra.mxu0 0.0
    %1507 = vmatprep.subr.mxu0 0.0
    %1508 = vmatpush1.msra.mxu0 0.0
    %1509 = vmatprep.subr.mxu0 0.0
    %1510 = vmatpush1.msra.mxu0 0.0
    %1511 = vmatprep.subr.mxu0 0.0
    %1512 = vmatpush1.msra.mxu0 0.0
    %1513 = vmatprep.subr.mxu0 0.0
    %1514 = vmatpush1.msra.mxu0 0.0
    %1515 = vmatprep.subr.mxu0 %v170
    %1516 = vmatpush1.msra.mxu0 %v169
    %1517 = vmatprep.subr.mxu0 %v146
    %1518 = vmatpush1.msra.mxu0 %v145
    %1519 = vmatprep.subr.mxu0 %v122
    %1520 = vmatpush1.msra.mxu0 %v121
    %1521 = vmatprep.subr.mxu0 %v98
    %1522 = vmatpush1.msra.mxu0 %v97
    %1523 = vmatprep.subr.mxu0 0.0
    %1524 = vmatpush2.msra.mxu0 0.0
    %1525 = vmatprep.subr.mxu0 0.0
    %1526 = vmatpush2.msra.mxu0 0.0
    %1527 = vmatprep.subr.mxu0 0.0
    %1528 = vmatpush2.msra.mxu0 0.0
    %1529 = vmatprep.subr.mxu0 0.0
    %1530 = vmatpush2.msra.mxu0 0.0
    %1531 = vmatprep.subr.mxu0 0.0
    %1532 = vmatpush2.msra.mxu0 0.0
    %1533 = vmatprep.subr.mxu0 0.0
    %1534 = vmatpush2.msra.mxu0 0.0
    %1535 = vmatprep.subr.mxu0 0.0
    %1536 = vmatpush2.msra.mxu0 0.0
    %1537 = vmatprep.subr.mxu0 0.0
    %1538 = vmatpush2.msra.mxu0 0.0
    %1539 = vmatprep.subr.mxu0 0.0
    %1540 = vmatpush2.msra.mxu0 0.0
    %1541 = vmatprep.subr.mxu0 0.0
    %1542 = vmatpush2.msra.mxu0 0.0
    %1543 = vmatprep.subr.mxu0 0.0
    %1544 = vmatpush2.msra.mxu0 0.0
    %1545 = vmatprep.subr.mxu0 0.0
    %1546 = vmatpush2.msra.mxu0 0.0
    %1547 = vmatprep.subr.mxu0 0.0
    %1548 = vmatpush2.msra.mxu0 0.0
    %1549 = vmatprep.subr.mxu0 0.0
    %1550 = vmatpush2.msra.mxu0 0.0
    %1551 = vmatprep.subr.mxu0 0.0
    %1552 = vmatpush2.msra.mxu0 0.0
    %1553 = vmatprep.subr.mxu0 0.0
    %1554 = vmatpush2.msra.mxu0 0.0
    %1555 = vmatprep.mubr.f32.mxu0 0.0
    %1556 = vmatmul.mubr.f32.gmra.mxu0 %v282
    %v1557 = vpop.f32.mrf.mxu0
    %v1558 = vadd.f32 0.0, %v1557
    %v1559 = vpop.f32.mrf.mxu0
    %v1560 = vadd.f32 0.0, %v1559
    %1561 = vdwg.mxu0
    %1562 = vmatprep.subr.mxu0 0.0
    %1563 = vmatpush1.msra.mxu0 0.0
    %1564 = vmatprep.subr.mxu0 0.0
    %1565 = vmatpush1.msra.mxu0 0.0
    %1566 = vmatprep.subr.mxu0 0.0
    %1567 = vmatpush1.msra.mxu0 0.0
    %1568 = vmatprep.subr.mxu0 0.0
    %1569 = vmatpush1.msra.mxu0 0.0
    %1570 = vmatprep.subr.mxu0 0.0
    %1571 = vmatpush1.msra.mxu0 0.0
    %1572 = vmatprep.subr.mxu0 0.0
    %1573 = vmatpush1.msra.mxu0 0.0
    %1574 = vmatprep.subr.mxu0 0.0
    %1575 = vmatpush1.msra.mxu0 0.0
    %1576 = vmatprep.subr.mxu0 0.0
    %1577 = vmatpush1.msra.mxu0 0.0
    %1578 = vmatprep.subr.mxu0 0.0
    %1579 = vmatpush1.msra.mxu0 0.0
    %1580 = vmatprep.subr.mxu0 0.0
    %1581 = vmatpush1.msra.mxu0 0.0
    %1582 = vmatprep.subr.mxu0 0.0
    %1583 = vmatpush1.msra.mxu0 0.0
    %1584 = vmatprep.subr.mxu0 0.0
    %1585 = vmatpush1.msra.mxu0 0.0
    %1586 = vmatprep.subr.mxu0 %v172
    %1587 = vmatpush1.msra.mxu0 %v171
    %1588 = vmatprep.subr.mxu0 %v148
    %1589 = vmatpush1.msra.mxu0 %v147
    %1590 = vmatprep.subr.mxu0 %v124
    %1591 = vmatpush1.msra.mxu0 %v123
    %1592 = vmatprep.subr.mxu0 %v100
    %1593 = vmatpush1.msra.mxu0 %v99
    %1594 = vmatprep.subr.mxu0 0.0
    %1595 = vmatpush2.msra.mxu0 0.0
    %1596 = vmatprep.subr.mxu0 0.0
    %1597 = vmatpush2.msra.mxu0 0.0
    %1598 = vmatprep.subr.mxu0 0.0
    %1599 = vmatpush2.msra.mxu0 0.0
    %1600 = vmatprep.subr.mxu0 0.0
    %1601 = vmatpush2.msra.mxu0 0.0
    %1602 = vmatprep.subr.mxu0 0.0
    %1603 = vmatpush2.msra.mxu0 0.0
    %1604 = vmatprep.subr.mxu0 0.0
    %1605 = vmatpush2.msra.mxu0 0.0
    %1606 = vmatprep.subr.mxu0 0.0
    %1607 = vmatpush2.msra.mxu0 0.0
    %1608 = vmatprep.subr.mxu0 0.0
    %1609 = vmatpush2.msra.mxu0 0.0
    %1610 = vmatprep.subr.mxu0 0.0
    %1611 = vmatpush2.msra.mxu0 0.0
    %1612 = vmatprep.subr.mxu0 0.0
    %1613 = vmatpush2.msra.mxu0 0.0
    %1614 = vmatprep.subr.mxu0 0.0
    %1615 = vmatpush2.msra.mxu0 0.0
    %1616 = vmatprep.subr.mxu0 0.0
    %1617 = vmatpush2.msra.mxu0 0.0
    %1618 = vmatprep.subr.mxu0 0.0
    %1619 = vmatpush2.msra.mxu0 0.0
    %1620 = vmatprep.subr.mxu0 0.0
    %1621 = vmatpush2.msra.mxu0 0.0
    %1622 = vmatprep.subr.mxu0 0.0
    %1623 = vmatpush2.msra.mxu0 0.0
    %1624 = vmatprep.subr.mxu0 0.0
    %1625 = vmatpush2.msra.mxu0 0.0
    %1626 = vmatprep.mubr.f32.mxu0 0.0
    %1627 = vmatmul.mubr.f32.gmra.mxu0 %v282
    %v1628 = vpop.f32.mrf.mxu0
    %v1629 = vadd.f32 0.0, %v1628
    %v1630 = vpop.f32.mrf.mxu0
    %v1631 = vadd.f32 0.0, %v1630
    %1632 = vdwg.mxu0
    %1633 = vmatprep.subr.mxu0 0.0
    %1634 = vmatpush1.msra.mxu0 0.0
    %1635 = vmatprep.subr.mxu0 0.0
    %1636 = vmatpush1.msra.mxu0 0.0
    %1637 = vmatprep.subr.mxu0 0.0
    %1638 = vmatpush1.msra.mxu0 0.0
    %1639 = vmatprep.subr.mxu0 0.0
    %1640 = vmatpush1.msra.mxu0 0.0
    %1641 = vmatprep.subr.mxu0 0.0
    %1642 = vmatpush1.msra.mxu0 0.0
    %1643 = vmatprep.subr.mxu0 0.0
    %1644 = vmatpush1.msra.mxu0 0.0
    %1645 = vmatprep.subr.mxu0 0.0
    %1646 = vmatpush1.msra.mxu0 0.0
    %1647 = vmatprep.subr.mxu0 0.0
    %1648 = vmatpush1.msra.mxu0 0.0
    %1649 = vmatprep.subr.mxu0 0.0
    %1650 = vmatpush1.msra.mxu0 0.0
    %1651 = vmatprep.subr.mxu0 0.0
    %1652 = vmatpush1.msra.mxu0 0.0
    %1653 = vmatprep.subr.mxu0 0.0
    %1654 = vmatpush1.msra.mxu0 0.0
    %1655 = vmatprep.subr.mxu0 0.0
    %1656 = vmatpush1.msra.mxu0 0.0
    %1657 = vmatprep.subr.mxu0 %v174
    %1658 = vmatpush1.msra.mxu0 %v173
    %1659 = vmatprep.subr.mxu0 %v150
    %1660 = vmatpush1.msra.mxu0 %v149
    %1661 = vmatprep.subr.mxu0 %v126
    %1662 = vmatpush1.msra.mxu0 %v125
    %1663 = vmatprep.subr.mxu0 %v102
    %1664 = vmatpush1.msra.mxu0 %v101
    %1665 = vmatprep.subr.mxu0 0.0
    %1666 = vmatpush2.msra.mxu0 0.0
    %1667 = vmatprep.subr.mxu0 0.0
    %1668 = vmatpush2.msra.mxu0 0.0
    %1669 = vmatprep.subr.mxu0 0.0
    %1670 = vmatpush2.msra.mxu0 0.0
    %1671 = vmatprep.subr.mxu0 0.0
    %1672 = vmatpush2.msra.mxu0 0.0
    %1673 = vmatprep.subr.mxu0 0.0
    %1674 = vmatpush2.msra.mxu0 0.0
    %1675 = vmatprep.subr.mxu0 0.0
    %1676 = vmatpush2.msra.mxu0 0.0
    %1677 = vmatprep.subr.mxu0 0.0
    %1678 = vmatpush2.msra.mxu0 0.0
    %1679 = vmatprep.subr.mxu0 0.0
    %1680 = vmatpush2.msra.mxu0 0.0
    %1681 = vmatprep.subr.mxu0 0.0
    %1682 = vmatpush2.msra.mxu0 0.0
    %1683 = vmatprep.subr.mxu0 0.0
    %1684 = vmatpush2.msra.mxu0 0.0
    %1685 = vmatprep.subr.mxu0 0.0
    %1686 = vmatpush2.msra.mxu0 0.0
    %1687 = vmatprep.subr.mxu0 0.0
    %1688 = vmatpush2.msra.mxu0 0.0
    %1689 = vmatprep.subr.mxu0 0.0
    %1690 = vmatpush2.msra.mxu0 0.0
    %1691 = vmatprep.subr.mxu0 0.0
    %1692 = vmatpush2.msra.mxu0 0.0
    %1693 = vmatprep.subr.mxu0 0.0
    %1694 = vmatpush2.msra.mxu0 0.0
    %1695 = vmatprep.subr.mxu0 0.0
    %1696 = vmatpush2.msra.mxu0 0.0
    %1697 = vmatprep.mubr.f32.mxu0 0.0
    %1698 = vmatmul.mubr.f32.gmra.mxu0 %v282
    %v1699 = vpop.f32.mrf.mxu0
    %v1700 = vadd.f32 0.0, %v1699
    %v1701 = vpop.f32.mrf.mxu0
    %v1702 = vadd.f32 0.0, %v1701
    %1703 = vdwg.mxu0
    %1704 = vmatprep.subr.mxu0 0.0
    %1705 = vmatpush1.msra.mxu0 0.0
    %1706 = vmatprep.subr.mxu0 0.0
    %1707 = vmatpush1.msra.mxu0 0.0
    %1708 = vmatprep.subr.mxu0 0.0
    %1709 = vmatpush1.msra.mxu0 0.0
    %1710 = vmatprep.subr.mxu0 0.0
    %1711 = vmatpush1.msra.mxu0 0.0
    %1712 = vmatprep.subr.mxu0 0.0
    %1713 = vmatpush1.msra.mxu0 0.0
    %1714 = vmatprep.subr.mxu0 0.0
    %1715 = vmatpush1.msra.mxu0 0.0
    %1716 = vmatprep.subr.mxu0 0.0
    %1717 = vmatpush1.msra.mxu0 0.0
    %1718 = vmatprep.subr.mxu0 0.0
    %1719 = vmatpush1.msra.mxu0 0.0
    %1720 = vmatprep.subr.mxu0 0.0
    %1721 = vmatpush1.msra.mxu0 0.0
    %1722 = vmatprep.subr.mxu0 0.0
    %1723 = vmatpush1.msra.mxu0 0.0
    %1724 = vmatprep.subr.mxu0 0.0
    %1725 = vmatpush1.msra.mxu0 0.0
    %1726 = vmatprep.subr.mxu0 0.0
    %1727 = vmatpush1.msra.mxu0 0.0
    %1728 = vmatprep.subr.mxu0 %v176
    %1729 = vmatpush1.msra.mxu0 %v175
    %1730 = vmatprep.subr.mxu0 %v152
    %1731 = vmatpush1.msra.mxu0 %v151
    %1732 = vmatprep.subr.mxu0 %v128
    %1733 = vmatpush1.msra.mxu0 %v127
    %1734 = vmatprep.subr.mxu0 %v104
    %1735 = vmatpush1.msra.mxu0 %v103
    %1736 = vmatprep.subr.mxu0 0.0
    %1737 = vmatpush2.msra.mxu0 0.0
    %1738 = vmatprep.subr.mxu0 0.0
    %1739 = vmatpush2.msra.mxu0 0.0
    %1740 = vmatprep.subr.mxu0 0.0
    %1741 = vmatpush2.msra.mxu0 0.0
    %1742 = vmatprep.subr.mxu0 0.0
    %1743 = vmatpush2.msra.mxu0 0.0
    %1744 = vmatprep.subr.mxu0 0.0
    %1745 = vmatpush2.msra.mxu0 0.0
    %1746 = vmatprep.subr.mxu0 0.0
    %1747 = vmatpush2.msra.mxu0 0.0
    %1748 = vmatprep.subr.mxu0 0.0
    %1749 = vmatpush2.msra.mxu0 0.0
    %1750 = vmatprep.subr.mxu0 0.0
    %1751 = vmatpush2.msra.mxu0 0.0
    %1752 = vmatprep.subr.mxu0 0.0
    %1753 = vmatpush2.msra.mxu0 0.0
    %1754 = vmatprep.subr.mxu0 0.0
    %1755 = vmatpush2.msra.mxu0 0.0
    %1756 = vmatprep.subr.mxu0 0.0
    %1757 = vmatpush2.msra.mxu0 0.0
    %1758 = vmatprep.subr.mxu0 0.0
    %1759 = vmatpush2.msra.mxu0 0.0
    %1760 = vmatprep.subr.mxu0 0.0
    %1761 = vmatpush2.msra.mxu0 0.0
    %1762 = vmatprep.subr.mxu0 0.0
    %1763 = vmatpush2.msra.mxu0 0.0
    %1764 = vmatprep.subr.mxu0 0.0
    %1765 = vmatpush2.msra.mxu0 0.0
    %1766 = vmatprep.subr.mxu0 0.0
    %1767 = vmatpush2.msra.mxu0 0.0
    %1768 = vmatprep.mubr.f32.mxu0 0.0
    %1769 = vmatmul.mubr.f32.gmra.mxu0 %v282
    %v1770 = vpop.f32.mrf.mxu0
    %v1771 = vadd.f32 0.0, %v1770
    %v1772 = vpop.f32.mrf.mxu0
    %v1773 = vadd.f32 0.0, %v1772
    %1774 = vdwg.mxu0
    %1775 = vmatprep.subr.mxu0 0.0
    %1776 = vmatpush1.msra.mxu0 0.0
    %1777 = vmatprep.subr.mxu0 0.0
    %1778 = vmatpush1.msra.mxu0 0.0
    %1779 = vmatprep.subr.mxu0 0.0
    %1780 = vmatpush1.msra.mxu0 0.0
    %1781 = vmatprep.subr.mxu0 0.0
    %1782 = vmatpush1.msra.mxu0 0.0
    %1783 = vmatprep.subr.mxu0 0.0
    %1784 = vmatpush1.msra.mxu0 0.0
    %1785 = vmatprep.subr.mxu0 0.0
    %1786 = vmatpush1.msra.mxu0 0.0
    %1787 = vmatprep.subr.mxu0 0.0
    %1788 = vmatpush1.msra.mxu0 0.0
    %1789 = vmatprep.subr.mxu0 0.0
    %1790 = vmatpush1.msra.mxu0 0.0
    %1791 = vmatprep.subr.mxu0 0.0
    %1792 = vmatpush1.msra.mxu0 0.0
    %1793 = vmatprep.subr.mxu0 0.0
    %1794 = vmatpush1.msra.mxu0 0.0
    %1795 = vmatprep.subr.mxu0 0.0
    %1796 = vmatpush1.msra.mxu0 0.0
    %1797 = vmatprep.subr.mxu0 0.0
    %1798 = vmatpush1.msra.mxu0 0.0
    %1799 = vmatprep.subr.mxu0 %v178
    %1800 = vmatpush1.msra.mxu0 %v177
    %1801 = vmatprep.subr.mxu0 %v154
    %1802 = vmatpush1.msra.mxu0 %v153
    %1803 = vmatprep.subr.mxu0 %v130
    %1804 = vmatpush1.msra.mxu0 %v129
    %1805 = vmatprep.subr.mxu0 %v106
    %1806 = vmatpush1.msra.mxu0 %v105
    %1807 = vmatprep.subr.mxu0 0.0
    %1808 = vmatpush2.msra.mxu0 0.0
    %1809 = vmatprep.subr.mxu0 0.0
    %1810 = vmatpush2.msra.mxu0 0.0
    %1811 = vmatprep.subr.mxu0 0.0
    %1812 = vmatpush2.msra.mxu0 0.0
    %1813 = vmatprep.subr.mxu0 0.0
    %1814 = vmatpush2.msra.mxu0 0.0
    %1815 = vmatprep.subr.mxu0 0.0
    %1816 = vmatpush2.msra.mxu0 0.0
    %1817 = vmatprep.subr.mxu0 0.0
    %1818 = vmatpush2.msra.mxu0 0.0
    %1819 = vmatprep.subr.mxu0 0.0
    %1820 = vmatpush2.msra.mxu0 0.0
    %1821 = vmatprep.subr.mxu0 0.0
    %1822 = vmatpush2.msra.mxu0 0.0
    %1823 = vmatprep.subr.mxu0 0.0
    %1824 = vmatpush2.msra.mxu0 0.0
    %1825 = vmatprep.subr.mxu0 0.0
    %1826 = vmatpush2.msra.mxu0 0.0
    %1827 = vmatprep.subr.mxu0 0.0
    %1828 = vmatpush2.msra.mxu0 0.0
    %1829 = vmatprep.subr.mxu0 0.0
    %1830 = vmatpush2.msra.mxu0 0.0
    %1831 = vmatprep.subr.mxu0 0.0
    %1832 = vmatpush2.msra.mxu0 0.0
    %1833 = vmatprep.subr.mxu0 0.0
    %1834 = vmatpush2.msra.mxu0 0.0
    %1835 = vmatprep.subr.mxu0 0.0
    %1836 = vmatpush2.msra.mxu0 0.0
    %1837 = vmatprep.subr.mxu0 0.0
    %1838 = vmatpush2.msra.mxu0 0.0
    %1839 = vmatprep.mubr.f32.mxu0 0.0
    %1840 = vmatmul.mubr.f32.gmra.mxu0 %v282
    %v1841 = vpop.f32.mrf.mxu0
    %v1842 = vadd.f32 0.0, %v1841
    %v1843 = vpop.f32.mrf.mxu0
    %v1844 = vadd.f32 0.0, %v1843
    %1845 = vdwg.mxu0
    %1846 = vmatprep.subr.mxu0 0.0
    %1847 = vmatpush1.msra.mxu0 0.0
    %1848 = vmatprep.subr.mxu0 0.0
    %1849 = vmatpush1.msra.mxu0 0.0
    %1850 = vmatprep.subr.mxu0 0.0
    %1851 = vmatpush1.msra.mxu0 0.0
    %1852 = vmatprep.subr.mxu0 0.0
    %1853 = vmatpush1.msra.mxu0 0.0
    %1854 = vmatprep.subr.mxu0 0.0
    %1855 = vmatpush1.msra.mxu0 0.0
    %1856 = vmatprep.subr.mxu0 0.0
    %1857 = vmatpush1.msra.mxu0 0.0
    %1858 = vmatprep.subr.mxu0 0.0
    %1859 = vmatpush1.msra.mxu0 0.0
    %1860 = vmatprep.subr.mxu0 0.0
    %1861 = vmatpush1.msra.mxu0 0.0
    %1862 = vmatprep.subr.mxu0 0.0
    %1863 = vmatpush1.msra.mxu0 0.0
    %1864 = vmatprep.subr.mxu0 0.0
    %1865 = vmatpush1.msra.mxu0 0.0
    %1866 = vmatprep.subr.mxu0 0.0
    %1867 = vmatpush1.msra.mxu0 0.0
    %1868 = vmatprep.subr.mxu0 0.0
    %1869 = vmatpush1.msra.mxu0 0.0
    %1870 = vmatprep.subr.mxu0 %v180
    %1871 = vmatpush1.msra.mxu0 %v179
    %1872 = vmatprep.subr.mxu0 %v156
    %1873 = vmatpush1.msra.mxu0 %v155
    %1874 = vmatprep.subr.mxu0 %v132
    %1875 = vmatpush1.msra.mxu0 %v131
    %1876 = vmatprep.subr.mxu0 %v108
    %1877 = vmatpush1.msra.mxu0 %v107
    %1878 = vmatprep.subr.mxu0 0.0
    %1879 = vmatpush2.msra.mxu0 0.0
    %1880 = vmatprep.subr.mxu0 0.0
    %1881 = vmatpush2.msra.mxu0 0.0
    %1882 = vmatprep.subr.mxu0 0.0
    %1883 = vmatpush2.msra.mxu0 0.0
    %1884 = vmatprep.subr.mxu0 0.0
    %1885 = vmatpush2.msra.mxu0 0.0
    %1886 = vmatprep.subr.mxu0 0.0
    %1887 = vmatpush2.msra.mxu0 0.0
    %1888 = vmatprep.subr.mxu0 0.0
    %1889 = vmatpush2.msra.mxu0 0.0
    %1890 = vmatprep.subr.mxu0 0.0
    %1891 = vmatpush2.msra.mxu0 0.0
    %1892 = vmatprep.subr.mxu0 0.0
    %1893 = vmatpush2.msra.mxu0 0.0
    %1894 = vmatprep.subr.mxu0 0.0
    %1895 = vmatpush2.msra.mxu0 0.0
    %1896 = vmatprep.subr.mxu0 0.0
    %1897 = vmatpush2.msra.mxu0 0.0
    %1898 = vmatprep.subr.mxu0 0.0
    %1899 = vmatpush2.msra.mxu0 0.0
    %1900 = vmatprep.subr.mxu0 0.0
    %1901 = vmatpush2.msra.mxu0 0.0
    %1902 = vmatprep.subr.mxu0 0.0
    %1903 = vmatpush2.msra.mxu0 0.0
    %1904 = vmatprep.subr.mxu0 0.0
    %1905 = vmatpush2.msra.mxu0 0.0
    %1906 = vmatprep.subr.mxu0 0.0
    %1907 = vmatpush2.msra.mxu0 0.0
    %1908 = vmatprep.subr.mxu0 0.0
    %1909 = vmatpush2.msra.mxu0 0.0
    %1910 = vmatprep.mubr.f32.mxu0 0.0
    %1911 = vmatmul.mubr.f32.gmra.mxu0 %v282
    %v1912 = vpop.f32.mrf.mxu0
    %v1913 = vadd.f32 0.0, %v1912
    %v1914 = vpop.f32.mrf.mxu0
    %v1915 = vadd.f32 0.0, %v1914
    %1916 = vdwg.mxu0
    %1917 = vmatprep.subr.mxu0 0.0
    %1918 = vmatpush1.msra.mxu0 0.0
    %1919 = vmatprep.subr.mxu0 0.0
    %1920 = vmatpush1.msra.mxu0 0.0
    %1921 = vmatprep.subr.mxu0 0.0
    %1922 = vmatpush1.msra.mxu0 0.0
    %1923 = vmatprep.subr.mxu0 0.0
    %1924 = vmatpush1.msra.mxu0 0.0
    %1925 = vmatprep.subr.mxu0 0.0
    %1926 = vmatpush1.msra.mxu0 0.0
    %1927 = vmatprep.subr.mxu0 0.0
    %1928 = vmatpush1.msra.mxu0 0.0
    %1929 = vmatprep.subr.mxu0 0.0
    %1930 = vmatpush1.msra.mxu0 0.0
    %1931 = vmatprep.subr.mxu0 0.0
    %1932 = vmatpush1.msra.mxu0 0.0
    %1933 = vmatprep.subr.mxu0 0.0
    %1934 = vmatpush1.msra.mxu0 0.0
    %1935 = vmatprep.subr.mxu0 0.0
    %1936 = vmatpush1.msra.mxu0 0.0
    %1937 = vmatprep.subr.mxu0 0.0
    %1938 = vmatpush1.msra.mxu0 0.0
    %1939 = vmatprep.subr.mxu0 0.0
    %1940 = vmatpush1.msra.mxu0 0.0
    %1941 = vmatprep.subr.mxu0 %v182
    %1942 = vmatpush1.msra.mxu0 %v181
    %1943 = vmatprep.subr.mxu0 %v158
    %1944 = vmatpush1.msra.mxu0 %v157
    %1945 = vmatprep.subr.mxu0 %v134
    %1946 = vmatpush1.msra.mxu0 %v133
    %1947 = vmatprep.subr.mxu0 %v110
    %1948 = vmatpush1.msra.mxu0 %v109
    %1949 = vmatprep.subr.mxu0 0.0
    %1950 = vmatpush2.msra.mxu0 0.0
    %1951 = vmatprep.subr.mxu0 0.0
    %1952 = vmatpush2.msra.mxu0 0.0
    %1953 = vmatprep.subr.mxu0 0.0
    %1954 = vmatpush2.msra.mxu0 0.0
    %1955 = vmatprep.subr.mxu0 0.0
    %1956 = vmatpush2.msra.mxu0 0.0
    %1957 = vmatprep.subr.mxu0 0.0
    %1958 = vmatpush2.msra.mxu0 0.0
    %1959 = vmatprep.subr.mxu0 0.0
    %1960 = vmatpush2.msra.mxu0 0.0
    %1961 = vmatprep.subr.mxu0 0.0
    %1962 = vmatpush2.msra.mxu0 0.0
    %1963 = vmatprep.subr.mxu0 0.0
    %1964 = vmatpush2.msra.mxu0 0.0
    %1965 = vmatprep.subr.mxu0 0.0
    %1966 = vmatpush2.msra.mxu0 0.0
    %1967 = vmatprep.subr.mxu0 0.0
    %1968 = vmatpush2.msra.mxu0 0.0
    %1969 = vmatprep.subr.mxu0 0.0
    %1970 = vmatpush2.msra.mxu0 0.0
    %1971 = vmatprep.subr.mxu0 0.0
    %1972 = vmatpush2.msra.mxu0 0.0
    %1973 = vmatprep.subr.mxu0 0.0
    %1974 = vmatpush2.msra.mxu0 0.0
    %1975 = vmatprep.subr.mxu0 0.0
    %1976 = vmatpush2.msra.mxu0 0.0
    %1977 = vmatprep.subr.mxu0 0.0
    %1978 = vmatpush2.msra.mxu0 0.0
    %1979 = vmatprep.subr.mxu0 0.0
    %1980 = vmatpush2.msra.mxu0 0.0
    %1981 = vmatprep.mubr.f32.mxu0 0.0
    %1982 = vmatmul.mubr.f32.gmra.mxu0 %v282
    %v1983 = vpop.f32.mrf.mxu0
    %v1984 = vadd.f32 0.0, %v1983
    %v1985 = vpop.f32.mrf.mxu0
    %v1986 = vadd.f32 0.0, %v1985
    %1987 = vdwg.mxu0
    %v1988 = vmul.f32 %v351, %v1203
    %v1989 = vmul.f32 %v353, %v1205
    %v1990 = vmul.f32 %v422, %v1274
    %v1991 = vmul.f32 %v424, %v1276
    %v1992 = vmul.f32 %v493, %v1345
    %v1993 = vmul.f32 %v495, %v1347
    %v1994 = vmul.f32 %v564, %v1416
    %v1995 = vmul.f32 %v566, %v1418
    %v1996 = vmul.f32 %v635, %v1487
    %v1997 = vmul.f32 %v637, %v1489
    %v1998 = vmul.f32 %v706, %v1558
    %v1999 = vmul.f32 %v708, %v1560
    %v2000 = vmul.f32 %v777, %v1629
    %v2001 = vmul.f32 %v779, %v1631
    %v2002 = vmul.f32 %v848, %v1700
    %v2003 = vmul.f32 %v850, %v1702
    %v2004 = vmul.f32 %v919, %v1771
    %v2005 = vmul.f32 %v921, %v1773
    %v2006 = vmul.f32 %v990, %v1842
    %v2007 = vmul.f32 %v992, %v1844
    %v2008 = vmul.f32 %v1061, %v1913
    %v2009 = vmul.f32 %v1063, %v1915
    %v2010 = vmul.f32 %v1132, %v1984
    %v2011 = vmul.f32 %v1134, %v1986
    %v2012 = vld [vmem:[#allocation5] sm:$0xff]
    %v2013 = vld [vmem:[#allocation5 + $0x8] sm:$0xff]
    %v2014 = vld [vmem:[#allocation5 + $0x10] sm:$0xff]
    %s2015 = scalar_lea.vmem [#allocation8], 768
    %v2016 = vld [vmem:[%s2015] sm:$0xff]
    %v2017 = vld [vmem:[%s2015 + $0x8] sm:$0xff]
    %v2018 = vld [vmem:[%s2015 + $0x10] sm:$0xff]
    %v2019 = vld [vmem:[%s2015 + $0x18] sm:$0xff]
    %v2020 = vld [vmem:[%s2015 + $0x20] sm:$0xff]
    %v2021 = vld [vmem:[%s2015 + $0x28] sm:$0xff]
    %v2022 = vld [vmem:[%s2015 + $0x30] sm:$0xff]
    %v2023 = vld [vmem:[%s2015 + $0x38] sm:$0xff]
    %v2024 = vld [vmem:[%s2015 + $0x40] sm:$0xff]
    %v2025 = vld [vmem:[%s2015 + $0x48] sm:$0xff]
    %v2026 = vld [vmem:[%s2015 + $0x50] sm:$0xff]
    %v2027 = vld [vmem:[%s2015 + $0x58] sm:$0xff]
    %v2028 = vld [vmem:[%s2015 + $0x60] sm:$0xff]
    %v2029 = vld [vmem:[%s2015 + $0x68] sm:$0xff]
    %v2030 = vld [vmem:[%s2015 + $0x70] sm:$0xff]
    %v2031 = vld [vmem:[%s2015 + $0x78] sm:$0xff]
    %v2032 = vld [vmem:[%s2015 + $0x80] sm:$0xff]
    %v2033 = vld [vmem:[%s2015 + $0x88] sm:$0xff]
    %v2034 = vld [vmem:[%s2015 + $0x90] sm:$0xff]
    %v2035 = vld [vmem:[%s2015 + $0x98] sm:$0xff]
    %v2036 = vld [vmem:[%s2015 + $0xa0] sm:$0xff]
    %v2037 = vld [vmem:[%s2015 + $0xa8] sm:$0xff]
    %v2038 = vld [vmem:[%s2015 + $0xb0] sm:$0xff]
    %v2039 = vld [vmem:[%s2015 + $0xb8] sm:$0xff]
    %v2040 = vld [vmem:[%s2015 + $0xc0] sm:$0xff]
    %v2041 = vld [vmem:[%s2015 + $0xc8] sm:$0xff]
    %v2042 = vld [vmem:[%s2015 + $0xd0] sm:$0xff]
    %v2043 = vld [vmem:[%s2015 + $0xd8] sm:$0xff]
    %v2044 = vld [vmem:[%s2015 + $0xe0] sm:$0xff]
    %v2045 = vld [vmem:[%s2015 + $0xe8] sm:$0xff]
    %v2046 = vld [vmem:[%s2015 + $0xf0] sm:$0xff]
    %v2047 = vld [vmem:[%s2015 + $0xf8] sm:$0xff]
    %v2048 = vld [vmem:[%s2015 + $0x100] sm:$0xff]
    %v2049 = vld [vmem:[%s2015 + $0x108] sm:$0xff]
    %v2050 = vld [vmem:[%s2015 + $0x110] sm:$0xff]
    %v2051 = vld [vmem:[%s2015 + $0x118] sm:$0xff]
    %v2052 = vld [vmem:[%s2015 + $0x120] sm:$0xff]
    %v2053 = vld [vmem:[%s2015 + $0x128] sm:$0xff]
    %v2054 = vld [vmem:[%s2015 + $0x130] sm:$0xff]
    %v2055 = vld [vmem:[%s2015 + $0x138] sm:$0xff]
    %v2056 = vld [vmem:[%s2015 + $0x140] sm:$0xff]
    %v2057 = vld [vmem:[%s2015 + $0x148] sm:$0xff]
    %v2058 = vld [vmem:[%s2015 + $0x150] sm:$0xff]
    %v2059 = vld [vmem:[%s2015 + $0x158] sm:$0xff]
    %v2060 = vld [vmem:[%s2015 + $0x160] sm:$0xff]
    %v2061 = vld [vmem:[%s2015 + $0x168] sm:$0xff]
    %v2062 = vld [vmem:[%s2015 + $0x170] sm:$0xff]
    %v2063 = vld [vmem:[%s2015 + $0x178] sm:$0xff]
    %v2064 = vld [vmem:[%s2015 + $0x180] sm:$0xff]
    %v2065 = vld [vmem:[%s2015 + $0x188] sm:$0xff]
    %v2066 = vld [vmem:[%s2015 + $0x190] sm:$0xff]
    %v2067 = vld [vmem:[%s2015 + $0x198] sm:$0xff]
    %v2068 = vld [vmem:[%s2015 + $0x1a0] sm:$0xff]
    %v2069 = vld [vmem:[%s2015 + $0x1a8] sm:$0xff]
    %v2070 = vld [vmem:[%s2015 + $0x1b0] sm:$0xff]
    %v2071 = vld [vmem:[%s2015 + $0x1b8] sm:$0xff]
    %v2072 = vld [vmem:[%s2015 + $0x1c0] sm:$0xff]
    %v2073 = vld [vmem:[%s2015 + $0x1c8] sm:$0xff]
    %v2074 = vld [vmem:[%s2015 + $0x1d0] sm:$0xff]
    %v2075 = vld [vmem:[%s2015 + $0x1d8] sm:$0xff]
    %v2076 = vld [vmem:[%s2015 + $0x1e0] sm:$0xff]
    %v2077 = vld [vmem:[%s2015 + $0x1e8] sm:$0xff]
    %v2078 = vld [vmem:[%s2015 + $0x1f0] sm:$0xff]
    %v2079 = vld [vmem:[%s2015 + $0x1f8] sm:$0xff]
    %v2080 = vld [vmem:[%s2015 + $0x200] sm:$0xff]
    %v2081 = vld [vmem:[%s2015 + $0x208] sm:$0xff]
    %v2082 = vld [vmem:[%s2015 + $0x210] sm:$0xff]
    %v2083 = vld [vmem:[%s2015 + $0x218] sm:$0xff]
    %v2084 = vld [vmem:[%s2015 + $0x220] sm:$0xff]
    %v2085 = vld [vmem:[%s2015 + $0x228] sm:$0xff]
    %v2086 = vld [vmem:[%s2015 + $0x230] sm:$0xff]
    %v2087 = vld [vmem:[%s2015 + $0x238] sm:$0xff]
    %v2088 = vld [vmem:[%s2015 + $0x240] sm:$0xff]
    %v2089 = vld [vmem:[%s2015 + $0x248] sm:$0xff]
    %v2090 = vld [vmem:[%s2015 + $0x250] sm:$0xff]
    %v2091 = vld [vmem:[%s2015 + $0x258] sm:$0xff]
    %v2092 = vld [vmem:[%s2015 + $0x260] sm:$0xff]
    %v2093 = vld [vmem:[%s2015 + $0x268] sm:$0xff]
    %v2094 = vld [vmem:[%s2015 + $0x270] sm:$0xff]
    %v2095 = vld [vmem:[%s2015 + $0x278] sm:$0xff]
    %v2096 = vld [vmem:[%s2015 + $0x280] sm:$0xff]
    %v2097 = vld [vmem:[%s2015 + $0x288] sm:$0xff]
    %v2098 = vld [vmem:[%s2015 + $0x290] sm:$0xff]
    %v2099 = vld [vmem:[%s2015 + $0x298] sm:$0xff]
    %v2100 = vld [vmem:[%s2015 + $0x2a0] sm:$0xff]
    %v2101 = vld [vmem:[%s2015 + $0x2a8] sm:$0xff]
    %v2102 = vld [vmem:[%s2015 + $0x2b0] sm:$0xff]
    %v2103 = vld [vmem:[%s2015 + $0x2b8] sm:$0xff]
    %v2104 = vld [vmem:[%s2015 + $0x2c0] sm:$0xff]
    %v2105 = vld [vmem:[%s2015 + $0x2c8] sm:$0xff]
    %v2106 = vld [vmem:[%s2015 + $0x2d0] sm:$0xff]
    %v2107 = vld [vmem:[%s2015 + $0x2d8] sm:$0xff]
    %v2108 = vld [vmem:[%s2015 + $0x2e0] sm:$0xff]
    %v2109 = vld [vmem:[%s2015 + $0x2e8] sm:$0xff]
    %v2110 = vld [vmem:[%s2015 + $0x2f0] sm:$0xff]
    %v2111 = vld [vmem:[%s2015 + $0x2f8] sm:$0xff]
    %v2113 = vsel %vm280, %v2012, 0
    %v2116 = vsel %vm280, %v2013, 0
    %v2119 = vsel %vm280, %v2014, 0
    %2121 = vmatprep.subr.mxu0 0.0
    %2122 = vmatpush1.msra.mxu0 0.0
    %2123 = vmatprep.subr.mxu0 0.0
    %2124 = vmatpush1.msra.mxu0 0.0
    %2125 = vmatprep.subr.mxu0 0.0
    %2126 = vmatpush1.msra.mxu0 0.0
    %2127 = vmatprep.subr.mxu0 0.0
    %2128 = vmatpush1.msra.mxu0 0.0
    %2129 = vmatprep.subr.mxu0 0.0
    %2130 = vmatpush1.msra.mxu0 0.0
    %2131 = vmatprep.subr.mxu0 0.0
    %2132 = vmatpush1.msra.mxu0 0.0
    %2133 = vmatprep.subr.mxu0 0.0
    %2134 = vmatpush1.msra.mxu0 0.0
    %2135 = vmatprep.subr.mxu0 0.0
    %2136 = vmatpush1.msra.mxu0 0.0
    %2137 = vmatprep.subr.mxu0 0.0
    %2138 = vmatpush1.msra.mxu0 0.0
    %2139 = vmatprep.subr.mxu0 0.0
    %2140 = vmatpush1.msra.mxu0 0.0
    %2141 = vmatprep.subr.mxu0 0.0
    %2142 = vmatpush1.msra.mxu0 0.0
    %2143 = vmatprep.subr.mxu0 0.0
    %2144 = vmatpush1.msra.mxu0 0.0
    %2145 = vmatprep.subr.mxu0 %v2089
    %2146 = vmatpush1.msra.mxu0 %v2088
    %2147 = vmatprep.subr.mxu0 %v2065
    %2148 = vmatpush1.msra.mxu0 %v2064
    %2149 = vmatprep.subr.mxu0 %v2041
    %2150 = vmatpush1.msra.mxu0 %v2040
    %2151 = vmatprep.subr.mxu0 %v2017
    %2152 = vmatpush1.msra.mxu0 %v2016
    %2153 = vmatprep.subr.mxu0 0.0
    %2154 = vmatpush2.msra.mxu0 0.0
    %2155 = vmatprep.subr.mxu0 0.0
    %2156 = vmatpush2.msra.mxu0 0.0
    %2157 = vmatprep.subr.mxu0 0.0
    %2158 = vmatpush2.msra.mxu0 0.0
    %2159 = vmatprep.subr.mxu0 0.0
    %2160 = vmatpush2.msra.mxu0 0.0
    %2161 = vmatprep.subr.mxu0 0.0
    %2162 = vmatpush2.msra.mxu0 0.0
    %2163 = vmatprep.subr.mxu0 0.0
    %2164 = vmatpush2.msra.mxu0 0.0
    %2165 = vmatprep.subr.mxu0 0.0
    %2166 = vmatpush2.msra.mxu0 0.0
    %2167 = vmatprep.subr.mxu0 0.0
    %2168 = vmatpush2.msra.mxu0 0.0
    %2169 = vmatprep.subr.mxu0 0.0
    %2170 = vmatpush2.msra.mxu0 0.0
    %2171 = vmatprep.subr.mxu0 0.0
    %2172 = vmatpush2.msra.mxu0 0.0
    %2173 = vmatprep.subr.mxu0 0.0
    %2174 = vmatpush2.msra.mxu0 0.0
    %2175 = vmatprep.subr.mxu0 0.0
    %2176 = vmatpush2.msra.mxu0 0.0
    %2177 = vmatprep.subr.mxu0 0.0
    %2178 = vmatpush2.msra.mxu0 0.0
    %2179 = vmatprep.subr.mxu0 0.0
    %2180 = vmatpush2.msra.mxu0 0.0
    %2181 = vmatprep.subr.mxu0 0.0
    %2182 = vmatpush2.msra.mxu0 0.0
    %2183 = vmatprep.subr.mxu0 0.0
    %2184 = vmatpush2.msra.mxu0 0.0
    %2185 = vmatprep.mubr.f32.mxu0 0.0
    %2186 = vmatmul.mubr.f32.gmra.mxu0 %v2113
    %v2187 = vpop.f32.mrf.mxu0
    %v2188 = vadd.f32 0.0, %v2187
    %v2189 = vpop.f32.mrf.mxu0
    %v2190 = vadd.f32 0.0, %v2189
    %2191 = vmatprep.mubr.f32.mxu0 0.0
    %2192 = vmatmul.mubr.f32.gmra.mxu0 %v2116
    %v2193 = vpop.f32.mrf.mxu0
    %v2194 = vadd.f32 0.0, %v2193
    %v2195 = vpop.f32.mrf.mxu0
    %v2196 = vadd.f32 0.0, %v2195
    %2197 = vmatprep.mubr.f32.mxu0 0.0
    %2198 = vmatmul.mubr.f32.gmra.mxu0 %v2119
    %v2199 = vpop.f32.mrf.mxu0
    %v2200 = vadd.f32 0.0, %v2199
    %v2201 = vpop.f32.mrf.mxu0
    %v2202 = vadd.f32 0.0, %v2201
    %2203 = vdwg.mxu0
    %2204 = vmatprep.subr.mxu0 0.0
    %2205 = vmatpush1.msra.mxu0 0.0
    %2206 = vmatprep.subr.mxu0 0.0
    %2207 = vmatpush1.msra.mxu0 0.0
    %2208 = vmatprep.subr.mxu0 0.0
    %2209 = vmatpush1.msra.mxu0 0.0
    %2210 = vmatprep.subr.mxu0 0.0
    %2211 = vmatpush1.msra.mxu0 0.0
    %2212 = vmatprep.subr.mxu0 0.0
    %2213 = vmatpush1.msra.mxu0 0.0
    %2214 = vmatprep.subr.mxu0 0.0
    %2215 = vmatpush1.msra.mxu0 0.0
    %2216 = vmatprep.subr.mxu0 0.0
    %2217 = vmatpush1.msra.mxu0 0.0
    %2218 = vmatprep.subr.mxu0 0.0
    %2219 = vmatpush1.msra.mxu0 0.0
    %2220 = vmatprep.subr.mxu0 0.0
    %2221 = vmatpush1.msra.mxu0 0.0
    %2222 = vmatprep.subr.mxu0 0.0
    %2223 = vmatpush1.msra.mxu0 0.0
    %2224 = vmatprep.subr.mxu0 0.0
    %2225 = vmatpush1.msra.mxu0 0.0
    %2226 = vmatprep.subr.mxu0 0.0
    %2227 = vmatpush1.msra.mxu0 0.0
    %2228 = vmatprep.subr.mxu0 %v2091
    %2229 = vmatpush1.msra.mxu0 %v2090
    %2230 = vmatprep.subr.mxu0 %v2067
    %2231 = vmatpush1.msra.mxu0 %v2066
    %2232 = vmatprep.subr.mxu0 %v2043
    %2233 = vmatpush1.msra.mxu0 %v2042
    %2234 = vmatprep.subr.mxu0 %v2019
    %2235 = vmatpush1.msra.mxu0 %v2018
    %2236 = vmatprep.subr.mxu0 0.0
    %2237 = vmatpush2.msra.mxu0 0.0
    %2238 = vmatprep.subr.mxu0 0.0
    %2239 = vmatpush2.msra.mxu0 0.0
    %2240 = vmatprep.subr.mxu0 0.0
    %2241 = vmatpush2.msra.mxu0 0.0
    %2242 = vmatprep.subr.mxu0 0.0
    %2243 = vmatpush2.msra.mxu0 0.0
    %2244 = vmatprep.subr.mxu0 0.0
    %2245 = vmatpush2.msra.mxu0 0.0
    %2246 = vmatprep.subr.mxu0 0.0
    %2247 = vmatpush2.msra.mxu0 0.0
    %2248 = vmatprep.subr.mxu0 0.0
    %2249 = vmatpush2.msra.mxu0 0.0
    %2250 = vmatprep.subr.mxu0 0.0
    %2251 = vmatpush2.msra.mxu0 0.0
    %2252 = vmatprep.subr.mxu0 0.0
    %2253 = vmatpush2.msra.mxu0 0.0
    %2254 = vmatprep.subr.mxu0 0.0
    %2255 = vmatpush2.msra.mxu0 0.0
    %2256 = vmatprep.subr.mxu0 0.0
    %2257 = vmatpush2.msra.mxu0 0.0
    %2258 = vmatprep.subr.mxu0 0.0
    %2259 = vmatpush2.msra.mxu0 0.0
    %2260 = vmatprep.subr.mxu0 0.0
    %2261 = vmatpush2.msra.mxu0 0.0
    %2262 = vmatprep.subr.mxu0 0.0
    %2263 = vmatpush2.msra.mxu0 0.0
    %2264 = vmatprep.subr.mxu0 0.0
    %2265 = vmatpush2.msra.mxu0 0.0
    %2266 = vmatprep.subr.mxu0 0.0
    %2267 = vmatpush2.msra.mxu0 0.0
    %2268 = vmatprep.mubr.f32.mxu0 0.0
    %2269 = vmatmul.mubr.f32.gmra.mxu0 %v2113
    %v2270 = vpop.f32.mrf.mxu0
    %v2271 = vadd.f32 0.0, %v2270
    %v2272 = vpop.f32.mrf.mxu0
    %v2273 = vadd.f32 0.0, %v2272
    %2274 = vmatprep.mubr.f32.mxu0 0.0
    %2275 = vmatmul.mubr.f32.gmra.mxu0 %v2116
    %v2276 = vpop.f32.mrf.mxu0
    %v2277 = vadd.f32 0.0, %v2276
    %v2278 = vpop.f32.mrf.mxu0
    %v2279 = vadd.f32 0.0, %v2278
    %2280 = vmatprep.mubr.f32.mxu0 0.0
    %2281 = vmatmul.mubr.f32.gmra.mxu0 %v2119
    %v2282 = vpop.f32.mrf.mxu0
    %v2283 = vadd.f32 0.0, %v2282
    %v2284 = vpop.f32.mrf.mxu0
    %v2285 = vadd.f32 0.0, %v2284
    %2286 = vdwg.mxu0
    %2287 = vmatprep.subr.mxu0 0.0
    %2288 = vmatpush1.msra.mxu0 0.0
    %2289 = vmatprep.subr.mxu0 0.0
    %2290 = vmatpush1.msra.mxu0 0.0
    %2291 = vmatprep.subr.mxu0 0.0
    %2292 = vmatpush1.msra.mxu0 0.0
    %2293 = vmatprep.subr.mxu0 0.0
    %2294 = vmatpush1.msra.mxu0 0.0
    %2295 = vmatprep.subr.mxu0 0.0
    %2296 = vmatpush1.msra.mxu0 0.0
    %2297 = vmatprep.subr.mxu0 0.0
    %2298 = vmatpush1.msra.mxu0 0.0
    %2299 = vmatprep.subr.mxu0 0.0
    %2300 = vmatpush1.msra.mxu0 0.0
    %2301 = vmatprep.subr.mxu0 0.0
    %2302 = vmatpush1.msra.mxu0 0.0
    %2303 = vmatprep.subr.mxu0 0.0
    %2304 = vmatpush1.msra.mxu0 0.0
    %2305 = vmatprep.subr.mxu0 0.0
    %2306 = vmatpush1.msra.mxu0 0.0
    %2307 = vmatprep.subr.mxu0 0.0
    %2308 = vmatpush1.msra.mxu0 0.0
    %2309 = vmatprep.subr.mxu0 0.0
    %2310 = vmatpush1.msra.mxu0 0.0
    %2311 = vmatprep.subr.mxu0 %v2093
    %2312 = vmatpush1.msra.mxu0 %v2092
    %2313 = vmatprep.subr.mxu0 %v2069
    %2314 = vmatpush1.msra.mxu0 %v2068
    %2315 = vmatprep.subr.mxu0 %v2045
    %2316 = vmatpush1.msra.mxu0 %v2044
    %2317 = vmatprep.subr.mxu0 %v2021
    %2318 = vmatpush1.msra.mxu0 %v2020
    %2319 = vmatprep.subr.mxu0 0.0
    %2320 = vmatpush2.msra.mxu0 0.0
    %2321 = vmatprep.subr.mxu0 0.0
    %2322 = vmatpush2.msra.mxu0 0.0
    %2323 = vmatprep.subr.mxu0 0.0
    %2324 = vmatpush2.msra.mxu0 0.0
    %2325 = vmatprep.subr.mxu0 0.0
    %2326 = vmatpush2.msra.mxu0 0.0
    %2327 = vmatprep.subr.mxu0 0.0
    %2328 = vmatpush2.msra.mxu0 0.0
    %2329 = vmatprep.subr.mxu0 0.0
    %2330 = vmatpush2.msra.mxu0 0.0
    %2331 = vmatprep.subr.mxu0 0.0
    %2332 = vmatpush2.msra.mxu0 0.0
    %2333 = vmatprep.subr.mxu0 0.0
    %2334 = vmatpush2.msra.mxu0 0.0
    %2335 = vmatprep.subr.mxu0 0.0
    %2336 = vmatpush2.msra.mxu0 0.0
    %2337 = vmatprep.subr.mxu0 0.0
    %2338 = vmatpush2.msra.mxu0 0.0
    %2339 = vmatprep.subr.mxu0 0.0
    %2340 = vmatpush2.msra.mxu0 0.0
    %2341 = vmatprep.subr.mxu0 0.0
    %2342 = vmatpush2.msra.mxu0 0.0
    %2343 = vmatprep.subr.mxu0 0.0
    %2344 = vmatpush2.msra.mxu0 0.0
    %2345 = vmatprep.subr.mxu0 0.0
    %2346 = vmatpush2.msra.mxu0 0.0
    %2347 = vmatprep.subr.mxu0 0.0
    %2348 = vmatpush2.msra.mxu0 0.0
    %2349 = vmatprep.subr.mxu0 0.0
    %2350 = vmatpush2.msra.mxu0 0.0
    %2351 = vmatprep.mubr.f32.mxu0 0.0
    %2352 = vmatmul.mubr.f32.gmra.mxu0 %v2113
    %v2353 = vpop.f32.mrf.mxu0
    %v2354 = vadd.f32 0.0, %v2353
    %v2355 = vpop.f32.mrf.mxu0
    %v2356 = vadd.f32 0.0, %v2355
    %2357 = vmatprep.mubr.f32.mxu0 0.0
    %2358 = vmatmul.mubr.f32.gmra.mxu0 %v2116
    %v2359 = vpop.f32.mrf.mxu0
    %v2360 = vadd.f32 0.0, %v2359
    %v2361 = vpop.f32.mrf.mxu0
    %v2362 = vadd.f32 0.0, %v2361
    %2363 = vmatprep.mubr.f32.mxu0 0.0
    %2364 = vmatmul.mubr.f32.gmra.mxu0 %v2119
    %v2365 = vpop.f32.mrf.mxu0
    %v2366 = vadd.f32 0.0, %v2365
    %v2367 = vpop.f32.mrf.mxu0
    %v2368 = vadd.f32 0.0, %v2367
    %2369 = vdwg.mxu0
    %2370 = vmatprep.subr.mxu0 0.0
    %2371 = vmatpush1.msra.mxu0 0.0
    %2372 = vmatprep.subr.mxu0 0.0
    %2373 = vmatpush1.msra.mxu0 0.0
    %2374 = vmatprep.subr.mxu0 0.0
    %2375 = vmatpush1.msra.mxu0 0.0
    %2376 = vmatprep.subr.mxu0 0.0
    %2377 = vmatpush1.msra.mxu0 0.0
    %2378 = vmatprep.subr.mxu0 0.0
    %2379 = vmatpush1.msra.mxu0 0.0
    %2380 = vmatprep.subr.mxu0 0.0
    %2381 = vmatpush1.msra.mxu0 0.0
    %2382 = vmatprep.subr.mxu0 0.0
    %2383 = vmatpush1.msra.mxu0 0.0
    %2384 = vmatprep.subr.mxu0 0.0
    %2385 = vmatpush1.msra.mxu0 0.0
    %2386 = vmatprep.subr.mxu0 0.0
    %2387 = vmatpush1.msra.mxu0 0.0
    %2388 = vmatprep.subr.mxu0 0.0
    %2389 = vmatpush1.msra.mxu0 0.0
    %2390 = vmatprep.subr.mxu0 0.0
    %2391 = vmatpush1.msra.mxu0 0.0
    %2392 = vmatprep.subr.mxu0 0.0
    %2393 = vmatpush1.msra.mxu0 0.0
    %2394 = vmatprep.subr.mxu0 %v2095
    %2395 = vmatpush1.msra.mxu0 %v2094
    %2396 = vmatprep.subr.mxu0 %v2071
    %2397 = vmatpush1.msra.mxu0 %v2070
    %2398 = vmatprep.subr.mxu0 %v2047
    %2399 = vmatpush1.msra.mxu0 %v2046
    %2400 = vmatprep.subr.mxu0 %v2023
    %2401 = vmatpush1.msra.mxu0 %v2022
    %2402 = vmatprep.subr.mxu0 0.0
    %2403 = vmatpush2.msra.mxu0 0.0
    %2404 = vmatprep.subr.mxu0 0.0
    %2405 = vmatpush2.msra.mxu0 0.0
    %2406 = vmatprep.subr.mxu0 0.0
    %2407 = vmatpush2.msra.mxu0 0.0
    %2408 = vmatprep.subr.mxu0 0.0
    %2409 = vmatpush2.msra.mxu0 0.0
    %2410 = vmatprep.subr.mxu0 0.0
    %2411 = vmatpush2.msra.mxu0 0.0
    %2412 = vmatprep.subr.mxu0 0.0
    %2413 = vmatpush2.msra.mxu0 0.0
    %2414 = vmatprep.subr.mxu0 0.0
    %2415 = vmatpush2.msra.mxu0 0.0
    %2416 = vmatprep.subr.mxu0 0.0
    %2417 = vmatpush2.msra.mxu0 0.0
    %2418 = vmatprep.subr.mxu0 0.0
    %2419 = vmatpush2.msra.mxu0 0.0
    %2420 = vmatprep.subr.mxu0 0.0
    %2421 = vmatpush2.msra.mxu0 0.0
    %2422 = vmatprep.subr.mxu0 0.0
    %2423 = vmatpush2.msra.mxu0 0.0
    %2424 = vmatprep.subr.mxu0 0.0
    %2425 = vmatpush2.msra.mxu0 0.0
    %2426 = vmatprep.subr.mxu0 0.0
    %2427 = vmatpush2.msra.mxu0 0.0
    %2428 = vmatprep.subr.mxu0 0.0
    %2429 = vmatpush2.msra.mxu0 0.0
    %2430 = vmatprep.subr.mxu0 0.0
    %2431 = vmatpush2.msra.mxu0 0.0
    %2432 = vmatprep.subr.mxu0 0.0
    %2433 = vmatpush2.msra.mxu0 0.0
    %2434 = vmatprep.mubr.f32.mxu0 0.0
    %2435 = vmatmul.mubr.f32.gmra.mxu0 %v2113
    %v2436 = vpop.f32.mrf.mxu0
    %v2437 = vadd.f32 0.0, %v2436
    %v2438 = vpop.f32.mrf.mxu0
    %v2439 = vadd.f32 0.0, %v2438
    %2440 = vmatprep.mubr.f32.mxu0 0.0
    %2441 = vmatmul.mubr.f32.gmra.mxu0 %v2116
    %v2442 = vpop.f32.mrf.mxu0
    %v2443 = vadd.f32 0.0, %v2442
    %v2444 = vpop.f32.mrf.mxu0
    %v2445 = vadd.f32 0.0, %v2444
    %2446 = vmatprep.mubr.f32.mxu0 0.0
    %2447 = vmatmul.mubr.f32.gmra.mxu0 %v2119
    %v2448 = vpop.f32.mrf.mxu0
    %v2449 = vadd.f32 0.0, %v2448
    %v2450 = vpop.f32.mrf.mxu0
    %v2451 = vadd.f32 0.0, %v2450
    %2452 = vdwg.mxu0
    %2453 = vmatprep.subr.mxu0 0.0
    %2454 = vmatpush1.msra.mxu0 0.0
    %2455 = vmatprep.subr.mxu0 0.0
    %2456 = vmatpush1.msra.mxu0 0.0
    %2457 = vmatprep.subr.mxu0 0.0
    %2458 = vmatpush1.msra.mxu0 0.0
    %2459 = vmatprep.subr.mxu0 0.0
    %2460 = vmatpush1.msra.mxu0 0.0
    %2461 = vmatprep.subr.mxu0 0.0
    %2462 = vmatpush1.msra.mxu0 0.0
    %2463 = vmatprep.subr.mxu0 0.0
    %2464 = vmatpush1.msra.mxu0 0.0
    %2465 = vmatprep.subr.mxu0 0.0
    %2466 = vmatpush1.msra.mxu0 0.0
    %2467 = vmatprep.subr.mxu0 0.0
    %2468 = vmatpush1.msra.mxu0 0.0
    %2469 = vmatprep.subr.mxu0 0.0
    %2470 = vmatpush1.msra.mxu0 0.0
    %2471 = vmatprep.subr.mxu0 0.0
    %2472 = vmatpush1.msra.mxu0 0.0
    %2473 = vmatprep.subr.mxu0 0.0
    %2474 = vmatpush1.msra.mxu0 0.0
    %2475 = vmatprep.subr.mxu0 0.0
    %2476 = vmatpush1.msra.mxu0 0.0
    %2477 = vmatprep.subr.mxu0 %v2097
    %2478 = vmatpush1.msra.mxu0 %v2096
    %2479 = vmatprep.subr.mxu0 %v2073
    %2480 = vmatpush1.msra.mxu0 %v2072
    %2481 = vmatprep.subr.mxu0 %v2049
    %2482 = vmatpush1.msra.mxu0 %v2048
    %2483 = vmatprep.subr.mxu0 %v2025
    %2484 = vmatpush1.msra.mxu0 %v2024
    %2485 = vmatprep.subr.mxu0 0.0
    %2486 = vmatpush2.msra.mxu0 0.0
    %2487 = vmatprep.subr.mxu0 0.0
    %2488 = vmatpush2.msra.mxu0 0.0
    %2489 = vmatprep.subr.mxu0 0.0
    %2490 = vmatpush2.msra.mxu0 0.0
    %2491 = vmatprep.subr.mxu0 0.0
    %2492 = vmatpush2.msra.mxu0 0.0
    %2493 = vmatprep.subr.mxu0 0.0
    %2494 = vmatpush2.msra.mxu0 0.0
    %2495 = vmatprep.subr.mxu0 0.0
    %2496 = vmatpush2.msra.mxu0 0.0
    %2497 = vmatprep.subr.mxu0 0.0
    %2498 = vmatpush2.msra.mxu0 0.0
    %2499 = vmatprep.subr.mxu0 0.0
    %2500 = vmatpush2.msra.mxu0 0.0
    %2501 = vmatprep.subr.mxu0 0.0
    %2502 = vmatpush2.msra.mxu0 0.0
    %2503 = vmatprep.subr.mxu0 0.0
    %2504 = vmatpush2.msra.mxu0 0.0
    %2505 = vmatprep.subr.mxu0 0.0
    %2506 = vmatpush2.msra.mxu0 0.0
    %2507 = vmatprep.subr.mxu0 0.0
    %2508 = vmatpush2.msra.mxu0 0.0
    %2509 = vmatprep.subr.mxu0 0.0
    %2510 = vmatpush2.msra.mxu0 0.0
    %2511 = vmatprep.subr.mxu0 0.0
    %2512 = vmatpush2.msra.mxu0 0.0
    %2513 = vmatprep.subr.mxu0 0.0
    %2514 = vmatpush2.msra.mxu0 0.0
    %2515 = vmatprep.subr.mxu0 0.0
    %2516 = vmatpush2.msra.mxu0 0.0
    %2517 = vmatprep.mubr.f32.mxu0 0.0
    %2518 = vmatmul.mubr.f32.gmra.mxu0 %v2113
    %v2519 = vpop.f32.mrf.mxu0
    %v2520 = vadd.f32 0.0, %v2519
    %v2521 = vpop.f32.mrf.mxu0
    %v2522 = vadd.f32 0.0, %v2521
    %2523 = vmatprep.mubr.f32.mxu0 0.0
    %2524 = vmatmul.mubr.f32.gmra.mxu0 %v2116
    %v2525 = vpop.f32.mrf.mxu0
    %v2526 = vadd.f32 0.0, %v2525
    %v2527 = vpop.f32.mrf.mxu0
    %v2528 = vadd.f32 0.0, %v2527
    %2529 = vmatprep.mubr.f32.mxu0 0.0
    %2530 = vmatmul.mubr.f32.gmra.mxu0 %v2119
    %v2531 = vpop.f32.mrf.mxu0
    %v2532 = vadd.f32 0.0, %v2531
    %v2533 = vpop.f32.mrf.mxu0
    %v2534 = vadd.f32 0.0, %v2533
    %2535 = vdwg.mxu0
    %2536 = vmatprep.subr.mxu0 0.0
    %2537 = vmatpush1.msra.mxu0 0.0
    %2538 = vmatprep.subr.mxu0 0.0
    %2539 = vmatpush1.msra.mxu0 0.0
    %2540 = vmatprep.subr.mxu0 0.0
    %2541 = vmatpush1.msra.mxu0 0.0
    %2542 = vmatprep.subr.mxu0 0.0
    %2543 = vmatpush1.msra.mxu0 0.0
    %2544 = vmatprep.subr.mxu0 0.0
    %2545 = vmatpush1.msra.mxu0 0.0
    %2546 = vmatprep.subr.mxu0 0.0
    %2547 = vmatpush1.msra.mxu0 0.0
    %2548 = vmatprep.subr.mxu0 0.0
    %2549 = vmatpush1.msra.mxu0 0.0
    %2550 = vmatprep.subr.mxu0 0.0
    %2551 = vmatpush1.msra.mxu0 0.0
    %2552 = vmatprep.subr.mxu0 0.0
    %2553 = vmatpush1.msra.mxu0 0.0
    %2554 = vmatprep.subr.mxu0 0.0
    %2555 = vmatpush1.msra.mxu0 0.0
    %2556 = vmatprep.subr.mxu0 0.0
    %2557 = vmatpush1.msra.mxu0 0.0
    %2558 = vmatprep.subr.mxu0 0.0
    %2559 = vmatpush1.msra.mxu0 0.0
    %2560 = vmatprep.subr.mxu0 %v2099
    %2561 = vmatpush1.msra.mxu0 %v2098
    %2562 = vmatprep.subr.mxu0 %v2075
    %2563 = vmatpush1.msra.mxu0 %v2074
    %2564 = vmatprep.subr.mxu0 %v2051
    %2565 = vmatpush1.msra.mxu0 %v2050
    %2566 = vmatprep.subr.mxu0 %v2027
    %2567 = vmatpush1.msra.mxu0 %v2026
    %2568 = vmatprep.subr.mxu0 0.0
    %2569 = vmatpush2.msra.mxu0 0.0
    %2570 = vmatprep.subr.mxu0 0.0
    %2571 = vmatpush2.msra.mxu0 0.0
    %2572 = vmatprep.subr.mxu0 0.0
    %2573 = vmatpush2.msra.mxu0 0.0
    %2574 = vmatprep.subr.mxu0 0.0
    %2575 = vmatpush2.msra.mxu0 0.0
    %2576 = vmatprep.subr.mxu0 0.0
    %2577 = vmatpush2.msra.mxu0 0.0
    %2578 = vmatprep.subr.mxu0 0.0
    %2579 = vmatpush2.msra.mxu0 0.0
    %2580 = vmatprep.subr.mxu0 0.0
    %2581 = vmatpush2.msra.mxu0 0.0
    %2582 = vmatprep.subr.mxu0 0.0
    %2583 = vmatpush2.msra.mxu0 0.0
    %2584 = vmatprep.subr.mxu0 0.0
    %2585 = vmatpush2.msra.mxu0 0.0
    %2586 = vmatprep.subr.mxu0 0.0
    %2587 = vmatpush2.msra.mxu0 0.0
    %2588 = vmatprep.subr.mxu0 0.0
    %2589 = vmatpush2.msra.mxu0 0.0
    %2590 = vmatprep.subr.mxu0 0.0
    %2591 = vmatpush2.msra.mxu0 0.0
    %2592 = vmatprep.subr.mxu0 0.0
    %2593 = vmatpush2.msra.mxu0 0.0
    %2594 = vmatprep.subr.mxu0 0.0
    %2595 = vmatpush2.msra.mxu0 0.0
    %2596 = vmatprep.subr.mxu0 0.0
    %2597 = vmatpush2.msra.mxu0 0.0
    %2598 = vmatprep.subr.mxu0 0.0
    %2599 = vmatpush2.msra.mxu0 0.0
    %2600 = vmatprep.mubr.f32.mxu0 0.0
    %2601 = vmatmul.mubr.f32.gmra.mxu0 %v2113
    %v2602 = vpop.f32.mrf.mxu0
    %v2603 = vadd.f32 0.0, %v2602
    %v2604 = vpop.f32.mrf.mxu0
    %v2605 = vadd.f32 0.0, %v2604
    %2606 = vmatprep.mubr.f32.mxu0 0.0
    %2607 = vmatmul.mubr.f32.gmra.mxu0 %v2116
    %v2608 = vpop.f32.mrf.mxu0
    %v2609 = vadd.f32 0.0, %v2608
    %v2610 = vpop.f32.mrf.mxu0
    %v2611 = vadd.f32 0.0, %v2610
    %2612 = vmatprep.mubr.f32.mxu0 0.0
    %2613 = vmatmul.mubr.f32.gmra.mxu0 %v2119
    %v2614 = vpop.f32.mrf.mxu0
    %v2615 = vadd.f32 0.0, %v2614
    %v2616 = vpop.f32.mrf.mxu0
    %v2617 = vadd.f32 0.0, %v2616
    %2618 = vdwg.mxu0
    %2619 = vmatprep.subr.mxu0 0.0
    %2620 = vmatpush1.msra.mxu0 0.0
    %2621 = vmatprep.subr.mxu0 0.0
    %2622 = vmatpush1.msra.mxu0 0.0
    %2623 = vmatprep.subr.mxu0 0.0
    %2624 = vmatpush1.msra.mxu0 0.0
    %2625 = vmatprep.subr.mxu0 0.0
    %2626 = vmatpush1.msra.mxu0 0.0
    %2627 = vmatprep.subr.mxu0 0.0
    %2628 = vmatpush1.msra.mxu0 0.0
    %2629 = vmatprep.subr.mxu0 0.0
    %2630 = vmatpush1.msra.mxu0 0.0
    %2631 = vmatprep.subr.mxu0 0.0
    %2632 = vmatpush1.msra.mxu0 0.0
    %2633 = vmatprep.subr.mxu0 0.0
    %2634 = vmatpush1.msra.mxu0 0.0
    %2635 = vmatprep.subr.mxu0 0.0
    %2636 = vmatpush1.msra.mxu0 0.0
    %2637 = vmatprep.subr.mxu0 0.0
    %2638 = vmatpush1.msra.mxu0 0.0
    %2639 = vmatprep.subr.mxu0 0.0
    %2640 = vmatpush1.msra.mxu0 0.0
    %2641 = vmatprep.subr.mxu0 0.0
    %2642 = vmatpush1.msra.mxu0 0.0
    %2643 = vmatprep.subr.mxu0 %v2101
    %2644 = vmatpush1.msra.mxu0 %v2100
    %2645 = vmatprep.subr.mxu0 %v2077
    %2646 = vmatpush1.msra.mxu0 %v2076
    %2647 = vmatprep.subr.mxu0 %v2053
    %2648 = vmatpush1.msra.mxu0 %v2052
    %2649 = vmatprep.subr.mxu0 %v2029
    %2650 = vmatpush1.msra.mxu0 %v2028
    %2651 = vmatprep.subr.mxu0 0.0
    %2652 = vmatpush2.msra.mxu0 0.0
    %2653 = vmatprep.subr.mxu0 0.0
    %2654 = vmatpush2.msra.mxu0 0.0
    %2655 = vmatprep.subr.mxu0 0.0
    %2656 = vmatpush2.msra.mxu0 0.0
    %2657 = vmatprep.subr.mxu0 0.0
    %2658 = vmatpush2.msra.mxu0 0.0
    %2659 = vmatprep.subr.mxu0 0.0
    %2660 = vmatpush2.msra.mxu0 0.0
    %2661 = vmatprep.subr.mxu0 0.0
    %2662 = vmatpush2.msra.mxu0 0.0
    %2663 = vmatprep.subr.mxu0 0.0
    %2664 = vmatpush2.msra.mxu0 0.0
    %2665 = vmatprep.subr.mxu0 0.0
    %2666 = vmatpush2.msra.mxu0 0.0
    %2667 = vmatprep.subr.mxu0 0.0
    %2668 = vmatpush2.msra.mxu0 0.0
    %2669 = vmatprep.subr.mxu0 0.0
    %2670 = vmatpush2.msra.mxu0 0.0
    %2671 = vmatprep.subr.mxu0 0.0
    %2672 = vmatpush2.msra.mxu0 0.0
    %2673 = vmatprep.subr.mxu0 0.0
    %2674 = vmatpush2.msra.mxu0 0.0
    %2675 = vmatprep.subr.mxu0 0.0
    %2676 = vmatpush2.msra.mxu0 0.0
    %2677 = vmatprep.subr.mxu0 0.0
    %2678 = vmatpush2.msra.mxu0 0.0
    %2679 = vmatprep.subr.mxu0 0.0
    %2680 = vmatpush2.msra.mxu0 0.0
    %2681 = vmatprep.subr.mxu0 0.0
    %2682 = vmatpush2.msra.mxu0 0.0
    %2683 = vmatprep.mubr.f32.mxu0 0.0
    %2684 = vmatmul.mubr.f32.gmra.mxu0 %v2113
    %v2685 = vpop.f32.mrf.mxu0
    %v2686 = vadd.f32 0.0, %v2685
    %v2687 = vpop.f32.mrf.mxu0
    %v2688 = vadd.f32 0.0, %v2687
    %2689 = vmatprep.mubr.f32.mxu0 0.0
    %2690 = vmatmul.mubr.f32.gmra.mxu0 %v2116
    %v2691 = vpop.f32.mrf.mxu0
    %v2692 = vadd.f32 0.0, %v2691
    %v2693 = vpop.f32.mrf.mxu0
    %v2694 = vadd.f32 0.0, %v2693
    %2695 = vmatprep.mubr.f32.mxu0 0.0
    %2696 = vmatmul.mubr.f32.gmra.mxu0 %v2119
    %v2697 = vpop.f32.mrf.mxu0
    %v2698 = vadd.f32 0.0, %v2697
    %v2699 = vpop.f32.mrf.mxu0
    %v2700 = vadd.f32 0.0, %v2699
    %2701 = vdwg.mxu0
    %2702 = vmatprep.subr.mxu0 0.0
    %2703 = vmatpush1.msra.mxu0 0.0
    %2704 = vmatprep.subr.mxu0 0.0
    %2705 = vmatpush1.msra.mxu0 0.0
    %2706 = vmatprep.subr.mxu0 0.0
    %2707 = vmatpush1.msra.mxu0 0.0
    %2708 = vmatprep.subr.mxu0 0.0
    %2709 = vmatpush1.msra.mxu0 0.0
    %2710 = vmatprep.subr.mxu0 0.0
    %2711 = vmatpush1.msra.mxu0 0.0
    %2712 = vmatprep.subr.mxu0 0.0
    %2713 = vmatpush1.msra.mxu0 0.0
    %2714 = vmatprep.subr.mxu0 0.0
    %2715 = vmatpush1.msra.mxu0 0.0
    %2716 = vmatprep.subr.mxu0 0.0
    %2717 = vmatpush1.msra.mxu0 0.0
    %2718 = vmatprep.subr.mxu0 0.0
    %2719 = vmatpush1.msra.mxu0 0.0
    %2720 = vmatprep.subr.mxu0 0.0
    %2721 = vmatpush1.msra.mxu0 0.0
    %2722 = vmatprep.subr.mxu0 0.0
    %2723 = vmatpush1.msra.mxu0 0.0
    %2724 = vmatprep.subr.mxu0 0.0
    %2725 = vmatpush1.msra.mxu0 0.0
    %2726 = vmatprep.subr.mxu0 %v2103
    %2727 = vmatpush1.msra.mxu0 %v2102
    %2728 = vmatprep.subr.mxu0 %v2079
    %2729 = vmatpush1.msra.mxu0 %v2078
    %2730 = vmatprep.subr.mxu0 %v2055
    %2731 = vmatpush1.msra.mxu0 %v2054
    %2732 = vmatprep.subr.mxu0 %v2031
    %2733 = vmatpush1.msra.mxu0 %v2030
    %2734 = vmatprep.subr.mxu0 0.0
    %2735 = vmatpush2.msra.mxu0 0.0
    %2736 = vmatprep.subr.mxu0 0.0
    %2737 = vmatpush2.msra.mxu0 0.0
    %2738 = vmatprep.subr.mxu0 0.0
    %2739 = vmatpush2.msra.mxu0 0.0
    %2740 = vmatprep.subr.mxu0 0.0
    %2741 = vmatpush2.msra.mxu0 0.0
    %2742 = vmatprep.subr.mxu0 0.0
    %2743 = vmatpush2.msra.mxu0 0.0
    %2744 = vmatprep.subr.mxu0 0.0
    %2745 = vmatpush2.msra.mxu0 0.0
    %2746 = vmatprep.subr.mxu0 0.0
    %2747 = vmatpush2.msra.mxu0 0.0
    %2748 = vmatprep.subr.mxu0 0.0
    %2749 = vmatpush2.msra.mxu0 0.0
    %2750 = vmatprep.subr.mxu0 0.0
    %2751 = vmatpush2.msra.mxu0 0.0
    %2752 = vmatprep.subr.mxu0 0.0
    %2753 = vmatpush2.msra.mxu0 0.0
    %2754 = vmatprep.subr.mxu0 0.0
    %2755 = vmatpush2.msra.mxu0 0.0
    %2756 = vmatprep.subr.mxu0 0.0
    %2757 = vmatpush2.msra.mxu0 0.0
    %2758 = vmatprep.subr.mxu0 0.0
    %2759 = vmatpush2.msra.mxu0 0.0
    %2760 = vmatprep.subr.mxu0 0.0
    %2761 = vmatpush2.msra.mxu0 0.0
    %2762 = vmatprep.subr.mxu0 0.0
    %2763 = vmatpush2.msra.mxu0 0.0
    %2764 = vmatprep.subr.mxu0 0.0
    %2765 = vmatpush2.msra.mxu0 0.0
    %2766 = vmatprep.mubr.f32.mxu0 0.0
    %2767 = vmatmul.mubr.f32.gmra.mxu0 %v2113
    %v2768 = vpop.f32.mrf.mxu0
    %v2769 = vadd.f32 0.0, %v2768
    %v2770 = vpop.f32.mrf.mxu0
    %v2771 = vadd.f32 0.0, %v2770
    %2772 = vmatprep.mubr.f32.mxu0 0.0
    %2773 = vmatmul.mubr.f32.gmra.mxu0 %v2116
    %v2774 = vpop.f32.mrf.mxu0
    %v2775 = vadd.f32 0.0, %v2774
    %v2776 = vpop.f32.mrf.mxu0
    %v2777 = vadd.f32 0.0, %v2776
    %2778 = vmatprep.mubr.f32.mxu0 0.0
    %2779 = vmatmul.mubr.f32.gmra.mxu0 %v2119
    %v2780 = vpop.f32.mrf.mxu0
    %v2781 = vadd.f32 0.0, %v2780
    %v2782 = vpop.f32.mrf.mxu0
    %v2783 = vadd.f32 0.0, %v2782
    %2784 = vdwg.mxu0
    %2785 = vmatprep.subr.mxu0 0.0
    %2786 = vmatpush1.msra.mxu0 0.0
    %2787 = vmatprep.subr.mxu0 0.0
    %2788 = vmatpush1.msra.mxu0 0.0
    %2789 = vmatprep.subr.mxu0 0.0
    %2790 = vmatpush1.msra.mxu0 0.0
    %2791 = vmatprep.subr.mxu0 0.0
    %2792 = vmatpush1.msra.mxu0 0.0
    %2793 = vmatprep.subr.mxu0 0.0
    %2794 = vmatpush1.msra.mxu0 0.0
    %2795 = vmatprep.subr.mxu0 0.0
    %2796 = vmatpush1.msra.mxu0 0.0
    %2797 = vmatprep.subr.mxu0 0.0
    %2798 = vmatpush1.msra.mxu0 0.0
    %2799 = vmatprep.subr.mxu0 0.0
    %2800 = vmatpush1.msra.mxu0 0.0
    %2801 = vmatprep.subr.mxu0 0.0
    %2802 = vmatpush1.msra.mxu0 0.0
    %2803 = vmatprep.subr.mxu0 0.0
    %2804 = vmatpush1.msra.mxu0 0.0
    %2805 = vmatprep.subr.mxu0 0.0
    %2806 = vmatpush1.msra.mxu0 0.0
    %2807 = vmatprep.subr.mxu0 0.0
    %2808 = vmatpush1.msra.mxu0 0.0
    %2809 = vmatprep.subr.mxu0 %v2105
    %2810 = vmatpush1.msra.mxu0 %v2104
    %2811 = vmatprep.subr.mxu0 %v2081
    %2812 = vmatpush1.msra.mxu0 %v2080
    %2813 = vmatprep.subr.mxu0 %v2057
    %2814 = vmatpush1.msra.mxu0 %v2056
    %2815 = vmatprep.subr.mxu0 %v2033
    %2816 = vmatpush1.msra.mxu0 %v2032
    %2817 = vmatprep.subr.mxu0 0.0
    %2818 = vmatpush2.msra.mxu0 0.0
    %2819 = vmatprep.subr.mxu0 0.0
    %2820 = vmatpush2.msra.mxu0 0.0
    %2821 = vmatprep.subr.mxu0 0.0
    %2822 = vmatpush2.msra.mxu0 0.0
    %2823 = vmatprep.subr.mxu0 0.0
    %2824 = vmatpush2.msra.mxu0 0.0
    %2825 = vmatprep.subr.mxu0 0.0
    %2826 = vmatpush2.msra.mxu0 0.0
    %2827 = vmatprep.subr.mxu0 0.0
    %2828 = vmatpush2.msra.mxu0 0.0
    %2829 = vmatprep.subr.mxu0 0.0
    %2830 = vmatpush2.msra.mxu0 0.0
    %2831 = vmatprep.subr.mxu0 0.0
    %2832 = vmatpush2.msra.mxu0 0.0
    %2833 = vmatprep.subr.mxu0 0.0
    %2834 = vmatpush2.msra.mxu0 0.0
    %2835 = vmatprep.subr.mxu0 0.0
    %2836 = vmatpush2.msra.mxu0 0.0
    %2837 = vmatprep.subr.mxu0 0.0
    %2838 = vmatpush2.msra.mxu0 0.0
    %2839 = vmatprep.subr.mxu0 0.0
    %2840 = vmatpush2.msra.mxu0 0.0
    %2841 = vmatprep.subr.mxu0 0.0
    %2842 = vmatpush2.msra.mxu0 0.0
    %2843 = vmatprep.subr.mxu0 0.0
    %2844 = vmatpush2.msra.mxu0 0.0
    %2845 = vmatprep.subr.mxu0 0.0
    %2846 = vmatpush2.msra.mxu0 0.0
    %2847 = vmatprep.subr.mxu0 0.0
    %2848 = vmatpush2.msra.mxu0 0.0
    %2849 = vmatprep.mubr.f32.mxu0 0.0
    %2850 = vmatmul.mubr.f32.gmra.mxu0 %v2113
    %v2851 = vpop.f32.mrf.mxu0
    %v2852 = vadd.f32 0.0, %v2851
    %v2853 = vpop.f32.mrf.mxu0
    %v2854 = vadd.f32 0.0, %v2853
    %2855 = vmatprep.mubr.f32.mxu0 0.0
    %2856 = vmatmul.mubr.f32.gmra.mxu0 %v2116
    %v2857 = vpop.f32.mrf.mxu0
    %v2858 = vadd.f32 0.0, %v2857
    %v2859 = vpop.f32.mrf.mxu0
    %v2860 = vadd.f32 0.0, %v2859
    %2861 = vmatprep.mubr.f32.mxu0 0.0
    %2862 = vmatmul.mubr.f32.gmra.mxu0 %v2119
    %v2863 = vpop.f32.mrf.mxu0
    %v2864 = vadd.f32 0.0, %v2863
    %v2865 = vpop.f32.mrf.mxu0
    %v2866 = vadd.f32 0.0, %v2865
    %2867 = vdwg.mxu0
    %2868 = vmatprep.subr.mxu0 0.0
    %2869 = vmatpush1.msra.mxu0 0.0
    %2870 = vmatprep.subr.mxu0 0.0
    %2871 = vmatpush1.msra.mxu0 0.0
    %2872 = vmatprep.subr.mxu0 0.0
    %2873 = vmatpush1.msra.mxu0 0.0
    %2874 = vmatprep.subr.mxu0 0.0
    %2875 = vmatpush1.msra.mxu0 0.0
    %2876 = vmatprep.subr.mxu0 0.0
    %2877 = vmatpush1.msra.mxu0 0.0
    %2878 = vmatprep.subr.mxu0 0.0
    %2879 = vmatpush1.msra.mxu0 0.0
    %2880 = vmatprep.subr.mxu0 0.0
    %2881 = vmatpush1.msra.mxu0 0.0
    %2882 = vmatprep.subr.mxu0 0.0
    %2883 = vmatpush1.msra.mxu0 0.0
    %2884 = vmatprep.subr.mxu0 0.0
    %2885 = vmatpush1.msra.mxu0 0.0
    %2886 = vmatprep.subr.mxu0 0.0
    %2887 = vmatpush1.msra.mxu0 0.0
    %2888 = vmatprep.subr.mxu0 0.0
    %2889 = vmatpush1.msra.mxu0 0.0
    %2890 = vmatprep.subr.mxu0 0.0
    %2891 = vmatpush1.msra.mxu0 0.0
    %2892 = vmatprep.subr.mxu0 %v2107
    %2893 = vmatpush1.msra.mxu0 %v2106
    %2894 = vmatprep.subr.mxu0 %v2083
    %2895 = vmatpush1.msra.mxu0 %v2082
    %2896 = vmatprep.subr.mxu0 %v2059
    %2897 = vmatpush1.msra.mxu0 %v2058
    %2898 = vmatprep.subr.mxu0 %v2035
    %2899 = vmatpush1.msra.mxu0 %v2034
    %2900 = vmatprep.subr.mxu0 0.0
    %2901 = vmatpush2.msra.mxu0 0.0
    %2902 = vmatprep.subr.mxu0 0.0
    %2903 = vmatpush2.msra.mxu0 0.0
    %2904 = vmatprep.subr.mxu0 0.0
    %2905 = vmatpush2.msra.mxu0 0.0
    %2906 = vmatprep.subr.mxu0 0.0
    %2907 = vmatpush2.msra.mxu0 0.0
    %2908 = vmatprep.subr.mxu0 0.0
    %2909 = vmatpush2.msra.mxu0 0.0
    %2910 = vmatprep.subr.mxu0 0.0
    %2911 = vmatpush2.msra.mxu0 0.0
    %2912 = vmatprep.subr.mxu0 0.0
    %2913 = vmatpush2.msra.mxu0 0.0
    %2914 = vmatprep.subr.mxu0 0.0
    %2915 = vmatpush2.msra.mxu0 0.0
    %2916 = vmatprep.subr.mxu0 0.0
    %2917 = vmatpush2.msra.mxu0 0.0
    %2918 = vmatprep.subr.mxu0 0.0
    %2919 = vmatpush2.msra.mxu0 0.0
    %2920 = vmatprep.subr.mxu0 0.0
    %2921 = vmatpush2.msra.mxu0 0.0
    %2922 = vmatprep.subr.mxu0 0.0
    %2923 = vmatpush2.msra.mxu0 0.0
    %2924 = vmatprep.subr.mxu0 0.0
    %2925 = vmatpush2.msra.mxu0 0.0
    %2926 = vmatprep.subr.mxu0 0.0
    %2927 = vmatpush2.msra.mxu0 0.0
    %2928 = vmatprep.subr.mxu0 0.0
    %2929 = vmatpush2.msra.mxu0 0.0
    %2930 = vmatprep.subr.mxu0 0.0
    %2931 = vmatpush2.msra.mxu0 0.0
    %2932 = vmatprep.mubr.f32.mxu0 0.0
    %2933 = vmatmul.mubr.f32.gmra.mxu0 %v2113
    %v2934 = vpop.f32.mrf.mxu0
    %v2935 = vadd.f32 0.0, %v2934
    %v2936 = vpop.f32.mrf.mxu0
    %v2937 = vadd.f32 0.0, %v2936
    %2938 = vmatprep.mubr.f32.mxu0 0.0
    %2939 = vmatmul.mubr.f32.gmra.mxu0 %v2116
    %v2940 = vpop.f32.mrf.mxu0
    %v2941 = vadd.f32 0.0, %v2940
    %v2942 = vpop.f32.mrf.mxu0
    %v2943 = vadd.f32 0.0, %v2942
    %2944 = vmatprep.mubr.f32.mxu0 0.0
    %2945 = vmatmul.mubr.f32.gmra.mxu0 %v2119
    %v2946 = vpop.f32.mrf.mxu0
    %v2947 = vadd.f32 0.0, %v2946
    %v2948 = vpop.f32.mrf.mxu0
    %v2949 = vadd.f32 0.0, %v2948
    %2950 = vdwg.mxu0
    %2951 = vmatprep.subr.mxu0 0.0
    %2952 = vmatpush1.msra.mxu0 0.0
    %2953 = vmatprep.subr.mxu0 0.0
    %2954 = vmatpush1.msra.mxu0 0.0
    %2955 = vmatprep.subr.mxu0 0.0
    %2956 = vmatpush1.msra.mxu0 0.0
    %2957 = vmatprep.subr.mxu0 0.0
    %2958 = vmatpush1.msra.mxu0 0.0
    %2959 = vmatprep.subr.mxu0 0.0
    %2960 = vmatpush1.msra.mxu0 0.0
    %2961 = vmatprep.subr.mxu0 0.0
    %2962 = vmatpush1.msra.mxu0 0.0
    %2963 = vmatprep.subr.mxu0 0.0
    %2964 = vmatpush1.msra.mxu0 0.0
    %2965 = vmatprep.subr.mxu0 0.0
    %2966 = vmatpush1.msra.mxu0 0.0
    %2967 = vmatprep.subr.mxu0 0.0
    %2968 = vmatpush1.msra.mxu0 0.0
    %2969 = vmatprep.subr.mxu0 0.0
    %2970 = vmatpush1.msra.mxu0 0.0
    %2971 = vmatprep.subr.mxu0 0.0
    %2972 = vmatpush1.msra.mxu0 0.0
    %2973 = vmatprep.subr.mxu0 0.0
    %2974 = vmatpush1.msra.mxu0 0.0
    %2975 = vmatprep.subr.mxu0 %v2109
    %2976 = vmatpush1.msra.mxu0 %v2108
    %2977 = vmatprep.subr.mxu0 %v2085
    %2978 = vmatpush1.msra.mxu0 %v2084
    %2979 = vmatprep.subr.mxu0 %v2061
    %2980 = vmatpush1.msra.mxu0 %v2060
    %2981 = vmatprep.subr.mxu0 %v2037
    %2982 = vmatpush1.msra.mxu0 %v2036
    %2983 = vmatprep.subr.mxu0 0.0
    %2984 = vmatpush2.msra.mxu0 0.0
    %2985 = vmatprep.subr.mxu0 0.0
    %2986 = vmatpush2.msra.mxu0 0.0
    %2987 = vmatprep.subr.mxu0 0.0
    %2988 = vmatpush2.msra.mxu0 0.0
    %2989 = vmatprep.subr.mxu0 0.0
    %2990 = vmatpush2.msra.mxu0 0.0
    %2991 = vmatprep.subr.mxu0 0.0
    %2992 = vmatpush2.msra.mxu0 0.0
    %2993 = vmatprep.subr.mxu0 0.0
    %2994 = vmatpush2.msra.mxu0 0.0
    %2995 = vmatprep.subr.mxu0 0.0
    %2996 = vmatpush2.msra.mxu0 0.0
    %2997 = vmatprep.subr.mxu0 0.0
    %2998 = vmatpush2.msra.mxu0 0.0
    %2999 = vmatprep.subr.mxu0 0.0
    %3000 = vmatpush2.msra.mxu0 0.0
    %3001 = vmatprep.subr.mxu0 0.0
    %3002 = vmatpush2.msra.mxu0 0.0
    %3003 = vmatprep.subr.mxu0 0.0
    %3004 = vmatpush2.msra.mxu0 0.0
    %3005 = vmatprep.subr.mxu0 0.0
    %3006 = vmatpush2.msra.mxu0 0.0
    %3007 = vmatprep.subr.mxu0 0.0
    %3008 = vmatpush2.msra.mxu0 0.0
    %3009 = vmatprep.subr.mxu0 0.0
    %3010 = vmatpush2.msra.mxu0 0.0
    %3011 = vmatprep.subr.mxu0 0.0
    %3012 = vmatpush2.msra.mxu0 0.0
    %3013 = vmatprep.subr.mxu0 0.0
    %3014 = vmatpush2.msra.mxu0 0.0
    %3015 = vmatprep.mubr.f32.mxu0 0.0
    %3016 = vmatmul.mubr.f32.gmra.mxu0 %v2113
    %v3017 = vpop.f32.mrf.mxu0
    %v3018 = vadd.f32 0.0, %v3017
    %v3019 = vpop.f32.mrf.mxu0
    %v3020 = vadd.f32 0.0, %v3019
    %3021 = vmatprep.mubr.f32.mxu0 0.0
    %3022 = vmatmul.mubr.f32.gmra.mxu0 %v2116
    %v3023 = vpop.f32.mrf.mxu0
    %v3024 = vadd.f32 0.0, %v3023
    %v3025 = vpop.f32.mrf.mxu0
    %v3026 = vadd.f32 0.0, %v3025
    %3027 = vmatprep.mubr.f32.mxu0 0.0
    %3028 = vmatmul.mubr.f32.gmra.mxu0 %v2119
    %v3029 = vpop.f32.mrf.mxu0
    %v3030 = vadd.f32 0.0, %v3029
    %v3031 = vpop.f32.mrf.mxu0
    %v3032 = vadd.f32 0.0, %v3031
    %3033 = vdwg.mxu0
    %3034 = vmatprep.subr.mxu0 0.0
    %3035 = vmatpush1.msra.mxu0 0.0
    %3036 = vmatprep.subr.mxu0 0.0
    %3037 = vmatpush1.msra.mxu0 0.0
    %3038 = vmatprep.subr.mxu0 0.0
    %3039 = vmatpush1.msra.mxu0 0.0
    %3040 = vmatprep.subr.mxu0 0.0
    %3041 = vmatpush1.msra.mxu0 0.0
    %3042 = vmatprep.subr.mxu0 0.0
    %3043 = vmatpush1.msra.mxu0 0.0
    %3044 = vmatprep.subr.mxu0 0.0
    %3045 = vmatpush1.msra.mxu0 0.0
    %3046 = vmatprep.subr.mxu0 0.0
    %3047 = vmatpush1.msra.mxu0 0.0
    %3048 = vmatprep.subr.mxu0 0.0
    %3049 = vmatpush1.msra.mxu0 0.0
    %3050 = vmatprep.subr.mxu0 0.0
    %3051 = vmatpush1.msra.mxu0 0.0
    %3052 = vmatprep.subr.mxu0 0.0
    %3053 = vmatpush1.msra.mxu0 0.0
    %3054 = vmatprep.subr.mxu0 0.0
    %3055 = vmatpush1.msra.mxu0 0.0
    %3056 = vmatprep.subr.mxu0 0.0
    %3057 = vmatpush1.msra.mxu0 0.0
    %3058 = vmatprep.subr.mxu0 %v2111
    %3059 = vmatpush1.msra.mxu0 %v2110
    %3060 = vmatprep.subr.mxu0 %v2087
    %3061 = vmatpush1.msra.mxu0 %v2086
    %3062 = vmatprep.subr.mxu0 %v2063
    %3063 = vmatpush1.msra.mxu0 %v2062
    %3064 = vmatprep.subr.mxu0 %v2039
    %3065 = vmatpush1.msra.mxu0 %v2038
    %3066 = vmatprep.subr.mxu0 0.0
    %3067 = vmatpush2.msra.mxu0 0.0
    %3068 = vmatprep.subr.mxu0 0.0
    %3069 = vmatpush2.msra.mxu0 0.0
    %3070 = vmatprep.subr.mxu0 0.0
    %3071 = vmatpush2.msra.mxu0 0.0
    %3072 = vmatprep.subr.mxu0 0.0
    %3073 = vmatpush2.msra.mxu0 0.0
    %3074 = vmatprep.subr.mxu0 0.0
    %3075 = vmatpush2.msra.mxu0 0.0
    %3076 = vmatprep.subr.mxu0 0.0
    %3077 = vmatpush2.msra.mxu0 0.0
    %3078 = vmatprep.subr.mxu0 0.0
    %3079 = vmatpush2.msra.mxu0 0.0
    %3080 = vmatprep.subr.mxu0 0.0
    %3081 = vmatpush2.msra.mxu0 0.0
    %3082 = vmatprep.subr.mxu0 0.0
    %3083 = vmatpush2.msra.mxu0 0.0
    %3084 = vmatprep.subr.mxu0 0.0
    %3085 = vmatpush2.msra.mxu0 0.0
    %3086 = vmatprep.subr.mxu0 0.0
    %3087 = vmatpush2.msra.mxu0 0.0
    %3088 = vmatprep.subr.mxu0 0.0
    %3089 = vmatpush2.msra.mxu0 0.0
    %3090 = vmatprep.subr.mxu0 0.0
    %3091 = vmatpush2.msra.mxu0 0.0
    %3092 = vmatprep.subr.mxu0 0.0
    %3093 = vmatpush2.msra.mxu0 0.0
    %3094 = vmatprep.subr.mxu0 0.0
    %3095 = vmatpush2.msra.mxu0 0.0
    %3096 = vmatprep.subr.mxu0 0.0
    %3097 = vmatpush2.msra.mxu0 0.0
    %3098 = vmatprep.mubr.f32.mxu0 0.0
    %3099 = vmatmul.mubr.f32.gmra.mxu0 %v2113
    %v3100 = vpop.f32.mrf.mxu0
    %v3101 = vadd.f32 0.0, %v3100
    %v3102 = vpop.f32.mrf.mxu0
    %v3103 = vadd.f32 0.0, %v3102
    %3104 = vmatprep.mubr.f32.mxu0 0.0
    %3105 = vmatmul.mubr.f32.gmra.mxu0 %v2116
    %v3106 = vpop.f32.mrf.mxu0
    %v3107 = vadd.f32 0.0, %v3106
    %v3108 = vpop.f32.mrf.mxu0
    %v3109 = vadd.f32 0.0, %v3108
    %3110 = vmatprep.mubr.f32.mxu0 0.0
    %3111 = vmatmul.mubr.f32.gmra.mxu0 %v2119
    %v3112 = vpop.f32.mrf.mxu0
    %v3113 = vadd.f32 0.0, %v3112
    %v3114 = vpop.f32.mrf.mxu0
    %v3115 = vadd.f32 0.0, %v3114
    %3116 = vdwg.mxu0
    %3117 = vmatprep.subr.mxu0 0.0
    %3118 = vmatpush1.msra.mxu0 0.0
    %3119 = vmatprep.subr.mxu0 0.0
    %3120 = vmatpush1.msra.mxu0 0.0
    %3121 = vmatprep.subr.mxu0 0.0
    %3122 = vmatpush1.msra.mxu0 0.0
    %3123 = vmatprep.subr.mxu0 0.0
    %3124 = vmatpush1.msra.mxu0 0.0
    %3125 = vmatprep.subr.mxu0 0.0
    %3126 = vmatpush1.msra.mxu0 0.0
    %3127 = vmatprep.subr.mxu0 0.0
    %3128 = vmatpush1.msra.mxu0 0.0
    %3129 = vmatprep.subr.mxu0 0.0
    %3130 = vmatpush1.msra.mxu0 0.0
    %3131 = vmatprep.subr.mxu0 0.0
    %3132 = vmatpush1.msra.mxu0 0.0
    %3133 = vmatprep.subr.mxu0 0.0
    %3134 = vmatpush1.msra.mxu0 0.0
    %3135 = vmatprep.subr.mxu0 0.0
    %3136 = vmatpush1.msra.mxu0 0.0
    %3137 = vmatprep.subr.mxu0 0.0
    %3138 = vmatpush1.msra.mxu0 0.0
    %3139 = vmatprep.subr.mxu0 0.0
    %3140 = vmatpush1.msra.mxu0 0.0
    %3141 = vmatprep.subr.mxu0 %v160
    %3142 = vmatpush1.msra.mxu0 %v159
    %3143 = vmatprep.subr.mxu0 %v136
    %3144 = vmatpush1.msra.mxu0 %v135
    %3145 = vmatprep.subr.mxu0 %v112
    %3146 = vmatpush1.msra.mxu0 %v111
    %3147 = vmatprep.subr.mxu0 %v88
    %3148 = vmatpush1.msra.mxu0 %v87
    %3149 = vmatprep.subr.mxu0 0.0
    %3150 = vmatpush2.msra.mxu0 0.0
    %3151 = vmatprep.subr.mxu0 0.0
    %3152 = vmatpush2.msra.mxu0 0.0
    %3153 = vmatprep.subr.mxu0 0.0
    %3154 = vmatpush2.msra.mxu0 0.0
    %3155 = vmatprep.subr.mxu0 0.0
    %3156 = vmatpush2.msra.mxu0 0.0
    %3157 = vmatprep.subr.mxu0 0.0
    %3158 = vmatpush2.msra.mxu0 0.0
    %3159 = vmatprep.subr.mxu0 0.0
    %3160 = vmatpush2.msra.mxu0 0.0
    %3161 = vmatprep.subr.mxu0 0.0
    %3162 = vmatpush2.msra.mxu0 0.0
    %3163 = vmatprep.subr.mxu0 0.0
    %3164 = vmatpush2.msra.mxu0 0.0
    %3165 = vmatprep.subr.mxu0 0.0
    %3166 = vmatpush2.msra.mxu0 0.0
    %3167 = vmatprep.subr.mxu0 0.0
    %3168 = vmatpush2.msra.mxu0 0.0
    %3169 = vmatprep.subr.mxu0 0.0
    %3170 = vmatpush2.msra.mxu0 0.0
    %3171 = vmatprep.subr.mxu0 0.0
    %3172 = vmatpush2.msra.mxu0 0.0
    %3173 = vmatprep.subr.mxu0 0.0
    %3174 = vmatpush2.msra.mxu0 0.0
    %3175 = vmatprep.subr.mxu0 0.0
    %3176 = vmatpush2.msra.mxu0 0.0
    %3177 = vmatprep.subr.mxu0 0.0
    %3178 = vmatpush2.msra.mxu0 0.0
    %3179 = vmatprep.subr.mxu0 0.0
    %3180 = vmatpush2.msra.mxu0 0.0
    %3181 = vmatprep.mubr.f32.mxu0 0.0
    %3182 = vmatmul.mubr.f32.gmra.mxu0 %v2113
    %v3183 = vpop.f32.mrf.mxu0
    %v3184 = vadd.f32 0.0, %v3183
    %v3185 = vpop.f32.mrf.mxu0
    %v3186 = vadd.f32 0.0, %v3185
    %3187 = vmatprep.mubr.f32.mxu0 0.0
    %3188 = vmatmul.mubr.f32.gmra.mxu0 %v2116
    %v3189 = vpop.f32.mrf.mxu0
    %v3190 = vadd.f32 0.0, %v3189
    %v3191 = vpop.f32.mrf.mxu0
    %v3192 = vadd.f32 0.0, %v3191
    %3193 = vmatprep.mubr.f32.mxu0 0.0
    %3194 = vmatmul.mubr.f32.gmra.mxu0 %v2119
    %v3195 = vpop.f32.mrf.mxu0
    %v3196 = vadd.f32 0.0, %v3195
    %v3197 = vpop.f32.mrf.mxu0
    %v3198 = vadd.f32 0.0, %v3197
    %3199 = vdwg.mxu0
    %3200 = vmatprep.subr.mxu0 0.0
    %3201 = vmatpush1.msra.mxu0 0.0
    %3202 = vmatprep.subr.mxu0 0.0
    %3203 = vmatpush1.msra.mxu0 0.0
    %3204 = vmatprep.subr.mxu0 0.0
    %3205 = vmatpush1.msra.mxu0 0.0
    %3206 = vmatprep.subr.mxu0 0.0
    %3207 = vmatpush1.msra.mxu0 0.0
    %3208 = vmatprep.subr.mxu0 0.0
    %3209 = vmatpush1.msra.mxu0 0.0
    %3210 = vmatprep.subr.mxu0 0.0
    %3211 = vmatpush1.msra.mxu0 0.0
    %3212 = vmatprep.subr.mxu0 0.0
    %3213 = vmatpush1.msra.mxu0 0.0
    %3214 = vmatprep.subr.mxu0 0.0
    %3215 = vmatpush1.msra.mxu0 0.0
    %3216 = vmatprep.subr.mxu0 0.0
    %3217 = vmatpush1.msra.mxu0 0.0
    %3218 = vmatprep.subr.mxu0 0.0
    %3219 = vmatpush1.msra.mxu0 0.0
    %3220 = vmatprep.subr.mxu0 0.0
    %3221 = vmatpush1.msra.mxu0 0.0
    %3222 = vmatprep.subr.mxu0 0.0
    %3223 = vmatpush1.msra.mxu0 0.0
    %3224 = vmatprep.subr.mxu0 %v162
    %3225 = vmatpush1.msra.mxu0 %v161
    %3226 = vmatprep.subr.mxu0 %v138
    %3227 = vmatpush1.msra.mxu0 %v137
    %3228 = vmatprep.subr.mxu0 %v114
    %3229 = vmatpush1.msra.mxu0 %v113
    %3230 = vmatprep.subr.mxu0 %v90
    %3231 = vmatpush1.msra.mxu0 %v89
    %3232 = vmatprep.subr.mxu0 0.0
    %3233 = vmatpush2.msra.mxu0 0.0
    %3234 = vmatprep.subr.mxu0 0.0
    %3235 = vmatpush2.msra.mxu0 0.0
    %3236 = vmatprep.subr.mxu0 0.0
    %3237 = vmatpush2.msra.mxu0 0.0
    %3238 = vmatprep.subr.mxu0 0.0
    %3239 = vmatpush2.msra.mxu0 0.0
    %3240 = vmatprep.subr.mxu0 0.0
    %3241 = vmatpush2.msra.mxu0 0.0
    %3242 = vmatprep.subr.mxu0 0.0
    %3243 = vmatpush2.msra.mxu0 0.0
    %3244 = vmatprep.subr.mxu0 0.0
    %3245 = vmatpush2.msra.mxu0 0.0
    %3246 = vmatprep.subr.mxu0 0.0
    %3247 = vmatpush2.msra.mxu0 0.0
    %3248 = vmatprep.subr.mxu0 0.0
    %3249 = vmatpush2.msra.mxu0 0.0
    %3250 = vmatprep.subr.mxu0 0.0
    %3251 = vmatpush2.msra.mxu0 0.0
    %3252 = vmatprep.subr.mxu0 0.0
    %3253 = vmatpush2.msra.mxu0 0.0
    %3254 = vmatprep.subr.mxu0 0.0
    %3255 = vmatpush2.msra.mxu0 0.0
    %3256 = vmatprep.subr.mxu0 0.0
    %3257 = vmatpush2.msra.mxu0 0.0
    %3258 = vmatprep.subr.mxu0 0.0
    %3259 = vmatpush2.msra.mxu0 0.0
    %3260 = vmatprep.subr.mxu0 0.0
    %3261 = vmatpush2.msra.mxu0 0.0
    %3262 = vmatprep.subr.mxu0 0.0
    %3263 = vmatpush2.msra.mxu0 0.0
    %3264 = vmatprep.mubr.f32.mxu0 0.0
    %3265 = vmatmul.mubr.f32.gmra.mxu0 %v2113
    %v3266 = vpop.f32.mrf.mxu0
    %v3267 = vadd.f32 0.0, %v3266
    %v3268 = vpop.f32.mrf.mxu0
    %v3269 = vadd.f32 0.0, %v3268
    %3270 = vmatprep.mubr.f32.mxu0 0.0
    %3271 = vmatmul.mubr.f32.gmra.mxu0 %v2116
    %v3272 = vpop.f32.mrf.mxu0
    %v3273 = vadd.f32 0.0, %v3272
    %v3274 = vpop.f32.mrf.mxu0
    %v3275 = vadd.f32 0.0, %v3274
    %3276 = vmatprep.mubr.f32.mxu0 0.0
    %3277 = vmatmul.mubr.f32.gmra.mxu0 %v2119
    %v3278 = vpop.f32.mrf.mxu0
    %v3279 = vadd.f32 0.0, %v3278
    %v3280 = vpop.f32.mrf.mxu0
    %v3281 = vadd.f32 0.0, %v3280
    %3282 = vdwg.mxu0
    %3283 = vmatprep.subr.mxu0 0.0
    %3284 = vmatpush1.msra.mxu0 0.0
    %3285 = vmatprep.subr.mxu0 0.0
    %3286 = vmatpush1.msra.mxu0 0.0
    %3287 = vmatprep.subr.mxu0 0.0
    %3288 = vmatpush1.msra.mxu0 0.0
    %3289 = vmatprep.subr.mxu0 0.0
    %3290 = vmatpush1.msra.mxu0 0.0
    %3291 = vmatprep.subr.mxu0 0.0
    %3292 = vmatpush1.msra.mxu0 0.0
    %3293 = vmatprep.subr.mxu0 0.0
    %3294 = vmatpush1.msra.mxu0 0.0
    %3295 = vmatprep.subr.mxu0 0.0
    %3296 = vmatpush1.msra.mxu0 0.0
    %3297 = vmatprep.subr.mxu0 0.0
    %3298 = vmatpush1.msra.mxu0 0.0
    %3299 = vmatprep.subr.mxu0 0.0
    %3300 = vmatpush1.msra.mxu0 0.0
    %3301 = vmatprep.subr.mxu0 0.0
    %3302 = vmatpush1.msra.mxu0 0.0
    %3303 = vmatprep.subr.mxu0 0.0
    %3304 = vmatpush1.msra.mxu0 0.0
    %3305 = vmatprep.subr.mxu0 0.0
    %3306 = vmatpush1.msra.mxu0 0.0
    %3307 = vmatprep.subr.mxu0 %v164
    %3308 = vmatpush1.msra.mxu0 %v163
    %3309 = vmatprep.subr.mxu0 %v140
    %3310 = vmatpush1.msra.mxu0 %v139
    %3311 = vmatprep.subr.mxu0 %v116
    %3312 = vmatpush1.msra.mxu0 %v115
    %3313 = vmatprep.subr.mxu0 %v92
    %3314 = vmatpush1.msra.mxu0 %v91
    %3315 = vmatprep.subr.mxu0 0.0
    %3316 = vmatpush2.msra.mxu0 0.0
    %3317 = vmatprep.subr.mxu0 0.0
    %3318 = vmatpush2.msra.mxu0 0.0
    %3319 = vmatprep.subr.mxu0 0.0
    %3320 = vmatpush2.msra.mxu0 0.0
    %3321 = vmatprep.subr.mxu0 0.0
    %3322 = vmatpush2.msra.mxu0 0.0
    %3323 = vmatprep.subr.mxu0 0.0
    %3324 = vmatpush2.msra.mxu0 0.0
    %3325 = vmatprep.subr.mxu0 0.0
    %3326 = vmatpush2.msra.mxu0 0.0
    %3327 = vmatprep.subr.mxu0 0.0
    %3328 = vmatpush2.msra.mxu0 0.0
    %3329 = vmatprep.subr.mxu0 0.0
    %3330 = vmatpush2.msra.mxu0 0.0
    %3331 = vmatprep.subr.mxu0 0.0
    %3332 = vmatpush2.msra.mxu0 0.0
    %3333 = vmatprep.subr.mxu0 0.0
    %3334 = vmatpush2.msra.mxu0 0.0
    %3335 = vmatprep.subr.mxu0 0.0
    %3336 = vmatpush2.msra.mxu0 0.0
    %3337 = vmatprep.subr.mxu0 0.0
    %3338 = vmatpush2.msra.mxu0 0.0
    %3339 = vmatprep.subr.mxu0 0.0
    %3340 = vmatpush2.msra.mxu0 0.0
    %3341 = vmatprep.subr.mxu0 0.0
    %3342 = vmatpush2.msra.mxu0 0.0
    %3343 = vmatprep.subr.mxu0 0.0
    %3344 = vmatpush2.msra.mxu0 0.0
    %3345 = vmatprep.subr.mxu0 0.0
    %3346 = vmatpush2.msra.mxu0 0.0
    %3347 = vmatprep.mubr.f32.mxu0 0.0
    %3348 = vmatmul.mubr.f32.gmra.mxu0 %v2113
    %v3349 = vpop.f32.mrf.mxu0
    %v3350 = vadd.f32 0.0, %v3349
    %v3351 = vpop.f32.mrf.mxu0
    %v3352 = vadd.f32 0.0, %v3351
    %3353 = vmatprep.mubr.f32.mxu0 0.0
    %3354 = vmatmul.mubr.f32.gmra.mxu0 %v2116
    %v3355 = vpop.f32.mrf.mxu0
    %v3356 = vadd.f32 0.0, %v3355
    %v3357 = vpop.f32.mrf.mxu0
    %v3358 = vadd.f32 0.0, %v3357
    %3359 = vmatprep.mubr.f32.mxu0 0.0
    %3360 = vmatmul.mubr.f32.gmra.mxu0 %v2119
    %v3361 = vpop.f32.mrf.mxu0
    %v3362 = vadd.f32 0.0, %v3361
    %v3363 = vpop.f32.mrf.mxu0
    %v3364 = vadd.f32 0.0, %v3363
    %3365 = vdwg.mxu0
    %3366 = vmatprep.subr.mxu0 0.0
    %3367 = vmatpush1.msra.mxu0 0.0
    %3368 = vmatprep.subr.mxu0 0.0
    %3369 = vmatpush1.msra.mxu0 0.0
    %3370 = vmatprep.subr.mxu0 0.0
    %3371 = vmatpush1.msra.mxu0 0.0
    %3372 = vmatprep.subr.mxu0 0.0
    %3373 = vmatpush1.msra.mxu0 0.0
    %3374 = vmatprep.subr.mxu0 0.0
    %3375 = vmatpush1.msra.mxu0 0.0
    %3376 = vmatprep.subr.mxu0 0.0
    %3377 = vmatpush1.msra.mxu0 0.0
    %3378 = vmatprep.subr.mxu0 0.0
    %3379 = vmatpush1.msra.mxu0 0.0
    %3380 = vmatprep.subr.mxu0 0.0
    %3381 = vmatpush1.msra.mxu0 0.0
    %3382 = vmatprep.subr.mxu0 0.0
    %3383 = vmatpush1.msra.mxu0 0.0
    %3384 = vmatprep.subr.mxu0 0.0
    %3385 = vmatpush1.msra.mxu0 0.0
    %3386 = vmatprep.subr.mxu0 0.0
    %3387 = vmatpush1.msra.mxu0 0.0
    %3388 = vmatprep.subr.mxu0 0.0
    %3389 = vmatpush1.msra.mxu0 0.0
    %3390 = vmatprep.subr.mxu0 %v166
    %3391 = vmatpush1.msra.mxu0 %v165
    %3392 = vmatprep.subr.mxu0 %v142
    %3393 = vmatpush1.msra.mxu0 %v141
    %3394 = vmatprep.subr.mxu0 %v118
    %3395 = vmatpush1.msra.mxu0 %v117
    %3396 = vmatprep.subr.mxu0 %v94
    %3397 = vmatpush1.msra.mxu0 %v93
    %3398 = vmatprep.subr.mxu0 0.0
    %3399 = vmatpush2.msra.mxu0 0.0
    %3400 = vmatprep.subr.mxu0 0.0
    %3401 = vmatpush2.msra.mxu0 0.0
    %3402 = vmatprep.subr.mxu0 0.0
    %3403 = vmatpush2.msra.mxu0 0.0
    %3404 = vmatprep.subr.mxu0 0.0
    %3405 = vmatpush2.msra.mxu0 0.0
    %3406 = vmatprep.subr.mxu0 0.0
    %3407 = vmatpush2.msra.mxu0 0.0
    %3408 = vmatprep.subr.mxu0 0.0
    %3409 = vmatpush2.msra.mxu0 0.0
    %3410 = vmatprep.subr.mxu0 0.0
    %3411 = vmatpush2.msra.mxu0 0.0
    %3412 = vmatprep.subr.mxu0 0.0
    %3413 = vmatpush2.msra.mxu0 0.0
    %3414 = vmatprep.subr.mxu0 0.0
    %3415 = vmatpush2.msra.mxu0 0.0
    %3416 = vmatprep.subr.mxu0 0.0
    %3417 = vmatpush2.msra.mxu0 0.0
    %3418 = vmatprep.subr.mxu0 0.0
    %3419 = vmatpush2.msra.mxu0 0.0
    %3420 = vmatprep.subr.mxu0 0.0
    %3421 = vmatpush2.msra.mxu0 0.0
    %3422 = vmatprep.subr.mxu0 0.0
    %3423 = vmatpush2.msra.mxu0 0.0
    %3424 = vmatprep.subr.mxu0 0.0
    %3425 = vmatpush2.msra.mxu0 0.0
    %3426 = vmatprep.subr.mxu0 0.0
    %3427 = vmatpush2.msra.mxu0 0.0
    %3428 = vmatprep.subr.mxu0 0.0
    %3429 = vmatpush2.msra.mxu0 0.0
    %3430 = vmatprep.mubr.f32.mxu0 0.0
    %3431 = vmatmul.mubr.f32.gmra.mxu0 %v2113
    %v3432 = vpop.f32.mrf.mxu0
    %v3433 = vadd.f32 0.0, %v3432
    %v3434 = vpop.f32.mrf.mxu0
    %v3435 = vadd.f32 0.0, %v3434
    %3436 = vmatprep.mubr.f32.mxu0 0.0
    %3437 = vmatmul.mubr.f32.gmra.mxu0 %v2116
    %v3438 = vpop.f32.mrf.mxu0
    %v3439 = vadd.f32 0.0, %v3438
    %v3440 = vpop.f32.mrf.mxu0
    %v3441 = vadd.f32 0.0, %v3440
    %3442 = vmatprep.mubr.f32.mxu0 0.0
    %3443 = vmatmul.mubr.f32.gmra.mxu0 %v2119
    %v3444 = vpop.f32.mrf.mxu0
    %v3445 = vadd.f32 0.0, %v3444
    %v3446 = vpop.f32.mrf.mxu0
    %v3447 = vadd.f32 0.0, %v3446
    %3448 = vdwg.mxu0
    %3449 = vmatprep.subr.mxu0 0.0
    %3450 = vmatpush1.msra.mxu0 0.0
    %3451 = vmatprep.subr.mxu0 0.0
    %3452 = vmatpush1.msra.mxu0 0.0
    %3453 = vmatprep.subr.mxu0 0.0
    %3454 = vmatpush1.msra.mxu0 0.0
    %3455 = vmatprep.subr.mxu0 0.0
    %3456 = vmatpush1.msra.mxu0 0.0
    %3457 = vmatprep.subr.mxu0 0.0
    %3458 = vmatpush1.msra.mxu0 0.0
    %3459 = vmatprep.subr.mxu0 0.0
    %3460 = vmatpush1.msra.mxu0 0.0
    %3461 = vmatprep.subr.mxu0 0.0
    %3462 = vmatpush1.msra.mxu0 0.0
    %3463 = vmatprep.subr.mxu0 0.0
    %3464 = vmatpush1.msra.mxu0 0.0
    %3465 = vmatprep.subr.mxu0 0.0
    %3466 = vmatpush1.msra.mxu0 0.0
    %3467 = vmatprep.subr.mxu0 0.0
    %3468 = vmatpush1.msra.mxu0 0.0
    %3469 = vmatprep.subr.mxu0 0.0
    %3470 = vmatpush1.msra.mxu0 0.0
    %3471 = vmatprep.subr.mxu0 0.0
    %3472 = vmatpush1.msra.mxu0 0.0
    %3473 = vmatprep.subr.mxu0 %v168
    %3474 = vmatpush1.msra.mxu0 %v167
    %3475 = vmatprep.subr.mxu0 %v144
    %3476 = vmatpush1.msra.mxu0 %v143
    %3477 = vmatprep.subr.mxu0 %v120
    %3478 = vmatpush1.msra.mxu0 %v119
    %3479 = vmatprep.subr.mxu0 %v96
    %3480 = vmatpush1.msra.mxu0 %v95
    %3481 = vmatprep.subr.mxu0 0.0
    %3482 = vmatpush2.msra.mxu0 0.0
    %3483 = vmatprep.subr.mxu0 0.0
    %3484 = vmatpush2.msra.mxu0 0.0
    %3485 = vmatprep.subr.mxu0 0.0
    %3486 = vmatpush2.msra.mxu0 0.0
    %3487 = vmatprep.subr.mxu0 0.0
    %3488 = vmatpush2.msra.mxu0 0.0
    %3489 = vmatprep.subr.mxu0 0.0
    %3490 = vmatpush2.msra.mxu0 0.0
    %3491 = vmatprep.subr.mxu0 0.0
    %3492 = vmatpush2.msra.mxu0 0.0
    %3493 = vmatprep.subr.mxu0 0.0
    %3494 = vmatpush2.msra.mxu0 0.0
    %3495 = vmatprep.subr.mxu0 0.0
    %3496 = vmatpush2.msra.mxu0 0.0
    %3497 = vmatprep.subr.mxu0 0.0
    %3498 = vmatpush2.msra.mxu0 0.0
    %3499 = vmatprep.subr.mxu0 0.0
    %3500 = vmatpush2.msra.mxu0 0.0
    %3501 = vmatprep.subr.mxu0 0.0
    %3502 = vmatpush2.msra.mxu0 0.0
    %3503 = vmatprep.subr.mxu0 0.0
    %3504 = vmatpush2.msra.mxu0 0.0
    %3505 = vmatprep.subr.mxu0 0.0
    %3506 = vmatpush2.msra.mxu0 0.0
    %3507 = vmatprep.subr.mxu0 0.0
    %3508 = vmatpush2.msra.mxu0 0.0
    %3509 = vmatprep.subr.mxu0 0.0
    %3510 = vmatpush2.msra.mxu0 0.0
    %3511 = vmatprep.subr.mxu0 0.0
    %3512 = vmatpush2.msra.mxu0 0.0
    %3513 = vmatprep.mubr.f32.mxu0 0.0
    %3514 = vmatmul.mubr.f32.gmra.mxu0 %v2113
    %v3515 = vpop.f32.mrf.mxu0
    %v3516 = vadd.f32 0.0, %v3515
    %v3517 = vpop.f32.mrf.mxu0
    %v3518 = vadd.f32 0.0, %v3517
    %3519 = vmatprep.mubr.f32.mxu0 0.0
    %3520 = vmatmul.mubr.f32.gmra.mxu0 %v2116
    %v3521 = vpop.f32.mrf.mxu0
    %v3522 = vadd.f32 0.0, %v3521
    %v3523 = vpop.f32.mrf.mxu0
    %v3524 = vadd.f32 0.0, %v3523
    %3525 = vmatprep.mubr.f32.mxu0 0.0
    %3526 = vmatmul.mubr.f32.gmra.mxu0 %v2119
    %v3527 = vpop.f32.mrf.mxu0
    %v3528 = vadd.f32 0.0, %v3527
    %v3529 = vpop.f32.mrf.mxu0
    %v3530 = vadd.f32 0.0, %v3529
    %3531 = vdwg.mxu0
    %3532 = vmatprep.subr.mxu0 0.0
    %3533 = vmatpush1.msra.mxu0 0.0
    %3534 = vmatprep.subr.mxu0 0.0
    %3535 = vmatpush1.msra.mxu0 0.0
    %3536 = vmatprep.subr.mxu0 0.0
    %3537 = vmatpush1.msra.mxu0 0.0
    %3538 = vmatprep.subr.mxu0 0.0
    %3539 = vmatpush1.msra.mxu0 0.0
    %3540 = vmatprep.subr.mxu0 0.0
    %3541 = vmatpush1.msra.mxu0 0.0
    %3542 = vmatprep.subr.mxu0 0.0
    %3543 = vmatpush1.msra.mxu0 0.0
    %3544 = vmatprep.subr.mxu0 0.0
    %3545 = vmatpush1.msra.mxu0 0.0
    %3546 = vmatprep.subr.mxu0 0.0
    %3547 = vmatpush1.msra.mxu0 0.0
    %3548 = vmatprep.subr.mxu0 0.0
    %3549 = vmatpush1.msra.mxu0 0.0
    %3550 = vmatprep.subr.mxu0 0.0
    %3551 = vmatpush1.msra.mxu0 0.0
    %3552 = vmatprep.subr.mxu0 0.0
    %3553 = vmatpush1.msra.mxu0 0.0
    %3554 = vmatprep.subr.mxu0 0.0
    %3555 = vmatpush1.msra.mxu0 0.0
    %3556 = vmatprep.subr.mxu0 %v170
    %3557 = vmatpush1.msra.mxu0 %v169
    %3558 = vmatprep.subr.mxu0 %v146
    %3559 = vmatpush1.msra.mxu0 %v145
    %3560 = vmatprep.subr.mxu0 %v122
    %3561 = vmatpush1.msra.mxu0 %v121
    %3562 = vmatprep.subr.mxu0 %v98
    %3563 = vmatpush1.msra.mxu0 %v97
    %3564 = vmatprep.subr.mxu0 0.0
    %3565 = vmatpush2.msra.mxu0 0.0
    %3566 = vmatprep.subr.mxu0 0.0
    %3567 = vmatpush2.msra.mxu0 0.0
    %3568 = vmatprep.subr.mxu0 0.0
    %3569 = vmatpush2.msra.mxu0 0.0
    %3570 = vmatprep.subr.mxu0 0.0
    %3571 = vmatpush2.msra.mxu0 0.0
    %3572 = vmatprep.subr.mxu0 0.0
    %3573 = vmatpush2.msra.mxu0 0.0
    %3574 = vmatprep.subr.mxu0 0.0
    %3575 = vmatpush2.msra.mxu0 0.0
    %3576 = vmatprep.subr.mxu0 0.0
    %3577 = vmatpush2.msra.mxu0 0.0
    %3578 = vmatprep.subr.mxu0 0.0
    %3579 = vmatpush2.msra.mxu0 0.0
    %3580 = vmatprep.subr.mxu0 0.0
    %3581 = vmatpush2.msra.mxu0 0.0
    %3582 = vmatprep.subr.mxu0 0.0
    %3583 = vmatpush2.msra.mxu0 0.0
    %3584 = vmatprep.subr.mxu0 0.0
    %3585 = vmatpush2.msra.mxu0 0.0
    %3586 = vmatprep.subr.mxu0 0.0
    %3587 = vmatpush2.msra.mxu0 0.0
    %3588 = vmatprep.subr.mxu0 0.0
    %3589 = vmatpush2.msra.mxu0 0.0
    %3590 = vmatprep.subr.mxu0 0.0
    %3591 = vmatpush2.msra.mxu0 0.0
    %3592 = vmatprep.subr.mxu0 0.0
    %3593 = vmatpush2.msra.mxu0 0.0
    %3594 = vmatprep.subr.mxu0 0.0
    %3595 = vmatpush2.msra.mxu0 0.0
    %3596 = vmatprep.mubr.f32.mxu0 0.0
    %3597 = vmatmul.mubr.f32.gmra.mxu0 %v2113
    %v3598 = vpop.f32.mrf.mxu0
    %v3599 = vadd.f32 0.0, %v3598
    %v3600 = vpop.f32.mrf.mxu0
    %v3601 = vadd.f32 0.0, %v3600
    %3602 = vmatprep.mubr.f32.mxu0 0.0
    %3603 = vmatmul.mubr.f32.gmra.mxu0 %v2116
    %v3604 = vpop.f32.mrf.mxu0
    %v3605 = vadd.f32 0.0, %v3604
    %v3606 = vpop.f32.mrf.mxu0
    %v3607 = vadd.f32 0.0, %v3606
    %3608 = vmatprep.mubr.f32.mxu0 0.0
    %3609 = vmatmul.mubr.f32.gmra.mxu0 %v2119
    %v3610 = vpop.f32.mrf.mxu0
    %v3611 = vadd.f32 0.0, %v3610
    %v3612 = vpop.f32.mrf.mxu0
    %v3613 = vadd.f32 0.0, %v3612
    %3614 = vdwg.mxu0
    %3615 = vmatprep.subr.mxu0 0.0
    %3616 = vmatpush1.msra.mxu0 0.0
    %3617 = vmatprep.subr.mxu0 0.0
    %3618 = vmatpush1.msra.mxu0 0.0
    %3619 = vmatprep.subr.mxu0 0.0
    %3620 = vmatpush1.msra.mxu0 0.0
    %3621 = vmatprep.subr.mxu0 0.0
    %3622 = vmatpush1.msra.mxu0 0.0
    %3623 = vmatprep.subr.mxu0 0.0
    %3624 = vmatpush1.msra.mxu0 0.0
    %3625 = vmatprep.subr.mxu0 0.0
    %3626 = vmatpush1.msra.mxu0 0.0
    %3627 = vmatprep.subr.mxu0 0.0
    %3628 = vmatpush1.msra.mxu0 0.0
    %3629 = vmatprep.subr.mxu0 0.0
    %3630 = vmatpush1.msra.mxu0 0.0
    %3631 = vmatprep.subr.mxu0 0.0
    %3632 = vmatpush1.msra.mxu0 0.0
    %3633 = vmatprep.subr.mxu0 0.0
    %3634 = vmatpush1.msra.mxu0 0.0
    %3635 = vmatprep.subr.mxu0 0.0
    %3636 = vmatpush1.msra.mxu0 0.0
    %3637 = vmatprep.subr.mxu0 0.0
    %3638 = vmatpush1.msra.mxu0 0.0
    %3639 = vmatprep.subr.mxu0 %v172
    %3640 = vmatpush1.msra.mxu0 %v171
    %3641 = vmatprep.subr.mxu0 %v148
    %3642 = vmatpush1.msra.mxu0 %v147
    %3643 = vmatprep.subr.mxu0 %v124
    %3644 = vmatpush1.msra.mxu0 %v123
    %3645 = vmatprep.subr.mxu0 %v100
    %3646 = vmatpush1.msra.mxu0 %v99
    %3647 = vmatprep.subr.mxu0 0.0
    %3648 = vmatpush2.msra.mxu0 0.0
    %3649 = vmatprep.subr.mxu0 0.0
    %3650 = vmatpush2.msra.mxu0 0.0
    %3651 = vmatprep.subr.mxu0 0.0
    %3652 = vmatpush2.msra.mxu0 0.0
    %3653 = vmatprep.subr.mxu0 0.0
    %3654 = vmatpush2.msra.mxu0 0.0
    %3655 = vmatprep.subr.mxu0 0.0
    %3656 = vmatpush2.msra.mxu0 0.0
    %3657 = vmatprep.subr.mxu0 0.0
    %3658 = vmatpush2.msra.mxu0 0.0
    %3659 = vmatprep.subr.mxu0 0.0
    %3660 = vmatpush2.msra.mxu0 0.0
    %3661 = vmatprep.subr.mxu0 0.0
    %3662 = vmatpush2.msra.mxu0 0.0
    %3663 = vmatprep.subr.mxu0 0.0
    %3664 = vmatpush2.msra.mxu0 0.0
    %3665 = vmatprep.subr.mxu0 0.0
    %3666 = vmatpush2.msra.mxu0 0.0
    %3667 = vmatprep.subr.mxu0 0.0
    %3668 = vmatpush2.msra.mxu0 0.0
    %3669 = vmatprep.subr.mxu0 0.0
    %3670 = vmatpush2.msra.mxu0 0.0
    %3671 = vmatprep.subr.mxu0 0.0
    %3672 = vmatpush2.msra.mxu0 0.0
    %3673 = vmatprep.subr.mxu0 0.0
    %3674 = vmatpush2.msra.mxu0 0.0
    %3675 = vmatprep.subr.mxu0 0.0
    %3676 = vmatpush2.msra.mxu0 0.0
    %3677 = vmatprep.subr.mxu0 0.0
    %3678 = vmatpush2.msra.mxu0 0.0
    %3679 = vmatprep.mubr.f32.mxu0 0.0
    %3680 = vmatmul.mubr.f32.gmra.mxu0 %v2113
    %v3681 = vpop.f32.mrf.mxu0
    %v3682 = vadd.f32 0.0, %v3681
    %v3683 = vpop.f32.mrf.mxu0
    %v3684 = vadd.f32 0.0, %v3683
    %3685 = vmatprep.mubr.f32.mxu0 0.0
    %3686 = vmatmul.mubr.f32.gmra.mxu0 %v2116
    %v3687 = vpop.f32.mrf.mxu0
    %v3688 = vadd.f32 0.0, %v3687
    %v3689 = vpop.f32.mrf.mxu0
    %v3690 = vadd.f32 0.0, %v3689
    %3691 = vmatprep.mubr.f32.mxu0 0.0
    %3692 = vmatmul.mubr.f32.gmra.mxu0 %v2119
    %v3693 = vpop.f32.mrf.mxu0
    %v3694 = vadd.f32 0.0, %v3693
    %v3695 = vpop.f32.mrf.mxu0
    %v3696 = vadd.f32 0.0, %v3695
    %3697 = vdwg.mxu0
    %3698 = vmatprep.subr.mxu0 0.0
    %3699 = vmatpush1.msra.mxu0 0.0
    %3700 = vmatprep.subr.mxu0 0.0
    %3701 = vmatpush1.msra.mxu0 0.0
    %3702 = vmatprep.subr.mxu0 0.0
    %3703 = vmatpush1.msra.mxu0 0.0
    %3704 = vmatprep.subr.mxu0 0.0
    %3705 = vmatpush1.msra.mxu0 0.0
    %3706 = vmatprep.subr.mxu0 0.0
    %3707 = vmatpush1.msra.mxu0 0.0
    %3708 = vmatprep.subr.mxu0 0.0
    %3709 = vmatpush1.msra.mxu0 0.0
    %3710 = vmatprep.subr.mxu0 0.0
    %3711 = vmatpush1.msra.mxu0 0.0
    %3712 = vmatprep.subr.mxu0 0.0
    %3713 = vmatpush1.msra.mxu0 0.0
    %3714 = vmatprep.subr.mxu0 0.0
    %3715 = vmatpush1.msra.mxu0 0.0
    %3716 = vmatprep.subr.mxu0 0.0
    %3717 = vmatpush1.msra.mxu0 0.0
    %3718 = vmatprep.subr.mxu0 0.0
    %3719 = vmatpush1.msra.mxu0 0.0
    %3720 = vmatprep.subr.mxu0 0.0
    %3721 = vmatpush1.msra.mxu0 0.0
    %3722 = vmatprep.subr.mxu0 %v174
    %3723 = vmatpush1.msra.mxu0 %v173
    %3724 = vmatprep.subr.mxu0 %v150
    %3725 = vmatpush1.msra.mxu0 %v149
    %3726 = vmatprep.subr.mxu0 %v126
    %3727 = vmatpush1.msra.mxu0 %v125
    %3728 = vmatprep.subr.mxu0 %v102
    %3729 = vmatpush1.msra.mxu0 %v101
    %3730 = vmatprep.subr.mxu0 0.0
    %3731 = vmatpush2.msra.mxu0 0.0
    %3732 = vmatprep.subr.mxu0 0.0
    %3733 = vmatpush2.msra.mxu0 0.0
    %3734 = vmatprep.subr.mxu0 0.0
    %3735 = vmatpush2.msra.mxu0 0.0
    %3736 = vmatprep.subr.mxu0 0.0
    %3737 = vmatpush2.msra.mxu0 0.0
    %3738 = vmatprep.subr.mxu0 0.0
    %3739 = vmatpush2.msra.mxu0 0.0
    %3740 = vmatprep.subr.mxu0 0.0
    %3741 = vmatpush2.msra.mxu0 0.0
    %3742 = vmatprep.subr.mxu0 0.0
    %3743 = vmatpush2.msra.mxu0 0.0
    %3744 = vmatprep.subr.mxu0 0.0
    %3745 = vmatpush2.msra.mxu0 0.0
    %3746 = vmatprep.subr.mxu0 0.0
    %3747 = vmatpush2.msra.mxu0 0.0
    %3748 = vmatprep.subr.mxu0 0.0
    %3749 = vmatpush2.msra.mxu0 0.0
    %3750 = vmatprep.subr.mxu0 0.0
    %3751 = vmatpush2.msra.mxu0 0.0
    %3752 = vmatprep.subr.mxu0 0.0
    %3753 = vmatpush2.msra.mxu0 0.0
    %3754 = vmatprep.subr.mxu0 0.0
    %3755 = vmatpush2.msra.mxu0 0.0
    %3756 = vmatprep.subr.mxu0 0.0
    %3757 = vmatpush2.msra.mxu0 0.0
    %3758 = vmatprep.subr.mxu0 0.0
    %3759 = vmatpush2.msra.mxu0 0.0
    %3760 = vmatprep.subr.mxu0 0.0
    %3761 = vmatpush2.msra.mxu0 0.0
    %3762 = vmatprep.mubr.f32.mxu0 0.0
    %3763 = vmatmul.mubr.f32.gmra.mxu0 %v2113
    %v3764 = vpop.f32.mrf.mxu0
    %v3765 = vadd.f32 0.0, %v3764
    %v3766 = vpop.f32.mrf.mxu0
    %v3767 = vadd.f32 0.0, %v3766
    %3768 = vmatprep.mubr.f32.mxu0 0.0
    %3769 = vmatmul.mubr.f32.gmra.mxu0 %v2116
    %v3770 = vpop.f32.mrf.mxu0
    %v3771 = vadd.f32 0.0, %v3770
    %v3772 = vpop.f32.mrf.mxu0
    %v3773 = vadd.f32 0.0, %v3772
    %3774 = vmatprep.mubr.f32.mxu0 0.0
    %3775 = vmatmul.mubr.f32.gmra.mxu0 %v2119
    %v3776 = vpop.f32.mrf.mxu0
    %v3777 = vadd.f32 0.0, %v3776
    %v3778 = vpop.f32.mrf.mxu0
    %v3779 = vadd.f32 0.0, %v3778
    %3780 = vdwg.mxu0
    %3781 = vmatprep.subr.mxu0 0.0
    %3782 = vmatpush1.msra.mxu0 0.0
    %3783 = vmatprep.subr.mxu0 0.0
    %3784 = vmatpush1.msra.mxu0 0.0
    %3785 = vmatprep.subr.mxu0 0.0
    %3786 = vmatpush1.msra.mxu0 0.0
    %3787 = vmatprep.subr.mxu0 0.0
    %3788 = vmatpush1.msra.mxu0 0.0
    %3789 = vmatprep.subr.mxu0 0.0
    %3790 = vmatpush1.msra.mxu0 0.0
    %3791 = vmatprep.subr.mxu0 0.0
    %3792 = vmatpush1.msra.mxu0 0.0
    %3793 = vmatprep.subr.mxu0 0.0
    %3794 = vmatpush1.msra.mxu0 0.0
    %3795 = vmatprep.subr.mxu0 0.0
    %3796 = vmatpush1.msra.mxu0 0.0
    %3797 = vmatprep.subr.mxu0 0.0
    %3798 = vmatpush1.msra.mxu0 0.0
    %3799 = vmatprep.subr.mxu0 0.0
    %3800 = vmatpush1.msra.mxu0 0.0
    %3801 = vmatprep.subr.mxu0 0.0
    %3802 = vmatpush1.msra.mxu0 0.0
    %3803 = vmatprep.subr.mxu0 0.0
    %3804 = vmatpush1.msra.mxu0 0.0
    %3805 = vmatprep.subr.mxu0 %v176
    %3806 = vmatpush1.msra.mxu0 %v175
    %3807 = vmatprep.subr.mxu0 %v152
    %3808 = vmatpush1.msra.mxu0 %v151
    %3809 = vmatprep.subr.mxu0 %v128
    %3810 = vmatpush1.msra.mxu0 %v127
    %3811 = vmatprep.subr.mxu0 %v104
    %3812 = vmatpush1.msra.mxu0 %v103
    %3813 = vmatprep.subr.mxu0 0.0
    %3814 = vmatpush2.msra.mxu0 0.0
    %3815 = vmatprep.subr.mxu0 0.0
    %3816 = vmatpush2.msra.mxu0 0.0
    %3817 = vmatprep.subr.mxu0 0.0
    %3818 = vmatpush2.msra.mxu0 0.0
    %3819 = vmatprep.subr.mxu0 0.0
    %3820 = vmatpush2.msra.mxu0 0.0
    %3821 = vmatprep.subr.mxu0 0.0
    %3822 = vmatpush2.msra.mxu0 0.0
    %3823 = vmatprep.subr.mxu0 0.0
    %3824 = vmatpush2.msra.mxu0 0.0
    %3825 = vmatprep.subr.mxu0 0.0
    %3826 = vmatpush2.msra.mxu0 0.0
    %3827 = vmatprep.subr.mxu0 0.0
    %3828 = vmatpush2.msra.mxu0 0.0
    %3829 = vmatprep.subr.mxu0 0.0
    %3830 = vmatpush2.msra.mxu0 0.0
    %3831 = vmatprep.subr.mxu0 0.0
    %3832 = vmatpush2.msra.mxu0 0.0
    %3833 = vmatprep.subr.mxu0 0.0
    %3834 = vmatpush2.msra.mxu0 0.0
    %3835 = vmatprep.subr.mxu0 0.0
    %3836 = vmatpush2.msra.mxu0 0.0
    %3837 = vmatprep.subr.mxu0 0.0
    %3838 = vmatpush2.msra.mxu0 0.0
    %3839 = vmatprep.subr.mxu0 0.0
    %3840 = vmatpush2.msra.mxu0 0.0
    %3841 = vmatprep.subr.mxu0 0.0
    %3842 = vmatpush2.msra.mxu0 0.0
    %3843 = vmatprep.subr.mxu0 0.0
    %3844 = vmatpush2.msra.mxu0 0.0
    %3845 = vmatprep.mubr.f32.mxu0 0.0
    %3846 = vmatmul.mubr.f32.gmra.mxu0 %v2113
    %v3847 = vpop.f32.mrf.mxu0
    %v3848 = vadd.f32 0.0, %v3847
    %v3849 = vpop.f32.mrf.mxu0
    %v3850 = vadd.f32 0.0, %v3849
    %3851 = vmatprep.mubr.f32.mxu0 0.0
    %3852 = vmatmul.mubr.f32.gmra.mxu0 %v2116
    %v3853 = vpop.f32.mrf.mxu0
    %v3854 = vadd.f32 0.0, %v3853
    %v3855 = vpop.f32.mrf.mxu0
    %v3856 = vadd.f32 0.0, %v3855
    %3857 = vmatprep.mubr.f32.mxu0 0.0
    %3858 = vmatmul.mubr.f32.gmra.mxu0 %v2119
    %v3859 = vpop.f32.mrf.mxu0
    %v3860 = vadd.f32 0.0, %v3859
    %v3861 = vpop.f32.mrf.mxu0
    %v3862 = vadd.f32 0.0, %v3861
    %3863 = vdwg.mxu0
    %3864 = vmatprep.subr.mxu0 0.0
    %3865 = vmatpush1.msra.mxu0 0.0
    %3866 = vmatprep.subr.mxu0 0.0
    %3867 = vmatpush1.msra.mxu0 0.0
    %3868 = vmatprep.subr.mxu0 0.0
    %3869 = vmatpush1.msra.mxu0 0.0
    %3870 = vmatprep.subr.mxu0 0.0
    %3871 = vmatpush1.msra.mxu0 0.0
    %3872 = vmatprep.subr.mxu0 0.0
    %3873 = vmatpush1.msra.mxu0 0.0
    %3874 = vmatprep.subr.mxu0 0.0
    %3875 = vmatpush1.msra.mxu0 0.0
    %3876 = vmatprep.subr.mxu0 0.0
    %3877 = vmatpush1.msra.mxu0 0.0
    %3878 = vmatprep.subr.mxu0 0.0
    %3879 = vmatpush1.msra.mxu0 0.0
    %3880 = vmatprep.subr.mxu0 0.0
    %3881 = vmatpush1.msra.mxu0 0.0
    %3882 = vmatprep.subr.mxu0 0.0
    %3883 = vmatpush1.msra.mxu0 0.0
    %3884 = vmatprep.subr.mxu0 0.0
    %3885 = vmatpush1.msra.mxu0 0.0
    %3886 = vmatprep.subr.mxu0 0.0
    %3887 = vmatpush1.msra.mxu0 0.0
    %3888 = vmatprep.subr.mxu0 %v178
    %3889 = vmatpush1.msra.mxu0 %v177
    %3890 = vmatprep.subr.mxu0 %v154
    %3891 = vmatpush1.msra.mxu0 %v153
    %3892 = vmatprep.subr.mxu0 %v130
    %3893 = vmatpush1.msra.mxu0 %v129
    %3894 = vmatprep.subr.mxu0 %v106
    %3895 = vmatpush1.msra.mxu0 %v105
    %3896 = vmatprep.subr.mxu0 0.0
    %3897 = vmatpush2.msra.mxu0 0.0
    %3898 = vmatprep.subr.mxu0 0.0
    %3899 = vmatpush2.msra.mxu0 0.0
    %3900 = vmatprep.subr.mxu0 0.0
    %3901 = vmatpush2.msra.mxu0 0.0
    %3902 = vmatprep.subr.mxu0 0.0
    %3903 = vmatpush2.msra.mxu0 0.0
    %3904 = vmatprep.subr.mxu0 0.0
    %3905 = vmatpush2.msra.mxu0 0.0
    %3906 = vmatprep.subr.mxu0 0.0
    %3907 = vmatpush2.msra.mxu0 0.0
    %3908 = vmatprep.subr.mxu0 0.0
    %3909 = vmatpush2.msra.mxu0 0.0
    %3910 = vmatprep.subr.mxu0 0.0
    %3911 = vmatpush2.msra.mxu0 0.0
    %3912 = vmatprep.subr.mxu0 0.0
    %3913 = vmatpush2.msra.mxu0 0.0
    %3914 = vmatprep.subr.mxu0 0.0
    %3915 = vmatpush2.msra.mxu0 0.0
    %3916 = vmatprep.subr.mxu0 0.0
    %3917 = vmatpush2.msra.mxu0 0.0
    %3918 = vmatprep.subr.mxu0 0.0
    %3919 = vmatpush2.msra.mxu0 0.0
    %3920 = vmatprep.subr.mxu0 0.0
    %3921 = vmatpush2.msra.mxu0 0.0
    %3922 = vmatprep.subr.mxu0 0.0
    %3923 = vmatpush2.msra.mxu0 0.0
    %3924 = vmatprep.subr.mxu0 0.0
    %3925 = vmatpush2.msra.mxu0 0.0
    %3926 = vmatprep.subr.mxu0 0.0
    %3927 = vmatpush2.msra.mxu0 0.0
    %3928 = vmatprep.mubr.f32.mxu0 0.0
    %3929 = vmatmul.mubr.f32.gmra.mxu0 %v2113
    %v3930 = vpop.f32.mrf.mxu0
    %v3931 = vadd.f32 0.0, %v3930
    %v3932 = vpop.f32.mrf.mxu0
    %v3933 = vadd.f32 0.0, %v3932
    %3934 = vmatprep.mubr.f32.mxu0 0.0
    %3935 = vmatmul.mubr.f32.gmra.mxu0 %v2116
    %v3936 = vpop.f32.mrf.mxu0
    %v3937 = vadd.f32 0.0, %v3936
    %v3938 = vpop.f32.mrf.mxu0
    %v3939 = vadd.f32 0.0, %v3938
    %3940 = vmatprep.mubr.f32.mxu0 0.0
    %3941 = vmatmul.mubr.f32.gmra.mxu0 %v2119
    %v3942 = vpop.f32.mrf.mxu0
    %v3943 = vadd.f32 0.0, %v3942
    %v3944 = vpop.f32.mrf.mxu0
    %v3945 = vadd.f32 0.0, %v3944
    %3946 = vdwg.mxu0
    %3947 = vmatprep.subr.mxu0 0.0
    %3948 = vmatpush1.msra.mxu0 0.0
    %3949 = vmatprep.subr.mxu0 0.0
    %3950 = vmatpush1.msra.mxu0 0.0
    %3951 = vmatprep.subr.mxu0 0.0
    %3952 = vmatpush1.msra.mxu0 0.0
    %3953 = vmatprep.subr.mxu0 0.0
    %3954 = vmatpush1.msra.mxu0 0.0
    %3955 = vmatprep.subr.mxu0 0.0
    %3956 = vmatpush1.msra.mxu0 0.0
    %3957 = vmatprep.subr.mxu0 0.0
    %3958 = vmatpush1.msra.mxu0 0.0
    %3959 = vmatprep.subr.mxu0 0.0
    %3960 = vmatpush1.msra.mxu0 0.0
    %3961 = vmatprep.subr.mxu0 0.0
    %3962 = vmatpush1.msra.mxu0 0.0
    %3963 = vmatprep.subr.mxu0 0.0
    %3964 = vmatpush1.msra.mxu0 0.0
    %3965 = vmatprep.subr.mxu0 0.0
    %3966 = vmatpush1.msra.mxu0 0.0
    %3967 = vmatprep.subr.mxu0 0.0
    %3968 = vmatpush1.msra.mxu0 0.0
    %3969 = vmatprep.subr.mxu0 0.0
    %3970 = vmatpush1.msra.mxu0 0.0
    %3971 = vmatprep.subr.mxu0 %v180
    %3972 = vmatpush1.msra.mxu0 %v179
    %3973 = vmatprep.subr.mxu0 %v156
    %3974 = vmatpush1.msra.mxu0 %v155
    %3975 = vmatprep.subr.mxu0 %v132
    %3976 = vmatpush1.msra.mxu0 %v131
    %3977 = vmatprep.subr.mxu0 %v108
    %3978 = vmatpush1.msra.mxu0 %v107
    %3979 = vmatprep.subr.mxu0 0.0
    %3980 = vmatpush2.msra.mxu0 0.0
    %3981 = vmatprep.subr.mxu0 0.0
    %3982 = vmatpush2.msra.mxu0 0.0
    %3983 = vmatprep.subr.mxu0 0.0
    %3984 = vmatpush2.msra.mxu0 0.0
    %3985 = vmatprep.subr.mxu0 0.0
    %3986 = vmatpush2.msra.mxu0 0.0
    %3987 = vmatprep.subr.mxu0 0.0
    %3988 = vmatpush2.msra.mxu0 0.0
    %3989 = vmatprep.subr.mxu0 0.0
    %3990 = vmatpush2.msra.mxu0 0.0
    %3991 = vmatprep.subr.mxu0 0.0
    %3992 = vmatpush2.msra.mxu0 0.0
    %3993 = vmatprep.subr.mxu0 0.0
    %3994 = vmatpush2.msra.mxu0 0.0
    %3995 = vmatprep.subr.mxu0 0.0
    %3996 = vmatpush2.msra.mxu0 0.0
    %3997 = vmatprep.subr.mxu0 0.0
    %3998 = vmatpush2.msra.mxu0 0.0
    %3999 = vmatprep.subr.mxu0 0.0
    %4000 = vmatpush2.msra.mxu0 0.0
    %4001 = vmatprep.subr.mxu0 0.0
    %4002 = vmatpush2.msra.mxu0 0.0
    %4003 = vmatprep.subr.mxu0 0.0
    %4004 = vmatpush2.msra.mxu0 0.0
    %4005 = vmatprep.subr.mxu0 0.0
    %4006 = vmatpush2.msra.mxu0 0.0
    %4007 = vmatprep.subr.mxu0 0.0
    %4008 = vmatpush2.msra.mxu0 0.0
    %4009 = vmatprep.subr.mxu0 0.0
    %4010 = vmatpush2.msra.mxu0 0.0
    %4011 = vmatprep.mubr.f32.mxu0 0.0
    %4012 = vmatmul.mubr.f32.gmra.mxu0 %v2113
    %v4013 = vpop.f32.mrf.mxu0
    %v4014 = vadd.f32 0.0, %v4013
    %v4015 = vpop.f32.mrf.mxu0
    %v4016 = vadd.f32 0.0, %v4015
    %4017 = vmatprep.mubr.f32.mxu0 0.0
    %4018 = vmatmul.mubr.f32.gmra.mxu0 %v2116
    %v4019 = vpop.f32.mrf.mxu0
    %v4020 = vadd.f32 0.0, %v4019
    %v4021 = vpop.f32.mrf.mxu0
    %v4022 = vadd.f32 0.0, %v4021
    %4023 = vmatprep.mubr.f32.mxu0 0.0
    %4024 = vmatmul.mubr.f32.gmra.mxu0 %v2119
    %v4025 = vpop.f32.mrf.mxu0
    %v4026 = vadd.f32 0.0, %v4025
    %v4027 = vpop.f32.mrf.mxu0
    %v4028 = vadd.f32 0.0, %v4027
    %4029 = vdwg.mxu0
    %4030 = vmatprep.subr.mxu0 0.0
    %4031 = vmatpush1.msra.mxu0 0.0
    %4032 = vmatprep.subr.mxu0 0.0
    %4033 = vmatpush1.msra.mxu0 0.0
    %4034 = vmatprep.subr.mxu0 0.0
    %4035 = vmatpush1.msra.mxu0 0.0
    %4036 = vmatprep.subr.mxu0 0.0
    %4037 = vmatpush1.msra.mxu0 0.0
    %4038 = vmatprep.subr.mxu0 0.0
    %4039 = vmatpush1.msra.mxu0 0.0
    %4040 = vmatprep.subr.mxu0 0.0
    %4041 = vmatpush1.msra.mxu0 0.0
    %4042 = vmatprep.subr.mxu0 0.0
    %4043 = vmatpush1.msra.mxu0 0.0
    %4044 = vmatprep.subr.mxu0 0.0
    %4045 = vmatpush1.msra.mxu0 0.0
    %4046 = vmatprep.subr.mxu0 0.0
    %4047 = vmatpush1.msra.mxu0 0.0
    %4048 = vmatprep.subr.mxu0 0.0
    %4049 = vmatpush1.msra.mxu0 0.0
    %4050 = vmatprep.subr.mxu0 0.0
    %4051 = vmatpush1.msra.mxu0 0.0
    %4052 = vmatprep.subr.mxu0 0.0
    %4053 = vmatpush1.msra.mxu0 0.0
    %4054 = vmatprep.subr.mxu0 %v182
    %4055 = vmatpush1.msra.mxu0 %v181
    %4056 = vmatprep.subr.mxu0 %v158
    %4057 = vmatpush1.msra.mxu0 %v157
    %4058 = vmatprep.subr.mxu0 %v134
    %4059 = vmatpush1.msra.mxu0 %v133
    %4060 = vmatprep.subr.mxu0 %v110
    %4061 = vmatpush1.msra.mxu0 %v109
    %4062 = vmatprep.subr.mxu0 0.0
    %4063 = vmatpush2.msra.mxu0 0.0
    %4064 = vmatprep.subr.mxu0 0.0
    %4065 = vmatpush2.msra.mxu0 0.0
    %4066 = vmatprep.subr.mxu0 0.0
    %4067 = vmatpush2.msra.mxu0 0.0
    %4068 = vmatprep.subr.mxu0 0.0
    %4069 = vmatpush2.msra.mxu0 0.0
    %4070 = vmatprep.subr.mxu0 0.0
    %4071 = vmatpush2.msra.mxu0 0.0
    %4072 = vmatprep.subr.mxu0 0.0
    %4073 = vmatpush2.msra.mxu0 0.0
    %4074 = vmatprep.subr.mxu0 0.0
    %4075 = vmatpush2.msra.mxu0 0.0
    %4076 = vmatprep.subr.mxu0 0.0
    %4077 = vmatpush2.msra.mxu0 0.0
    %4078 = vmatprep.subr.mxu0 0.0
    %4079 = vmatpush2.msra.mxu0 0.0
    %4080 = vmatprep.subr.mxu0 0.0
    %4081 = vmatpush2.msra.mxu0 0.0
    %4082 = vmatprep.subr.mxu0 0.0
    %4083 = vmatpush2.msra.mxu0 0.0
    %4084 = vmatprep.subr.mxu0 0.0
    %4085 = vmatpush2.msra.mxu0 0.0
    %4086 = vmatprep.subr.mxu0 0.0
    %4087 = vmatpush2.msra.mxu0 0.0
    %4088 = vmatprep.subr.mxu0 0.0
    %4089 = vmatpush2.msra.mxu0 0.0
    %4090 = vmatprep.subr.mxu0 0.0
    %4091 = vmatpush2.msra.mxu0 0.0
    %4092 = vmatprep.subr.mxu0 0.0
    %4093 = vmatpush2.msra.mxu0 0.0
    %4094 = vmatprep.mubr.f32.mxu0 0.0
    %4095 = vmatmul.mubr.f32.gmra.mxu0 %v2113
    %v4096 = vpop.f32.mrf.mxu0
    %v4097 = vadd.f32 0.0, %v4096
    %v4098 = vpop.f32.mrf.mxu0
    %v4099 = vadd.f32 0.0, %v4098
    %4100 = vmatprep.mubr.f32.mxu0 0.0
    %4101 = vmatmul.mubr.f32.gmra.mxu0 %v2116
    %v4102 = vpop.f32.mrf.mxu0
    %v4103 = vadd.f32 0.0, %v4102
    %v4104 = vpop.f32.mrf.mxu0
    %v4105 = vadd.f32 0.0, %v4104
    %4106 = vmatprep.mubr.f32.mxu0 0.0
    %4107 = vmatmul.mubr.f32.gmra.mxu0 %v2119
    %v4108 = vpop.f32.mrf.mxu0
    %v4109 = vadd.f32 0.0, %v4108
    %v4110 = vpop.f32.mrf.mxu0
    %v4111 = vadd.f32 0.0, %v4110
    %4112 = vdwg.mxu0
    %v4113 = vmul.f32 %v2188, %v3184
    %v4114 = vmul.f32 %v2190, %v3186
    %v4115 = vmul.f32 %v2271, %v3267
    %v4116 = vmul.f32 %v2273, %v3269
    %v4117 = vmul.f32 %v2354, %v3350
    %v4118 = vmul.f32 %v2356, %v3352
    %v4119 = vmul.f32 %v2437, %v3433
    %v4120 = vmul.f32 %v2439, %v3435
    %v4121 = vmul.f32 %v2520, %v3516
    %v4122 = vmul.f32 %v2522, %v3518
    %v4123 = vmul.f32 %v2603, %v3599
    %v4124 = vmul.f32 %v2605, %v3601
    %v4125 = vmul.f32 %v2686, %v3682
    %v4126 = vmul.f32 %v2688, %v3684
    %v4127 = vmul.f32 %v2769, %v3765
    %v4128 = vmul.f32 %v2771, %v3767
    %v4129 = vmul.f32 %v2852, %v3848
    %v4130 = vmul.f32 %v2854, %v3850
    %v4131 = vmul.f32 %v2935, %v3931
    %v4132 = vmul.f32 %v2937, %v3933
    %v4133 = vmul.f32 %v3018, %v4014
    %v4134 = vmul.f32 %v3020, %v4016
    %v4135 = vmul.f32 %v3101, %v4097
    %v4136 = vmul.f32 %v3103, %v4099
    %v4137 = vmul.f32 %v2194, %v3190
    %v4138 = vmul.f32 %v2196, %v3192
    %v4139 = vmul.f32 %v2277, %v3273
    %v4140 = vmul.f32 %v2279, %v3275
    %v4141 = vmul.f32 %v2360, %v3356
    %v4142 = vmul.f32 %v2362, %v3358
    %v4143 = vmul.f32 %v2443, %v3439
    %v4144 = vmul.f32 %v2445, %v3441
    %v4145 = vmul.f32 %v2526, %v3522
    %v4146 = vmul.f32 %v2528, %v3524
    %v4147 = vmul.f32 %v2609, %v3605
    %v4148 = vmul.f32 %v2611, %v3607
    %v4149 = vmul.f32 %v2692, %v3688
    %v4150 = vmul.f32 %v2694, %v3690
    %v4151 = vmul.f32 %v2775, %v3771
    %v4152 = vmul.f32 %v2777, %v3773
    %v4153 = vmul.f32 %v2858, %v3854
    %v4154 = vmul.f32 %v2860, %v3856
    %v4155 = vmul.f32 %v2941, %v3937
    %v4156 = vmul.f32 %v2943, %v3939
    %v4157 = vmul.f32 %v3024, %v4020
    %v4158 = vmul.f32 %v3026, %v4022
    %v4159 = vmul.f32 %v3107, %v4103
    %v4160 = vmul.f32 %v3109, %v4105
    %v4161 = vmul.f32 %v2200, %v3196
    %v4162 = vmul.f32 %v2202, %v3198
    %v4163 = vmul.f32 %v2283, %v3279
    %v4164 = vmul.f32 %v2285, %v3281
    %v4165 = vmul.f32 %v2366, %v3362
    %v4166 = vmul.f32 %v2368, %v3364
    %v4167 = vmul.f32 %v2449, %v3445
    %v4168 = vmul.f32 %v2451, %v3447
    %v4169 = vmul.f32 %v2532, %v3528
    %v4170 = vmul.f32 %v2534, %v3530
    %v4171 = vmul.f32 %v2615, %v3611
    %v4172 = vmul.f32 %v2617, %v3613
    %v4173 = vmul.f32 %v2698, %v3694
    %v4174 = vmul.f32 %v2700, %v3696
    %v4175 = vmul.f32 %v2781, %v3777
    %v4176 = vmul.f32 %v2783, %v3779
    %v4177 = vmul.f32 %v2864, %v3860
    %v4178 = vmul.f32 %v2866, %v3862
    %v4179 = vmul.f32 %v2947, %v3943
    %v4180 = vmul.f32 %v2949, %v3945
    %v4181 = vmul.f32 %v3030, %v4026
    %v4182 = vmul.f32 %v3032, %v4028
    %v4183 = vmul.f32 %v3113, %v4109
    %v4184 = vmul.f32 %v3115, %v4111
    %v4185 = vadd.f32 %v4113, %v4137
    %v4186 = vadd.f32 %v4114, %v4138
    %v4187 = vadd.f32 %v4115, %v4139
    %v4188 = vadd.f32 %v4116, %v4140
    %v4189 = vadd.f32 %v4117, %v4141
    %v4190 = vadd.f32 %v4118, %v4142
    %v4191 = vadd.f32 %v4119, %v4143
    %v4192 = vadd.f32 %v4120, %v4144
    %v4193 = vadd.f32 %v4121, %v4145
    %v4194 = vadd.f32 %v4122, %v4146
    %v4195 = vadd.f32 %v4123, %v4147
    %v4196 = vadd.f32 %v4124, %v4148
    %v4197 = vadd.f32 %v4125, %v4149
    %v4198 = vadd.f32 %v4126, %v4150
    %v4199 = vadd.f32 %v4127, %v4151
    %v4200 = vadd.f32 %v4128, %v4152
    %v4201 = vadd.f32 %v4129, %v4153
    %v4202 = vadd.f32 %v4130, %v4154
    %v4203 = vadd.f32 %v4131, %v4155
    %v4204 = vadd.f32 %v4132, %v4156
    %v4205 = vadd.f32 %v4133, %v4157
    %v4206 = vadd.f32 %v4134, %v4158
    %v4207 = vadd.f32 %v4135, %v4159
    %v4208 = vadd.f32 %v4136, %v4160
    %v4209 = vadd.f32 %v4185, %v4161
    %v4210 = vadd.f32 %v4186, %v4162
    %v4211 = vadd.f32 %v4187, %v4163
    %v4212 = vadd.f32 %v4188, %v4164
    %v4213 = vadd.f32 %v4189, %v4165
    %v4214 = vadd.f32 %v4190, %v4166
    %v4215 = vadd.f32 %v4191, %v4167
    %v4216 = vadd.f32 %v4192, %v4168
    %v4217 = vadd.f32 %v4193, %v4169
    %v4218 = vadd.f32 %v4194, %v4170
    %v4219 = vadd.f32 %v4195, %v4171
    %v4220 = vadd.f32 %v4196, %v4172
    %v4221 = vadd.f32 %v4197, %v4173
    %v4222 = vadd.f32 %v4198, %v4174
    %v4223 = vadd.f32 %v4199, %v4175
    %v4224 = vadd.f32 %v4200, %v4176
    %v4225 = vadd.f32 %v4201, %v4177
    %v4226 = vadd.f32 %v4202, %v4178
    %v4227 = vadd.f32 %v4203, %v4179
    %v4228 = vadd.f32 %v4204, %v4180
    %v4229 = vadd.f32 %v4205, %v4181
    %v4230 = vadd.f32 %v4206, %v4182
    %v4231 = vadd.f32 %v4207, %v4183
    %v4232 = vadd.f32 %v4208, %v4184
    %v4233 = vadd.f32 %v1988, %v4209
    %v4234 = vadd.f32 %v1989, %v4210
    %v4235 = vadd.f32 %v1990, %v4211
    %v4236 = vadd.f32 %v1991, %v4212
    %v4237 = vadd.f32 %v1992, %v4213
    %v4238 = vadd.f32 %v1993, %v4214
    %v4239 = vadd.f32 %v1994, %v4215
    %v4240 = vadd.f32 %v1995, %v4216
    %v4241 = vadd.f32 %v1996, %v4217
    %v4242 = vadd.f32 %v1997, %v4218
    %v4243 = vadd.f32 %v1998, %v4219
    %v4244 = vadd.f32 %v1999, %v4220
    %v4245 = vadd.f32 %v2000, %v4221
    %v4246 = vadd.f32 %v2001, %v4222
    %v4247 = vadd.f32 %v2002, %v4223
    %v4248 = vadd.f32 %v2003, %v4224
    %v4249 = vadd.f32 %v2004, %v4225
    %v4250 = vadd.f32 %v2005, %v4226
    %v4251 = vadd.f32 %v2006, %v4227
    %v4252 = vadd.f32 %v2007, %v4228
    %v4253 = vadd.f32 %v2008, %v4229
    %v4254 = vadd.f32 %v2009, %v4230
    %v4255 = vadd.f32 %v2010, %v4231
    %v4256 = vadd.f32 %v2011, %v4232
    %v4257 = vld [vmem:[#allocation7] sm:$0xff]
    %v4258 = vld [vmem:[#allocation7 + $0x8] sm:$0xff]
    %v4259 = vld [vmem:[#allocation7 + $0x10] sm:$0xff]
    %v4260 = vld [vmem:[#allocation7 + $0x18] sm:$0xff]
    %v4261 = vld [vmem:[#allocation7 + $0x20] sm:$0xff]
    %s4262 = scalar_lea.vmem [#allocation8], 1536
    %v4263 = vld [vmem:[%s4262] sm:$0xff]
    %v4264 = vld [vmem:[%s4262 + $0x8] sm:$0xff]
    %v4265 = vld [vmem:[%s4262 + $0x10] sm:$0xff]
    %v4266 = vld [vmem:[%s4262 + $0x18] sm:$0xff]
    %v4267 = vld [vmem:[%s4262 + $0x20] sm:$0xff]
    %v4268 = vld [vmem:[%s4262 + $0x28] sm:$0xff]
    %v4269 = vld [vmem:[%s4262 + $0x30] sm:$0xff]
    %v4270 = vld [vmem:[%s4262 + $0x38] sm:$0xff]
    %v4271 = vld [vmem:[%s4262 + $0x40] sm:$0xff]
    %v4272 = vld [vmem:[%s4262 + $0x48] sm:$0xff]
    %v4273 = vld [vmem:[%s4262 + $0x50] sm:$0xff]
    %v4274 = vld [vmem:[%s4262 + $0x58] sm:$0xff]
    %v4275 = vld [vmem:[%s4262 + $0x60] sm:$0xff]
    %v4276 = vld [vmem:[%s4262 + $0x68] sm:$0xff]
    %v4277 = vld [vmem:[%s4262 + $0x70] sm:$0xff]
    %v4278 = vld [vmem:[%s4262 + $0x78] sm:$0xff]
    %v4279 = vld [vmem:[%s4262 + $0x80] sm:$0xff]
    %v4280 = vld [vmem:[%s4262 + $0x88] sm:$0xff]
    %v4281 = vld [vmem:[%s4262 + $0x90] sm:$0xff]
    %v4282 = vld [vmem:[%s4262 + $0x98] sm:$0xff]
    %v4283 = vld [vmem:[%s4262 + $0xa0] sm:$0xff]
    %v4284 = vld [vmem:[%s4262 + $0xa8] sm:$0xff]
    %v4285 = vld [vmem:[%s4262 + $0xb0] sm:$0xff]
    %v4286 = vld [vmem:[%s4262 + $0xb8] sm:$0xff]
    %v4287 = vld [vmem:[%s4262 + $0xc0] sm:$0xff]
    %v4288 = vld [vmem:[%s4262 + $0xc8] sm:$0xff]
    %v4289 = vld [vmem:[%s4262 + $0xd0] sm:$0xff]
    %v4290 = vld [vmem:[%s4262 + $0xd8] sm:$0xff]
    %v4291 = vld [vmem:[%s4262 + $0xe0] sm:$0xff]
    %v4292 = vld [vmem:[%s4262 + $0xe8] sm:$0xff]
    %v4293 = vld [vmem:[%s4262 + $0xf0] sm:$0xff]
    %v4294 = vld [vmem:[%s4262 + $0xf8] sm:$0xff]
    %v4295 = vld [vmem:[%s4262 + $0x100] sm:$0xff]
    %v4296 = vld [vmem:[%s4262 + $0x108] sm:$0xff]
    %v4297 = vld [vmem:[%s4262 + $0x110] sm:$0xff]
    %v4298 = vld [vmem:[%s4262 + $0x118] sm:$0xff]
    %v4299 = vld [vmem:[%s4262 + $0x120] sm:$0xff]
    %v4300 = vld [vmem:[%s4262 + $0x128] sm:$0xff]
    %v4301 = vld [vmem:[%s4262 + $0x130] sm:$0xff]
    %v4302 = vld [vmem:[%s4262 + $0x138] sm:$0xff]
    %v4303 = vld [vmem:[%s4262 + $0x140] sm:$0xff]
    %v4304 = vld [vmem:[%s4262 + $0x148] sm:$0xff]
    %v4305 = vld [vmem:[%s4262 + $0x150] sm:$0xff]
    %v4306 = vld [vmem:[%s4262 + $0x158] sm:$0xff]
    %v4307 = vld [vmem:[%s4262 + $0x160] sm:$0xff]
    %v4308 = vld [vmem:[%s4262 + $0x168] sm:$0xff]
    %v4309 = vld [vmem:[%s4262 + $0x170] sm:$0xff]
    %v4310 = vld [vmem:[%s4262 + $0x178] sm:$0xff]
    %v4311 = vld [vmem:[%s4262 + $0x180] sm:$0xff]
    %v4312 = vld [vmem:[%s4262 + $0x188] sm:$0xff]
    %v4313 = vld [vmem:[%s4262 + $0x190] sm:$0xff]
    %v4314 = vld [vmem:[%s4262 + $0x198] sm:$0xff]
    %v4315 = vld [vmem:[%s4262 + $0x1a0] sm:$0xff]
    %v4316 = vld [vmem:[%s4262 + $0x1a8] sm:$0xff]
    %v4317 = vld [vmem:[%s4262 + $0x1b0] sm:$0xff]
    %v4318 = vld [vmem:[%s4262 + $0x1b8] sm:$0xff]
    %v4319 = vld [vmem:[%s4262 + $0x1c0] sm:$0xff]
    %v4320 = vld [vmem:[%s4262 + $0x1c8] sm:$0xff]
    %v4321 = vld [vmem:[%s4262 + $0x1d0] sm:$0xff]
    %v4322 = vld [vmem:[%s4262 + $0x1d8] sm:$0xff]
    %v4323 = vld [vmem:[%s4262 + $0x1e0] sm:$0xff]
    %v4324 = vld [vmem:[%s4262 + $0x1e8] sm:$0xff]
    %v4325 = vld [vmem:[%s4262 + $0x1f0] sm:$0xff]
    %v4326 = vld [vmem:[%s4262 + $0x1f8] sm:$0xff]
    %v4327 = vld [vmem:[%s4262 + $0x200] sm:$0xff]
    %v4328 = vld [vmem:[%s4262 + $0x208] sm:$0xff]
    %v4329 = vld [vmem:[%s4262 + $0x210] sm:$0xff]
    %v4330 = vld [vmem:[%s4262 + $0x218] sm:$0xff]
    %v4331 = vld [vmem:[%s4262 + $0x220] sm:$0xff]
    %v4332 = vld [vmem:[%s4262 + $0x228] sm:$0xff]
    %v4333 = vld [vmem:[%s4262 + $0x230] sm:$0xff]
    %v4334 = vld [vmem:[%s4262 + $0x238] sm:$0xff]
    %v4335 = vld [vmem:[%s4262 + $0x240] sm:$0xff]
    %v4336 = vld [vmem:[%s4262 + $0x248] sm:$0xff]
    %v4337 = vld [vmem:[%s4262 + $0x250] sm:$0xff]
    %v4338 = vld [vmem:[%s4262 + $0x258] sm:$0xff]
    %v4339 = vld [vmem:[%s4262 + $0x260] sm:$0xff]
    %v4340 = vld [vmem:[%s4262 + $0x268] sm:$0xff]
    %v4341 = vld [vmem:[%s4262 + $0x270] sm:$0xff]
    %v4342 = vld [vmem:[%s4262 + $0x278] sm:$0xff]
    %v4343 = vld [vmem:[%s4262 + $0x280] sm:$0xff]
    %v4344 = vld [vmem:[%s4262 + $0x288] sm:$0xff]
    %v4345 = vld [vmem:[%s4262 + $0x290] sm:$0xff]
    %v4346 = vld [vmem:[%s4262 + $0x298] sm:$0xff]
    %v4347 = vld [vmem:[%s4262 + $0x2a0] sm:$0xff]
    %v4348 = vld [vmem:[%s4262 + $0x2a8] sm:$0xff]
    %v4349 = vld [vmem:[%s4262 + $0x2b0] sm:$0xff]
    %v4350 = vld [vmem:[%s4262 + $0x2b8] sm:$0xff]
    %v4351 = vld [vmem:[%s4262 + $0x2c0] sm:$0xff]
    %v4352 = vld [vmem:[%s4262 + $0x2c8] sm:$0xff]
    %v4353 = vld [vmem:[%s4262 + $0x2d0] sm:$0xff]
    %v4354 = vld [vmem:[%s4262 + $0x2d8] sm:$0xff]
    %v4355 = vld [vmem:[%s4262 + $0x2e0] sm:$0xff]
    %v4356 = vld [vmem:[%s4262 + $0x2e8] sm:$0xff]
    %v4357 = vld [vmem:[%s4262 + $0x2f0] sm:$0xff]
    %v4358 = vld [vmem:[%s4262 + $0x2f8] sm:$0xff]
    %v4360 = vsel %vm280, %v4257, 0
    %v4363 = vsel %vm280, %v4258, 0
    %v4366 = vsel %vm280, %v4259, 0
    %v4369 = vsel %vm280, %v4260, 0
    %v4372 = vsel %vm280, %v4261, 0
    %4374 = vmatprep.subr.mxu0 0.0
    %4375 = vmatpush1.msra.mxu0 0.0
    %4376 = vmatprep.subr.mxu0 0.0
    %4377 = vmatpush1.msra.mxu0 0.0
    %4378 = vmatprep.subr.mxu0 0.0
    %4379 = vmatpush1.msra.mxu0 0.0
    %4380 = vmatprep.subr.mxu0 0.0
    %4381 = vmatpush1.msra.mxu0 0.0
    %4382 = vmatprep.subr.mxu0 0.0
    %4383 = vmatpush1.msra.mxu0 0.0
    %4384 = vmatprep.subr.mxu0 0.0
    %4385 = vmatpush1.msra.mxu0 0.0
    %4386 = vmatprep.subr.mxu0 0.0
    %4387 = vmatpush1.msra.mxu0 0.0
    %4388 = vmatprep.subr.mxu0 0.0
    %4389 = vmatpush1.msra.mxu0 0.0
    %4390 = vmatprep.subr.mxu0 0.0
    %4391 = vmatpush1.msra.mxu0 0.0
    %4392 = vmatprep.subr.mxu0 0.0
    %4393 = vmatpush1.msra.mxu0 0.0
    %4394 = vmatprep.subr.mxu0 0.0
    %4395 = vmatpush1.msra.mxu0 0.0
    %4396 = vmatprep.subr.mxu0 0.0
    %4397 = vmatpush1.msra.mxu0 0.0
    %4398 = vmatprep.subr.mxu0 %v4336
    %4399 = vmatpush1.msra.mxu0 %v4335
    %4400 = vmatprep.subr.mxu0 %v4312
    %4401 = vmatpush1.msra.mxu0 %v4311
    %4402 = vmatprep.subr.mxu0 %v4288
    %4403 = vmatpush1.msra.mxu0 %v4287
    %4404 = vmatprep.subr.mxu0 %v4264
    %4405 = vmatpush1.msra.mxu0 %v4263
    %4406 = vmatprep.subr.mxu0 0.0
    %4407 = vmatpush2.msra.mxu0 0.0
    %4408 = vmatprep.subr.mxu0 0.0
    %4409 = vmatpush2.msra.mxu0 0.0
    %4410 = vmatprep.subr.mxu0 0.0
    %4411 = vmatpush2.msra.mxu0 0.0
    %4412 = vmatprep.subr.mxu0 0.0
    %4413 = vmatpush2.msra.mxu0 0.0
    %4414 = vmatprep.subr.mxu0 0.0
    %4415 = vmatpush2.msra.mxu0 0.0
    %4416 = vmatprep.subr.mxu0 0.0
    %4417 = vmatpush2.msra.mxu0 0.0
    %4418 = vmatprep.subr.mxu0 0.0
    %4419 = vmatpush2.msra.mxu0 0.0
    %4420 = vmatprep.subr.mxu0 0.0
    %4421 = vmatpush2.msra.mxu0 0.0
    %4422 = vmatprep.subr.mxu0 0.0
    %4423 = vmatpush2.msra.mxu0 0.0
    %4424 = vmatprep.subr.mxu0 0.0
    %4425 = vmatpush2.msra.mxu0 0.0
    %4426 = vmatprep.subr.mxu0 0.0
    %4427 = vmatpush2.msra.mxu0 0.0
    %4428 = vmatprep.subr.mxu0 0.0
    %4429 = vmatpush2.msra.mxu0 0.0
    %4430 = vmatprep.subr.mxu0 0.0
    %4431 = vmatpush2.msra.mxu0 0.0
    %4432 = vmatprep.subr.mxu0 0.0
    %4433 = vmatpush2.msra.mxu0 0.0
    %4434 = vmatprep.subr.mxu0 0.0
    %4435 = vmatpush2.msra.mxu0 0.0
    %4436 = vmatprep.subr.mxu0 0.0
    %4437 = vmatpush2.msra.mxu0 0.0
    %4438 = vmatprep.mubr.f32.mxu0 0.0
    %4439 = vmatmul.mubr.f32.gmra.mxu0 %v4360
    %v4440 = vpop.f32.mrf.mxu0
    %v4441 = vadd.f32 0.0, %v4440
    %v4442 = vpop.f32.mrf.mxu0
    %v4443 = vadd.f32 0.0, %v4442
    %4444 = vmatprep.mubr.f32.mxu0 0.0
    %4445 = vmatmul.mubr.f32.gmra.mxu0 %v4363
    %v4446 = vpop.f32.mrf.mxu0
    %v4447 = vadd.f32 0.0, %v4446
    %v4448 = vpop.f32.mrf.mxu0
    %v4449 = vadd.f32 0.0, %v4448
    %4450 = vmatprep.mubr.f32.mxu0 0.0
    %4451 = vmatmul.mubr.f32.gmra.mxu0 %v4366
    %v4452 = vpop.f32.mrf.mxu0
    %v4453 = vadd.f32 0.0, %v4452
    %v4454 = vpop.f32.mrf.mxu0
    %v4455 = vadd.f32 0.0, %v4454
    %4456 = vmatprep.mubr.f32.mxu0 0.0
    %4457 = vmatmul.mubr.f32.gmra.mxu0 %v4369
    %v4458 = vpop.f32.mrf.mxu0
    %v4459 = vadd.f32 0.0, %v4458
    %v4460 = vpop.f32.mrf.mxu0
    %v4461 = vadd.f32 0.0, %v4460
    %4462 = vmatprep.mubr.f32.mxu0 0.0
    %4463 = vmatmul.mubr.f32.gmra.mxu0 %v4372
    %v4464 = vpop.f32.mrf.mxu0
    %v4465 = vadd.f32 0.0, %v4464
    %v4466 = vpop.f32.mrf.mxu0
    %v4467 = vadd.f32 0.0, %v4466
    %4468 = vdwg.mxu0
    %4469 = vmatprep.subr.mxu0 0.0
    %4470 = vmatpush1.msra.mxu0 0.0
    %4471 = vmatprep.subr.mxu0 0.0
    %4472 = vmatpush1.msra.mxu0 0.0
    %4473 = vmatprep.subr.mxu0 0.0
    %4474 = vmatpush1.msra.mxu0 0.0
    %4475 = vmatprep.subr.mxu0 0.0
    %4476 = vmatpush1.msra.mxu0 0.0
    %4477 = vmatprep.subr.mxu0 0.0
    %4478 = vmatpush1.msra.mxu0 0.0
    %4479 = vmatprep.subr.mxu0 0.0
    %4480 = vmatpush1.msra.mxu0 0.0
    %4481 = vmatprep.subr.mxu0 0.0
    %4482 = vmatpush1.msra.mxu0 0.0
    %4483 = vmatprep.subr.mxu0 0.0
    %4484 = vmatpush1.msra.mxu0 0.0
    %4485 = vmatprep.subr.mxu0 0.0
    %4486 = vmatpush1.msra.mxu0 0.0
    %4487 = vmatprep.subr.mxu0 0.0
    %4488 = vmatpush1.msra.mxu0 0.0
    %4489 = vmatprep.subr.mxu0 0.0
    %4490 = vmatpush1.msra.mxu0 0.0
    %4491 = vmatprep.subr.mxu0 0.0
    %4492 = vmatpush1.msra.mxu0 0.0
    %4493 = vmatprep.subr.mxu0 %v4338
    %4494 = vmatpush1.msra.mxu0 %v4337
    %4495 = vmatprep.subr.mxu0 %v4314
    %4496 = vmatpush1.msra.mxu0 %v4313
    %4497 = vmatprep.subr.mxu0 %v4290
    %4498 = vmatpush1.msra.mxu0 %v4289
    %4499 = vmatprep.subr.mxu0 %v4266
    %4500 = vmatpush1.msra.mxu0 %v4265
    %4501 = vmatprep.subr.mxu0 0.0
    %4502 = vmatpush2.msra.mxu0 0.0
    %4503 = vmatprep.subr.mxu0 0.0
    %4504 = vmatpush2.msra.mxu0 0.0
    %4505 = vmatprep.subr.mxu0 0.0
    %4506 = vmatpush2.msra.mxu0 0.0
    %4507 = vmatprep.subr.mxu0 0.0
    %4508 = vmatpush2.msra.mxu0 0.0
    %4509 = vmatprep.subr.mxu0 0.0
    %4510 = vmatpush2.msra.mxu0 0.0
    %4511 = vmatprep.subr.mxu0 0.0
    %4512 = vmatpush2.msra.mxu0 0.0
    %4513 = vmatprep.subr.mxu0 0.0
    %4514 = vmatpush2.msra.mxu0 0.0
    %4515 = vmatprep.subr.mxu0 0.0
    %4516 = vmatpush2.msra.mxu0 0.0
    %4517 = vmatprep.subr.mxu0 0.0
    %4518 = vmatpush2.msra.mxu0 0.0
    %4519 = vmatprep.subr.mxu0 0.0
    %4520 = vmatpush2.msra.mxu0 0.0
    %4521 = vmatprep.subr.mxu0 0.0
    %4522 = vmatpush2.msra.mxu0 0.0
    %4523 = vmatprep.subr.mxu0 0.0
    %4524 = vmatpush2.msra.mxu0 0.0
    %4525 = vmatprep.subr.mxu0 0.0
    %4526 = vmatpush2.msra.mxu0 0.0
    %4527 = vmatprep.subr.mxu0 0.0
    %4528 = vmatpush2.msra.mxu0 0.0
    %4529 = vmatprep.subr.mxu0 0.0
    %4530 = vmatpush2.msra.mxu0 0.0
    %4531 = vmatprep.subr.mxu0 0.0
    %4532 = vmatpush2.msra.mxu0 0.0
    %4533 = vmatprep.mubr.f32.mxu0 0.0
    %4534 = vmatmul.mubr.f32.gmra.mxu0 %v4360
    %v4535 = vpop.f32.mrf.mxu0
    %v4536 = vadd.f32 0.0, %v4535
    %v4537 = vpop.f32.mrf.mxu0
    %v4538 = vadd.f32 0.0, %v4537
    %4539 = vmatprep.mubr.f32.mxu0 0.0
    %4540 = vmatmul.mubr.f32.gmra.mxu0 %v4363
    %v4541 = vpop.f32.mrf.mxu0
    %v4542 = vadd.f32 0.0, %v4541
    %v4543 = vpop.f32.mrf.mxu0
    %v4544 = vadd.f32 0.0, %v4543
    %4545 = vmatprep.mubr.f32.mxu0 0.0
    %4546 = vmatmul.mubr.f32.gmra.mxu0 %v4366
    %v4547 = vpop.f32.mrf.mxu0
    %v4548 = vadd.f32 0.0, %v4547
    %v4549 = vpop.f32.mrf.mxu0
    %v4550 = vadd.f32 0.0, %v4549
    %4551 = vmatprep.mubr.f32.mxu0 0.0
    %4552 = vmatmul.mubr.f32.gmra.mxu0 %v4369
    %v4553 = vpop.f32.mrf.mxu0
    %v4554 = vadd.f32 0.0, %v4553
    %v4555 = vpop.f32.mrf.mxu0
    %v4556 = vadd.f32 0.0, %v4555
    %4557 = vmatprep.mubr.f32.mxu0 0.0
    %4558 = vmatmul.mubr.f32.gmra.mxu0 %v4372
    %v4559 = vpop.f32.mrf.mxu0
    %v4560 = vadd.f32 0.0, %v4559
    %v4561 = vpop.f32.mrf.mxu0
    %v4562 = vadd.f32 0.0, %v4561
    %4563 = vdwg.mxu0
    %4564 = vmatprep.subr.mxu0 0.0
    %4565 = vmatpush1.msra.mxu0 0.0
    %4566 = vmatprep.subr.mxu0 0.0
    %4567 = vmatpush1.msra.mxu0 0.0
    %4568 = vmatprep.subr.mxu0 0.0
    %4569 = vmatpush1.msra.mxu0 0.0
    %4570 = vmatprep.subr.mxu0 0.0
    %4571 = vmatpush1.msra.mxu0 0.0
    %4572 = vmatprep.subr.mxu0 0.0
    %4573 = vmatpush1.msra.mxu0 0.0
    %4574 = vmatprep.subr.mxu0 0.0
    %4575 = vmatpush1.msra.mxu0 0.0
    %4576 = vmatprep.subr.mxu0 0.0
    %4577 = vmatpush1.msra.mxu0 0.0
    %4578 = vmatprep.subr.mxu0 0.0
    %4579 = vmatpush1.msra.mxu0 0.0
    %4580 = vmatprep.subr.mxu0 0.0
    %4581 = vmatpush1.msra.mxu0 0.0
    %4582 = vmatprep.subr.mxu0 0.0
    %4583 = vmatpush1.msra.mxu0 0.0
    %4584 = vmatprep.subr.mxu0 0.0
    %4585 = vmatpush1.msra.mxu0 0.0
    %4586 = vmatprep.subr.mxu0 0.0
    %4587 = vmatpush1.msra.mxu0 0.0
    %4588 = vmatprep.subr.mxu0 %v4340
    %4589 = vmatpush1.msra.mxu0 %v4339
    %4590 = vmatprep.subr.mxu0 %v4316
    %4591 = vmatpush1.msra.mxu0 %v4315
    %4592 = vmatprep.subr.mxu0 %v4292
    %4593 = vmatpush1.msra.mxu0 %v4291
    %4594 = vmatprep.subr.mxu0 %v4268
    %4595 = vmatpush1.msra.mxu0 %v4267
    %4596 = vmatprep.subr.mxu0 0.0
    %4597 = vmatpush2.msra.mxu0 0.0
    %4598 = vmatprep.subr.mxu0 0.0
    %4599 = vmatpush2.msra.mxu0 0.0
    %4600 = vmatprep.subr.mxu0 0.0
    %4601 = vmatpush2.msra.mxu0 0.0
    %4602 = vmatprep.subr.mxu0 0.0
    %4603 = vmatpush2.msra.mxu0 0.0
    %4604 = vmatprep.subr.mxu0 0.0
    %4605 = vmatpush2.msra.mxu0 0.0
    %4606 = vmatprep.subr.mxu0 0.0
    %4607 = vmatpush2.msra.mxu0 0.0
    %4608 = vmatprep.subr.mxu0 0.0
    %4609 = vmatpush2.msra.mxu0 0.0
    %4610 = vmatprep.subr.mxu0 0.0
    %4611 = vmatpush2.msra.mxu0 0.0
    %4612 = vmatprep.subr.mxu0 0.0
    %4613 = vmatpush2.msra.mxu0 0.0
    %4614 = vmatprep.subr.mxu0 0.0
    %4615 = vmatpush2.msra.mxu0 0.0
    %4616 = vmatprep.subr.mxu0 0.0
    %4617 = vmatpush2.msra.mxu0 0.0
    %4618 = vmatprep.subr.mxu0 0.0
    %4619 = vmatpush2.msra.mxu0 0.0
    %4620 = vmatprep.subr.mxu0 0.0
    %4621 = vmatpush2.msra.mxu0 0.0
    %4622 = vmatprep.subr.mxu0 0.0
    %4623 = vmatpush2.msra.mxu0 0.0
    %4624 = vmatprep.subr.mxu0 0.0
    %4625 = vmatpush2.msra.mxu0 0.0
    %4626 = vmatprep.subr.mxu0 0.0
    %4627 = vmatpush2.msra.mxu0 0.0
    %4628 = vmatprep.mubr.f32.mxu0 0.0
    %4629 = vmatmul.mubr.f32.gmra.mxu0 %v4360
    %v4630 = vpop.f32.mrf.mxu0
    %v4631 = vadd.f32 0.0, %v4630
    %v4632 = vpop.f32.mrf.mxu0
    %v4633 = vadd.f32 0.0, %v4632
    %4634 = vmatprep.mubr.f32.mxu0 0.0
    %4635 = vmatmul.mubr.f32.gmra.mxu0 %v4363
    %v4636 = vpop.f32.mrf.mxu0
    %v4637 = vadd.f32 0.0, %v4636
    %v4638 = vpop.f32.mrf.mxu0
    %v4639 = vadd.f32 0.0, %v4638
    %4640 = vmatprep.mubr.f32.mxu0 0.0
    %4641 = vmatmul.mubr.f32.gmra.mxu0 %v4366
    %v4642 = vpop.f32.mrf.mxu0
    %v4643 = vadd.f32 0.0, %v4642
    %v4644 = vpop.f32.mrf.mxu0
    %v4645 = vadd.f32 0.0, %v4644
    %4646 = vmatprep.mubr.f32.mxu0 0.0
    %4647 = vmatmul.mubr.f32.gmra.mxu0 %v4369
    %v4648 = vpop.f32.mrf.mxu0
    %v4649 = vadd.f32 0.0, %v4648
    %v4650 = vpop.f32.mrf.mxu0
    %v4651 = vadd.f32 0.0, %v4650
    %4652 = vmatprep.mubr.f32.mxu0 0.0
    %4653 = vmatmul.mubr.f32.gmra.mxu0 %v4372
    %v4654 = vpop.f32.mrf.mxu0
    %v4655 = vadd.f32 0.0, %v4654
    %v4656 = vpop.f32.mrf.mxu0
    %v4657 = vadd.f32 0.0, %v4656
    %4658 = vdwg.mxu0
    %4659 = vmatprep.subr.mxu0 0.0
    %4660 = vmatpush1.msra.mxu0 0.0
    %4661 = vmatprep.subr.mxu0 0.0
    %4662 = vmatpush1.msra.mxu0 0.0
    %4663 = vmatprep.subr.mxu0 0.0
    %4664 = vmatpush1.msra.mxu0 0.0
    %4665 = vmatprep.subr.mxu0 0.0
    %4666 = vmatpush1.msra.mxu0 0.0
    %4667 = vmatprep.subr.mxu0 0.0
    %4668 = vmatpush1.msra.mxu0 0.0
    %4669 = vmatprep.subr.mxu0 0.0
    %4670 = vmatpush1.msra.mxu0 0.0
    %4671 = vmatprep.subr.mxu0 0.0
    %4672 = vmatpush1.msra.mxu0 0.0
    %4673 = vmatprep.subr.mxu0 0.0
    %4674 = vmatpush1.msra.mxu0 0.0
    %4675 = vmatprep.subr.mxu0 0.0
    %4676 = vmatpush1.msra.mxu0 0.0
    %4677 = vmatprep.subr.mxu0 0.0
    %4678 = vmatpush1.msra.mxu0 0.0
    %4679 = vmatprep.subr.mxu0 0.0
    %4680 = vmatpush1.msra.mxu0 0.0
    %4681 = vmatprep.subr.mxu0 0.0
    %4682 = vmatpush1.msra.mxu0 0.0
    %4683 = vmatprep.subr.mxu0 %v4342
    %4684 = vmatpush1.msra.mxu0 %v4341
    %4685 = vmatprep.subr.mxu0 %v4318
    %4686 = vmatpush1.msra.mxu0 %v4317
    %4687 = vmatprep.subr.mxu0 %v4294
    %4688 = vmatpush1.msra.mxu0 %v4293
    %4689 = vmatprep.subr.mxu0 %v4270
    %4690 = vmatpush1.msra.mxu0 %v4269
    %4691 = vmatprep.subr.mxu0 0.0
    %4692 = vmatpush2.msra.mxu0 0.0
    %4693 = vmatprep.subr.mxu0 0.0
    %4694 = vmatpush2.msra.mxu0 0.0
    %4695 = vmatprep.subr.mxu0 0.0
    %4696 = vmatpush2.msra.mxu0 0.0
    %4697 = vmatprep.subr.mxu0 0.0
    %4698 = vmatpush2.msra.mxu0 0.0
    %4699 = vmatprep.subr.mxu0 0.0
    %4700 = vmatpush2.msra.mxu0 0.0
    %4701 = vmatprep.subr.mxu0 0.0
    %4702 = vmatpush2.msra.mxu0 0.0
    %4703 = vmatprep.subr.mxu0 0.0
    %4704 = vmatpush2.msra.mxu0 0.0
    %4705 = vmatprep.subr.mxu0 0.0
    %4706 = vmatpush2.msra.mxu0 0.0
    %4707 = vmatprep.subr.mxu0 0.0
    %4708 = vmatpush2.msra.mxu0 0.0
    %4709 = vmatprep.subr.mxu0 0.0
    %4710 = vmatpush2.msra.mxu0 0.0
    %4711 = vmatprep.subr.mxu0 0.0
    %4712 = vmatpush2.msra.mxu0 0.0
    %4713 = vmatprep.subr.mxu0 0.0
    %4714 = vmatpush2.msra.mxu0 0.0
    %4715 = vmatprep.subr.mxu0 0.0
    %4716 = vmatpush2.msra.mxu0 0.0
    %4717 = vmatprep.subr.mxu0 0.0
    %4718 = vmatpush2.msra.mxu0 0.0
    %4719 = vmatprep.subr.mxu0 0.0
    %4720 = vmatpush2.msra.mxu0 0.0
    %4721 = vmatprep.subr.mxu0 0.0
    %4722 = vmatpush2.msra.mxu0 0.0
    %4723 = vmatprep.mubr.f32.mxu0 0.0
    %4724 = vmatmul.mubr.f32.gmra.mxu0 %v4360
    %v4725 = vpop.f32.mrf.mxu0
    %v4726 = vadd.f32 0.0, %v4725
    %v4727 = vpop.f32.mrf.mxu0
    %v4728 = vadd.f32 0.0, %v4727
    %4729 = vmatprep.mubr.f32.mxu0 0.0
    %4730 = vmatmul.mubr.f32.gmra.mxu0 %v4363
    %v4731 = vpop.f32.mrf.mxu0
    %v4732 = vadd.f32 0.0, %v4731
    %v4733 = vpop.f32.mrf.mxu0
    %v4734 = vadd.f32 0.0, %v4733
    %4735 = vmatprep.mubr.f32.mxu0 0.0
    %4736 = vmatmul.mubr.f32.gmra.mxu0 %v4366
    %v4737 = vpop.f32.mrf.mxu0
    %v4738 = vadd.f32 0.0, %v4737
    %v4739 = vpop.f32.mrf.mxu0
    %v4740 = vadd.f32 0.0, %v4739
    %4741 = vmatprep.mubr.f32.mxu0 0.0
    %4742 = vmatmul.mubr.f32.gmra.mxu0 %v4369
    %v4743 = vpop.f32.mrf.mxu0
    %v4744 = vadd.f32 0.0, %v4743
    %v4745 = vpop.f32.mrf.mxu0
    %v4746 = vadd.f32 0.0, %v4745
    %4747 = vmatprep.mubr.f32.mxu0 0.0
    %4748 = vmatmul.mubr.f32.gmra.mxu0 %v4372
    %v4749 = vpop.f32.mrf.mxu0
    %v4750 = vadd.f32 0.0, %v4749
    %v4751 = vpop.f32.mrf.mxu0
    %v4752 = vadd.f32 0.0, %v4751
    %4753 = vdwg.mxu0
    %4754 = vmatprep.subr.mxu0 0.0
    %4755 = vmatpush1.msra.mxu0 0.0
    %4756 = vmatprep.subr.mxu0 0.0
    %4757 = vmatpush1.msra.mxu0 0.0
    %4758 = vmatprep.subr.mxu0 0.0
    %4759 = vmatpush1.msra.mxu0 0.0
    %4760 = vmatprep.subr.mxu0 0.0
    %4761 = vmatpush1.msra.mxu0 0.0
    %4762 = vmatprep.subr.mxu0 0.0
    %4763 = vmatpush1.msra.mxu0 0.0
    %4764 = vmatprep.subr.mxu0 0.0
    %4765 = vmatpush1.msra.mxu0 0.0
    %4766 = vmatprep.subr.mxu0 0.0
    %4767 = vmatpush1.msra.mxu0 0.0
    %4768 = vmatprep.subr.mxu0 0.0
    %4769 = vmatpush1.msra.mxu0 0.0
    %4770 = vmatprep.subr.mxu0 0.0
    %4771 = vmatpush1.msra.mxu0 0.0
    %4772 = vmatprep.subr.mxu0 0.0
    %4773 = vmatpush1.msra.mxu0 0.0
    %4774 = vmatprep.subr.mxu0 0.0
    %4775 = vmatpush1.msra.mxu0 0.0
    %4776 = vmatprep.subr.mxu0 0.0
    %4777 = vmatpush1.msra.mxu0 0.0
    %4778 = vmatprep.subr.mxu0 %v4344
    %4779 = vmatpush1.msra.mxu0 %v4343
    %4780 = vmatprep.subr.mxu0 %v4320
    %4781 = vmatpush1.msra.mxu0 %v4319
    %4782 = vmatprep.subr.mxu0 %v4296
    %4783 = vmatpush1.msra.mxu0 %v4295
    %4784 = vmatprep.subr.mxu0 %v4272
    %4785 = vmatpush1.msra.mxu0 %v4271
    %4786 = vmatprep.subr.mxu0 0.0
    %4787 = vmatpush2.msra.mxu0 0.0
    %4788 = vmatprep.subr.mxu0 0.0
    %4789 = vmatpush2.msra.mxu0 0.0
    %4790 = vmatprep.subr.mxu0 0.0
    %4791 = vmatpush2.msra.mxu0 0.0
    %4792 = vmatprep.subr.mxu0 0.0
    %4793 = vmatpush2.msra.mxu0 0.0
    %4794 = vmatprep.subr.mxu0 0.0
    %4795 = vmatpush2.msra.mxu0 0.0
    %4796 = vmatprep.subr.mxu0 0.0
    %4797 = vmatpush2.msra.mxu0 0.0
    %4798 = vmatprep.subr.mxu0 0.0
    %4799 = vmatpush2.msra.mxu0 0.0
    %4800 = vmatprep.subr.mxu0 0.0
    %4801 = vmatpush2.msra.mxu0 0.0
    %4802 = vmatprep.subr.mxu0 0.0
    %4803 = vmatpush2.msra.mxu0 0.0
    %4804 = vmatprep.subr.mxu0 0.0
    %4805 = vmatpush2.msra.mxu0 0.0
    %4806 = vmatprep.subr.mxu0 0.0
    %4807 = vmatpush2.msra.mxu0 0.0
    %4808 = vmatprep.subr.mxu0 0.0
    %4809 = vmatpush2.msra.mxu0 0.0
    %4810 = vmatprep.subr.mxu0 0.0
    %4811 = vmatpush2.msra.mxu0 0.0
    %4812 = vmatprep.subr.mxu0 0.0
    %4813 = vmatpush2.msra.mxu0 0.0
    %4814 = vmatprep.subr.mxu0 0.0
    %4815 = vmatpush2.msra.mxu0 0.0
    %4816 = vmatprep.subr.mxu0 0.0
    %4817 = vmatpush2.msra.mxu0 0.0
    %4818 = vmatprep.mubr.f32.mxu0 0.0
    %4819 = vmatmul.mubr.f32.gmra.mxu0 %v4360
    %v4820 = vpop.f32.mrf.mxu0
    %v4821 = vadd.f32 0.0, %v4820
    %v4822 = vpop.f32.mrf.mxu0
    %v4823 = vadd.f32 0.0, %v4822
    %4824 = vmatprep.mubr.f32.mxu0 0.0
    %4825 = vmatmul.mubr.f32.gmra.mxu0 %v4363
    %v4826 = vpop.f32.mrf.mxu0
    %v4827 = vadd.f32 0.0, %v4826
    %v4828 = vpop.f32.mrf.mxu0
    %v4829 = vadd.f32 0.0, %v4828
    %4830 = vmatprep.mubr.f32.mxu0 0.0
    %4831 = vmatmul.mubr.f32.gmra.mxu0 %v4366
    %v4832 = vpop.f32.mrf.mxu0
    %v4833 = vadd.f32 0.0, %v4832
    %v4834 = vpop.f32.mrf.mxu0
    %v4835 = vadd.f32 0.0, %v4834
    %4836 = vmatprep.mubr.f32.mxu0 0.0
    %4837 = vmatmul.mubr.f32.gmra.mxu0 %v4369
    %v4838 = vpop.f32.mrf.mxu0
    %v4839 = vadd.f32 0.0, %v4838
    %v4840 = vpop.f32.mrf.mxu0
    %v4841 = vadd.f32 0.0, %v4840
    %4842 = vmatprep.mubr.f32.mxu0 0.0
    %4843 = vmatmul.mubr.f32.gmra.mxu0 %v4372
    %v4844 = vpop.f32.mrf.mxu0
    %v4845 = vadd.f32 0.0, %v4844
    %v4846 = vpop.f32.mrf.mxu0
    %v4847 = vadd.f32 0.0, %v4846
    %4848 = vdwg.mxu0
    %4849 = vmatprep.subr.mxu0 0.0
    %4850 = vmatpush1.msra.mxu0 0.0
    %4851 = vmatprep.subr.mxu0 0.0
    %4852 = vmatpush1.msra.mxu0 0.0
    %4853 = vmatprep.subr.mxu0 0.0
    %4854 = vmatpush1.msra.mxu0 0.0
    %4855 = vmatprep.subr.mxu0 0.0
    %4856 = vmatpush1.msra.mxu0 0.0
    %4857 = vmatprep.subr.mxu0 0.0
    %4858 = vmatpush1.msra.mxu0 0.0
    %4859 = vmatprep.subr.mxu0 0.0
    %4860 = vmatpush1.msra.mxu0 0.0
    %4861 = vmatprep.subr.mxu0 0.0
    %4862 = vmatpush1.msra.mxu0 0.0
    %4863 = vmatprep.subr.mxu0 0.0
    %4864 = vmatpush1.msra.mxu0 0.0
    %4865 = vmatprep.subr.mxu0 0.0
    %4866 = vmatpush1.msra.mxu0 0.0
    %4867 = vmatprep.subr.mxu0 0.0
    %4868 = vmatpush1.msra.mxu0 0.0
    %4869 = vmatprep.subr.mxu0 0.0
    %4870 = vmatpush1.msra.mxu0 0.0
    %4871 = vmatprep.subr.mxu0 0.0
    %4872 = vmatpush1.msra.mxu0 0.0
    %4873 = vmatprep.subr.mxu0 %v4346
    %4874 = vmatpush1.msra.mxu0 %v4345
    %4875 = vmatprep.subr.mxu0 %v4322
    %4876 = vmatpush1.msra.mxu0 %v4321
    %4877 = vmatprep.subr.mxu0 %v4298
    %4878 = vmatpush1.msra.mxu0 %v4297
    %4879 = vmatprep.subr.mxu0 %v4274
    %4880 = vmatpush1.msra.mxu0 %v4273
    %4881 = vmatprep.subr.mxu0 0.0
    %4882 = vmatpush2.msra.mxu0 0.0
    %4883 = vmatprep.subr.mxu0 0.0
    %4884 = vmatpush2.msra.mxu0 0.0
    %4885 = vmatprep.subr.mxu0 0.0
    %4886 = vmatpush2.msra.mxu0 0.0
    %4887 = vmatprep.subr.mxu0 0.0
    %4888 = vmatpush2.msra.mxu0 0.0
    %4889 = vmatprep.subr.mxu0 0.0
    %4890 = vmatpush2.msra.mxu0 0.0
    %4891 = vmatprep.subr.mxu0 0.0
    %4892 = vmatpush2.msra.mxu0 0.0
    %4893 = vmatprep.subr.mxu0 0.0
    %4894 = vmatpush2.msra.mxu0 0.0
    %4895 = vmatprep.subr.mxu0 0.0
    %4896 = vmatpush2.msra.mxu0 0.0
    %4897 = vmatprep.subr.mxu0 0.0
    %4898 = vmatpush2.msra.mxu0 0.0
    %4899 = vmatprep.subr.mxu0 0.0
    %4900 = vmatpush2.msra.mxu0 0.0
    %4901 = vmatprep.subr.mxu0 0.0
    %4902 = vmatpush2.msra.mxu0 0.0
    %4903 = vmatprep.subr.mxu0 0.0
    %4904 = vmatpush2.msra.mxu0 0.0
    %4905 = vmatprep.subr.mxu0 0.0
    %4906 = vmatpush2.msra.mxu0 0.0
    %4907 = vmatprep.subr.mxu0 0.0
    %4908 = vmatpush2.msra.mxu0 0.0
    %4909 = vmatprep.subr.mxu0 0.0
    %4910 = vmatpush2.msra.mxu0 0.0
    %4911 = vmatprep.subr.mxu0 0.0
    %4912 = vmatpush2.msra.mxu0 0.0
    %4913 = vmatprep.mubr.f32.mxu0 0.0
    %4914 = vmatmul.mubr.f32.gmra.mxu0 %v4360
    %v4915 = vpop.f32.mrf.mxu0
    %v4916 = vadd.f32 0.0, %v4915
    %v4917 = vpop.f32.mrf.mxu0
    %v4918 = vadd.f32 0.0, %v4917
    %4919 = vmatprep.mubr.f32.mxu0 0.0
    %4920 = vmatmul.mubr.f32.gmra.mxu0 %v4363
    %v4921 = vpop.f32.mrf.mxu0
    %v4922 = vadd.f32 0.0, %v4921
    %v4923 = vpop.f32.mrf.mxu0
    %v4924 = vadd.f32 0.0, %v4923
    %4925 = vmatprep.mubr.f32.mxu0 0.0
    %4926 = vmatmul.mubr.f32.gmra.mxu0 %v4366
    %v4927 = vpop.f32.mrf.mxu0
    %v4928 = vadd.f32 0.0, %v4927
    %v4929 = vpop.f32.mrf.mxu0
    %v4930 = vadd.f32 0.0, %v4929
    %4931 = vmatprep.mubr.f32.mxu0 0.0
    %4932 = vmatmul.mubr.f32.gmra.mxu0 %v4369
    %v4933 = vpop.f32.mrf.mxu0
    %v4934 = vadd.f32 0.0, %v4933
    %v4935 = vpop.f32.mrf.mxu0
    %v4936 = vadd.f32 0.0, %v4935
    %4937 = vmatprep.mubr.f32.mxu0 0.0
    %4938 = vmatmul.mubr.f32.gmra.mxu0 %v4372
    %v4939 = vpop.f32.mrf.mxu0
    %v4940 = vadd.f32 0.0, %v4939
    %v4941 = vpop.f32.mrf.mxu0
    %v4942 = vadd.f32 0.0, %v4941
    %4943 = vdwg.mxu0
    %4944 = vmatprep.subr.mxu0 0.0
    %4945 = vmatpush1.msra.mxu0 0.0
    %4946 = vmatprep.subr.mxu0 0.0
    %4947 = vmatpush1.msra.mxu0 0.0
    %4948 = vmatprep.subr.mxu0 0.0
    %4949 = vmatpush1.msra.mxu0 0.0
    %4950 = vmatprep.subr.mxu0 0.0
    %4951 = vmatpush1.msra.mxu0 0.0
    %4952 = vmatprep.subr.mxu0 0.0
    %4953 = vmatpush1.msra.mxu0 0.0
    %4954 = vmatprep.subr.mxu0 0.0
    %4955 = vmatpush1.msra.mxu0 0.0
    %4956 = vmatprep.subr.mxu0 0.0
    %4957 = vmatpush1.msra.mxu0 0.0
    %4958 = vmatprep.subr.mxu0 0.0
    %4959 = vmatpush1.msra.mxu0 0.0
    %4960 = vmatprep.subr.mxu0 0.0
    %4961 = vmatpush1.msra.mxu0 0.0
    %4962 = vmatprep.subr.mxu0 0.0
    %4963 = vmatpush1.msra.mxu0 0.0
    %4964 = vmatprep.subr.mxu0 0.0
    %4965 = vmatpush1.msra.mxu0 0.0
    %4966 = vmatprep.subr.mxu0 0.0
    %4967 = vmatpush1.msra.mxu0 0.0
    %4968 = vmatprep.subr.mxu0 %v4348
    %4969 = vmatpush1.msra.mxu0 %v4347
    %4970 = vmatprep.subr.mxu0 %v4324
    %4971 = vmatpush1.msra.mxu0 %v4323
    %4972 = vmatprep.subr.mxu0 %v4300
    %4973 = vmatpush1.msra.mxu0 %v4299
    %4974 = vmatprep.subr.mxu0 %v4276
    %4975 = vmatpush1.msra.mxu0 %v4275
    %4976 = vmatprep.subr.mxu0 0.0
    %4977 = vmatpush2.msra.mxu0 0.0
    %4978 = vmatprep.subr.mxu0 0.0
    %4979 = vmatpush2.msra.mxu0 0.0
    %4980 = vmatprep.subr.mxu0 0.0
    %4981 = vmatpush2.msra.mxu0 0.0
    %4982 = vmatprep.subr.mxu0 0.0
    %4983 = vmatpush2.msra.mxu0 0.0
    %4984 = vmatprep.subr.mxu0 0.0
    %4985 = vmatpush2.msra.mxu0 0.0
    %4986 = vmatprep.subr.mxu0 0.0
    %4987 = vmatpush2.msra.mxu0 0.0
    %4988 = vmatprep.subr.mxu0 0.0
    %4989 = vmatpush2.msra.mxu0 0.0
    %4990 = vmatprep.subr.mxu0 0.0
    %4991 = vmatpush2.msra.mxu0 0.0
    %4992 = vmatprep.subr.mxu0 0.0
    %4993 = vmatpush2.msra.mxu0 0.0
    %4994 = vmatprep.subr.mxu0 0.0
    %4995 = vmatpush2.msra.mxu0 0.0
    %4996 = vmatprep.subr.mxu0 0.0
    %4997 = vmatpush2.msra.mxu0 0.0
    %4998 = vmatprep.subr.mxu0 0.0
    %4999 = vmatpush2.msra.mxu0 0.0
    %5000 = vmatprep.subr.mxu0 0.0
    %5001 = vmatpush2.msra.mxu0 0.0
    %5002 = vmatprep.subr.mxu0 0.0
    %5003 = vmatpush2.msra.mxu0 0.0
    %5004 = vmatprep.subr.mxu0 0.0
    %5005 = vmatpush2.msra.mxu0 0.0
    %5006 = vmatprep.subr.mxu0 0.0
    %5007 = vmatpush2.msra.mxu0 0.0
    %5008 = vmatprep.mubr.f32.mxu0 0.0
    %5009 = vmatmul.mubr.f32.gmra.mxu0 %v4360
    %v5010 = vpop.f32.mrf.mxu0
    %v5011 = vadd.f32 0.0, %v5010
    %v5012 = vpop.f32.mrf.mxu0
    %v5013 = vadd.f32 0.0, %v5012
    %5014 = vmatprep.mubr.f32.mxu0 0.0
    %5015 = vmatmul.mubr.f32.gmra.mxu0 %v4363
    %v5016 = vpop.f32.mrf.mxu0
    %v5017 = vadd.f32 0.0, %v5016
    %v5018 = vpop.f32.mrf.mxu0
    %v5019 = vadd.f32 0.0, %v5018
    %5020 = vmatprep.mubr.f32.mxu0 0.0
    %5021 = vmatmul.mubr.f32.gmra.mxu0 %v4366
    %v5022 = vpop.f32.mrf.mxu0
    %v5023 = vadd.f32 0.0, %v5022
    %v5024 = vpop.f32.mrf.mxu0
    %v5025 = vadd.f32 0.0, %v5024
    %5026 = vmatprep.mubr.f32.mxu0 0.0
    %5027 = vmatmul.mubr.f32.gmra.mxu0 %v4369
    %v5028 = vpop.f32.mrf.mxu0
    %v5029 = vadd.f32 0.0, %v5028
    %v5030 = vpop.f32.mrf.mxu0
    %v5031 = vadd.f32 0.0, %v5030
    %5032 = vmatprep.mubr.f32.mxu0 0.0
    %5033 = vmatmul.mubr.f32.gmra.mxu0 %v4372
    %v5034 = vpop.f32.mrf.mxu0
    %v5035 = vadd.f32 0.0, %v5034
    %v5036 = vpop.f32.mrf.mxu0
    %v5037 = vadd.f32 0.0, %v5036
    %5038 = vdwg.mxu0
    %5039 = vmatprep.subr.mxu0 0.0
    %5040 = vmatpush1.msra.mxu0 0.0
    %5041 = vmatprep.subr.mxu0 0.0
    %5042 = vmatpush1.msra.mxu0 0.0
    %5043 = vmatprep.subr.mxu0 0.0
    %5044 = vmatpush1.msra.mxu0 0.0
    %5045 = vmatprep.subr.mxu0 0.0
    %5046 = vmatpush1.msra.mxu0 0.0
    %5047 = vmatprep.subr.mxu0 0.0
    %5048 = vmatpush1.msra.mxu0 0.0
    %5049 = vmatprep.subr.mxu0 0.0
    %5050 = vmatpush1.msra.mxu0 0.0
    %5051 = vmatprep.subr.mxu0 0.0
    %5052 = vmatpush1.msra.mxu0 0.0
    %5053 = vmatprep.subr.mxu0 0.0
    %5054 = vmatpush1.msra.mxu0 0.0
    %5055 = vmatprep.subr.mxu0 0.0
    %5056 = vmatpush1.msra.mxu0 0.0
    %5057 = vmatprep.subr.mxu0 0.0
    %5058 = vmatpush1.msra.mxu0 0.0
    %5059 = vmatprep.subr.mxu0 0.0
    %5060 = vmatpush1.msra.mxu0 0.0
    %5061 = vmatprep.subr.mxu0 0.0
    %5062 = vmatpush1.msra.mxu0 0.0
    %5063 = vmatprep.subr.mxu0 %v4350
    %5064 = vmatpush1.msra.mxu0 %v4349
    %5065 = vmatprep.subr.mxu0 %v4326
    %5066 = vmatpush1.msra.mxu0 %v4325
    %5067 = vmatprep.subr.mxu0 %v4302
    %5068 = vmatpush1.msra.mxu0 %v4301
    %5069 = vmatprep.subr.mxu0 %v4278
    %5070 = vmatpush1.msra.mxu0 %v4277
    %5071 = vmatprep.subr.mxu0 0.0
    %5072 = vmatpush2.msra.mxu0 0.0
    %5073 = vmatprep.subr.mxu0 0.0
    %5074 = vmatpush2.msra.mxu0 0.0
    %5075 = vmatprep.subr.mxu0 0.0
    %5076 = vmatpush2.msra.mxu0 0.0
    %5077 = vmatprep.subr.mxu0 0.0
    %5078 = vmatpush2.msra.mxu0 0.0
    %5079 = vmatprep.subr.mxu0 0.0
    %5080 = vmatpush2.msra.mxu0 0.0
    %5081 = vmatprep.subr.mxu0 0.0
    %5082 = vmatpush2.msra.mxu0 0.0
    %5083 = vmatprep.subr.mxu0 0.0
    %5084 = vmatpush2.msra.mxu0 0.0
    %5085 = vmatprep.subr.mxu0 0.0
    %5086 = vmatpush2.msra.mxu0 0.0
    %5087 = vmatprep.subr.mxu0 0.0
    %5088 = vmatpush2.msra.mxu0 0.0
    %5089 = vmatprep.subr.mxu0 0.0
    %5090 = vmatpush2.msra.mxu0 0.0
    %5091 = vmatprep.subr.mxu0 0.0
    %5092 = vmatpush2.msra.mxu0 0.0
    %5093 = vmatprep.subr.mxu0 0.0
    %5094 = vmatpush2.msra.mxu0 0.0
    %5095 = vmatprep.subr.mxu0 0.0
    %5096 = vmatpush2.msra.mxu0 0.0
    %5097 = vmatprep.subr.mxu0 0.0
    %5098 = vmatpush2.msra.mxu0 0.0
    %5099 = vmatprep.subr.mxu0 0.0
    %5100 = vmatpush2.msra.mxu0 0.0
    %5101 = vmatprep.subr.mxu0 0.0
    %5102 = vmatpush2.msra.mxu0 0.0
    %5103 = vmatprep.mubr.f32.mxu0 0.0
    %5104 = vmatmul.mubr.f32.gmra.mxu0 %v4360
    %v5105 = vpop.f32.mrf.mxu0
    %v5106 = vadd.f32 0.0, %v5105
    %v5107 = vpop.f32.mrf.mxu0
    %v5108 = vadd.f32 0.0, %v5107
    %5109 = vmatprep.mubr.f32.mxu0 0.0
    %5110 = vmatmul.mubr.f32.gmra.mxu0 %v4363
    %v5111 = vpop.f32.mrf.mxu0
    %v5112 = vadd.f32 0.0, %v5111
    %v5113 = vpop.f32.mrf.mxu0
    %v5114 = vadd.f32 0.0, %v5113
    %5115 = vmatprep.mubr.f32.mxu0 0.0
    %5116 = vmatmul.mubr.f32.gmra.mxu0 %v4366
    %v5117 = vpop.f32.mrf.mxu0
    %v5118 = vadd.f32 0.0, %v5117
    %v5119 = vpop.f32.mrf.mxu0
    %v5120 = vadd.f32 0.0, %v5119
    %5121 = vmatprep.mubr.f32.mxu0 0.0
    %5122 = vmatmul.mubr.f32.gmra.mxu0 %v4369
    %v5123 = vpop.f32.mrf.mxu0
    %v5124 = vadd.f32 0.0, %v5123
    %v5125 = vpop.f32.mrf.mxu0
    %v5126 = vadd.f32 0.0, %v5125
    %5127 = vmatprep.mubr.f32.mxu0 0.0
    %5128 = vmatmul.mubr.f32.gmra.mxu0 %v4372
    %v5129 = vpop.f32.mrf.mxu0
    %v5130 = vadd.f32 0.0, %v5129
    %v5131 = vpop.f32.mrf.mxu0
    %v5132 = vadd.f32 0.0, %v5131
    %5133 = vdwg.mxu0
    %5134 = vmatprep.subr.mxu0 0.0
    %5135 = vmatpush1.msra.mxu0 0.0
    %5136 = vmatprep.subr.mxu0 0.0
    %5137 = vmatpush1.msra.mxu0 0.0
    %5138 = vmatprep.subr.mxu0 0.0
    %5139 = vmatpush1.msra.mxu0 0.0
    %5140 = vmatprep.subr.mxu0 0.0
    %5141 = vmatpush1.msra.mxu0 0.0
    %5142 = vmatprep.subr.mxu0 0.0
    %5143 = vmatpush1.msra.mxu0 0.0
    %5144 = vmatprep.subr.mxu0 0.0
    %5145 = vmatpush1.msra.mxu0 0.0
    %5146 = vmatprep.subr.mxu0 0.0
    %5147 = vmatpush1.msra.mxu0 0.0
    %5148 = vmatprep.subr.mxu0 0.0
    %5149 = vmatpush1.msra.mxu0 0.0
    %5150 = vmatprep.subr.mxu0 0.0
    %5151 = vmatpush1.msra.mxu0 0.0
    %5152 = vmatprep.subr.mxu0 0.0
    %5153 = vmatpush1.msra.mxu0 0.0
    %5154 = vmatprep.subr.mxu0 0.0
    %5155 = vmatpush1.msra.mxu0 0.0
    %5156 = vmatprep.subr.mxu0 0.0
    %5157 = vmatpush1.msra.mxu0 0.0
    %5158 = vmatprep.subr.mxu0 %v4352
    %5159 = vmatpush1.msra.mxu0 %v4351
    %5160 = vmatprep.subr.mxu0 %v4328
    %5161 = vmatpush1.msra.mxu0 %v4327
    %5162 = vmatprep.subr.mxu0 %v4304
    %5163 = vmatpush1.msra.mxu0 %v4303
    %5164 = vmatprep.subr.mxu0 %v4280
    %5165 = vmatpush1.msra.mxu0 %v4279
    %5166 = vmatprep.subr.mxu0 0.0
    %5167 = vmatpush2.msra.mxu0 0.0
    %5168 = vmatprep.subr.mxu0 0.0
    %5169 = vmatpush2.msra.mxu0 0.0
    %5170 = vmatprep.subr.mxu0 0.0
    %5171 = vmatpush2.msra.mxu0 0.0
    %5172 = vmatprep.subr.mxu0 0.0
    %5173 = vmatpush2.msra.mxu0 0.0
    %5174 = vmatprep.subr.mxu0 0.0
    %5175 = vmatpush2.msra.mxu0 0.0
    %5176 = vmatprep.subr.mxu0 0.0
    %5177 = vmatpush2.msra.mxu0 0.0
    %5178 = vmatprep.subr.mxu0 0.0
    %5179 = vmatpush2.msra.mxu0 0.0
    %5180 = vmatprep.subr.mxu0 0.0
    %5181 = vmatpush2.msra.mxu0 0.0
    %5182 = vmatprep.subr.mxu0 0.0
    %5183 = vmatpush2.msra.mxu0 0.0
    %5184 = vmatprep.subr.mxu0 0.0
    %5185 = vmatpush2.msra.mxu0 0.0
    %5186 = vmatprep.subr.mxu0 0.0
    %5187 = vmatpush2.msra.mxu0 0.0
    %5188 = vmatprep.subr.mxu0 0.0
    %5189 = vmatpush2.msra.mxu0 0.0
    %5190 = vmatprep.subr.mxu0 0.0
    %5191 = vmatpush2.msra.mxu0 0.0
    %5192 = vmatprep.subr.mxu0 0.0
    %5193 = vmatpush2.msra.mxu0 0.0
    %5194 = vmatprep.subr.mxu0 0.0
    %5195 = vmatpush2.msra.mxu0 0.0
    %5196 = vmatprep.subr.mxu0 0.0
    %5197 = vmatpush2.msra.mxu0 0.0
    %5198 = vmatprep.mubr.f32.mxu0 0.0
    %5199 = vmatmul.mubr.f32.gmra.mxu0 %v4360
    %v5200 = vpop.f32.mrf.mxu0
    %v5201 = vadd.f32 0.0, %v5200
    %v5202 = vpop.f32.mrf.mxu0
    %v5203 = vadd.f32 0.0, %v5202
    %5204 = vmatprep.mubr.f32.mxu0 0.0
    %5205 = vmatmul.mubr.f32.gmra.mxu0 %v4363
    %v5206 = vpop.f32.mrf.mxu0
    %v5207 = vadd.f32 0.0, %v5206
    %v5208 = vpop.f32.mrf.mxu0
    %v5209 = vadd.f32 0.0, %v5208
    %5210 = vmatprep.mubr.f32.mxu0 0.0
    %5211 = vmatmul.mubr.f32.gmra.mxu0 %v4366
    %v5212 = vpop.f32.mrf.mxu0
    %v5213 = vadd.f32 0.0, %v5212
    %v5214 = vpop.f32.mrf.mxu0
    %v5215 = vadd.f32 0.0, %v5214
    %5216 = vmatprep.mubr.f32.mxu0 0.0
    %5217 = vmatmul.mubr.f32.gmra.mxu0 %v4369
    %v5218 = vpop.f32.mrf.mxu0
    %v5219 = vadd.f32 0.0, %v5218
    %v5220 = vpop.f32.mrf.mxu0
    %v5221 = vadd.f32 0.0, %v5220
    %5222 = vmatprep.mubr.f32.mxu0 0.0
    %5223 = vmatmul.mubr.f32.gmra.mxu0 %v4372
    %v5224 = vpop.f32.mrf.mxu0
    %v5225 = vadd.f32 0.0, %v5224
    %v5226 = vpop.f32.mrf.mxu0
    %v5227 = vadd.f32 0.0, %v5226
    %5228 = vdwg.mxu0
    %5229 = vmatprep.subr.mxu0 0.0
    %5230 = vmatpush1.msra.mxu0 0.0
    %5231 = vmatprep.subr.mxu0 0.0
    %5232 = vmatpush1.msra.mxu0 0.0
    %5233 = vmatprep.subr.mxu0 0.0
    %5234 = vmatpush1.msra.mxu0 0.0
    %5235 = vmatprep.subr.mxu0 0.0
    %5236 = vmatpush1.msra.mxu0 0.0
    %5237 = vmatprep.subr.mxu0 0.0
    %5238 = vmatpush1.msra.mxu0 0.0
    %5239 = vmatprep.subr.mxu0 0.0
    %5240 = vmatpush1.msra.mxu0 0.0
    %5241 = vmatprep.subr.mxu0 0.0
    %5242 = vmatpush1.msra.mxu0 0.0
    %5243 = vmatprep.subr.mxu0 0.0
    %5244 = vmatpush1.msra.mxu0 0.0
    %5245 = vmatprep.subr.mxu0 0.0
    %5246 = vmatpush1.msra.mxu0 0.0
    %5247 = vmatprep.subr.mxu0 0.0
    %5248 = vmatpush1.msra.mxu0 0.0
    %5249 = vmatprep.subr.mxu0 0.0
    %5250 = vmatpush1.msra.mxu0 0.0
    %5251 = vmatprep.subr.mxu0 0.0
    %5252 = vmatpush1.msra.mxu0 0.0
    %5253 = vmatprep.subr.mxu0 %v4354
    %5254 = vmatpush1.msra.mxu0 %v4353
    %5255 = vmatprep.subr.mxu0 %v4330
    %5256 = vmatpush1.msra.mxu0 %v4329
    %5257 = vmatprep.subr.mxu0 %v4306
    %5258 = vmatpush1.msra.mxu0 %v4305
    %5259 = vmatprep.subr.mxu0 %v4282
    %5260 = vmatpush1.msra.mxu0 %v4281
    %5261 = vmatprep.subr.mxu0 0.0
    %5262 = vmatpush2.msra.mxu0 0.0
    %5263 = vmatprep.subr.mxu0 0.0
    %5264 = vmatpush2.msra.mxu0 0.0
    %5265 = vmatprep.subr.mxu0 0.0
    %5266 = vmatpush2.msra.mxu0 0.0
    %5267 = vmatprep.subr.mxu0 0.0
    %5268 = vmatpush2.msra.mxu0 0.0
    %5269 = vmatprep.subr.mxu0 0.0
    %5270 = vmatpush2.msra.mxu0 0.0
    %5271 = vmatprep.subr.mxu0 0.0
    %5272 = vmatpush2.msra.mxu0 0.0
    %5273 = vmatprep.subr.mxu0 0.0
    %5274 = vmatpush2.msra.mxu0 0.0
    %5275 = vmatprep.subr.mxu0 0.0
    %5276 = vmatpush2.msra.mxu0 0.0
    %5277 = vmatprep.subr.mxu0 0.0
    %5278 = vmatpush2.msra.mxu0 0.0
    %5279 = vmatprep.subr.mxu0 0.0
    %5280 = vmatpush2.msra.mxu0 0.0
    %5281 = vmatprep.subr.mxu0 0.0
    %5282 = vmatpush2.msra.mxu0 0.0
    %5283 = vmatprep.subr.mxu0 0.0
    %5284 = vmatpush2.msra.mxu0 0.0
    %5285 = vmatprep.subr.mxu0 0.0
    %5286 = vmatpush2.msra.mxu0 0.0
    %5287 = vmatprep.subr.mxu0 0.0
    %5288 = vmatpush2.msra.mxu0 0.0
    %5289 = vmatprep.subr.mxu0 0.0
    %5290 = vmatpush2.msra.mxu0 0.0
    %5291 = vmatprep.subr.mxu0 0.0
    %5292 = vmatpush2.msra.mxu0 0.0
    %5293 = vmatprep.mubr.f32.mxu0 0.0
    %5294 = vmatmul.mubr.f32.gmra.mxu0 %v4360
    %v5295 = vpop.f32.mrf.mxu0
    %v5296 = vadd.f32 0.0, %v5295
    %v5297 = vpop.f32.mrf.mxu0
    %v5298 = vadd.f32 0.0, %v5297
    %5299 = vmatprep.mubr.f32.mxu0 0.0
    %5300 = vmatmul.mubr.f32.gmra.mxu0 %v4363
    %v5301 = vpop.f32.mrf.mxu0
    %v5302 = vadd.f32 0.0, %v5301
    %v5303 = vpop.f32.mrf.mxu0
    %v5304 = vadd.f32 0.0, %v5303
    %5305 = vmatprep.mubr.f32.mxu0 0.0
    %5306 = vmatmul.mubr.f32.gmra.mxu0 %v4366
    %v5307 = vpop.f32.mrf.mxu0
    %v5308 = vadd.f32 0.0, %v5307
    %v5309 = vpop.f32.mrf.mxu0
    %v5310 = vadd.f32 0.0, %v5309
    %5311 = vmatprep.mubr.f32.mxu0 0.0
    %5312 = vmatmul.mubr.f32.gmra.mxu0 %v4369
    %v5313 = vpop.f32.mrf.mxu0
    %v5314 = vadd.f32 0.0, %v5313
    %v5315 = vpop.f32.mrf.mxu0
    %v5316 = vadd.f32 0.0, %v5315
    %5317 = vmatprep.mubr.f32.mxu0 0.0
    %5318 = vmatmul.mubr.f32.gmra.mxu0 %v4372
    %v5319 = vpop.f32.mrf.mxu0
    %v5320 = vadd.f32 0.0, %v5319
    %v5321 = vpop.f32.mrf.mxu0
    %v5322 = vadd.f32 0.0, %v5321
    %5323 = vdwg.mxu0
    %5324 = vmatprep.subr.mxu0 0.0
    %5325 = vmatpush1.msra.mxu0 0.0
    %5326 = vmatprep.subr.mxu0 0.0
    %5327 = vmatpush1.msra.mxu0 0.0
    %5328 = vmatprep.subr.mxu0 0.0
    %5329 = vmatpush1.msra.mxu0 0.0
    %5330 = vmatprep.subr.mxu0 0.0
    %5331 = vmatpush1.msra.mxu0 0.0
    %5332 = vmatprep.subr.mxu0 0.0
    %5333 = vmatpush1.msra.mxu0 0.0
    %5334 = vmatprep.subr.mxu0 0.0
    %5335 = vmatpush1.msra.mxu0 0.0
    %5336 = vmatprep.subr.mxu0 0.0
    %5337 = vmatpush1.msra.mxu0 0.0
    %5338 = vmatprep.subr.mxu0 0.0
    %5339 = vmatpush1.msra.mxu0 0.0
    %5340 = vmatprep.subr.mxu0 0.0
    %5341 = vmatpush1.msra.mxu0 0.0
    %5342 = vmatprep.subr.mxu0 0.0
    %5343 = vmatpush1.msra.mxu0 0.0
    %5344 = vmatprep.subr.mxu0 0.0
    %5345 = vmatpush1.msra.mxu0 0.0
    %5346 = vmatprep.subr.mxu0 0.0
    %5347 = vmatpush1.msra.mxu0 0.0
    %5348 = vmatprep.subr.mxu0 %v4356
    %5349 = vmatpush1.msra.mxu0 %v4355
    %5350 = vmatprep.subr.mxu0 %v4332
    %5351 = vmatpush1.msra.mxu0 %v4331
    %5352 = vmatprep.subr.mxu0 %v4308
    %5353 = vmatpush1.msra.mxu0 %v4307
    %5354 = vmatprep.subr.mxu0 %v4284
    %5355 = vmatpush1.msra.mxu0 %v4283
    %5356 = vmatprep.subr.mxu0 0.0
    %5357 = vmatpush2.msra.mxu0 0.0
    %5358 = vmatprep.subr.mxu0 0.0
    %5359 = vmatpush2.msra.mxu0 0.0
    %5360 = vmatprep.subr.mxu0 0.0
    %5361 = vmatpush2.msra.mxu0 0.0
    %5362 = vmatprep.subr.mxu0 0.0
    %5363 = vmatpush2.msra.mxu0 0.0
    %5364 = vmatprep.subr.mxu0 0.0
    %5365 = vmatpush2.msra.mxu0 0.0
    %5366 = vmatprep.subr.mxu0 0.0
    %5367 = vmatpush2.msra.mxu0 0.0
    %5368 = vmatprep.subr.mxu0 0.0
    %5369 = vmatpush2.msra.mxu0 0.0
    %5370 = vmatprep.subr.mxu0 0.0
    %5371 = vmatpush2.msra.mxu0 0.0
    %5372 = vmatprep.subr.mxu0 0.0
    %5373 = vmatpush2.msra.mxu0 0.0
    %5374 = vmatprep.subr.mxu0 0.0
    %5375 = vmatpush2.msra.mxu0 0.0
    %5376 = vmatprep.subr.mxu0 0.0
    %5377 = vmatpush2.msra.mxu0 0.0
    %5378 = vmatprep.subr.mxu0 0.0
    %5379 = vmatpush2.msra.mxu0 0.0
    %5380 = vmatprep.subr.mxu0 0.0
    %5381 = vmatpush2.msra.mxu0 0.0
    %5382 = vmatprep.subr.mxu0 0.0
    %5383 = vmatpush2.msra.mxu0 0.0
    %5384 = vmatprep.subr.mxu0 0.0
    %5385 = vmatpush2.msra.mxu0 0.0
    %5386 = vmatprep.subr.mxu0 0.0
    %5387 = vmatpush2.msra.mxu0 0.0
    %5388 = vmatprep.mubr.f32.mxu0 0.0
    %5389 = vmatmul.mubr.f32.gmra.mxu0 %v4360
    %v5390 = vpop.f32.mrf.mxu0
    %v5391 = vadd.f32 0.0, %v5390
    %v5392 = vpop.f32.mrf.mxu0
    %v5393 = vadd.f32 0.0, %v5392
    %5394 = vmatprep.mubr.f32.mxu0 0.0
    %5395 = vmatmul.mubr.f32.gmra.mxu0 %v4363
    %v5396 = vpop.f32.mrf.mxu0
    %v5397 = vadd.f32 0.0, %v5396
    %v5398 = vpop.f32.mrf.mxu0
    %v5399 = vadd.f32 0.0, %v5398
    %5400 = vmatprep.mubr.f32.mxu0 0.0
    %5401 = vmatmul.mubr.f32.gmra.mxu0 %v4366
    %v5402 = vpop.f32.mrf.mxu0
    %v5403 = vadd.f32 0.0, %v5402
    %v5404 = vpop.f32.mrf.mxu0
    %v5405 = vadd.f32 0.0, %v5404
    %5406 = vmatprep.mubr.f32.mxu0 0.0
    %5407 = vmatmul.mubr.f32.gmra.mxu0 %v4369
    %v5408 = vpop.f32.mrf.mxu0
    %v5409 = vadd.f32 0.0, %v5408
    %v5410 = vpop.f32.mrf.mxu0
    %v5411 = vadd.f32 0.0, %v5410
    %5412 = vmatprep.mubr.f32.mxu0 0.0
    %5413 = vmatmul.mubr.f32.gmra.mxu0 %v4372
    %v5414 = vpop.f32.mrf.mxu0
    %v5415 = vadd.f32 0.0, %v5414
    %v5416 = vpop.f32.mrf.mxu0
    %v5417 = vadd.f32 0.0, %v5416
    %5418 = vdwg.mxu0
    %5419 = vmatprep.subr.mxu0 0.0
    %5420 = vmatpush1.msra.mxu0 0.0
    %5421 = vmatprep.subr.mxu0 0.0
    %5422 = vmatpush1.msra.mxu0 0.0
    %5423 = vmatprep.subr.mxu0 0.0
    %5424 = vmatpush1.msra.mxu0 0.0
    %5425 = vmatprep.subr.mxu0 0.0
    %5426 = vmatpush1.msra.mxu0 0.0
    %5427 = vmatprep.subr.mxu0 0.0
    %5428 = vmatpush1.msra.mxu0 0.0
    %5429 = vmatprep.subr.mxu0 0.0
    %5430 = vmatpush1.msra.mxu0 0.0
    %5431 = vmatprep.subr.mxu0 0.0
    %5432 = vmatpush1.msra.mxu0 0.0
    %5433 = vmatprep.subr.mxu0 0.0
    %5434 = vmatpush1.msra.mxu0 0.0
    %5435 = vmatprep.subr.mxu0 0.0
    %5436 = vmatpush1.msra.mxu0 0.0
    %5437 = vmatprep.subr.mxu0 0.0
    %5438 = vmatpush1.msra.mxu0 0.0
    %5439 = vmatprep.subr.mxu0 0.0
    %5440 = vmatpush1.msra.mxu0 0.0
    %5441 = vmatprep.subr.mxu0 0.0
    %5442 = vmatpush1.msra.mxu0 0.0
    %5443 = vmatprep.subr.mxu0 %v4358
    %5444 = vmatpush1.msra.mxu0 %v4357
    %5445 = vmatprep.subr.mxu0 %v4334
    %5446 = vmatpush1.msra.mxu0 %v4333
    %5447 = vmatprep.subr.mxu0 %v4310
    %5448 = vmatpush1.msra.mxu0 %v4309
    %5449 = vmatprep.subr.mxu0 %v4286
    %5450 = vmatpush1.msra.mxu0 %v4285
    %5451 = vmatprep.subr.mxu0 0.0
    %5452 = vmatpush2.msra.mxu0 0.0
    %5453 = vmatprep.subr.mxu0 0.0
    %5454 = vmatpush2.msra.mxu0 0.0
    %5455 = vmatprep.subr.mxu0 0.0
    %5456 = vmatpush2.msra.mxu0 0.0
    %5457 = vmatprep.subr.mxu0 0.0
    %5458 = vmatpush2.msra.mxu0 0.0
    %5459 = vmatprep.subr.mxu0 0.0
    %5460 = vmatpush2.msra.mxu0 0.0
    %5461 = vmatprep.subr.mxu0 0.0
    %5462 = vmatpush2.msra.mxu0 0.0
    %5463 = vmatprep.subr.mxu0 0.0
    %5464 = vmatpush2.msra.mxu0 0.0
    %5465 = vmatprep.subr.mxu0 0.0
    %5466 = vmatpush2.msra.mxu0 0.0
    %5467 = vmatprep.subr.mxu0 0.0
    %5468 = vmatpush2.msra.mxu0 0.0
    %5469 = vmatprep.subr.mxu0 0.0
    %5470 = vmatpush2.msra.mxu0 0.0
    %5471 = vmatprep.subr.mxu0 0.0
    %5472 = vmatpush2.msra.mxu0 0.0
    %5473 = vmatprep.subr.mxu0 0.0
    %5474 = vmatpush2.msra.mxu0 0.0
    %5475 = vmatprep.subr.mxu0 0.0
    %5476 = vmatpush2.msra.mxu0 0.0
    %5477 = vmatprep.subr.mxu0 0.0
    %5478 = vmatpush2.msra.mxu0 0.0
    %5479 = vmatprep.subr.mxu0 0.0
    %5480 = vmatpush2.msra.mxu0 0.0
    %5481 = vmatprep.subr.mxu0 0.0
    %5482 = vmatpush2.msra.mxu0 0.0
    %5483 = vmatprep.mubr.f32.mxu0 0.0
    %5484 = vmatmul.mubr.f32.gmra.mxu0 %v4360
    %v5485 = vpop.f32.mrf.mxu0
    %v5486 = vadd.f32 0.0, %v5485
    %v5487 = vpop.f32.mrf.mxu0
    %v5488 = vadd.f32 0.0, %v5487
    %5489 = vmatprep.mubr.f32.mxu0 0.0
    %5490 = vmatmul.mubr.f32.gmra.mxu0 %v4363
    %v5491 = vpop.f32.mrf.mxu0
    %v5492 = vadd.f32 0.0, %v5491
    %v5493 = vpop.f32.mrf.mxu0
    %v5494 = vadd.f32 0.0, %v5493
    %5495 = vmatprep.mubr.f32.mxu0 0.0
    %5496 = vmatmul.mubr.f32.gmra.mxu0 %v4366
    %v5497 = vpop.f32.mrf.mxu0
    %v5498 = vadd.f32 0.0, %v5497
    %v5499 = vpop.f32.mrf.mxu0
    %v5500 = vadd.f32 0.0, %v5499
    %5501 = vmatprep.mubr.f32.mxu0 0.0
    %5502 = vmatmul.mubr.f32.gmra.mxu0 %v4369
    %v5503 = vpop.f32.mrf.mxu0
    %v5504 = vadd.f32 0.0, %v5503
    %v5505 = vpop.f32.mrf.mxu0
    %v5506 = vadd.f32 0.0, %v5505
    %5507 = vmatprep.mubr.f32.mxu0 0.0
    %5508 = vmatmul.mubr.f32.gmra.mxu0 %v4372
    %v5509 = vpop.f32.mrf.mxu0
    %v5510 = vadd.f32 0.0, %v5509
    %v5511 = vpop.f32.mrf.mxu0
    %v5512 = vadd.f32 0.0, %v5511
    %5513 = vdwg.mxu0
    %5514 = vmatprep.subr.mxu0 0.0
    %5515 = vmatpush1.msra.mxu0 0.0
    %5516 = vmatprep.subr.mxu0 0.0
    %5517 = vmatpush1.msra.mxu0 0.0
    %5518 = vmatprep.subr.mxu0 0.0
    %5519 = vmatpush1.msra.mxu0 0.0
    %5520 = vmatprep.subr.mxu0 0.0
    %5521 = vmatpush1.msra.mxu0 0.0
    %5522 = vmatprep.subr.mxu0 0.0
    %5523 = vmatpush1.msra.mxu0 0.0
    %5524 = vmatprep.subr.mxu0 0.0
    %5525 = vmatpush1.msra.mxu0 0.0
    %5526 = vmatprep.subr.mxu0 0.0
    %5527 = vmatpush1.msra.mxu0 0.0
    %5528 = vmatprep.subr.mxu0 0.0
    %5529 = vmatpush1.msra.mxu0 0.0
    %5530 = vmatprep.subr.mxu0 0.0
    %5531 = vmatpush1.msra.mxu0 0.0
    %5532 = vmatprep.subr.mxu0 0.0
    %5533 = vmatpush1.msra.mxu0 0.0
    %5534 = vmatprep.subr.mxu0 0.0
    %5535 = vmatpush1.msra.mxu0 0.0
    %5536 = vmatprep.subr.mxu0 0.0
    %5537 = vmatpush1.msra.mxu0 0.0
    %5538 = vmatprep.subr.mxu0 %v160
    %5539 = vmatpush1.msra.mxu0 %v159
    %5540 = vmatprep.subr.mxu0 %v136
    %5541 = vmatpush1.msra.mxu0 %v135
    %5542 = vmatprep.subr.mxu0 %v112
    %5543 = vmatpush1.msra.mxu0 %v111
    %5544 = vmatprep.subr.mxu0 %v88
    %5545 = vmatpush1.msra.mxu0 %v87
    %5546 = vmatprep.subr.mxu0 0.0
    %5547 = vmatpush2.msra.mxu0 0.0
    %5548 = vmatprep.subr.mxu0 0.0
    %5549 = vmatpush2.msra.mxu0 0.0
    %5550 = vmatprep.subr.mxu0 0.0
    %5551 = vmatpush2.msra.mxu0 0.0
    %5552 = vmatprep.subr.mxu0 0.0
    %5553 = vmatpush2.msra.mxu0 0.0
    %5554 = vmatprep.subr.mxu0 0.0
    %5555 = vmatpush2.msra.mxu0 0.0
    %5556 = vmatprep.subr.mxu0 0.0
    %5557 = vmatpush2.msra.mxu0 0.0
    %5558 = vmatprep.subr.mxu0 0.0
    %5559 = vmatpush2.msra.mxu0 0.0
    %5560 = vmatprep.subr.mxu0 0.0
    %5561 = vmatpush2.msra.mxu0 0.0
    %5562 = vmatprep.subr.mxu0 0.0
    %5563 = vmatpush2.msra.mxu0 0.0
    %5564 = vmatprep.subr.mxu0 0.0
    %5565 = vmatpush2.msra.mxu0 0.0
    %5566 = vmatprep.subr.mxu0 0.0
    %5567 = vmatpush2.msra.mxu0 0.0
    %5568 = vmatprep.subr.mxu0 0.0
    %5569 = vmatpush2.msra.mxu0 0.0
    %5570 = vmatprep.subr.mxu0 0.0
    %5571 = vmatpush2.msra.mxu0 0.0
    %5572 = vmatprep.subr.mxu0 0.0
    %5573 = vmatpush2.msra.mxu0 0.0
    %5574 = vmatprep.subr.mxu0 0.0
    %5575 = vmatpush2.msra.mxu0 0.0
    %5576 = vmatprep.subr.mxu0 0.0
    %5577 = vmatpush2.msra.mxu0 0.0
    %5578 = vmatprep.mubr.f32.mxu0 0.0
    %5579 = vmatmul.mubr.f32.gmra.mxu0 %v4360
    %v5580 = vpop.f32.mrf.mxu0
    %v5581 = vadd.f32 0.0, %v5580
    %v5582 = vpop.f32.mrf.mxu0
    %v5583 = vadd.f32 0.0, %v5582
    %5584 = vmatprep.mubr.f32.mxu0 0.0
    %5585 = vmatmul.mubr.f32.gmra.mxu0 %v4363
    %v5586 = vpop.f32.mrf.mxu0
    %v5587 = vadd.f32 0.0, %v5586
    %v5588 = vpop.f32.mrf.mxu0
    %v5589 = vadd.f32 0.0, %v5588
    %5590 = vmatprep.mubr.f32.mxu0 0.0
    %5591 = vmatmul.mubr.f32.gmra.mxu0 %v4366
    %v5592 = vpop.f32.mrf.mxu0
    %v5593 = vadd.f32 0.0, %v5592
    %v5594 = vpop.f32.mrf.mxu0
    %v5595 = vadd.f32 0.0, %v5594
    %5596 = vmatprep.mubr.f32.mxu0 0.0
    %5597 = vmatmul.mubr.f32.gmra.mxu0 %v4369
    %v5598 = vpop.f32.mrf.mxu0
    %v5599 = vadd.f32 0.0, %v5598
    %v5600 = vpop.f32.mrf.mxu0
    %v5601 = vadd.f32 0.0, %v5600
    %5602 = vmatprep.mubr.f32.mxu0 0.0
    %5603 = vmatmul.mubr.f32.gmra.mxu0 %v4372
    %v5604 = vpop.f32.mrf.mxu0
    %v5605 = vadd.f32 0.0, %v5604
    %v5606 = vpop.f32.mrf.mxu0
    %v5607 = vadd.f32 0.0, %v5606
    %5608 = vdwg.mxu0
    %5609 = vmatprep.subr.mxu0 0.0
    %5610 = vmatpush1.msra.mxu0 0.0
    %5611 = vmatprep.subr.mxu0 0.0
    %5612 = vmatpush1.msra.mxu0 0.0
    %5613 = vmatprep.subr.mxu0 0.0
    %5614 = vmatpush1.msra.mxu0 0.0
    %5615 = vmatprep.subr.mxu0 0.0
    %5616 = vmatpush1.msra.mxu0 0.0
    %5617 = vmatprep.subr.mxu0 0.0
    %5618 = vmatpush1.msra.mxu0 0.0
    %5619 = vmatprep.subr.mxu0 0.0
    %5620 = vmatpush1.msra.mxu0 0.0
    %5621 = vmatprep.subr.mxu0 0.0
    %5622 = vmatpush1.msra.mxu0 0.0
    %5623 = vmatprep.subr.mxu0 0.0
    %5624 = vmatpush1.msra.mxu0 0.0
    %5625 = vmatprep.subr.mxu0 0.0
    %5626 = vmatpush1.msra.mxu0 0.0
    %5627 = vmatprep.subr.mxu0 0.0
    %5628 = vmatpush1.msra.mxu0 0.0
    %5629 = vmatprep.subr.mxu0 0.0
    %5630 = vmatpush1.msra.mxu0 0.0
    %5631 = vmatprep.subr.mxu0 0.0
    %5632 = vmatpush1.msra.mxu0 0.0
    %5633 = vmatprep.subr.mxu0 %v162
    %5634 = vmatpush1.msra.mxu0 %v161
    %5635 = vmatprep.subr.mxu0 %v138
    %5636 = vmatpush1.msra.mxu0 %v137
    %5637 = vmatprep.subr.mxu0 %v114
    %5638 = vmatpush1.msra.mxu0 %v113
    %5639 = vmatprep.subr.mxu0 %v90
    %5640 = vmatpush1.msra.mxu0 %v89
    %5641 = vmatprep.subr.mxu0 0.0
    %5642 = vmatpush2.msra.mxu0 0.0
    %5643 = vmatprep.subr.mxu0 0.0
    %5644 = vmatpush2.msra.mxu0 0.0
    %5645 = vmatprep.subr.mxu0 0.0
    %5646 = vmatpush2.msra.mxu0 0.0
    %5647 = vmatprep.subr.mxu0 0.0
    %5648 = vmatpush2.msra.mxu0 0.0
    %5649 = vmatprep.subr.mxu0 0.0
    %5650 = vmatpush2.msra.mxu0 0.0
    %5651 = vmatprep.subr.mxu0 0.0
    %5652 = vmatpush2.msra.mxu0 0.0
    %5653 = vmatprep.subr.mxu0 0.0
    %5654 = vmatpush2.msra.mxu0 0.0
    %5655 = vmatprep.subr.mxu0 0.0
    %5656 = vmatpush2.msra.mxu0 0.0
    %5657 = vmatprep.subr.mxu0 0.0
    %5658 = vmatpush2.msra.mxu0 0.0
    %5659 = vmatprep.subr.mxu0 0.0
    %5660 = vmatpush2.msra.mxu0 0.0
    %5661 = vmatprep.subr.mxu0 0.0
    %5662 = vmatpush2.msra.mxu0 0.0
    %5663 = vmatprep.subr.mxu0 0.0
    %5664 = vmatpush2.msra.mxu0 0.0
    %5665 = vmatprep.subr.mxu0 0.0
    %5666 = vmatpush2.msra.mxu0 0.0
    %5667 = vmatprep.subr.mxu0 0.0
    %5668 = vmatpush2.msra.mxu0 0.0
    %5669 = vmatprep.subr.mxu0 0.0
    %5670 = vmatpush2.msra.mxu0 0.0
    %5671 = vmatprep.subr.mxu0 0.0
    %5672 = vmatpush2.msra.mxu0 0.0
    %5673 = vmatprep.mubr.f32.mxu0 0.0
    %5674 = vmatmul.mubr.f32.gmra.mxu0 %v4360
    %v5675 = vpop.f32.mrf.mxu0
    %v5676 = vadd.f32 0.0, %v5675
    %v5677 = vpop.f32.mrf.mxu0
    %v5678 = vadd.f32 0.0, %v5677
    %5679 = vmatprep.mubr.f32.mxu0 0.0
    %5680 = vmatmul.mubr.f32.gmra.mxu0 %v4363
    %v5681 = vpop.f32.mrf.mxu0
    %v5682 = vadd.f32 0.0, %v5681
    %v5683 = vpop.f32.mrf.mxu0
    %v5684 = vadd.f32 0.0, %v5683
    %5685 = vmatprep.mubr.f32.mxu0 0.0
    %5686 = vmatmul.mubr.f32.gmra.mxu0 %v4366
    %v5687 = vpop.f32.mrf.mxu0
    %v5688 = vadd.f32 0.0, %v5687
    %v5689 = vpop.f32.mrf.mxu0
    %v5690 = vadd.f32 0.0, %v5689
    %5691 = vmatprep.mubr.f32.mxu0 0.0
    %5692 = vmatmul.mubr.f32.gmra.mxu0 %v4369
    %v5693 = vpop.f32.mrf.mxu0
    %v5694 = vadd.f32 0.0, %v5693
    %v5695 = vpop.f32.mrf.mxu0
    %v5696 = vadd.f32 0.0, %v5695
    %5697 = vmatprep.mubr.f32.mxu0 0.0
    %5698 = vmatmul.mubr.f32.gmra.mxu0 %v4372
    %v5699 = vpop.f32.mrf.mxu0
    %v5700 = vadd.f32 0.0, %v5699
    %v5701 = vpop.f32.mrf.mxu0
    %v5702 = vadd.f32 0.0, %v5701
    %5703 = vdwg.mxu0
    %5704 = vmatprep.subr.mxu0 0.0
    %5705 = vmatpush1.msra.mxu0 0.0
    %5706 = vmatprep.subr.mxu0 0.0
    %5707 = vmatpush1.msra.mxu0 0.0
    %5708 = vmatprep.subr.mxu0 0.0
    %5709 = vmatpush1.msra.mxu0 0.0
    %5710 = vmatprep.subr.mxu0 0.0
    %5711 = vmatpush1.msra.mxu0 0.0
    %5712 = vmatprep.subr.mxu0 0.0
    %5713 = vmatpush1.msra.mxu0 0.0
    %5714 = vmatprep.subr.mxu0 0.0
    %5715 = vmatpush1.msra.mxu0 0.0
    %5716 = vmatprep.subr.mxu0 0.0
    %5717 = vmatpush1.msra.mxu0 0.0
    %5718 = vmatprep.subr.mxu0 0.0
    %5719 = vmatpush1.msra.mxu0 0.0
    %5720 = vmatprep.subr.mxu0 0.0
    %5721 = vmatpush1.msra.mxu0 0.0
    %5722 = vmatprep.subr.mxu0 0.0
    %5723 = vmatpush1.msra.mxu0 0.0
    %5724 = vmatprep.subr.mxu0 0.0
    %5725 = vmatpush1.msra.mxu0 0.0
    %5726 = vmatprep.subr.mxu0 0.0
    %5727 = vmatpush1.msra.mxu0 0.0
    %5728 = vmatprep.subr.mxu0 %v164
    %5729 = vmatpush1.msra.mxu0 %v163
    %5730 = vmatprep.subr.mxu0 %v140
    %5731 = vmatpush1.msra.mxu0 %v139
    %5732 = vmatprep.subr.mxu0 %v116
    %5733 = vmatpush1.msra.mxu0 %v115
    %5734 = vmatprep.subr.mxu0 %v92
    %5735 = vmatpush1.msra.mxu0 %v91
    %5736 = vmatprep.subr.mxu0 0.0
    %5737 = vmatpush2.msra.mxu0 0.0
    %5738 = vmatprep.subr.mxu0 0.0
    %5739 = vmatpush2.msra.mxu0 0.0
    %5740 = vmatprep.subr.mxu0 0.0
    %5741 = vmatpush2.msra.mxu0 0.0
    %5742 = vmatprep.subr.mxu0 0.0
    %5743 = vmatpush2.msra.mxu0 0.0
    %5744 = vmatprep.subr.mxu0 0.0
    %5745 = vmatpush2.msra.mxu0 0.0
    %5746 = vmatprep.subr.mxu0 0.0
    %5747 = vmatpush2.msra.mxu0 0.0
    %5748 = vmatprep.subr.mxu0 0.0
    %5749 = vmatpush2.msra.mxu0 0.0
    %5750 = vmatprep.subr.mxu0 0.0
    %5751 = vmatpush2.msra.mxu0 0.0
    %5752 = vmatprep.subr.mxu0 0.0
    %5753 = vmatpush2.msra.mxu0 0.0
    %5754 = vmatprep.subr.mxu0 0.0
    %5755 = vmatpush2.msra.mxu0 0.0
    %5756 = vmatprep.subr.mxu0 0.0
    %5757 = vmatpush2.msra.mxu0 0.0
    %5758 = vmatprep.subr.mxu0 0.0
    %5759 = vmatpush2.msra.mxu0 0.0
    %5760 = vmatprep.subr.mxu0 0.0
    %5761 = vmatpush2.msra.mxu0 0.0
    %5762 = vmatprep.subr.mxu0 0.0
    %5763 = vmatpush2.msra.mxu0 0.0
    %5764 = vmatprep.subr.mxu0 0.0
    %5765 = vmatpush2.msra.mxu0 0.0
    %5766 = vmatprep.subr.mxu0 0.0
    %5767 = vmatpush2.msra.mxu0 0.0
    %5768 = vmatprep.mubr.f32.mxu0 0.0
    %5769 = vmatmul.mubr.f32.gmra.mxu0 %v4360
    %v5770 = vpop.f32.mrf.mxu0
    %v5771 = vadd.f32 0.0, %v5770
    %v5772 = vpop.f32.mrf.mxu0
    %v5773 = vadd.f32 0.0, %v5772
    %5774 = vmatprep.mubr.f32.mxu0 0.0
    %5775 = vmatmul.mubr.f32.gmra.mxu0 %v4363
    %v5776 = vpop.f32.mrf.mxu0
    %v5777 = vadd.f32 0.0, %v5776
    %v5778 = vpop.f32.mrf.mxu0
    %v5779 = vadd.f32 0.0, %v5778
    %5780 = vmatprep.mubr.f32.mxu0 0.0
    %5781 = vmatmul.mubr.f32.gmra.mxu0 %v4366
    %v5782 = vpop.f32.mrf.mxu0
    %v5783 = vadd.f32 0.0, %v5782
    %v5784 = vpop.f32.mrf.mxu0
    %v5785 = vadd.f32 0.0, %v5784
    %5786 = vmatprep.mubr.f32.mxu0 0.0
    %5787 = vmatmul.mubr.f32.gmra.mxu0 %v4369
    %v5788 = vpop.f32.mrf.mxu0
    %v5789 = vadd.f32 0.0, %v5788
    %v5790 = vpop.f32.mrf.mxu0
    %v5791 = vadd.f32 0.0, %v5790
    %5792 = vmatprep.mubr.f32.mxu0 0.0
    %5793 = vmatmul.mubr.f32.gmra.mxu0 %v4372
    %v5794 = vpop.f32.mrf.mxu0
    %v5795 = vadd.f32 0.0, %v5794
    %v5796 = vpop.f32.mrf.mxu0
    %v5797 = vadd.f32 0.0, %v5796
    %5798 = vdwg.mxu0
    %5799 = vmatprep.subr.mxu0 0.0
    %5800 = vmatpush1.msra.mxu0 0.0
    %5801 = vmatprep.subr.mxu0 0.0
    %5802 = vmatpush1.msra.mxu0 0.0
    %5803 = vmatprep.subr.mxu0 0.0
    %5804 = vmatpush1.msra.mxu0 0.0
    %5805 = vmatprep.subr.mxu0 0.0
    %5806 = vmatpush1.msra.mxu0 0.0
    %5807 = vmatprep.subr.mxu0 0.0
    %5808 = vmatpush1.msra.mxu0 0.0
    %5809 = vmatprep.subr.mxu0 0.0
    %5810 = vmatpush1.msra.mxu0 0.0
    %5811 = vmatprep.subr.mxu0 0.0
    %5812 = vmatpush1.msra.mxu0 0.0
    %5813 = vmatprep.subr.mxu0 0.0
    %5814 = vmatpush1.msra.mxu0 0.0
    %5815 = vmatprep.subr.mxu0 0.0
    %5816 = vmatpush1.msra.mxu0 0.0
    %5817 = vmatprep.subr.mxu0 0.0
    %5818 = vmatpush1.msra.mxu0 0.0
    %5819 = vmatprep.subr.mxu0 0.0
    %5820 = vmatpush1.msra.mxu0 0.0
    %5821 = vmatprep.subr.mxu0 0.0
    %5822 = vmatpush1.msra.mxu0 0.0
    %5823 = vmatprep.subr.mxu0 %v166
    %5824 = vmatpush1.msra.mxu0 %v165
    %5825 = vmatprep.subr.mxu0 %v142
    %5826 = vmatpush1.msra.mxu0 %v141
    %5827 = vmatprep.subr.mxu0 %v118
    %5828 = vmatpush1.msra.mxu0 %v117
    %5829 = vmatprep.subr.mxu0 %v94
    %5830 = vmatpush1.msra.mxu0 %v93
    %5831 = vmatprep.subr.mxu0 0.0
    %5832 = vmatpush2.msra.mxu0 0.0
    %5833 = vmatprep.subr.mxu0 0.0
    %5834 = vmatpush2.msra.mxu0 0.0
    %5835 = vmatprep.subr.mxu0 0.0
    %5836 = vmatpush2.msra.mxu0 0.0
    %5837 = vmatprep.subr.mxu0 0.0
    %5838 = vmatpush2.msra.mxu0 0.0
    %5839 = vmatprep.subr.mxu0 0.0
    %5840 = vmatpush2.msra.mxu0 0.0
    %5841 = vmatprep.subr.mxu0 0.0
    %5842 = vmatpush2.msra.mxu0 0.0
    %5843 = vmatprep.subr.mxu0 0.0
    %5844 = vmatpush2.msra.mxu0 0.0
    %5845 = vmatprep.subr.mxu0 0.0
    %5846 = vmatpush2.msra.mxu0 0.0
    %5847 = vmatprep.subr.mxu0 0.0
    %5848 = vmatpush2.msra.mxu0 0.0
    %5849 = vmatprep.subr.mxu0 0.0
    %5850 = vmatpush2.msra.mxu0 0.0
    %5851 = vmatprep.subr.mxu0 0.0
    %5852 = vmatpush2.msra.mxu0 0.0
    %5853 = vmatprep.subr.mxu0 0.0
    %5854 = vmatpush2.msra.mxu0 0.0
    %5855 = vmatprep.subr.mxu0 0.0
    %5856 = vmatpush2.msra.mxu0 0.0
    %5857 = vmatprep.subr.mxu0 0.0
    %5858 = vmatpush2.msra.mxu0 0.0
    %5859 = vmatprep.subr.mxu0 0.0
    %5860 = vmatpush2.msra.mxu0 0.0
    %5861 = vmatprep.subr.mxu0 0.0
    %5862 = vmatpush2.msra.mxu0 0.0
    %5863 = vmatprep.mubr.f32.mxu0 0.0
    %5864 = vmatmul.mubr.f32.gmra.mxu0 %v4360
    %v5865 = vpop.f32.mrf.mxu0
    %v5866 = vadd.f32 0.0, %v5865
    %v5867 = vpop.f32.mrf.mxu0
    %v5868 = vadd.f32 0.0, %v5867
    %5869 = vmatprep.mubr.f32.mxu0 0.0
    %5870 = vmatmul.mubr.f32.gmra.mxu0 %v4363
    %v5871 = vpop.f32.mrf.mxu0
    %v5872 = vadd.f32 0.0, %v5871
    %v5873 = vpop.f32.mrf.mxu0
    %v5874 = vadd.f32 0.0, %v5873
    %5875 = vmatprep.mubr.f32.mxu0 0.0
    %5876 = vmatmul.mubr.f32.gmra.mxu0 %v4366
    %v5877 = vpop.f32.mrf.mxu0
    %v5878 = vadd.f32 0.0, %v5877
    %v5879 = vpop.f32.mrf.mxu0
    %v5880 = vadd.f32 0.0, %v5879
    %5881 = vmatprep.mubr.f32.mxu0 0.0
    %5882 = vmatmul.mubr.f32.gmra.mxu0 %v4369
    %v5883 = vpop.f32.mrf.mxu0
    %v5884 = vadd.f32 0.0, %v5883
    %v5885 = vpop.f32.mrf.mxu0
    %v5886 = vadd.f32 0.0, %v5885
    %5887 = vmatprep.mubr.f32.mxu0 0.0
    %5888 = vmatmul.mubr.f32.gmra.mxu0 %v4372
    %v5889 = vpop.f32.mrf.mxu0
    %v5890 = vadd.f32 0.0, %v5889
    %v5891 = vpop.f32.mrf.mxu0
    %v5892 = vadd.f32 0.0, %v5891
    %5893 = vdwg.mxu0
    %5894 = vmatprep.subr.mxu0 0.0
    %5895 = vmatpush1.msra.mxu0 0.0
    %5896 = vmatprep.subr.mxu0 0.0
    %5897 = vmatpush1.msra.mxu0 0.0
    %5898 = vmatprep.subr.mxu0 0.0
    %5899 = vmatpush1.msra.mxu0 0.0
    %5900 = vmatprep.subr.mxu0 0.0
    %5901 = vmatpush1.msra.mxu0 0.0
    %5902 = vmatprep.subr.mxu0 0.0
    %5903 = vmatpush1.msra.mxu0 0.0
    %5904 = vmatprep.subr.mxu0 0.0
    %5905 = vmatpush1.msra.mxu0 0.0
    %5906 = vmatprep.subr.mxu0 0.0
    %5907 = vmatpush1.msra.mxu0 0.0
    %5908 = vmatprep.subr.mxu0 0.0
    %5909 = vmatpush1.msra.mxu0 0.0
    %5910 = vmatprep.subr.mxu0 0.0
    %5911 = vmatpush1.msra.mxu0 0.0
    %5912 = vmatprep.subr.mxu0 0.0
    %5913 = vmatpush1.msra.mxu0 0.0
    %5914 = vmatprep.subr.mxu0 0.0
    %5915 = vmatpush1.msra.mxu0 0.0
    %5916 = vmatprep.subr.mxu0 0.0
    %5917 = vmatpush1.msra.mxu0 0.0
    %5918 = vmatprep.subr.mxu0 %v168
    %5919 = vmatpush1.msra.mxu0 %v167
    %5920 = vmatprep.subr.mxu0 %v144
    %5921 = vmatpush1.msra.mxu0 %v143
    %5922 = vmatprep.subr.mxu0 %v120
    %5923 = vmatpush1.msra.mxu0 %v119
    %5924 = vmatprep.subr.mxu0 %v96
    %5925 = vmatpush1.msra.mxu0 %v95
    %5926 = vmatprep.subr.mxu0 0.0
    %5927 = vmatpush2.msra.mxu0 0.0
    %5928 = vmatprep.subr.mxu0 0.0
    %5929 = vmatpush2.msra.mxu0 0.0
    %5930 = vmatprep.subr.mxu0 0.0
    %5931 = vmatpush2.msra.mxu0 0.0
    %5932 = vmatprep.subr.mxu0 0.0
    %5933 = vmatpush2.msra.mxu0 0.0
    %5934 = vmatprep.subr.mxu0 0.0
    %5935 = vmatpush2.msra.mxu0 0.0
    %5936 = vmatprep.subr.mxu0 0.0
    %5937 = vmatpush2.msra.mxu0 0.0
    %5938 = vmatprep.subr.mxu0 0.0
    %5939 = vmatpush2.msra.mxu0 0.0
    %5940 = vmatprep.subr.mxu0 0.0
    %5941 = vmatpush2.msra.mxu0 0.0
    %5942 = vmatprep.subr.mxu0 0.0
    %5943 = vmatpush2.msra.mxu0 0.0
    %5944 = vmatprep.subr.mxu0 0.0
    %5945 = vmatpush2.msra.mxu0 0.0
    %5946 = vmatprep.subr.mxu0 0.0
    %5947 = vmatpush2.msra.mxu0 0.0
    %5948 = vmatprep.subr.mxu0 0.0
    %5949 = vmatpush2.msra.mxu0 0.0
    %5950 = vmatprep.subr.mxu0 0.0
    %5951 = vmatpush2.msra.mxu0 0.0
    %5952 = vmatprep.subr.mxu0 0.0
    %5953 = vmatpush2.msra.mxu0 0.0
    %5954 = vmatprep.subr.mxu0 0.0
    %5955 = vmatpush2.msra.mxu0 0.0
    %5956 = vmatprep.subr.mxu0 0.0
    %5957 = vmatpush2.msra.mxu0 0.0
    %5958 = vmatprep.mubr.f32.mxu0 0.0
    %5959 = vmatmul.mubr.f32.gmra.mxu0 %v4360
    %v5960 = vpop.f32.mrf.mxu0
    %v5961 = vadd.f32 0.0, %v5960
    %v5962 = vpop.f32.mrf.mxu0
    %v5963 = vadd.f32 0.0, %v5962
    %5964 = vmatprep.mubr.f32.mxu0 0.0
    %5965 = vmatmul.mubr.f32.gmra.mxu0 %v4363
    %v5966 = vpop.f32.mrf.mxu0
    %v5967 = vadd.f32 0.0, %v5966
    %v5968 = vpop.f32.mrf.mxu0
    %v5969 = vadd.f32 0.0, %v5968
    %5970 = vmatprep.mubr.f32.mxu0 0.0
    %5971 = vmatmul.mubr.f32.gmra.mxu0 %v4366
    %v5972 = vpop.f32.mrf.mxu0
    %v5973 = vadd.f32 0.0, %v5972
    %v5974 = vpop.f32.mrf.mxu0
    %v5975 = vadd.f32 0.0, %v5974
    %5976 = vmatprep.mubr.f32.mxu0 0.0
    %5977 = vmatmul.mubr.f32.gmra.mxu0 %v4369
    %v5978 = vpop.f32.mrf.mxu0
    %v5979 = vadd.f32 0.0, %v5978
    %v5980 = vpop.f32.mrf.mxu0
    %v5981 = vadd.f32 0.0, %v5980
    %5982 = vmatprep.mubr.f32.mxu0 0.0
    %5983 = vmatmul.mubr.f32.gmra.mxu0 %v4372
    %v5984 = vpop.f32.mrf.mxu0
    %v5985 = vadd.f32 0.0, %v5984
    %v5986 = vpop.f32.mrf.mxu0
    %v5987 = vadd.f32 0.0, %v5986
    %5988 = vdwg.mxu0
    %5989 = vmatprep.subr.mxu0 0.0
    %5990 = vmatpush1.msra.mxu0 0.0
    %5991 = vmatprep.subr.mxu0 0.0
    %5992 = vmatpush1.msra.mxu0 0.0
    %5993 = vmatprep.subr.mxu0 0.0
    %5994 = vmatpush1.msra.mxu0 0.0
    %5995 = vmatprep.subr.mxu0 0.0
    %5996 = vmatpush1.msra.mxu0 0.0
    %5997 = vmatprep.subr.mxu0 0.0
    %5998 = vmatpush1.msra.mxu0 0.0
    %5999 = vmatprep.subr.mxu0 0.0
    %6000 = vmatpush1.msra.mxu0 0.0
    %6001 = vmatprep.subr.mxu0 0.0
    %6002 = vmatpush1.msra.mxu0 0.0
    %6003 = vmatprep.subr.mxu0 0.0
    %6004 = vmatpush1.msra.mxu0 0.0
    %6005 = vmatprep.subr.mxu0 0.0
    %6006 = vmatpush1.msra.mxu0 0.0
    %6007 = vmatprep.subr.mxu0 0.0
    %6008 = vmatpush1.msra.mxu0 0.0
    %6009 = vmatprep.subr.mxu0 0.0
    %6010 = vmatpush1.msra.mxu0 0.0
    %6011 = vmatprep.subr.mxu0 0.0
    %6012 = vmatpush1.msra.mxu0 0.0
    %6013 = vmatprep.subr.mxu0 %v170
    %6014 = vmatpush1.msra.mxu0 %v169
    %6015 = vmatprep.subr.mxu0 %v146
    %6016 = vmatpush1.msra.mxu0 %v145
    %6017 = vmatprep.subr.mxu0 %v122
    %6018 = vmatpush1.msra.mxu0 %v121
    %6019 = vmatprep.subr.mxu0 %v98
    %6020 = vmatpush1.msra.mxu0 %v97
    %6021 = vmatprep.subr.mxu0 0.0
    %6022 = vmatpush2.msra.mxu0 0.0
    %6023 = vmatprep.subr.mxu0 0.0
    %6024 = vmatpush2.msra.mxu0 0.0
    %6025 = vmatprep.subr.mxu0 0.0
    %6026 = vmatpush2.msra.mxu0 0.0
    %6027 = vmatprep.subr.mxu0 0.0
    %6028 = vmatpush2.msra.mxu0 0.0
    %6029 = vmatprep.subr.mxu0 0.0
    %6030 = vmatpush2.msra.mxu0 0.0
    %6031 = vmatprep.subr.mxu0 0.0
    %6032 = vmatpush2.msra.mxu0 0.0
    %6033 = vmatprep.subr.mxu0 0.0
    %6034 = vmatpush2.msra.mxu0 0.0
    %6035 = vmatprep.subr.mxu0 0.0
    %6036 = vmatpush2.msra.mxu0 0.0
    %6037 = vmatprep.subr.mxu0 0.0
    %6038 = vmatpush2.msra.mxu0 0.0
    %6039 = vmatprep.subr.mxu0 0.0
    %6040 = vmatpush2.msra.mxu0 0.0
    %6041 = vmatprep.subr.mxu0 0.0
    %6042 = vmatpush2.msra.mxu0 0.0
    %6043 = vmatprep.subr.mxu0 0.0
    %6044 = vmatpush2.msra.mxu0 0.0
    %6045 = vmatprep.subr.mxu0 0.0
    %6046 = vmatpush2.msra.mxu0 0.0
    %6047 = vmatprep.subr.mxu0 0.0
    %6048 = vmatpush2.msra.mxu0 0.0
    %6049 = vmatprep.subr.mxu0 0.0
    %6050 = vmatpush2.msra.mxu0 0.0
    %6051 = vmatprep.subr.mxu0 0.0
    %6052 = vmatpush2.msra.mxu0 0.0
    %6053 = vmatprep.mubr.f32.mxu0 0.0
    %6054 = vmatmul.mubr.f32.gmra.mxu0 %v4360
    %v6055 = vpop.f32.mrf.mxu0
    %v6056 = vadd.f32 0.0, %v6055
    %v6057 = vpop.f32.mrf.mxu0
    %v6058 = vadd.f32 0.0, %v6057
    %6059 = vmatprep.mubr.f32.mxu0 0.0
    %6060 = vmatmul.mubr.f32.gmra.mxu0 %v4363
    %v6061 = vpop.f32.mrf.mxu0
    %v6062 = vadd.f32 0.0, %v6061
    %v6063 = vpop.f32.mrf.mxu0
    %v6064 = vadd.f32 0.0, %v6063
    %6065 = vmatprep.mubr.f32.mxu0 0.0
    %6066 = vmatmul.mubr.f32.gmra.mxu0 %v4366
    %v6067 = vpop.f32.mrf.mxu0
    %v6068 = vadd.f32 0.0, %v6067
    %v6069 = vpop.f32.mrf.mxu0
    %v6070 = vadd.f32 0.0, %v6069
    %6071 = vmatprep.mubr.f32.mxu0 0.0
    %6072 = vmatmul.mubr.f32.gmra.mxu0 %v4369
    %v6073 = vpop.f32.mrf.mxu0
    %v6074 = vadd.f32 0.0, %v6073
    %v6075 = vpop.f32.mrf.mxu0
    %v6076 = vadd.f32 0.0, %v6075
    %6077 = vmatprep.mubr.f32.mxu0 0.0
    %6078 = vmatmul.mubr.f32.gmra.mxu0 %v4372
    %v6079 = vpop.f32.mrf.mxu0
    %v6080 = vadd.f32 0.0, %v6079
    %v6081 = vpop.f32.mrf.mxu0
    %v6082 = vadd.f32 0.0, %v6081
    %6083 = vdwg.mxu0
    %6084 = vmatprep.subr.mxu0 0.0
    %6085 = vmatpush1.msra.mxu0 0.0
    %6086 = vmatprep.subr.mxu0 0.0
    %6087 = vmatpush1.msra.mxu0 0.0
    %6088 = vmatprep.subr.mxu0 0.0
    %6089 = vmatpush1.msra.mxu0 0.0
    %6090 = vmatprep.subr.mxu0 0.0
    %6091 = vmatpush1.msra.mxu0 0.0
    %6092 = vmatprep.subr.mxu0 0.0
    %6093 = vmatpush1.msra.mxu0 0.0
    %6094 = vmatprep.subr.mxu0 0.0
    %6095 = vmatpush1.msra.mxu0 0.0
    %6096 = vmatprep.subr.mxu0 0.0
    %6097 = vmatpush1.msra.mxu0 0.0
    %6098 = vmatprep.subr.mxu0 0.0
    %6099 = vmatpush1.msra.mxu0 0.0
    %6100 = vmatprep.subr.mxu0 0.0
    %6101 = vmatpush1.msra.mxu0 0.0
    %6102 = vmatprep.subr.mxu0 0.0
    %6103 = vmatpush1.msra.mxu0 0.0
    %6104 = vmatprep.subr.mxu0 0.0
    %6105 = vmatpush1.msra.mxu0 0.0
    %6106 = vmatprep.subr.mxu0 0.0
    %6107 = vmatpush1.msra.mxu0 0.0
    %6108 = vmatprep.subr.mxu0 %v172
    %6109 = vmatpush1.msra.mxu0 %v171
    %6110 = vmatprep.subr.mxu0 %v148
    %6111 = vmatpush1.msra.mxu0 %v147
    %6112 = vmatprep.subr.mxu0 %v124
    %6113 = vmatpush1.msra.mxu0 %v123
    %6114 = vmatprep.subr.mxu0 %v100
    %6115 = vmatpush1.msra.mxu0 %v99
    %6116 = vmatprep.subr.mxu0 0.0
    %6117 = vmatpush2.msra.mxu0 0.0
    %6118 = vmatprep.subr.mxu0 0.0
    %6119 = vmatpush2.msra.mxu0 0.0
    %6120 = vmatprep.subr.mxu0 0.0
    %6121 = vmatpush2.msra.mxu0 0.0
    %6122 = vmatprep.subr.mxu0 0.0
    %6123 = vmatpush2.msra.mxu0 0.0
    %6124 = vmatprep.subr.mxu0 0.0
    %6125 = vmatpush2.msra.mxu0 0.0
    %6126 = vmatprep.subr.mxu0 0.0
    %6127 = vmatpush2.msra.mxu0 0.0
    %6128 = vmatprep.subr.mxu0 0.0
    %6129 = vmatpush2.msra.mxu0 0.0
    %6130 = vmatprep.subr.mxu0 0.0
    %6131 = vmatpush2.msra.mxu0 0.0
    %6132 = vmatprep.subr.mxu0 0.0
    %6133 = vmatpush2.msra.mxu0 0.0
    %6134 = vmatprep.subr.mxu0 0.0
    %6135 = vmatpush2.msra.mxu0 0.0
    %6136 = vmatprep.subr.mxu0 0.0
    %6137 = vmatpush2.msra.mxu0 0.0
    %6138 = vmatprep.subr.mxu0 0.0
    %6139 = vmatpush2.msra.mxu0 0.0
    %6140 = vmatprep.subr.mxu0 0.0
    %6141 = vmatpush2.msra.mxu0 0.0
    %6142 = vmatprep.subr.mxu0 0.0
    %6143 = vmatpush2.msra.mxu0 0.0
    %6144 = vmatprep.subr.mxu0 0.0
    %6145 = vmatpush2.msra.mxu0 0.0
    %6146 = vmatprep.subr.mxu0 0.0
    %6147 = vmatpush2.msra.mxu0 0.0
    %6148 = vmatprep.mubr.f32.mxu0 0.0
    %6149 = vmatmul.mubr.f32.gmra.mxu0 %v4360
    %v6150 = vpop.f32.mrf.mxu0
    %v6151 = vadd.f32 0.0, %v6150
    %v6152 = vpop.f32.mrf.mxu0
    %v6153 = vadd.f32 0.0, %v6152
    %6154 = vmatprep.mubr.f32.mxu0 0.0
    %6155 = vmatmul.mubr.f32.gmra.mxu0 %v4363
    %v6156 = vpop.f32.mrf.mxu0
    %v6157 = vadd.f32 0.0, %v6156
    %v6158 = vpop.f32.mrf.mxu0
    %v6159 = vadd.f32 0.0, %v6158
    %6160 = vmatprep.mubr.f32.mxu0 0.0
    %6161 = vmatmul.mubr.f32.gmra.mxu0 %v4366
    %v6162 = vpop.f32.mrf.mxu0
    %v6163 = vadd.f32 0.0, %v6162
    %v6164 = vpop.f32.mrf.mxu0
    %v6165 = vadd.f32 0.0, %v6164
    %6166 = vmatprep.mubr.f32.mxu0 0.0
    %6167 = vmatmul.mubr.f32.gmra.mxu0 %v4369
    %v6168 = vpop.f32.mrf.mxu0
    %v6169 = vadd.f32 0.0, %v6168
    %v6170 = vpop.f32.mrf.mxu0
    %v6171 = vadd.f32 0.0, %v6170
    %6172 = vmatprep.mubr.f32.mxu0 0.0
    %6173 = vmatmul.mubr.f32.gmra.mxu0 %v4372
    %v6174 = vpop.f32.mrf.mxu0
    %v6175 = vadd.f32 0.0, %v6174
    %v6176 = vpop.f32.mrf.mxu0
    %v6177 = vadd.f32 0.0, %v6176
    %6178 = vdwg.mxu0
    %6179 = vmatprep.subr.mxu0 0.0
    %6180 = vmatpush1.msra.mxu0 0.0
    %6181 = vmatprep.subr.mxu0 0.0
    %6182 = vmatpush1.msra.mxu0 0.0
    %6183 = vmatprep.subr.mxu0 0.0
    %6184 = vmatpush1.msra.mxu0 0.0
    %6185 = vmatprep.subr.mxu0 0.0
    %6186 = vmatpush1.msra.mxu0 0.0
    %6187 = vmatprep.subr.mxu0 0.0
    %6188 = vmatpush1.msra.mxu0 0.0
    %6189 = vmatprep.subr.mxu0 0.0
    %6190 = vmatpush1.msra.mxu0 0.0
    %6191 = vmatprep.subr.mxu0 0.0
    %6192 = vmatpush1.msra.mxu0 0.0
    %6193 = vmatprep.subr.mxu0 0.0
    %6194 = vmatpush1.msra.mxu0 0.0
    %6195 = vmatprep.subr.mxu0 0.0
    %6196 = vmatpush1.msra.mxu0 0.0
    %6197 = vmatprep.subr.mxu0 0.0
    %6198 = vmatpush1.msra.mxu0 0.0
    %6199 = vmatprep.subr.mxu0 0.0
    %6200 = vmatpush1.msra.mxu0 0.0
    %6201 = vmatprep.subr.mxu0 0.0
    %6202 = vmatpush1.msra.mxu0 0.0
    %6203 = vmatprep.subr.mxu0 %v174
    %6204 = vmatpush1.msra.mxu0 %v173
    %6205 = vmatprep.subr.mxu0 %v150
    %6206 = vmatpush1.msra.mxu0 %v149
    %6207 = vmatprep.subr.mxu0 %v126
    %6208 = vmatpush1.msra.mxu0 %v125
    %6209 = vmatprep.subr.mxu0 %v102
    %6210 = vmatpush1.msra.mxu0 %v101
    %6211 = vmatprep.subr.mxu0 0.0
    %6212 = vmatpush2.msra.mxu0 0.0
    %6213 = vmatprep.subr.mxu0 0.0
    %6214 = vmatpush2.msra.mxu0 0.0
    %6215 = vmatprep.subr.mxu0 0.0
    %6216 = vmatpush2.msra.mxu0 0.0
    %6217 = vmatprep.subr.mxu0 0.0
    %6218 = vmatpush2.msra.mxu0 0.0
    %6219 = vmatprep.subr.mxu0 0.0
    %6220 = vmatpush2.msra.mxu0 0.0
    %6221 = vmatprep.subr.mxu0 0.0
    %6222 = vmatpush2.msra.mxu0 0.0
    %6223 = vmatprep.subr.mxu0 0.0
    %6224 = vmatpush2.msra.mxu0 0.0
    %6225 = vmatprep.subr.mxu0 0.0
    %6226 = vmatpush2.msra.mxu0 0.0
    %6227 = vmatprep.subr.mxu0 0.0
    %6228 = vmatpush2.msra.mxu0 0.0
    %6229 = vmatprep.subr.mxu0 0.0
    %6230 = vmatpush2.msra.mxu0 0.0
    %6231 = vmatprep.subr.mxu0 0.0
    %6232 = vmatpush2.msra.mxu0 0.0
    %6233 = vmatprep.subr.mxu0 0.0
    %6234 = vmatpush2.msra.mxu0 0.0
    %6235 = vmatprep.subr.mxu0 0.0
    %6236 = vmatpush2.msra.mxu0 0.0
    %6237 = vmatprep.subr.mxu0 0.0
    %6238 = vmatpush2.msra.mxu0 0.0
    %6239 = vmatprep.subr.mxu0 0.0
    %6240 = vmatpush2.msra.mxu0 0.0
    %6241 = vmatprep.subr.mxu0 0.0
    %6242 = vmatpush2.msra.mxu0 0.0
    %6243 = vmatprep.mubr.f32.mxu0 0.0
    %6244 = vmatmul.mubr.f32.gmra.mxu0 %v4360
    %v6245 = vpop.f32.mrf.mxu0
    %v6246 = vadd.f32 0.0, %v6245
    %v6247 = vpop.f32.mrf.mxu0
    %v6248 = vadd.f32 0.0, %v6247
    %6249 = vmatprep.mubr.f32.mxu0 0.0
    %6250 = vmatmul.mubr.f32.gmra.mxu0 %v4363
    %v6251 = vpop.f32.mrf.mxu0
    %v6252 = vadd.f32 0.0, %v6251
    %v6253 = vpop.f32.mrf.mxu0
    %v6254 = vadd.f32 0.0, %v6253
    %6255 = vmatprep.mubr.f32.mxu0 0.0
    %6256 = vmatmul.mubr.f32.gmra.mxu0 %v4366
    %v6257 = vpop.f32.mrf.mxu0
    %v6258 = vadd.f32 0.0, %v6257
    %v6259 = vpop.f32.mrf.mxu0
    %v6260 = vadd.f32 0.0, %v6259
    %6261 = vmatprep.mubr.f32.mxu0 0.0
    %6262 = vmatmul.mubr.f32.gmra.mxu0 %v4369
    %v6263 = vpop.f32.mrf.mxu0
    %v6264 = vadd.f32 0.0, %v6263
    %v6265 = vpop.f32.mrf.mxu0
    %v6266 = vadd.f32 0.0, %v6265
    %6267 = vmatprep.mubr.f32.mxu0 0.0
    %6268 = vmatmul.mubr.f32.gmra.mxu0 %v4372
    %v6269 = vpop.f32.mrf.mxu0
    %v6270 = vadd.f32 0.0, %v6269
    %v6271 = vpop.f32.mrf.mxu0
    %v6272 = vadd.f32 0.0, %v6271
    %6273 = vdwg.mxu0
    %6274 = vmatprep.subr.mxu0 0.0
    %6275 = vmatpush1.msra.mxu0 0.0
    %6276 = vmatprep.subr.mxu0 0.0
    %6277 = vmatpush1.msra.mxu0 0.0
    %6278 = vmatprep.subr.mxu0 0.0
    %6279 = vmatpush1.msra.mxu0 0.0
    %6280 = vmatprep.subr.mxu0 0.0
    %6281 = vmatpush1.msra.mxu0 0.0
    %6282 = vmatprep.subr.mxu0 0.0
    %6283 = vmatpush1.msra.mxu0 0.0
    %6284 = vmatprep.subr.mxu0 0.0
    %6285 = vmatpush1.msra.mxu0 0.0
    %6286 = vmatprep.subr.mxu0 0.0
    %6287 = vmatpush1.msra.mxu0 0.0
    %6288 = vmatprep.subr.mxu0 0.0
    %6289 = vmatpush1.msra.mxu0 0.0
    %6290 = vmatprep.subr.mxu0 0.0
    %6291 = vmatpush1.msra.mxu0 0.0
    %6292 = vmatprep.subr.mxu0 0.0
    %6293 = vmatpush1.msra.mxu0 0.0
    %6294 = vmatprep.subr.mxu0 0.0
    %6295 = vmatpush1.msra.mxu0 0.0
    %6296 = vmatprep.subr.mxu0 0.0
    %6297 = vmatpush1.msra.mxu0 0.0
    %6298 = vmatprep.subr.mxu0 %v176
    %6299 = vmatpush1.msra.mxu0 %v175
    %6300 = vmatprep.subr.mxu0 %v152
    %6301 = vmatpush1.msra.mxu0 %v151
    %6302 = vmatprep.subr.mxu0 %v128
    %6303 = vmatpush1.msra.mxu0 %v127
    %6304 = vmatprep.subr.mxu0 %v104
    %6305 = vmatpush1.msra.mxu0 %v103
    %6306 = vmatprep.subr.mxu0 0.0
    %6307 = vmatpush2.msra.mxu0 0.0
    %6308 = vmatprep.subr.mxu0 0.0
    %6309 = vmatpush2.msra.mxu0 0.0
    %6310 = vmatprep.subr.mxu0 0.0
    %6311 = vmatpush2.msra.mxu0 0.0
    %6312 = vmatprep.subr.mxu0 0.0
    %6313 = vmatpush2.msra.mxu0 0.0
    %6314 = vmatprep.subr.mxu0 0.0
    %6315 = vmatpush2.msra.mxu0 0.0
    %6316 = vmatprep.subr.mxu0 0.0
    %6317 = vmatpush2.msra.mxu0 0.0
    %6318 = vmatprep.subr.mxu0 0.0
    %6319 = vmatpush2.msra.mxu0 0.0
    %6320 = vmatprep.subr.mxu0 0.0
    %6321 = vmatpush2.msra.mxu0 0.0
    %6322 = vmatprep.subr.mxu0 0.0
    %6323 = vmatpush2.msra.mxu0 0.0
    %6324 = vmatprep.subr.mxu0 0.0
    %6325 = vmatpush2.msra.mxu0 0.0
    %6326 = vmatprep.subr.mxu0 0.0
    %6327 = vmatpush2.msra.mxu0 0.0
    %6328 = vmatprep.subr.mxu0 0.0
    %6329 = vmatpush2.msra.mxu0 0.0
    %6330 = vmatprep.subr.mxu0 0.0
    %6331 = vmatpush2.msra.mxu0 0.0
    %6332 = vmatprep.subr.mxu0 0.0
    %6333 = vmatpush2.msra.mxu0 0.0
    %6334 = vmatprep.subr.mxu0 0.0
    %6335 = vmatpush2.msra.mxu0 0.0
    %6336 = vmatprep.subr.mxu0 0.0
    %6337 = vmatpush2.msra.mxu0 0.0
    %6338 = vmatprep.mubr.f32.mxu0 0.0
    %6339 = vmatmul.mubr.f32.gmra.mxu0 %v4360
    %v6340 = vpop.f32.mrf.mxu0
    %v6341 = vadd.f32 0.0, %v6340
    %v6342 = vpop.f32.mrf.mxu0
    %v6343 = vadd.f32 0.0, %v6342
    %6344 = vmatprep.mubr.f32.mxu0 0.0
    %6345 = vmatmul.mubr.f32.gmra.mxu0 %v4363
    %v6346 = vpop.f32.mrf.mxu0
    %v6347 = vadd.f32 0.0, %v6346
    %v6348 = vpop.f32.mrf.mxu0
    %v6349 = vadd.f32 0.0, %v6348
    %6350 = vmatprep.mubr.f32.mxu0 0.0
    %6351 = vmatmul.mubr.f32.gmra.mxu0 %v4366
    %v6352 = vpop.f32.mrf.mxu0
    %v6353 = vadd.f32 0.0, %v6352
    %v6354 = vpop.f32.mrf.mxu0
    %v6355 = vadd.f32 0.0, %v6354
    %6356 = vmatprep.mubr.f32.mxu0 0.0
    %6357 = vmatmul.mubr.f32.gmra.mxu0 %v4369
    %v6358 = vpop.f32.mrf.mxu0
    %v6359 = vadd.f32 0.0, %v6358
    %v6360 = vpop.f32.mrf.mxu0
    %v6361 = vadd.f32 0.0, %v6360
    %6362 = vmatprep.mubr.f32.mxu0 0.0
    %6363 = vmatmul.mubr.f32.gmra.mxu0 %v4372
    %v6364 = vpop.f32.mrf.mxu0
    %v6365 = vadd.f32 0.0, %v6364
    %v6366 = vpop.f32.mrf.mxu0
    %v6367 = vadd.f32 0.0, %v6366
    %6368 = vdwg.mxu0
    %6369 = vmatprep.subr.mxu0 0.0
    %6370 = vmatpush1.msra.mxu0 0.0
    %6371 = vmatprep.subr.mxu0 0.0
    %6372 = vmatpush1.msra.mxu0 0.0
    %6373 = vmatprep.subr.mxu0 0.0
    %6374 = vmatpush1.msra.mxu0 0.0
    %6375 = vmatprep.subr.mxu0 0.0
    %6376 = vmatpush1.msra.mxu0 0.0
    %6377 = vmatprep.subr.mxu0 0.0
    %6378 = vmatpush1.msra.mxu0 0.0
    %6379 = vmatprep.subr.mxu0 0.0
    %6380 = vmatpush1.msra.mxu0 0.0
    %6381 = vmatprep.subr.mxu0 0.0
    %6382 = vmatpush1.msra.mxu0 0.0
    %6383 = vmatprep.subr.mxu0 0.0
    %6384 = vmatpush1.msra.mxu0 0.0
    %6385 = vmatprep.subr.mxu0 0.0
    %6386 = vmatpush1.msra.mxu0 0.0
    %6387 = vmatprep.subr.mxu0 0.0
    %6388 = vmatpush1.msra.mxu0 0.0
    %6389 = vmatprep.subr.mxu0 0.0
    %6390 = vmatpush1.msra.mxu0 0.0
    %6391 = vmatprep.subr.mxu0 0.0
    %6392 = vmatpush1.msra.mxu0 0.0
    %6393 = vmatprep.subr.mxu0 %v178
    %6394 = vmatpush1.msra.mxu0 %v177
    %6395 = vmatprep.subr.mxu0 %v154
    %6396 = vmatpush1.msra.mxu0 %v153
    %6397 = vmatprep.subr.mxu0 %v130
    %6398 = vmatpush1.msra.mxu0 %v129
    %6399 = vmatprep.subr.mxu0 %v106
    %6400 = vmatpush1.msra.mxu0 %v105
    %6401 = vmatprep.subr.mxu0 0.0
    %6402 = vmatpush2.msra.mxu0 0.0
    %6403 = vmatprep.subr.mxu0 0.0
    %6404 = vmatpush2.msra.mxu0 0.0
    %6405 = vmatprep.subr.mxu0 0.0
    %6406 = vmatpush2.msra.mxu0 0.0
    %6407 = vmatprep.subr.mxu0 0.0
    %6408 = vmatpush2.msra.mxu0 0.0
    %6409 = vmatprep.subr.mxu0 0.0
    %6410 = vmatpush2.msra.mxu0 0.0
    %6411 = vmatprep.subr.mxu0 0.0
    %6412 = vmatpush2.msra.mxu0 0.0
    %6413 = vmatprep.subr.mxu0 0.0
    %6414 = vmatpush2.msra.mxu0 0.0
    %6415 = vmatprep.subr.mxu0 0.0
    %6416 = vmatpush2.msra.mxu0 0.0
    %6417 = vmatprep.subr.mxu0 0.0
    %6418 = vmatpush2.msra.mxu0 0.0
    %6419 = vmatprep.subr.mxu0 0.0
    %6420 = vmatpush2.msra.mxu0 0.0
    %6421 = vmatprep.subr.mxu0 0.0
    %6422 = vmatpush2.msra.mxu0 0.0
    %6423 = vmatprep.subr.mxu0 0.0
    %6424 = vmatpush2.msra.mxu0 0.0
    %6425 = vmatprep.subr.mxu0 0.0
    %6426 = vmatpush2.msra.mxu0 0.0
    %6427 = vmatprep.subr.mxu0 0.0
    %6428 = vmatpush2.msra.mxu0 0.0
    %6429 = vmatprep.subr.mxu0 0.0
    %6430 = vmatpush2.msra.mxu0 0.0
    %6431 = vmatprep.subr.mxu0 0.0
    %6432 = vmatpush2.msra.mxu0 0.0
    %6433 = vmatprep.mubr.f32.mxu0 0.0
    %6434 = vmatmul.mubr.f32.gmra.mxu0 %v4360
    %v6435 = vpop.f32.mrf.mxu0
    %v6436 = vadd.f32 0.0, %v6435
    %v6437 = vpop.f32.mrf.mxu0
    %v6438 = vadd.f32 0.0, %v6437
    %6439 = vmatprep.mubr.f32.mxu0 0.0
    %6440 = vmatmul.mubr.f32.gmra.mxu0 %v4363
    %v6441 = vpop.f32.mrf.mxu0
    %v6442 = vadd.f32 0.0, %v6441
    %v6443 = vpop.f32.mrf.mxu0
    %v6444 = vadd.f32 0.0, %v6443
    %6445 = vmatprep.mubr.f32.mxu0 0.0
    %6446 = vmatmul.mubr.f32.gmra.mxu0 %v4366
    %v6447 = vpop.f32.mrf.mxu0
    %v6448 = vadd.f32 0.0, %v6447
    %v6449 = vpop.f32.mrf.mxu0
    %v6450 = vadd.f32 0.0, %v6449
    %6451 = vmatprep.mubr.f32.mxu0 0.0
    %6452 = vmatmul.mubr.f32.gmra.mxu0 %v4369
    %v6453 = vpop.f32.mrf.mxu0
    %v6454 = vadd.f32 0.0, %v6453
    %v6455 = vpop.f32.mrf.mxu0
    %v6456 = vadd.f32 0.0, %v6455
    %6457 = vmatprep.mubr.f32.mxu0 0.0
    %6458 = vmatmul.mubr.f32.gmra.mxu0 %v4372
    %v6459 = vpop.f32.mrf.mxu0
    %v6460 = vadd.f32 0.0, %v6459
    %v6461 = vpop.f32.mrf.mxu0
    %v6462 = vadd.f32 0.0, %v6461
    %6463 = vdwg.mxu0
    %6464 = vmatprep.subr.mxu0 0.0
    %6465 = vmatpush1.msra.mxu0 0.0
    %6466 = vmatprep.subr.mxu0 0.0
    %6467 = vmatpush1.msra.mxu0 0.0
    %6468 = vmatprep.subr.mxu0 0.0
    %6469 = vmatpush1.msra.mxu0 0.0
    %6470 = vmatprep.subr.mxu0 0.0
    %6471 = vmatpush1.msra.mxu0 0.0
    %6472 = vmatprep.subr.mxu0 0.0
    %6473 = vmatpush1.msra.mxu0 0.0
    %6474 = vmatprep.subr.mxu0 0.0
    %6475 = vmatpush1.msra.mxu0 0.0
    %6476 = vmatprep.subr.mxu0 0.0
    %6477 = vmatpush1.msra.mxu0 0.0
    %6478 = vmatprep.subr.mxu0 0.0
    %6479 = vmatpush1.msra.mxu0 0.0
    %6480 = vmatprep.subr.mxu0 0.0
    %6481 = vmatpush1.msra.mxu0 0.0
    %6482 = vmatprep.subr.mxu0 0.0
    %6483 = vmatpush1.msra.mxu0 0.0
    %6484 = vmatprep.subr.mxu0 0.0
    %6485 = vmatpush1.msra.mxu0 0.0
    %6486 = vmatprep.subr.mxu0 0.0
    %6487 = vmatpush1.msra.mxu0 0.0
    %6488 = vmatprep.subr.mxu0 %v180
    %6489 = vmatpush1.msra.mxu0 %v179
    %6490 = vmatprep.subr.mxu0 %v156
    %6491 = vmatpush1.msra.mxu0 %v155
    %6492 = vmatprep.subr.mxu0 %v132
    %6493 = vmatpush1.msra.mxu0 %v131
    %6494 = vmatprep.subr.mxu0 %v108
    %6495 = vmatpush1.msra.mxu0 %v107
    %6496 = vmatprep.subr.mxu0 0.0
    %6497 = vmatpush2.msra.mxu0 0.0
    %6498 = vmatprep.subr.mxu0 0.0
    %6499 = vmatpush2.msra.mxu0 0.0
    %6500 = vmatprep.subr.mxu0 0.0
    %6501 = vmatpush2.msra.mxu0 0.0
    %6502 = vmatprep.subr.mxu0 0.0
    %6503 = vmatpush2.msra.mxu0 0.0
    %6504 = vmatprep.subr.mxu0 0.0
    %6505 = vmatpush2.msra.mxu0 0.0
    %6506 = vmatprep.subr.mxu0 0.0
    %6507 = vmatpush2.msra.mxu0 0.0
    %6508 = vmatprep.subr.mxu0 0.0
    %6509 = vmatpush2.msra.mxu0 0.0
    %6510 = vmatprep.subr.mxu0 0.0
    %6511 = vmatpush2.msra.mxu0 0.0
    %6512 = vmatprep.subr.mxu0 0.0
    %6513 = vmatpush2.msra.mxu0 0.0
    %6514 = vmatprep.subr.mxu0 0.0
    %6515 = vmatpush2.msra.mxu0 0.0
    %6516 = vmatprep.subr.mxu0 0.0
    %6517 = vmatpush2.msra.mxu0 0.0
    %6518 = vmatprep.subr.mxu0 0.0
    %6519 = vmatpush2.msra.mxu0 0.0
    %6520 = vmatprep.subr.mxu0 0.0
    %6521 = vmatpush2.msra.mxu0 0.0
    %6522 = vmatprep.subr.mxu0 0.0
    %6523 = vmatpush2.msra.mxu0 0.0
    %6524 = vmatprep.subr.mxu0 0.0
    %6525 = vmatpush2.msra.mxu0 0.0
    %6526 = vmatprep.subr.mxu0 0.0
    %6527 = vmatpush2.msra.mxu0 0.0
    %6528 = vmatprep.mubr.f32.mxu0 0.0
    %6529 = vmatmul.mubr.f32.gmra.mxu0 %v4360
    %v6530 = vpop.f32.mrf.mxu0
    %v6531 = vadd.f32 0.0, %v6530
    %v6532 = vpop.f32.mrf.mxu0
    %v6533 = vadd.f32 0.0, %v6532
    %6534 = vmatprep.mubr.f32.mxu0 0.0
    %6535 = vmatmul.mubr.f32.gmra.mxu0 %v4363
    %v6536 = vpop.f32.mrf.mxu0
    %v6537 = vadd.f32 0.0, %v6536
    %v6538 = vpop.f32.mrf.mxu0
    %v6539 = vadd.f32 0.0, %v6538
    %6540 = vmatprep.mubr.f32.mxu0 0.0
    %6541 = vmatmul.mubr.f32.gmra.mxu0 %v4366
    %v6542 = vpop.f32.mrf.mxu0
    %v6543 = vadd.f32 0.0, %v6542
    %v6544 = vpop.f32.mrf.mxu0
    %v6545 = vadd.f32 0.0, %v6544
    %6546 = vmatprep.mubr.f32.mxu0 0.0
    %6547 = vmatmul.mubr.f32.gmra.mxu0 %v4369
    %v6548 = vpop.f32.mrf.mxu0
    %v6549 = vadd.f32 0.0, %v6548
    %v6550 = vpop.f32.mrf.mxu0
    %v6551 = vadd.f32 0.0, %v6550
    %6552 = vmatprep.mubr.f32.mxu0 0.0
    %6553 = vmatmul.mubr.f32.gmra.mxu0 %v4372
    %v6554 = vpop.f32.mrf.mxu0
    %v6555 = vadd.f32 0.0, %v6554
    %v6556 = vpop.f32.mrf.mxu0
    %v6557 = vadd.f32 0.0, %v6556
    %6558 = vdwg.mxu0
    %6559 = vmatprep.subr.mxu0 0.0
    %6560 = vmatpush1.msra.mxu0 0.0
    %6561 = vmatprep.subr.mxu0 0.0
    %6562 = vmatpush1.msra.mxu0 0.0
    %6563 = vmatprep.subr.mxu0 0.0
    %6564 = vmatpush1.msra.mxu0 0.0
    %6565 = vmatprep.subr.mxu0 0.0
    %6566 = vmatpush1.msra.mxu0 0.0
    %6567 = vmatprep.subr.mxu0 0.0
    %6568 = vmatpush1.msra.mxu0 0.0
    %6569 = vmatprep.subr.mxu0 0.0
    %6570 = vmatpush1.msra.mxu0 0.0
    %6571 = vmatprep.subr.mxu0 0.0
    %6572 = vmatpush1.msra.mxu0 0.0
    %6573 = vmatprep.subr.mxu0 0.0
    %6574 = vmatpush1.msra.mxu0 0.0
    %6575 = vmatprep.subr.mxu0 0.0
    %6576 = vmatpush1.msra.mxu0 0.0
    %6577 = vmatprep.subr.mxu0 0.0
    %6578 = vmatpush1.msra.mxu0 0.0
    %6579 = vmatprep.subr.mxu0 0.0
    %6580 = vmatpush1.msra.mxu0 0.0
    %6581 = vmatprep.subr.mxu0 0.0
    %6582 = vmatpush1.msra.mxu0 0.0
    %6583 = vmatprep.subr.mxu0 %v182
    %6584 = vmatpush1.msra.mxu0 %v181
    %6585 = vmatprep.subr.mxu0 %v158
    %6586 = vmatpush1.msra.mxu0 %v157
    %6587 = vmatprep.subr.mxu0 %v134
    %6588 = vmatpush1.msra.mxu0 %v133
    %6589 = vmatprep.subr.mxu0 %v110
    %6590 = vmatpush1.msra.mxu0 %v109
    %6591 = vmatprep.subr.mxu0 0.0
    %6592 = vmatpush2.msra.mxu0 0.0
    %6593 = vmatprep.subr.mxu0 0.0
    %6594 = vmatpush2.msra.mxu0 0.0
    %6595 = vmatprep.subr.mxu0 0.0
    %6596 = vmatpush2.msra.mxu0 0.0
    %6597 = vmatprep.subr.mxu0 0.0
    %6598 = vmatpush2.msra.mxu0 0.0
    %6599 = vmatprep.subr.mxu0 0.0
    %6600 = vmatpush2.msra.mxu0 0.0
    %6601 = vmatprep.subr.mxu0 0.0
    %6602 = vmatpush2.msra.mxu0 0.0
    %6603 = vmatprep.subr.mxu0 0.0
    %6604 = vmatpush2.msra.mxu0 0.0
    %6605 = vmatprep.subr.mxu0 0.0
    %6606 = vmatpush2.msra.mxu0 0.0
    %6607 = vmatprep.subr.mxu0 0.0
    %6608 = vmatpush2.msra.mxu0 0.0
    %6609 = vmatprep.subr.mxu0 0.0
    %6610 = vmatpush2.msra.mxu0 0.0
    %6611 = vmatprep.subr.mxu0 0.0
    %6612 = vmatpush2.msra.mxu0 0.0
    %6613 = vmatprep.subr.mxu0 0.0
    %6614 = vmatpush2.msra.mxu0 0.0
    %6615 = vmatprep.subr.mxu0 0.0
    %6616 = vmatpush2.msra.mxu0 0.0
    %6617 = vmatprep.subr.mxu0 0.0
    %6618 = vmatpush2.msra.mxu0 0.0
    %6619 = vmatprep.subr.mxu0 0.0
    %6620 = vmatpush2.msra.mxu0 0.0
    %6621 = vmatprep.subr.mxu0 0.0
    %6622 = vmatpush2.msra.mxu0 0.0
    %6623 = vmatprep.mubr.f32.mxu0 0.0
    %6624 = vmatmul.mubr.f32.gmra.mxu0 %v4360
    %v6625 = vpop.f32.mrf.mxu0
    %v6626 = vadd.f32 0.0, %v6625
    %v6627 = vpop.f32.mrf.mxu0
    %v6628 = vadd.f32 0.0, %v6627
    %6629 = vmatprep.mubr.f32.mxu0 0.0
    %6630 = vmatmul.mubr.f32.gmra.mxu0 %v4363
    %v6631 = vpop.f32.mrf.mxu0
    %v6632 = vadd.f32 0.0, %v6631
    %v6633 = vpop.f32.mrf.mxu0
    %v6634 = vadd.f32 0.0, %v6633
    %6635 = vmatprep.mubr.f32.mxu0 0.0
    %6636 = vmatmul.mubr.f32.gmra.mxu0 %v4366
    %v6637 = vpop.f32.mrf.mxu0
    %v6638 = vadd.f32 0.0, %v6637
    %v6639 = vpop.f32.mrf.mxu0
    %v6640 = vadd.f32 0.0, %v6639
    %6641 = vmatprep.mubr.f32.mxu0 0.0
    %6642 = vmatmul.mubr.f32.gmra.mxu0 %v4369
    %v6643 = vpop.f32.mrf.mxu0
    %v6644 = vadd.f32 0.0, %v6643
    %v6645 = vpop.f32.mrf.mxu0
    %v6646 = vadd.f32 0.0, %v6645
    %6647 = vmatprep.mubr.f32.mxu0 0.0
    %6648 = vmatmul.mubr.f32.gmra.mxu0 %v4372
    %v6649 = vpop.f32.mrf.mxu0
    %v6650 = vadd.f32 0.0, %v6649
    %v6651 = vpop.f32.mrf.mxu0
    %v6652 = vadd.f32 0.0, %v6651
    %6653 = vdwg.mxu0
    %v6654 = vmul.f32 %v4441, %v5581
    %v6655 = vmul.f32 %v4443, %v5583
    %v6656 = vmul.f32 %v4536, %v5676
    %v6657 = vmul.f32 %v4538, %v5678
    %v6658 = vmul.f32 %v4631, %v5771
    %v6659 = vmul.f32 %v4633, %v5773
    %v6660 = vmul.f32 %v4726, %v5866
    %v6661 = vmul.f32 %v4728, %v5868
    %v6662 = vmul.f32 %v4821, %v5961
    %v6663 = vmul.f32 %v4823, %v5963
    %v6664 = vmul.f32 %v4916, %v6056
    %v6665 = vmul.f32 %v4918, %v6058
    %v6666 = vmul.f32 %v5011, %v6151
    %v6667 = vmul.f32 %v5013, %v6153
    %v6668 = vmul.f32 %v5106, %v6246
    %v6669 = vmul.f32 %v5108, %v6248
    %v6670 = vmul.f32 %v5201, %v6341
    %v6671 = vmul.f32 %v5203, %v6343
    %v6672 = vmul.f32 %v5296, %v6436
    %v6673 = vmul.f32 %v5298, %v6438
    %v6674 = vmul.f32 %v5391, %v6531
    %v6675 = vmul.f32 %v5393, %v6533
    %v6676 = vmul.f32 %v5486, %v6626
    %v6677 = vmul.f32 %v5488, %v6628
    %v6678 = vmul.f32 %v4447, %v5587
    %v6679 = vmul.f32 %v4449, %v5589
    %v6680 = vmul.f32 %v4542, %v5682
    %v6681 = vmul.f32 %v4544, %v5684
    %v6682 = vmul.f32 %v4637, %v5777
    %v6683 = vmul.f32 %v4639, %v5779
    %v6684 = vmul.f32 %v4732, %v5872
    %v6685 = vmul.f32 %v4734, %v5874
    %v6686 = vmul.f32 %v4827, %v5967
    %v6687 = vmul.f32 %v4829, %v5969
    %v6688 = vmul.f32 %v4922, %v6062
    %v6689 = vmul.f32 %v4924, %v6064
    %v6690 = vmul.f32 %v5017, %v6157
    %v6691 = vmul.f32 %v5019, %v6159
    %v6692 = vmul.f32 %v5112, %v6252
    %v6693 = vmul.f32 %v5114, %v6254
    %v6694 = vmul.f32 %v5207, %v6347
    %v6695 = vmul.f32 %v5209, %v6349
    %v6696 = vmul.f32 %v5302, %v6442
    %v6697 = vmul.f32 %v5304, %v6444
    %v6698 = vmul.f32 %v5397, %v6537
    %v6699 = vmul.f32 %v5399, %v6539
    %v6700 = vmul.f32 %v5492, %v6632
    %v6701 = vmul.f32 %v5494, %v6634
    %v6702 = vmul.f32 %v4453, %v5593
    %v6703 = vmul.f32 %v4455, %v5595
    %v6704 = vmul.f32 %v4548, %v5688
    %v6705 = vmul.f32 %v4550, %v5690
    %v6706 = vmul.f32 %v4643, %v5783
    %v6707 = vmul.f32 %v4645, %v5785
    %v6708 = vmul.f32 %v4738, %v5878
    %v6709 = vmul.f32 %v4740, %v5880
    %v6710 = vmul.f32 %v4833, %v5973
    %v6711 = vmul.f32 %v4835, %v5975
    %v6712 = vmul.f32 %v4928, %v6068
    %v6713 = vmul.f32 %v4930, %v6070
    %v6714 = vmul.f32 %v5023, %v6163
    %v6715 = vmul.f32 %v5025, %v6165
    %v6716 = vmul.f32 %v5118, %v6258
    %v6717 = vmul.f32 %v5120, %v6260
    %v6718 = vmul.f32 %v5213, %v6353
    %v6719 = vmul.f32 %v5215, %v6355
    %v6720 = vmul.f32 %v5308, %v6448
    %v6721 = vmul.f32 %v5310, %v6450
    %v6722 = vmul.f32 %v5403, %v6543
    %v6723 = vmul.f32 %v5405, %v6545
    %v6724 = vmul.f32 %v5498, %v6638
    %v6725 = vmul.f32 %v5500, %v6640
    %v6726 = vmul.f32 %v4459, %v5599
    %v6727 = vmul.f32 %v4461, %v5601
    %v6728 = vmul.f32 %v4554, %v5694
    %v6729 = vmul.f32 %v4556, %v5696
    %v6730 = vmul.f32 %v4649, %v5789
    %v6731 = vmul.f32 %v4651, %v5791
    %v6732 = vmul.f32 %v4744, %v5884
    %v6733 = vmul.f32 %v4746, %v5886
    %v6734 = vmul.f32 %v4839, %v5979
    %v6735 = vmul.f32 %v4841, %v5981
    %v6736 = vmul.f32 %v4934, %v6074
    %v6737 = vmul.f32 %v4936, %v6076
    %v6738 = vmul.f32 %v5029, %v6169
    %v6739 = vmul.f32 %v5031, %v6171
    %v6740 = vmul.f32 %v5124, %v6264
    %v6741 = vmul.f32 %v5126, %v6266
    %v6742 = vmul.f32 %v5219, %v6359
    %v6743 = vmul.f32 %v5221, %v6361
    %v6744 = vmul.f32 %v5314, %v6454
    %v6745 = vmul.f32 %v5316, %v6456
    %v6746 = vmul.f32 %v5409, %v6549
    %v6747 = vmul.f32 %v5411, %v6551
    %v6748 = vmul.f32 %v5504, %v6644
    %v6749 = vmul.f32 %v5506, %v6646
    %v6750 = vmul.f32 %v4465, %v5605
    %v6751 = vmul.f32 %v4467, %v5607
    %v6752 = vmul.f32 %v4560, %v5700
    %v6753 = vmul.f32 %v4562, %v5702
    %v6754 = vmul.f32 %v4655, %v5795
    %v6755 = vmul.f32 %v4657, %v5797
    %v6756 = vmul.f32 %v4750, %v5890
    %v6757 = vmul.f32 %v4752, %v5892
    %v6758 = vmul.f32 %v4845, %v5985
    %v6759 = vmul.f32 %v4847, %v5987
    %v6760 = vmul.f32 %v4940, %v6080
    %v6761 = vmul.f32 %v4942, %v6082
    %v6762 = vmul.f32 %v5035, %v6175
    %v6763 = vmul.f32 %v5037, %v6177
    %v6764 = vmul.f32 %v5130, %v6270
    %v6765 = vmul.f32 %v5132, %v6272
    %v6766 = vmul.f32 %v5225, %v6365
    %v6767 = vmul.f32 %v5227, %v6367
    %v6768 = vmul.f32 %v5320, %v6460
    %v6769 = vmul.f32 %v5322, %v6462
    %v6770 = vmul.f32 %v5415, %v6555
    %v6771 = vmul.f32 %v5417, %v6557
    %v6772 = vmul.f32 %v5510, %v6650
    %v6773 = vmul.f32 %v5512, %v6652
    %v6774 = vadd.f32 %v6654, %v6678
    %v6775 = vadd.f32 %v6655, %v6679
    %v6776 = vadd.f32 %v6656, %v6680
    %v6777 = vadd.f32 %v6657, %v6681
    %v6778 = vadd.f32 %v6658, %v6682
    %v6779 = vadd.f32 %v6659, %v6683
    %v6780 = vadd.f32 %v6660, %v6684
    %v6781 = vadd.f32 %v6661, %v6685
    %v6782 = vadd.f32 %v6662, %v6686
    %v6783 = vadd.f32 %v6663, %v6687
    %v6784 = vadd.f32 %v6664, %v6688
    %v6785 = vadd.f32 %v6665, %v6689
    %v6786 = vadd.f32 %v6666, %v6690
    %v6787 = vadd.f32 %v6667, %v6691
    %v6788 = vadd.f32 %v6668, %v6692
    %v6789 = vadd.f32 %v6669, %v6693
    %v6790 = vadd.f32 %v6670, %v6694
    %v6791 = vadd.f32 %v6671, %v6695
    %v6792 = vadd.f32 %v6672, %v6696
    %v6793 = vadd.f32 %v6673, %v6697
    %v6794 = vadd.f32 %v6674, %v6698
    %v6795 = vadd.f32 %v6675, %v6699
    %v6796 = vadd.f32 %v6676, %v6700
    %v6797 = vadd.f32 %v6677, %v6701
    %v6798 = vadd.f32 %v6774, %v6702
    %v6799 = vadd.f32 %v6775, %v6703
    %v6800 = vadd.f32 %v6776, %v6704
    %v6801 = vadd.f32 %v6777, %v6705
    %v6802 = vadd.f32 %v6778, %v6706
    %v6803 = vadd.f32 %v6779, %v6707
    %v6804 = vadd.f32 %v6780, %v6708
    %v6805 = vadd.f32 %v6781, %v6709
    %v6806 = vadd.f32 %v6782, %v6710
    %v6807 = vadd.f32 %v6783, %v6711
    %v6808 = vadd.f32 %v6784, %v6712
    %v6809 = vadd.f32 %v6785, %v6713
    %v6810 = vadd.f32 %v6786, %v6714
    %v6811 = vadd.f32 %v6787, %v6715
    %v6812 = vadd.f32 %v6788, %v6716
    %v6813 = vadd.f32 %v6789, %v6717
    %v6814 = vadd.f32 %v6790, %v6718
    %v6815 = vadd.f32 %v6791, %v6719
    %v6816 = vadd.f32 %v6792, %v6720
    %v6817 = vadd.f32 %v6793, %v6721
    %v6818 = vadd.f32 %v6794, %v6722
    %v6819 = vadd.f32 %v6795, %v6723
    %v6820 = vadd.f32 %v6796, %v6724
    %v6821 = vadd.f32 %v6797, %v6725
    %v6822 = vadd.f32 %v6798, %v6726
    %v6823 = vadd.f32 %v6799, %v6727
    %v6824 = vadd.f32 %v6800, %v6728
    %v6825 = vadd.f32 %v6801, %v6729
    %v6826 = vadd.f32 %v6802, %v6730
    %v6827 = vadd.f32 %v6803, %v6731
    %v6828 = vadd.f32 %v6804, %v6732
    %v6829 = vadd.f32 %v6805, %v6733
    %v6830 = vadd.f32 %v6806, %v6734
    %v6831 = vadd.f32 %v6807, %v6735
    %v6832 = vadd.f32 %v6808, %v6736
    %v6833 = vadd.f32 %v6809, %v6737
    %v6834 = vadd.f32 %v6810, %v6738
    %v6835 = vadd.f32 %v6811, %v6739
    %v6836 = vadd.f32 %v6812, %v6740
    %v6837 = vadd.f32 %v6813, %v6741
    %v6838 = vadd.f32 %v6814, %v6742
    %v6839 = vadd.f32 %v6815, %v6743
    %v6840 = vadd.f32 %v6816, %v6744
    %v6841 = vadd.f32 %v6817, %v6745
    %v6842 = vadd.f32 %v6818, %v6746
    %v6843 = vadd.f32 %v6819, %v6747
    %v6844 = vadd.f32 %v6820, %v6748
    %v6845 = vadd.f32 %v6821, %v6749
    %v6846 = vadd.f32 %v6822, %v6750
    %v6847 = vadd.f32 %v6823, %v6751
    %v6848 = vadd.f32 %v6824, %v6752
    %v6849 = vadd.f32 %v6825, %v6753
    %v6850 = vadd.f32 %v6826, %v6754
    %v6851 = vadd.f32 %v6827, %v6755
    %v6852 = vadd.f32 %v6828, %v6756
    %v6853 = vadd.f32 %v6829, %v6757
    %v6854 = vadd.f32 %v6830, %v6758
    %v6855 = vadd.f32 %v6831, %v6759
    %v6856 = vadd.f32 %v6832, %v6760
    %v6857 = vadd.f32 %v6833, %v6761
    %v6858 = vadd.f32 %v6834, %v6762
    %v6859 = vadd.f32 %v6835, %v6763
    %v6860 = vadd.f32 %v6836, %v6764
    %v6861 = vadd.f32 %v6837, %v6765
    %v6862 = vadd.f32 %v6838, %v6766
    %v6863 = vadd.f32 %v6839, %v6767
    %v6864 = vadd.f32 %v6840, %v6768
    %v6865 = vadd.f32 %v6841, %v6769
    %v6866 = vadd.f32 %v6842, %v6770
    %v6867 = vadd.f32 %v6843, %v6771
    %v6868 = vadd.f32 %v6844, %v6772
    %v6869 = vadd.f32 %v6845, %v6773
    %v6870 = vadd.f32 %v4233, %v6846
    %v6871 = vadd.f32 %v4234, %v6847
    %v6872 = vadd.f32 %v4235, %v6848
    %v6873 = vadd.f32 %v4236, %v6849
    %v6874 = vadd.f32 %v4237, %v6850
    %v6875 = vadd.f32 %v4238, %v6851
    %v6876 = vadd.f32 %v4239, %v6852
    %v6877 = vadd.f32 %v4240, %v6853
    %v6878 = vadd.f32 %v4241, %v6854
    %v6879 = vadd.f32 %v4242, %v6855
    %v6880 = vadd.f32 %v4243, %v6856
    %v6881 = vadd.f32 %v4244, %v6857
    %v6882 = vadd.f32 %v4245, %v6858
    %v6883 = vadd.f32 %v4246, %v6859
    %v6884 = vadd.f32 %v4247, %v6860
    %v6885 = vadd.f32 %v4248, %v6861
    %v6886 = vadd.f32 %v4249, %v6862
    %v6887 = vadd.f32 %v4250, %v6863
    %v6888 = vadd.f32 %v4251, %v6864
    %v6889 = vadd.f32 %v4252, %v6865
    %v6890 = vadd.f32 %v4253, %v6866
    %v6891 = vadd.f32 %v4254, %v6867
    %v6892 = vadd.f32 %v4255, %v6868
    %v6893 = vadd.f32 %v4256, %v6869
    %6894 = vst [vmem:[#allocation11] sm:$0xff] %v6870
    %6895 = vst [vmem:[#allocation11 + $0x8] sm:$0xff] %v6871
    %6896 = vst [vmem:[#allocation11 + $0x10] sm:$0xff] %v6872
    %6897 = vst [vmem:[#allocation11 + $0x18] sm:$0xff] %v6873
    %6898 = vst [vmem:[#allocation11 + $0x20] sm:$0xff] %v6874
    %6899 = vst [vmem:[#allocation11 + $0x28] sm:$0xff] %v6875
    %6900 = vst [vmem:[#allocation11 + $0x30] sm:$0xff] %v6876
    %6901 = vst [vmem:[#allocation11 + $0x38] sm:$0xff] %v6877
    %6902 = vst [vmem:[#allocation11 + $0x40] sm:$0xff] %v6878
    %6903 = vst [vmem:[#allocation11 + $0x48] sm:$0xff] %v6879
    %6904 = vst [vmem:[#allocation11 + $0x50] sm:$0xff] %v6880
    %6905 = vst [vmem:[#allocation11 + $0x58] sm:$0xff] %v6881
    %6906 = vst [vmem:[#allocation11 + $0x60] sm:$0xff] %v6882
    %6907 = vst [vmem:[#allocation11 + $0x68] sm:$0xff] %v6883
    %6908 = vst [vmem:[#allocation11 + $0x70] sm:$0xff] %v6884
    %6909 = vst [vmem:[#allocation11 + $0x78] sm:$0xff] %v6885
    %6910 = vst [vmem:[#allocation11 + $0x80] sm:$0xff] %v6886
    %6911 = vst [vmem:[#allocation11 + $0x88] sm:$0xff] %v6887
    %6912 = vst [vmem:[#allocation11 + $0x90] sm:$0xff] %v6888
    %6913 = vst [vmem:[#allocation11 + $0x98] sm:$0xff] %v6889
    %6914 = vst [vmem:[#allocation11 + $0xa0] sm:$0xff] %v6890
    %6915 = vst [vmem:[#allocation11 + $0xa8] sm:$0xff] %v6891
    %6916 = vst [vmem:[#allocation11 + $0xb0] sm:$0xff] %v6892
    %6917 = vst [vmem:[#allocation11 + $0xb8] sm:$0xff] %v6893
    // Predicated region
    $region42: #{tpu_custom_call.1} parent=1 // pred_check
      _
    $region43: #{tpu_custom_call.1} parent=1 // pred_check_branch
      %6919 = sbr.rel (0) target = $region45
    $region44: #{tpu_custom_call.1} parent=1 // pred_region
      %s6921 = ssub.s32 3072, 3072
      %6922 = vsyncadd [#allocation4], %s6921
      %s6924 = sshll.u32 [#allocation11], 4
      %s6925 = int_to_ptr.vmem [resolvable:$true] %s6924
      %6927 = dma.vmem_to_hbm [thread:$0]  %s6925, 3072, %s5, [#allocation4]
    $region45: #{tpu_custom_call.1} parent=1 // pred_fallthru
      _
    // Predicated region
    $region46: #{tpu_custom_call.1} parent=1 // pred_check
      _
    $region47: #{tpu_custom_call.1} parent=1 // pred_check_branch
      %6929 = sbr.rel (0) target = $region49
    $region48: #{tpu_custom_call.1} parent=1 // pred_region
      %6930 = dma.done [#allocation4], 3072
    $region49: #{tpu_custom_call.1} parent=1 // pred_fallthru
      _
    %6931 = vsyncpa [#allocation3], 1
    %6932 = vsyncpa [#allocation6], 1
    %6933 = vsyncpa [#allocation9], 1
    %6934 = vsyncpa [#allocation4], 1

</llo_original>
